<compile_context>
chip_gen: v6e
topology: v6e:2x2x1
jax: 0.10.0
libtpu: 0.0.40
codegen_flags: <defaults>
</compile_context>

<pallas_src>
import jax
import jax.numpy as jnp
from jax.experimental import pallas as pl
from jax.experimental.pallas import tpu as pltpu

BN_EPS = 1e-3


# ----------------------------------------------------------------------------
# Pallas kernels
# ----------------------------------------------------------------------------
def _matmul_bias_relu_kernel(x_ref, w_ref, b_ref, o_ref):
    # x: (M, K) bf16, w: (K, N) bf16, b: (1, N) f32, o: (M, N) f32
    acc = jnp.dot(x_ref[...], w_ref[...], preferred_element_type=jnp.float32)
    o_ref[...] = jnp.maximum(acc + b_ref[...], 0.0)


def _tail_kernel(xp_ref, yp_ref, w_ref, b_ref, pool_ref, conv_ref):
    # xp: (9, M, C)  f32 stacked 3x3/s2 views of the block input -> max-pool
    # yp: (M, K)     bf16 im2col of [x1 | x2 | x3b]
    # w : (K, Nc)    bf16 block-diagonal weight for {b1b, b2b, b3c}
    # pool: (M, C) f32, conv: (M, Nc) f32 (pre-concatenated [b1|b2|b3])
    pool_ref[...] = jnp.max(xp_ref[...], axis=0)
    acc = jnp.dot(yp_ref[...], w_ref[...], preferred_element_type=jnp.float32)
    conv_ref[...] = jnp.maximum(acc + b_ref[...], 0.0)


# ----------------------------------------------------------------------------
# Pallas wrappers (single-step grid, full-array blocks, bf16 MXU operands)
# ----------------------------------------------------------------------------
def matmul_bias_relu(x2d, w2d, bias):
    """relu(x2d @ w2d + bias) in one Pallas call; everything fits VMEM."""
    M, K = x2d.shape
    _, N = w2d.shape
    return pl.pallas_call(
        _matmul_bias_relu_kernel,
        out_shape=jax.ShapeDtypeStruct((M, N), jnp.float32),
        grid=(1,),
        in_specs=[
            pl.BlockSpec((M, K), lambda i: (0, 0)),
            pl.BlockSpec((K, N), lambda i: (0, 0)),
            pl.BlockSpec((1, N), lambda i: (0, 0)),
        ],
        out_specs=pl.BlockSpec((M, N), lambda i: (0, 0)),
        compiler_params=pltpu.CompilerParams(
            dimension_semantics=("arbitrary",)),
    )(x2d.astype(jnp.bfloat16), w2d.astype(jnp.bfloat16),
      bias.reshape(1, N).astype(jnp.float32))


def pool_and_fused_conv(xpatches, ypatches, w_blk, bias):
    """One call: max-pool over the 9 patch views + fused {b1b,b2b,b3c} matmul."""
    P, M, C = xpatches.shape
    _, K = ypatches.shape
    _, N = w_blk.shape
    return pl.pallas_call(
        _tail_kernel,
        out_shape=(jax.ShapeDtypeStruct((M, C), jnp.float32),
                   jax.ShapeDtypeStruct((M, N), jnp.float32)),
        grid=(1,),
        in_specs=[
            pl.BlockSpec((P, M, C), lambda i: (0, 0, 0)),
            pl.BlockSpec((M, K), lambda i: (0, 0)),
            pl.BlockSpec((K, N), lambda i: (0, 0)),
            pl.BlockSpec((1, N), lambda i: (0, 0)),
        ],
        out_specs=[pl.BlockSpec((M, C), lambda i: (0, 0)),
                   pl.BlockSpec((M, N), lambda i: (0, 0))],
        compiler_params=pltpu.CompilerParams(
            dimension_semantics=("arbitrary",)),
    )(xpatches, ypatches.astype(jnp.bfloat16), w_blk.astype(jnp.bfloat16),
      bias.reshape(1, N).astype(jnp.float32))


# ----------------------------------------------------------------------------
# im2col glue (plain JAX; static slicing only — tiny at 17x17)
# ----------------------------------------------------------------------------
def _extract_patches(x, kh, kw, stride, pad, stack=False):
    # x: (N, H, W, C)
    if pad > 0:
        x = jnp.pad(x, ((0, 0), (pad, pad), (pad, pad), (0, 0)))
    N, H, W, C = x.shape
    Ho = (H - kh) // stride + 1
    Wo = (W - kw) // stride + 1
    pats = [
        x[:, i:i + stride * (Ho - 1) + 1:stride,
             j:j + stride * (Wo - 1) + 1:stride, :]
        for i in range(kh) for j in range(kw)
    ]
    if stack:
        return jnp.stack(pats, axis=0), Ho, Wo          # (kh*kw, N, Ho, Wo, C)
    return jnp.concatenate(pats, axis=-1), Ho, Wo       # (N, Ho, Wo, kh*kw*C)


def _fold_bn(params):
    """Conv(no bias) + BatchNorm(eval, eps=1e-3) -> folded weight/bias."""
    w, gamma, beta, mean, var = params                   # w: (kh, kw, Cin, Cout)
    scale = gamma / jnp.sqrt(var + BN_EPS)
    return w * scale, beta - mean * scale


# ----------------------------------------------------------------------------
# ReductionB forward
# ----------------------------------------------------------------------------
def reduction_b_forward(x_nchw, params):
    x = jnp.transpose(x_nchw, (0, 2, 3, 1)).astype(jnp.float32)   # -> NHWC
    N, H, W, C = x.shape                                          # (N,17,17,288)

    # Fold BN into every conv.
    w1a, b1a = _fold_bn(params["b1a"])    # (1,1,288,72)
    w2a, b2a = _fold_bn(params["b2a"])
    w3a, b3a = _fold_bn(params["b3a"])
    w1b, b1b = _fold_bn(params["b1b"])    # (3,3,72,96)
    w2b, b2b = _fold_bn(params["b2b"])
    w3b, b3b = _fold_bn(params["b3b"])    # (3,3,72,82)
    w3c, b3c = _fold_bn(params["b3c"])    # (3,3,82,96)

    c4 = w1a.shape[-1]     # 72
    c3 = w1b.shape[-1]     # 96
    c35 = w3b.shape[-1]    # 82

    # --- stage 1: three shared 1x1 convs as ONE lane-dense matmul -----------
    # output channel layout: [b1a:72 | b2a:72 | b3a:72 | zero-pad:40] = 256
    n1 = 3 * c4
    n1p = ((n1 + 127) // 128) * 128                      # 256
    wc = jnp.concatenate(
        [w1a.reshape(C, c4), w2a.reshape(C, c4), w3a.reshape(C, c4),
         jnp.zeros((C, n1p - n1), jnp.float32)], axis=1)            # (288,256)
    bc = jnp.concatenate([b1a, b2a, b3a, jnp.zeros((n1p - n1,), jnp.float32)])
    s1 = matmul_bias_relu(x.reshape(N * H * W, C), wc, bc)          # (578,256)
    s1 = s1.reshape(N, H, W, n1p)
    x12 = s1[..., :2 * c4]                               # (N,17,17,144) [x1|x2]
    x3 = s1[..., 2 * c4:3 * c4]                          # (N,17,17,72)

    # --- stage 2: b3b (3x3, s1, pad 1) with lane-dense 128-wide output ------
    n2p = ((c35 + 127) // 128) * 128                     # 128
    p3, Ho1, Wo1 = _extract_patches(x3, 3, 3, 1, 1)      # (N,17,17,648)
    w3b_p = jnp.concatenate(
        [w3b.reshape(9 * c4, c35),
         jnp.zeros((9 * c4, n2p - c35), jnp.float32)], axis=1)      # (648,128)
    b3b_p = jnp.concatenate([b3b, jnp.zeros((n2p - c35,), jnp.float32)])
    x3b = matmul_bias_relu(p3.reshape(N * Ho1 * Wo1, 9 * c4), w3b_p, b3b_p)
    x3b = x3b.reshape(N, H, W, n2p)                      # (N,17,17,128) [82|pad]

    # --- stage 3: maxpool + {b1b, b2b, b3c} fused into one tail kernel ------
    # Block-diagonal folded weight so a single (M,K)@(K,288) matmul computes
    # all three 3x3/s2 convs, writing them pre-concatenated as [b1|b2|b3].
    y = jnp.concatenate([x12, x3b], axis=-1)             # (N,17,17,272)
    cy = y.shape[-1]                                     # 272
    yp, Ho, Wo = _extract_patches(y, 3, 3, 2, 0)         # (N,8,8,2448)

    w1r = w1b.reshape(9, c4, c3)
    w2r = w2b.reshape(9, c4, c3)
    w3r = w3c.reshape(9, c35, c3)
    w_blk = jnp.concatenate([
        jnp.pad(w1r, ((0, 0), (0, 0), (0, 2 * c3))),               # (9,72,288)
        jnp.pad(w2r, ((0, 0), (0, 0), (c3, c3))),                  # (9,72,288)
        jnp.pad(w3r, ((0, 0), (0, 0), (2 * c3, 0))),               # (9,82,288)
        jnp.zeros((9, n2p - c35, 3 * c3), jnp.float32),            # (9,46,288)
    ], axis=1).reshape(9 * cy, 3 * c3)                             # (2448,288)
    b_blk = jnp.concatenate([b1b, b2b, b3c])                       # (288,)

    xpool, _, _ = _extract_patches(x, 3, 3, 2, 0, stack=True)      # (9,N,8,8,288)
    pool, conv = pool_and_fused_conv(
        xpool.reshape(9, N * Ho * Wo, C),
        yp.reshape(N * Ho * Wo, 9 * cy),
        w_blk, b_blk)

    out = jnp.concatenate([pool.reshape(N, Ho, Wo, C),
                           conv.reshape(N, Ho, Wo, 3 * c3)], axis=-1)
    return jnp.transpose(out, (0, 3, 1, 2))                        # -> NCHW


# ----------------------------------------------------------------------------
# Parameter init (matches BasicConv2d: conv no-bias + BN(eps=1e-3) + ReLU)
# ----------------------------------------------------------------------------
def init_conv_bn(key, kh, kw, cin, cout):
    k1, k2, k3, k4, k5 = jax.random.split(key, 5)
    w = jax.random.normal(k1, (kh, kw, cin, cout), jnp.float32) * 0.05
    gamma = 1.0 + 0.1 * jax.random.normal(k2, (cout,), jnp.float32)
    beta = 0.1 * jax.random.normal(k3, (cout,), jnp.float32)
    mean = 0.1 * jax.random.normal(k4, (cout,), jnp.float32)
    var = 1.0 + 0.1 * jnp.abs(jax.random.normal(k5, (cout,), jnp.float32))
    return (w, gamma, beta, mean, var)


def init_reduction_b_params(key, planes=288):
    c4 = planes // 4                 # 72
    c3 = planes // 3                 # 96
    c35 = int(planes // 3.5)         # 82
    ks = jax.random.split(key, 8)
    return {
        "b1a": init_conv_bn(ks[0], 1, 1, planes, c4),
        "b1b": init_conv_bn(ks[1], 3, 3, c4, c3),
        "b2a": init_conv_bn(ks[2], 1, 1, planes, c4),
        "b2b": init_conv_bn(ks[3], 3, 3, c4, c3),
        "b3a": init_conv_bn(ks[4], 1, 1, planes, c4),
        "b3b": init_conv_bn(ks[5], 3, 3, c4, c35),
        "b3c": init_conv_bn(ks[6], 3, 3, c35, c3),
    }


# ----------------------------------------------------------------------------
# Pure-JAX reference.  With quantize=True it uses the same bf16 operand
# quantization as the kernels (accumulation in f32), so the comparison isolates
# wiring/lowering bugs rather than the deliberate bf16 precision choice.
# ----------------------------------------------------------------------------
def _q(a):
    return a.astype(jnp.bfloat16).astype(jnp.float32)


def _ref_basic(x, params, stride, padding, quantize):
    w_f, b_f = _fold_bn(params)
    if quantize:
        x, w_f = _q(x), _q(w_f)
    y = jax.lax.conv_general_dilated(
        x, w_f, (stride, stride), [(padding, padding), (padding, padding)],
        dimension_numbers=("NHWC", "HWIO", "NHWC"),
        precision=jax.lax.Precision.HIGHEST)
    return jnp.maximum(y + b_f, 0.0)


def _ref_forward(x_nchw, params, quantize=True):
    x = jnp.transpose(x_nchw, (0, 2, 3, 1))
    x0 = jax.lax.reduce_window(x, -jnp.inf, jax.lax.max,
                               (1, 3, 3, 1), (1, 2, 2, 1), "VALID")
    x1 = _ref_basic(_ref_basic(x, params["b1a"], 1, 0, quantize),
                    params["b1b"], 2, 0, quantize)
    x2 = _ref_basic(_ref_basic(x, params["b2a"], 1, 0, quantize),
                    params["b2b"], 2, 0, quantize)
    x3 = _ref_basic(x, params["b3a"], 1, 0, quantize)
    x3 = _ref_basic(x3, params["b3b"], 1, 1, quantize)
    x3 = _ref_basic(x3, params["b3c"], 2, 0, quantize)
    out = jnp.concatenate([x0, x1, x2, x3], axis=-1)
    return jnp.transpose(out, (0, 3, 1, 2))


# ----------------------------------------------------------------------------
if __name__ == "__main__":
    key = jax.random.PRNGKey(0)
    kx, kp = jax.random.split(key)

    planes = 288
    N, H, W = 2, 17, 17                      # matches "input 17*17*288"
    x = jax.random.normal(kx, (N, planes, H, W), jnp.float32)  # NCHW input
    params = init_reduction_b_params(kp, planes)

    fwd = jax.jit(reduction_b_forward)
    out = jax.block_until_ready(fwd(x, params))

    expected_c = planes + 3 * (planes // 3)  # 288 + 3*96 = 576
    assert out.shape == (N, expected_c, 8, 8), out.shape

    ref = jax.block_until_ready(_ref_forward(x, params, quantize=True))
    max_err = float(jnp.max(jnp.abs(out - ref)))
    assert jnp.allclose(out, ref, rtol=1e-2, atol=1e-2), max_err

    print("KERNEL_OK")
</pallas_src>

<mosaic_0001>
module attributes {stable_mosaic.version = 11 : i64} {
  func.func @_matmul_bias_relu_kernel(%arg0: i32, %arg1: memref<578x288xbf16, #tpu.memory_space<vmem>>, %arg2: memref<288x256xbf16, #tpu.memory_space<vmem>>, %arg3: memref<1x256xf32, #tpu.memory_space<vmem>>, %arg4: memref<578x256xf32, #tpu.memory_space<vmem>>) attributes {dimension_semantics = [#tpu.dimension_semantics<arbitrary>], iteration_bounds = array<i64: 1>, scalar_prefetch = 0 : i64, scratch_operands = 0 : i64, tpu.core_type = #tpu.core_type<tc>, window_params = [{pipeline_mode = #tpu.pipeline_mode<synchronous>, transform_indices = @transform_0, window_bounds = array<i64: 578, 288>}, {pipeline_mode = #tpu.pipeline_mode<synchronous>, transform_indices = @transform_1, window_bounds = array<i64: 288, 256>}, {pipeline_mode = #tpu.pipeline_mode<synchronous>, transform_indices = @transform_2, window_bounds = array<i64: 1, 256>}, {pipeline_mode = #tpu.pipeline_mode<synchronous>, transform_indices = @transform_3, window_bounds = array<i64: 578, 256>}]} {
    %c0 = arith.constant 0 : index
    %c0_0 = arith.constant 0 : index
    %0 = vector.load %arg1[%c0, %c0_0] : memref<578x288xbf16, #tpu.memory_space<vmem>>, vector<578x288xbf16>
    %c0_1 = arith.constant 0 : index
    %c0_2 = arith.constant 0 : index
    %1 = vector.load %arg2[%c0_1, %c0_2] : memref<288x256xbf16, #tpu.memory_space<vmem>>, vector<288x256xbf16>
    %cst = arith.constant dense<0.000000e+00> : vector<578x256xf32>
    %2 = tpu.matmul %0, %1, %cst {dimension_numbers = #tpu.dot_dimension_numbers<[1], [0], [0], [1], [0, 0, 1, 1], [], []>} : vector<578x288xbf16>, vector<288x256xbf16>, vector<578x256xf32> -> vector<578x256xf32>
    %c0_3 = arith.constant 0 : index
    %c0_4 = arith.constant 0 : index
    %3 = vector.load %arg3[%c0_3, %c0_4] : memref<1x256xf32, #tpu.memory_space<vmem>>, vector<1x256xf32>
    %4 = vector.broadcast %3 : vector<1x256xf32> to vector<578x256xf32>
    %5 = arith.addf %2, %4 : vector<578x256xf32>
    %cst_5 = arith.constant 0.000000e+00 : f32
    %6 = vector.broadcast %cst_5 : f32 to vector<578x256xf32>
    %7 = arith.maximumf %5, %6 : vector<578x256xf32>
    %c0_6 = arith.constant 0 : index
    %c0_7 = arith.constant 0 : index
    %8 = vector.load %arg4[%c0_6, %c0_7] : memref<578x256xf32, #tpu.memory_space<vmem>>, vector<578x256xf32>
    tpu.vector_store %arg4[%c0_6, %c0_7], %7 {strides = array<i32>} : memref<578x256xf32, #tpu.memory_space<vmem>>, vector<578x256xf32>,
    return
  }
  func.func @transform_0(%arg0: i32) -> (i32, i32) {
    %c0_i32 = arith.constant 0 : i32
    %c0_i32_0 = arith.constant 0 : i32
    %c0_i32_1 = arith.constant 0 : i32
    return %c0_i32, %c0_i32_0 : i32, i32
  }
  func.func @transform_1(%arg0: i32) -> (i32, i32) {
    %c0_i32 = arith.constant 0 : i32
    %c0_i32_0 = arith.constant 0 : i32
    %c0_i32_1 = arith.constant 0 : i32
    return %c0_i32, %c0_i32_0 : i32, i32
  }
  func.func @transform_2(%arg0: i32) -> (i32, i32) {
    %c0_i32 = arith.constant 0 : i32
    %c0_i32_0 = arith.constant 0 : i32
    %c0_i32_1 = arith.constant 0 : i32
    return %c0_i32, %c0_i32_0 : i32, i32
  }
  func.func @transform_3(%arg0: i32) -> (i32, i32) {
    %c0_i32 = arith.constant 0 : i32
    %c0_i32_0 = arith.constant 0 : i32
    %c0_i32_1 = arith.constant 0 : i32
    return %c0_i32, %c0_i32_0 : i32, i32
  }
}

module attributes {stable_mosaic.version = 11 : i64} {
  func.func @_matmul_bias_relu_kernel(%arg0: i32, %arg1: memref<578x648xbf16, #tpu.memory_space<vmem>>, %arg2: memref<648x128xbf16, #tpu.memory_space<vmem>>, %arg3: memref<1x128xf32, #tpu.memory_space<vmem>>, %arg4: memref<578x128xf32, #tpu.memory_space<vmem>>) attributes {dimension_semantics = [#tpu.dimension_semantics<arbitrary>], iteration_bounds = array<i64: 1>, scalar_prefetch = 0 : i64, scratch_operands = 0 : i64, tpu.core_type = #tpu.core_type<tc>, window_params = [{pipeline_mode = #tpu.pipeline_mode<synchronous>, transform_indices = @transform_0, window_bounds = array<i64: 578, 648>}, {pipeline_mode = #tpu.pipeline_mode<synchronous>, transform_indices = @transform_1, window_bounds = array<i64: 648, 128>}, {pipeline_mode = #tpu.pipeline_mode<synchronous>, transform_indices = @transform_2, window_bounds = array<i64: 1, 128>}, {pipeline_mode = #tpu.pipeline_mode<synchronous>, transform_indices = @transform_3, window_bounds = array<i64: 578, 128>}]} {
    %c0 = arith.constant 0 : index
    %c0_0 = arith.constant 0 : index
    %0 = vector.load %arg1[%c0, %c0_0] : memref<578x648xbf16, #tpu.memory_space<vmem>>, vector<578x648xbf16>
    %c0_1 = arith.constant 0 : index
    %c0_2 = arith.constant 0 : index
    %1 = vector.load %arg2[%c0_1, %c0_2] : memref<648x128xbf16, #tpu.memory_space<vmem>>, vector<648x128xbf16>
    %cst = arith.constant dense<0.000000e+00> : vector<578x128xf32>
    %2 = tpu.matmul %0, %1, %cst {dimension_numbers = #tpu.dot_dimension_numbers<[1], [0], [0], [1], [0, 0, 1, 1], [], []>} : vector<578x648xbf16>, vector<648x128xbf16>, vector<578x128xf32> -> vector<578x128xf32>
    %c0_3 = arith.constant 0 : index
    %c0_4 = arith.constant 0 : index
    %3 = vector.load %arg3[%c0_3, %c0_4] : memref<1x128xf32, #tpu.memory_space<vmem>>, vector<1x128xf32>
    %4 = vector.broadcast %3 : vector<1x128xf32> to vector<578x128xf32>
    %5 = arith.addf %2, %4 : vector<578x128xf32>
    %cst_5 = arith.constant 0.000000e+00 : f32
    %6 = vector.broadcast %cst_5 : f32 to vector<578x128xf32>
    %7 = arith.maximumf %5, %6 : vector<578x128xf32>
    %c0_6 = arith.constant 0 : index
    %c0_7 = arith.constant 0 : index
    %8 = vector.load %arg4[%c0_6, %c0_7] : memref<578x128xf32, #tpu.memory_space<vmem>>, vector<578x128xf32>
    tpu.vector_store %arg4[%c0_6, %c0_7], %7 {strides = array<i32>} : memref<578x128xf32, #tpu.memory_space<vmem>>, vector<578x128xf32>,
    return
  }
  func.func @transform_0(%arg0: i32) -> (i32, i32) {
    %c0_i32 = arith.constant 0 : i32
    %c0_i32_0 = arith.constant 0 : i32
    %c0_i32_1 = arith.constant 0 : i32
    return %c0_i32, %c0_i32_0 : i32, i32
  }
  func.func @transform_1(%arg0: i32) -> (i32, i32) {
    %c0_i32 = arith.constant 0 : i32
    %c0_i32_0 = arith.constant 0 : i32
    %c0_i32_1 = arith.constant 0 : i32
    return %c0_i32, %c0_i32_0 : i32, i32
  }
  func.func @transform_2(%arg0: i32) -> (i32, i32) {
    %c0_i32 = arith.constant 0 : i32
    %c0_i32_0 = arith.constant 0 : i32
    %c0_i32_1 = arith.constant 0 : i32
    return %c0_i32, %c0_i32_0 : i32, i32
  }
  func.func @transform_3(%arg0: i32) -> (i32, i32) {
    %c0_i32 = arith.constant 0 : i32
    %c0_i32_0 = arith.constant 0 : i32
    %c0_i32_1 = arith.constant 0 : i32
    return %c0_i32, %c0_i32_0 : i32, i32
  }
}

module attributes {stable_mosaic.version = 11 : i64} {
  func.func @_tail_kernel(%arg0: i32, %arg1: memref<9x128x288xf32, #tpu.memory_space<vmem>>, %arg2: memref<128x2448xbf16, #tpu.memory_space<vmem>>, %arg3: memref<2448x288xbf16, #tpu.memory_space<vmem>>, %arg4: memref<1x288xf32, #tpu.memory_space<vmem>>, %arg5: memref<128x288xf32, #tpu.memory_space<vmem>>, %arg6: memref<128x288xf32, #tpu.memory_space<vmem>>) attributes {dimension_semantics = [#tpu.dimension_semantics<arbitrary>], iteration_bounds = array<i64: 1>, scalar_prefetch = 0 : i64, scratch_operands = 0 : i64, tpu.core_type = #tpu.core_type<tc>, window_params = [{pipeline_mode = #tpu.pipeline_mode<synchronous>, transform_indices = @transform_0, window_bounds = array<i64: 9, 128, 288>}, {pipeline_mode = #tpu.pipeline_mode<synchronous>, transform_indices = @transform_1, window_bounds = array<i64: 128, 2448>}, {pipeline_mode = #tpu.pipeline_mode<synchronous>, transform_indices = @transform_2, window_bounds = array<i64: 2448, 288>}, {pipeline_mode = #tpu.pipeline_mode<synchronous>, transform_indices = @transform_3, window_bounds = array<i64: 1, 288>}, {pipeline_mode = #tpu.pipeline_mode<synchronous>, transform_indices = @transform_4, window_bounds = array<i64: 128, 288>}, {pipeline_mode = #tpu.pipeline_mode<synchronous>, transform_indices = @transform_5, window_bounds = array<i64: 128, 288>}]} {
    %c0 = arith.constant 0 : index
    %c0_0 = arith.constant 0 : index
    %c0_1 = arith.constant 0 : index
    %0 = vector.load %arg1[%c0, %c0_0, %c0_1] : memref<9x128x288xf32, #tpu.memory_space<vmem>>, vector<9x128x288xf32>
    %cst = arith.constant dense<0xFF800000> : vector<128x288xf32>
    %1 = vector.multi_reduction <maximumf>, %0, %cst [0] : vector<9x128x288xf32> to vector<128x288xf32>
    %c0_2 = arith.constant 0 : index
    %c0_3 = arith.constant 0 : index
    %2 = vector.load %arg5[%c0_2, %c0_3] : memref<128x288xf32, #tpu.memory_space<vmem>>, vector<128x288xf32>
    tpu.vector_store %arg5[%c0_2, %c0_3], %1 {strides = array<i32>} : memref<128x288xf32, #tpu.memory_space<vmem>>, vector<128x288xf32>,
    %c0_4 = arith.constant 0 : index
    %c0_5 = arith.constant 0 : index
    %3 = vector.load %arg2[%c0_4, %c0_5] : memref<128x2448xbf16, #tpu.memory_space<vmem>>, vector<128x2448xbf16>
    %c0_6 = arith.constant 0 : index
    %c0_7 = arith.constant 0 : index
    %4 = vector.load %arg3[%c0_6, %c0_7] : memref<2448x288xbf16, #tpu.memory_space<vmem>>, vector<2448x288xbf16>
    %cst_8 = arith.constant dense<0.000000e+00> : vector<128x288xf32>
    %5 = tpu.matmul %3, %4, %cst_8 {dimension_numbers = #tpu.dot_dimension_numbers<[1], [0], [0], [1], [0, 0, 1, 1], [], []>} : vector<128x2448xbf16>, vector<2448x288xbf16>, vector<128x288xf32> -> vector<128x288xf32>
    %c0_9 = arith.constant 0 : index
    %c0_10 = arith.constant 0 : index
    %6 = vector.load %arg4[%c0_9, %c0_10] : memref<1x288xf32, #tpu.memory_space<vmem>>, vector<1x288xf32>
    %7 = vector.broadcast %6 : vector<1x288xf32> to vector<128x288xf32>
    %8 = arith.addf %5, %7 : vector<128x288xf32>
    %cst_11 = arith.constant 0.000000e+00 : f32
    %9 = vector.broadcast %cst_11 : f32 to vector<128x288xf32>
    %10 = arith.maximumf %8, %9 : vector<128x288xf32>
    %c0_12 = arith.constant 0 : index
    %c0_13 = arith.constant 0 : index
    %11 = vector.load %arg6[%c0_12, %c0_13] : memref<128x288xf32, #tpu.memory_space<vmem>>, vector<128x288xf32>
    tpu.vector_store %arg6[%c0_12, %c0_13], %10 {strides = array<i32>} : memref<128x288xf32, #tpu.memory_space<vmem>>, vector<128x288xf32>,
    return
  }
  func.func @transform_0(%arg0: i32) -> (i32, i32, i32) {
    %c0_i32 = arith.constant 0 : i32
    %c0_i32_0 = arith.constant 0 : i32
    %c0_i32_1 = arith.constant 0 : i32
    %c0_i32_2 = arith.constant 0 : i32
    return %c0_i32, %c0_i32_0, %c0_i32_1 : i32, i32, i32
  }
  func.func @transform_1(%arg0: i32) -> (i32, i32) {
    %c0_i32 = arith.constant 0 : i32
    %c0_i32_0 = arith.constant 0 : i32
    %c0_i32_1 = arith.constant 0 : i32
    return %c0_i32, %c0_i32_0 : i32, i32
  }
  func.func @transform_2(%arg0: i32) -> (i32, i32) {
    %c0_i32 = arith.constant 0 : i32
    %c0_i32_0 = arith.constant 0 : i32
    %c0_i32_1 = arith.constant 0 : i32
    return %c0_i32, %c0_i32_0 : i32, i32
  }
  func.func @transform_3(%arg0: i32) -> (i32, i32) {
    %c0_i32 = arith.constant 0 : i32
    %c0_i32_0 = arith.constant 0 : i32
    %c0_i32_1 = arith.constant 0 : i32
    return %c0_i32, %c0_i32_0 : i32, i32
  }
  func.func @transform_4(%arg0: i32) -> (i32, i32) {
    %c0_i32 = arith.constant 0 : i32
    %c0_i32_0 = arith.constant 0 : i32
    %c0_i32_1 = arith.constant 0 : i32
    return %c0_i32, %c0_i32_0 : i32, i32
  }
  func.func @transform_5(%arg0: i32) -> (i32, i32) {
    %c0_i32 = arith.constant 0 : i32
    %c0_i32_0 = arith.constant 0 : i32
    %c0_i32_1 = arith.constant 0 : i32
    return %c0_i32, %c0_i32_0 : i32, i32
  }
}

</mosaic_0001>

<llo_original>
// kernel: reduction_b_forward.3
$region0: #{reduction_b_forward.3}
  #allocation0 [shape = 'u32[]', space=smem, size = 0x4, offset = 0x4, fixed_abs, tag = 'smem constant byte address 0x4 - core index']
  #allocation1 [shape = 'u32[144,128]{1,0:T(1,128)}', space=vmem, size = 0x12000, scoped, tag = 'internal scratch']
  %s0 = inlined_call_operand.vmem [shape: bf16[578,288], index: 0, kind: input, shape index: {}]
  %s1 = inlined_call_operand.vmem [shape: bf16[288,256], index: 1, kind: input, shape index: {}]
  %s2 = inlined_call_operand.vmem [shape: f32[1,256], index: 2, kind: input, shape index: {}]
  %s3 = inlined_call_operand.vmem [shape: f32[578,256], index: 3, kind: output, shape index: {}]
  %s4 = sld [smem:[#allocation0]]
  $region22: #{reduction_b_forward.3} parent=0
    _
  %s6 = ssub.s32 1, %s4
  %s7 = scalar_select 0, %s6, %s4
  // Predicated region
  $region2: #{reduction_b_forward.3} parent=0 // pred_check
    _
  $region3: #{reduction_b_forward.3} parent=0 // pred_check_branch
    %9 = sbr.rel (0) target = $region5
  $region4: #{reduction_b_forward.3} parent=0 // pred_region
    _
  $region5: #{reduction_b_forward.3} parent=0 // pred_fallthru
    _
  // Predicated region
  $region6: #{reduction_b_forward.3} parent=0 // pred_check
    _
  $region7: #{reduction_b_forward.3} parent=0 // pred_check_branch
    %11 = sbr.rel (0) target = $region9
  $region8: #{reduction_b_forward.3} parent=0 // pred_region
    _
  $region9: #{reduction_b_forward.3} parent=0 // pred_fallthru
    _
  // Predicated region
  $region10: #{reduction_b_forward.3} parent=0 // pred_check
    _
  $region11: #{reduction_b_forward.3} parent=0 // pred_check_branch
    %13 = sbr.rel (0) target = $region13
  $region12: #{reduction_b_forward.3} parent=0 // pred_region
    _
  $region13: #{reduction_b_forward.3} parent=0 // pred_fallthru
    _
  %v15 = vld [vmem:[%s0] sm:$0xff]
  %v16 = vld [vmem:[%s0 + $0x8] sm:$0xf]
  %v17 = vld [vmem:[%s0 + $0xc] sm:$0xff]
  %v18 = vld [vmem:[%s0 + $0x14] sm:$0xf]
  %v19 = vld [vmem:[%s0 + $0x18] sm:$0xff]
  %v20 = vld [vmem:[%s0 + $0x20] sm:$0xf]
  %v21 = vld [vmem:[%s0 + $0x24] sm:$0xff]
  %v22 = vld [vmem:[%s0 + $0x2c] sm:$0xf]
  %v23 = vld [vmem:[%s0 + $0x30] sm:$0xff]
  %v24 = vld [vmem:[%s0 + $0x38] sm:$0xf]
  %v25 = vld [vmem:[%s0 + $0x3c] sm:$0xff]
  %v26 = vld [vmem:[%s0 + $0x44] sm:$0xf]
  %v27 = vld [vmem:[%s0 + $0x48] sm:$0xff]
  %v28 = vld [vmem:[%s0 + $0x50] sm:$0xf]
  %v29 = vld [vmem:[%s0 + $0x54] sm:$0xff]
  %v30 = vld [vmem:[%s0 + $0x5c] sm:$0xf]
  %v31 = vld [vmem:[%s0 + $0x60] sm:$0xff]
  %v32 = vld [vmem:[%s0 + $0x68] sm:$0xf]
  %v33 = vld [vmem:[%s0 + $0x6c] sm:$0xff]
  %v34 = vld [vmem:[%s0 + $0x74] sm:$0xf]
  %v35 = vld [vmem:[%s0 + $0x78] sm:$0xff]
  %v36 = vld [vmem:[%s0 + $0x80] sm:$0xf]
  %v37 = vld [vmem:[%s0 + $0x84] sm:$0xff]
  %v38 = vld [vmem:[%s0 + $0x8c] sm:$0xf]
  %v39 = vld [vmem:[%s0 + $0x90] sm:$0xff]
  %v40 = vld [vmem:[%s0 + $0x98] sm:$0xf]
  %v41 = vld [vmem:[%s0 + $0x9c] sm:$0xff]
  %v42 = vld [vmem:[%s0 + $0xa4] sm:$0xf]
  %v43 = vld [vmem:[%s0 + $0xa8] sm:$0xff]
  %v44 = vld [vmem:[%s0 + $0xb0] sm:$0xf]
  %v45 = vld [vmem:[%s0 + $0xb4] sm:$0xff]
  %v46 = vld [vmem:[%s0 + $0xbc] sm:$0xf]
  %v47 = vld [vmem:[%s0 + $0xc0] sm:$0xff]
  %v48 = vld [vmem:[%s0 + $0xc8] sm:$0xf]
  %v49 = vld [vmem:[%s0 + $0xcc] sm:$0xff]
  %v50 = vld [vmem:[%s0 + $0xd4] sm:$0xf]
  %v51 = vld [vmem:[%s0 + $0xd8] sm:$0xff]
  %v52 = vld [vmem:[%s0 + $0xe0] sm:$0xf]
  %v53 = vld [vmem:[%s0 + $0xe4] sm:$0xff]
  %v54 = vld [vmem:[%s0 + $0xec] sm:$0xf]
  %v55 = vld [vmem:[%s0 + $0xf0] sm:$0xff]
  %v56 = vld [vmem:[%s0 + $0xf8] sm:$0xf]
  %v57 = vld [vmem:[%s0 + $0xfc] sm:$0xff]
  %v58 = vld [vmem:[%s0 + $0x104] sm:$0xf]
  %v59 = vld [vmem:[%s0 + $0x108] sm:$0xff]
  %v60 = vld [vmem:[%s0 + $0x110] sm:$0xf]
  %v61 = vld [vmem:[%s0 + $0x114] sm:$0xff]
  %v62 = vld [vmem:[%s0 + $0x11c] sm:$0xf]
  %v63 = vld [vmem:[%s0 + $0x120] sm:$0xff]
  %v64 = vld [vmem:[%s0 + $0x128] sm:$0xf]
  %v65 = vld [vmem:[%s0 + $0x12c] sm:$0xff]
  %v66 = vld [vmem:[%s0 + $0x134] sm:$0xf]
  %v67 = vld [vmem:[%s0 + $0x138] sm:$0xff]
  %v68 = vld [vmem:[%s0 + $0x140] sm:$0xf]
  %v69 = vld [vmem:[%s0 + $0x144] sm:$0xff]
  %v70 = vld [vmem:[%s0 + $0x14c] sm:$0xf]
  %v71 = vld [vmem:[%s0 + $0x150] sm:$0xff]
  %v72 = vld [vmem:[%s0 + $0x158] sm:$0xf]
  %v73 = vld [vmem:[%s0 + $0x15c] sm:$0xff]
  %v74 = vld [vmem:[%s0 + $0x164] sm:$0xf]
  %v75 = vld [vmem:[%s0 + $0x168] sm:$0xff]
  %v76 = vld [vmem:[%s0 + $0x170] sm:$0xf]
  %v77 = vld [vmem:[%s0 + $0x174] sm:$0xff]
  %v78 = vld [vmem:[%s0 + $0x17c] sm:$0xf]
  %v79 = vld [vmem:[%s0 + $0x180] sm:$0xff]
  %v80 = vld [vmem:[%s0 + $0x188] sm:$0xf]
  %v81 = vld [vmem:[%s0 + $0x18c] sm:$0xff]
  %v82 = vld [vmem:[%s0 + $0x194] sm:$0xf]
  %v83 = vld [vmem:[%s0 + $0x198] sm:$0xff]
  %v84 = vld [vmem:[%s0 + $0x1a0] sm:$0xf]
  %v85 = vld [vmem:[%s0 + $0x1a4] sm:$0xff]
  %v86 = vld [vmem:[%s0 + $0x1ac] sm:$0xf]
  %v87 = vld [vmem:[%s0 + $0x1b0] sm:$0xff]
  %v88 = vld [vmem:[%s0 + $0x1b8] sm:$0xf]
  %v89 = vld [vmem:[%s0 + $0x1bc] sm:$0xff]
  %v90 = vld [vmem:[%s0 + $0x1c4] sm:$0xf]
  %v91 = vld [vmem:[%s0 + $0x1c8] sm:$0xff]
  %v92 = vld [vmem:[%s0 + $0x1d0] sm:$0xf]
  %v93 = vld [vmem:[%s0 + $0x1d4] sm:$0xff]
  %v94 = vld [vmem:[%s0 + $0x1dc] sm:$0xf]
  %v95 = vld [vmem:[%s0 + $0x1e0] sm:$0xff]
  %v96 = vld [vmem:[%s0 + $0x1e8] sm:$0xf]
  %v97 = vld [vmem:[%s0 + $0x1ec] sm:$0xff]
  %v98 = vld [vmem:[%s0 + $0x1f4] sm:$0xf]
  %v99 = vld [vmem:[%s0 + $0x1f8] sm:$0xff]
  %v100 = vld [vmem:[%s0 + $0x200] sm:$0xf]
  %v101 = vld [vmem:[%s0 + $0x204] sm:$0xff]
  %v102 = vld [vmem:[%s0 + $0x20c] sm:$0xf]
  %v103 = vld [vmem:[%s0 + $0x210] sm:$0xff]
  %v104 = vld [vmem:[%s0 + $0x218] sm:$0xf]
  %v105 = vld [vmem:[%s0 + $0x21c] sm:$0xff]
  %v106 = vld [vmem:[%s0 + $0x224] sm:$0xf]
  %v107 = vld [vmem:[%s0 + $0x228] sm:$0xff]
  %v108 = vld [vmem:[%s0 + $0x230] sm:$0xf]
  %v109 = vld [vmem:[%s0 + $0x234] sm:$0xff]
  %v110 = vld [vmem:[%s0 + $0x23c] sm:$0xf]
  %v111 = vld [vmem:[%s0 + $0x240] sm:$0xff]
  %v112 = vld [vmem:[%s0 + $0x248] sm:$0xf]
  %v113 = vld [vmem:[%s0 + $0x24c] sm:$0xff]
  %v114 = vld [vmem:[%s0 + $0x254] sm:$0xf]
  %v115 = vld [vmem:[%s0 + $0x258] sm:$0xff]
  %v116 = vld [vmem:[%s0 + $0x260] sm:$0xf]
  %v117 = vld [vmem:[%s0 + $0x264] sm:$0xff]
  %v118 = vld [vmem:[%s0 + $0x26c] sm:$0xf]
  %v119 = vld [vmem:[%s0 + $0x270] sm:$0xff]
  %v120 = vld [vmem:[%s0 + $0x278] sm:$0xf]
  %v121 = vld [vmem:[%s0 + $0x27c] sm:$0xff]
  %v122 = vld [vmem:[%s0 + $0x284] sm:$0xf]
  %v123 = vld [vmem:[%s0 + $0x288] sm:$0xff]
  %v124 = vld [vmem:[%s0 + $0x290] sm:$0xf]
  %v125 = vld [vmem:[%s0 + $0x294] sm:$0xff]
  %v126 = vld [vmem:[%s0 + $0x29c] sm:$0xf]
  %v127 = vld [vmem:[%s0 + $0x2a0] sm:$0xff]
  %v128 = vld [vmem:[%s0 + $0x2a8] sm:$0xf]
  %v129 = vld [vmem:[%s0 + $0x2ac] sm:$0xff]
  %v130 = vld [vmem:[%s0 + $0x2b4] sm:$0xf]
  %v131 = vld [vmem:[%s0 + $0x2b8] sm:$0xff]
  %v132 = vld [vmem:[%s0 + $0x2c0] sm:$0xf]
  %v133 = vld [vmem:[%s0 + $0x2c4] sm:$0xff]
  %v134 = vld [vmem:[%s0 + $0x2cc] sm:$0xf]
  %v135 = vld [vmem:[%s0 + $0x2d0] sm:$0xff]
  %v136 = vld [vmem:[%s0 + $0x2d8] sm:$0xf]
  %v137 = vld [vmem:[%s0 + $0x2dc] sm:$0xff]
  %v138 = vld [vmem:[%s0 + $0x2e4] sm:$0xf]
  %v139 = vld [vmem:[%s0 + $0x2e8] sm:$0xff]
  %v140 = vld [vmem:[%s0 + $0x2f0] sm:$0xf]
  %v141 = vld [vmem:[%s0 + $0x2f4] sm:$0xff]
  %v142 = vld [vmem:[%s0 + $0x2fc] sm:$0xf]
  %v143 = vld [vmem:[%s0 + $0x300] sm:$0xff]
  %v144 = vld [vmem:[%s0 + $0x308] sm:$0xf]
  %v145 = vld [vmem:[%s0 + $0x30c] sm:$0xff]
  %v146 = vld [vmem:[%s0 + $0x314] sm:$0xf]
  %v147 = vld [vmem:[%s0 + $0x318] sm:$0xff]
  %v148 = vld [vmem:[%s0 + $0x320] sm:$0xf]
  %v149 = vld [vmem:[%s0 + $0x324] sm:$0xff]
  %v150 = vld [vmem:[%s0 + $0x32c] sm:$0xf]
  %v151 = vld [vmem:[%s0 + $0x330] sm:$0xff]
  %v152 = vld [vmem:[%s0 + $0x338] sm:$0xf]
  %v153 = vld [vmem:[%s0 + $0x33c] sm:$0xff]
  %v154 = vld [vmem:[%s0 + $0x344] sm:$0xf]
  %v155 = vld [vmem:[%s0 + $0x348] sm:$0xff]
  %v156 = vld [vmem:[%s0 + $0x350] sm:$0xf]
  %v157 = vld [vmem:[%s0 + $0x354] sm:$0xff]
  %v158 = vld [vmem:[%s0 + $0x35c] sm:$0xf]
  %v159 = vld [vmem:[%s0 + $0x360] sm:$0x11]
  %v160 = vld [vmem:[%s0 + $0x368] sm:$0x1]
  %v161 = vld [vmem:[%s1] sm:$0xff]
  %v162 = vld [vmem:[%s1 + $0x8] sm:$0xff]
  %v163 = vld [vmem:[%s1 + $0x10] sm:$0xff]
  %v164 = vld [vmem:[%s1 + $0x18] sm:$0xff]
  %v165 = vld [vmem:[%s1 + $0x20] sm:$0xff]
  %v166 = vld [vmem:[%s1 + $0x28] sm:$0xff]
  %v167 = vld [vmem:[%s1 + $0x30] sm:$0xff]
  %v168 = vld [vmem:[%s1 + $0x38] sm:$0xff]
  %v169 = vld [vmem:[%s1 + $0x40] sm:$0xff]
  %v170 = vld [vmem:[%s1 + $0x48] sm:$0xff]
  %v171 = vld [vmem:[%s1 + $0x50] sm:$0xff]
  %v172 = vld [vmem:[%s1 + $0x58] sm:$0xff]
  %v173 = vld [vmem:[%s1 + $0x60] sm:$0xff]
  %v174 = vld [vmem:[%s1 + $0x68] sm:$0xff]
  %v175 = vld [vmem:[%s1 + $0x70] sm:$0xff]
  %v176 = vld [vmem:[%s1 + $0x78] sm:$0xff]
  %v177 = vld [vmem:[%s1 + $0x80] sm:$0xff]
  %v178 = vld [vmem:[%s1 + $0x88] sm:$0xff]
  %v179 = vld [vmem:[%s1 + $0x90] sm:$0xff]
  %v180 = vld [vmem:[%s1 + $0x98] sm:$0xff]
  %v181 = vld [vmem:[%s1 + $0xa0] sm:$0xff]
  %v182 = vld [vmem:[%s1 + $0xa8] sm:$0xff]
  %v183 = vld [vmem:[%s1 + $0xb0] sm:$0xff]
  %v184 = vld [vmem:[%s1 + $0xb8] sm:$0xff]
  %v185 = vld [vmem:[%s1 + $0xc0] sm:$0xff]
  %v186 = vld [vmem:[%s1 + $0xc8] sm:$0xff]
  %v187 = vld [vmem:[%s1 + $0xd0] sm:$0xff]
  %v188 = vld [vmem:[%s1 + $0xd8] sm:$0xff]
  %v189 = vld [vmem:[%s1 + $0xe0] sm:$0xff]
  %v190 = vld [vmem:[%s1 + $0xe8] sm:$0xff]
  %v191 = vld [vmem:[%s1 + $0xf0] sm:$0xff]
  %v192 = vld [vmem:[%s1 + $0xf8] sm:$0xff]
  %v193 = vld [vmem:[%s1 + $0x100] sm:$0xff]
  %v194 = vld [vmem:[%s1 + $0x108] sm:$0xff]
  %v195 = vld [vmem:[%s1 + $0x110] sm:$0xff]
  %v196 = vld [vmem:[%s1 + $0x118] sm:$0xff]
  %v197 = vld [vmem:[%s2] sm:$0x3]
  %v199 = vlaneseq
  %v200 = vshrl.u32 %v199, 7
  %v201 = vsub.s32 0, %v200
  %v202 = vrot.slane %v197, %v201
  %v203 = vlaneseq
  %v204 = vshrl.u32 %v203, 7
  %v205 = vsub.s32 1, %v204
  %v206 = vrot.slane %v197, %v205
  %v355 = vunpack.c.l.b16 %v15
  %v356 = vunpack.c.h.b16 %v15
  %v357 = vunpack.c.l.b16 %v16
  %v358 = vunpack.c.l.b16 %v17
  %v359 = vunpack.c.h.b16 %v17
  %v360 = vunpack.c.l.b16 %v18
  %v361 = vunpack.c.l.b16 %v19
  %v362 = vunpack.c.h.b16 %v19
  %v363 = vunpack.c.l.b16 %v20
  %v364 = vunpack.c.l.b16 %v21
  %v365 = vunpack.c.h.b16 %v21
  %v366 = vunpack.c.l.b16 %v22
  %v367 = vunpack.c.l.b16 %v23
  %v368 = vunpack.c.h.b16 %v23
  %v369 = vunpack.c.l.b16 %v24
  %v370 = vunpack.c.l.b16 %v25
  %v371 = vunpack.c.h.b16 %v25
  %v372 = vunpack.c.l.b16 %v26
  %v373 = vunpack.c.l.b16 %v27
  %v374 = vunpack.c.h.b16 %v27
  %v375 = vunpack.c.l.b16 %v28
  %v376 = vunpack.c.l.b16 %v29
  %v377 = vunpack.c.h.b16 %v29
  %v378 = vunpack.c.l.b16 %v30
  %v379 = vunpack.c.l.b16 %v31
  %v380 = vunpack.c.h.b16 %v31
  %v381 = vunpack.c.l.b16 %v32
  %v382 = vunpack.c.l.b16 %v33
  %v383 = vunpack.c.h.b16 %v33
  %v384 = vunpack.c.l.b16 %v34
  %v385 = vunpack.c.l.b16 %v35
  %v386 = vunpack.c.h.b16 %v35
  %v387 = vunpack.c.l.b16 %v36
  %v388 = vunpack.c.l.b16 %v37
  %v389 = vunpack.c.h.b16 %v37
  %v390 = vunpack.c.l.b16 %v38
  %v391 = vunpack.c.l.b16 %v39
  %v392 = vunpack.c.h.b16 %v39
  %v393 = vunpack.c.l.b16 %v40
  %v394 = vunpack.c.l.b16 %v41
  %v395 = vunpack.c.h.b16 %v41
  %v396 = vunpack.c.l.b16 %v42
  %v397 = vunpack.c.l.b16 %v43
  %v398 = vunpack.c.h.b16 %v43
  %v399 = vunpack.c.l.b16 %v44
  %v400 = vunpack.c.l.b16 %v45
  %v401 = vunpack.c.h.b16 %v45
  %v402 = vunpack.c.l.b16 %v46
  %v403 = vunpack.c.l.b16 %v47
  %v404 = vunpack.c.h.b16 %v47
  %v405 = vunpack.c.l.b16 %v48
  %v406 = vunpack.c.l.b16 %v49
  %v407 = vunpack.c.h.b16 %v49
  %v408 = vunpack.c.l.b16 %v50
  %v409 = vunpack.c.l.b16 %v51
  %v410 = vunpack.c.h.b16 %v51
  %v411 = vunpack.c.l.b16 %v52
  %v412 = vunpack.c.l.b16 %v53
  %v413 = vunpack.c.h.b16 %v53
  %v414 = vunpack.c.l.b16 %v54
  %v415 = vunpack.c.l.b16 %v55
  %v416 = vunpack.c.h.b16 %v55
  %v417 = vunpack.c.l.b16 %v56
  %v418 = vunpack.c.l.b16 %v57
  %v419 = vunpack.c.h.b16 %v57
  %v420 = vunpack.c.l.b16 %v58
  %v421 = vunpack.c.l.b16 %v59
  %v422 = vunpack.c.h.b16 %v59
  %v423 = vunpack.c.l.b16 %v60
  %v424 = vunpack.c.l.b16 %v61
  %v425 = vunpack.c.h.b16 %v61
  %v426 = vunpack.c.l.b16 %v62
  %v427 = vunpack.c.l.b16 %v63
  %v428 = vunpack.c.h.b16 %v63
  %v429 = vunpack.c.l.b16 %v64
  %v430 = vunpack.c.l.b16 %v65
  %v431 = vunpack.c.h.b16 %v65
  %v432 = vunpack.c.l.b16 %v66
  %v433 = vunpack.c.l.b16 %v67
  %v434 = vunpack.c.h.b16 %v67
  %v435 = vunpack.c.l.b16 %v68
  %v436 = vunpack.c.l.b16 %v69
  %v437 = vunpack.c.h.b16 %v69
  %v438 = vunpack.c.l.b16 %v70
  %v439 = vunpack.c.l.b16 %v71
  %v440 = vunpack.c.h.b16 %v71
  %v441 = vunpack.c.l.b16 %v72
  %v442 = vunpack.c.l.b16 %v73
  %v443 = vunpack.c.h.b16 %v73
  %v444 = vunpack.c.l.b16 %v74
  %v445 = vunpack.c.l.b16 %v75
  %v446 = vunpack.c.h.b16 %v75
  %v447 = vunpack.c.l.b16 %v76
  %v448 = vunpack.c.l.b16 %v77
  %v449 = vunpack.c.h.b16 %v77
  %v450 = vunpack.c.l.b16 %v78
  %v451 = vunpack.c.l.b16 %v79
  %v452 = vunpack.c.h.b16 %v79
  %v453 = vunpack.c.l.b16 %v80
  %v454 = vunpack.c.l.b16 %v81
  %v455 = vunpack.c.h.b16 %v81
  %v456 = vunpack.c.l.b16 %v82
  %v457 = vunpack.c.l.b16 %v83
  %v458 = vunpack.c.h.b16 %v83
  %v459 = vunpack.c.l.b16 %v84
  %v460 = vunpack.c.l.b16 %v85
  %v461 = vunpack.c.h.b16 %v85
  %v462 = vunpack.c.l.b16 %v86
  %v463 = vunpack.c.l.b16 %v87
  %v464 = vunpack.c.h.b16 %v87
  %v465 = vunpack.c.l.b16 %v88
  %v466 = vunpack.c.l.b16 %v89
  %v467 = vunpack.c.h.b16 %v89
  %v468 = vunpack.c.l.b16 %v90
  %v469 = vunpack.c.l.b16 %v91
  %v470 = vunpack.c.h.b16 %v91
  %v471 = vunpack.c.l.b16 %v92
  %v472 = vunpack.c.l.b16 %v93
  %v473 = vunpack.c.h.b16 %v93
  %v474 = vunpack.c.l.b16 %v94
  %v475 = vunpack.c.l.b16 %v95
  %v476 = vunpack.c.h.b16 %v95
  %v477 = vunpack.c.l.b16 %v96
  %v478 = vunpack.c.l.b16 %v97
  %v479 = vunpack.c.h.b16 %v97
  %v480 = vunpack.c.l.b16 %v98
  %v481 = vunpack.c.l.b16 %v99
  %v482 = vunpack.c.h.b16 %v99
  %v483 = vunpack.c.l.b16 %v100
  %v484 = vunpack.c.l.b16 %v101
  %v485 = vunpack.c.h.b16 %v101
  %v486 = vunpack.c.l.b16 %v102
  %v487 = vunpack.c.l.b16 %v103
  %v488 = vunpack.c.h.b16 %v103
  %v489 = vunpack.c.l.b16 %v104
  %v490 = vunpack.c.l.b16 %v105
  %v491 = vunpack.c.h.b16 %v105
  %v492 = vunpack.c.l.b16 %v106
  %v493 = vunpack.c.l.b16 %v107
  %v494 = vunpack.c.h.b16 %v107
  %v495 = vunpack.c.l.b16 %v108
  %v496 = vunpack.c.l.b16 %v109
  %v497 = vunpack.c.h.b16 %v109
  %v498 = vunpack.c.l.b16 %v110
  %v499 = vunpack.c.l.b16 %v111
  %v500 = vunpack.c.h.b16 %v111
  %v501 = vunpack.c.l.b16 %v112
  %v502 = vunpack.c.l.b16 %v113
  %v503 = vunpack.c.h.b16 %v113
  %v504 = vunpack.c.l.b16 %v114
  %v505 = vunpack.c.l.b16 %v115
  %v506 = vunpack.c.h.b16 %v115
  %v507 = vunpack.c.l.b16 %v116
  %v508 = vunpack.c.l.b16 %v117
  %v509 = vunpack.c.h.b16 %v117
  %v510 = vunpack.c.l.b16 %v118
  %v511 = vunpack.c.l.b16 %v119
  %v512 = vunpack.c.h.b16 %v119
  %v513 = vunpack.c.l.b16 %v120
  %v514 = vunpack.c.l.b16 %v121
  %v515 = vunpack.c.h.b16 %v121
  %v516 = vunpack.c.l.b16 %v122
  %v517 = vunpack.c.l.b16 %v123
  %v518 = vunpack.c.h.b16 %v123
  %v519 = vunpack.c.l.b16 %v124
  %v520 = vunpack.c.l.b16 %v125
  %v521 = vunpack.c.h.b16 %v125
  %v522 = vunpack.c.l.b16 %v126
  %v523 = vunpack.c.l.b16 %v127
  %v524 = vunpack.c.h.b16 %v127
  %v525 = vunpack.c.l.b16 %v128
  %v526 = vunpack.c.l.b16 %v129
  %v527 = vunpack.c.h.b16 %v129
  %v528 = vunpack.c.l.b16 %v130
  %v529 = vunpack.c.l.b16 %v131
  %v530 = vunpack.c.h.b16 %v131
  %v531 = vunpack.c.l.b16 %v132
  %v532 = vunpack.c.l.b16 %v133
  %v533 = vunpack.c.h.b16 %v133
  %v534 = vunpack.c.l.b16 %v134
  %v535 = vunpack.c.l.b16 %v135
  %v536 = vunpack.c.h.b16 %v135
  %v537 = vunpack.c.l.b16 %v136
  %v538 = vunpack.c.l.b16 %v137
  %v539 = vunpack.c.h.b16 %v137
  %v540 = vunpack.c.l.b16 %v138
  %v541 = vunpack.c.l.b16 %v139
  %v542 = vunpack.c.h.b16 %v139
  %v543 = vunpack.c.l.b16 %v140
  %v544 = vunpack.c.l.b16 %v141
  %v545 = vunpack.c.h.b16 %v141
  %v546 = vunpack.c.l.b16 %v142
  %v547 = vunpack.c.l.b16 %v143
  %v548 = vunpack.c.h.b16 %v143
  %v549 = vunpack.c.l.b16 %v144
  %v550 = vunpack.c.l.b16 %v145
  %v551 = vunpack.c.h.b16 %v145
  %v552 = vunpack.c.l.b16 %v146
  %v553 = vunpack.c.l.b16 %v147
  %v554 = vunpack.c.h.b16 %v147
  %v555 = vunpack.c.l.b16 %v148
  %v556 = vunpack.c.l.b16 %v149
  %v557 = vunpack.c.h.b16 %v149
  %v558 = vunpack.c.l.b16 %v150
  %v559 = vunpack.c.l.b16 %v151
  %v560 = vunpack.c.h.b16 %v151
  %v561 = vunpack.c.l.b16 %v152
  %v562 = vunpack.c.l.b16 %v153
  %v563 = vunpack.c.h.b16 %v153
  %v564 = vunpack.c.l.b16 %v154
  %v565 = vunpack.c.l.b16 %v155
  %v566 = vunpack.c.h.b16 %v155
  %v567 = vunpack.c.l.b16 %v156
  %v568 = vunpack.c.l.b16 %v157
  %v569 = vunpack.c.h.b16 %v157
  %v570 = vunpack.c.l.b16 %v158
  %v571 = vunpack.c.l.b16 %v159
  %v572 = vunpack.c.h.b16 %v159
  %v573 = vunpack.c.l.b16 %v160
  %v574 = vpack.c.b16 %v358, %v355
  %v575 = vpack.c.b16 %v359, %v356
  %v576 = vpack.c.b16 %v360, %v357
  %v577 = vpack.c.b16 %v364, %v361
  %v578 = vpack.c.b16 %v365, %v362
  %v579 = vpack.c.b16 %v366, %v363
  %v580 = vpack.c.b16 %v370, %v367
  %v581 = vpack.c.b16 %v371, %v368
  %v582 = vpack.c.b16 %v372, %v369
  %v583 = vpack.c.b16 %v376, %v373
  %v584 = vpack.c.b16 %v377, %v374
  %v585 = vpack.c.b16 %v378, %v375
  %v586 = vpack.c.b16 %v382, %v379
  %v587 = vpack.c.b16 %v383, %v380
  %v588 = vpack.c.b16 %v384, %v381
  %v589 = vpack.c.b16 %v388, %v385
  %v590 = vpack.c.b16 %v389, %v386
  %v591 = vpack.c.b16 %v390, %v387
  %v592 = vpack.c.b16 %v394, %v391
  %v593 = vpack.c.b16 %v395, %v392
  %v594 = vpack.c.b16 %v396, %v393
  %v595 = vpack.c.b16 %v400, %v397
  %v596 = vpack.c.b16 %v401, %v398
  %v597 = vpack.c.b16 %v402, %v399
  %v598 = vpack.c.b16 %v406, %v403
  %v599 = vpack.c.b16 %v407, %v404
  %v600 = vpack.c.b16 %v408, %v405
  %v601 = vpack.c.b16 %v412, %v409
  %v602 = vpack.c.b16 %v413, %v410
  %v603 = vpack.c.b16 %v414, %v411
  %v604 = vpack.c.b16 %v418, %v415
  %v605 = vpack.c.b16 %v419, %v416
  %v606 = vpack.c.b16 %v420, %v417
  %v607 = vpack.c.b16 %v424, %v421
  %v608 = vpack.c.b16 %v425, %v422
  %v609 = vpack.c.b16 %v426, %v423
  %v610 = vpack.c.b16 %v430, %v427
  %v611 = vpack.c.b16 %v431, %v428
  %v612 = vpack.c.b16 %v432, %v429
  %v613 = vpack.c.b16 %v436, %v433
  %v614 = vpack.c.b16 %v437, %v434
  %v615 = vpack.c.b16 %v438, %v435
  %v616 = vpack.c.b16 %v442, %v439
  %v617 = vpack.c.b16 %v443, %v440
  %v618 = vpack.c.b16 %v444, %v441
  %v619 = vpack.c.b16 %v448, %v445
  %v620 = vpack.c.b16 %v449, %v446
  %v621 = vpack.c.b16 %v450, %v447
  %v622 = vpack.c.b16 %v454, %v451
  %v623 = vpack.c.b16 %v455, %v452
  %v624 = vpack.c.b16 %v456, %v453
  %v625 = vpack.c.b16 %v460, %v457
  %v626 = vpack.c.b16 %v461, %v458
  %v627 = vpack.c.b16 %v462, %v459
  %v628 = vpack.c.b16 %v466, %v463
  %v629 = vpack.c.b16 %v467, %v464
  %v630 = vpack.c.b16 %v468, %v465
  %v631 = vpack.c.b16 %v472, %v469
  %v632 = vpack.c.b16 %v473, %v470
  %v633 = vpack.c.b16 %v474, %v471
  %v634 = vpack.c.b16 %v478, %v475
  %v635 = vpack.c.b16 %v479, %v476
  %v636 = vpack.c.b16 %v480, %v477
  %v637 = vpack.c.b16 %v484, %v481
  %v638 = vpack.c.b16 %v485, %v482
  %v639 = vpack.c.b16 %v486, %v483
  %v640 = vpack.c.b16 %v490, %v487
  %v641 = vpack.c.b16 %v491, %v488
  %v642 = vpack.c.b16 %v492, %v489
  %v643 = vpack.c.b16 %v496, %v493
  %v644 = vpack.c.b16 %v497, %v494
  %v645 = vpack.c.b16 %v498, %v495
  %v646 = vpack.c.b16 %v502, %v499
  %v647 = vpack.c.b16 %v503, %v500
  %v648 = vpack.c.b16 %v504, %v501
  %v649 = vpack.c.b16 %v508, %v505
  %v650 = vpack.c.b16 %v509, %v506
  %v651 = vpack.c.b16 %v510, %v507
  %v652 = vpack.c.b16 %v514, %v511
  %v653 = vpack.c.b16 %v515, %v512
  %v654 = vpack.c.b16 %v516, %v513
  %v655 = vpack.c.b16 %v520, %v517
  %v656 = vpack.c.b16 %v521, %v518
  %v657 = vpack.c.b16 %v522, %v519
  %v658 = vpack.c.b16 %v526, %v523
  %v659 = vpack.c.b16 %v527, %v524
  %v660 = vpack.c.b16 %v528, %v525
  %v661 = vpack.c.b16 %v532, %v529
  %v662 = vpack.c.b16 %v533, %v530
  %v663 = vpack.c.b16 %v534, %v531
  %v664 = vpack.c.b16 %v538, %v535
  %v665 = vpack.c.b16 %v539, %v536
  %v666 = vpack.c.b16 %v540, %v537
  %v667 = vpack.c.b16 %v544, %v541
  %v668 = vpack.c.b16 %v545, %v542
  %v669 = vpack.c.b16 %v546, %v543
  %v670 = vpack.c.b16 %v550, %v547
  %v671 = vpack.c.b16 %v551, %v548
  %v672 = vpack.c.b16 %v552, %v549
  %v673 = vpack.c.b16 %v556, %v553
  %v674 = vpack.c.b16 %v557, %v554
  %v675 = vpack.c.b16 %v558, %v555
  %v676 = vpack.c.b16 %v562, %v559
  %v677 = vpack.c.b16 %v563, %v560
  %v678 = vpack.c.b16 %v564, %v561
  %v679 = vpack.c.b16 %v568, %v565
  %v680 = vpack.c.b16 %v569, %v566
  %v681 = vpack.c.b16 %v570, %v567
  %v682 = vpack.c.b16 %v571, %v571
  %v683 = vpack.c.b16 %v572, %v572
  %v684 = vpack.c.b16 %v573, %v573
  %v795 = vunpack.c.l.b16 %v161
  %v796 = vunpack.c.h.b16 %v161
  %v797 = vunpack.c.l.b16 %v162
  %v798 = vunpack.c.h.b16 %v162
  %v799 = vunpack.c.l.b16 %v163
  %v800 = vunpack.c.h.b16 %v163
  %v801 = vunpack.c.l.b16 %v164
  %v802 = vunpack.c.h.b16 %v164
  %v803 = vunpack.c.l.b16 %v165
  %v804 = vunpack.c.h.b16 %v165
  %v805 = vunpack.c.l.b16 %v166
  %v806 = vunpack.c.h.b16 %v166
  %v807 = vunpack.c.l.b16 %v167
  %v808 = vunpack.c.h.b16 %v167
  %v809 = vunpack.c.l.b16 %v168
  %v810 = vunpack.c.h.b16 %v168
  %v811 = vunpack.c.l.b16 %v169
  %v812 = vunpack.c.h.b16 %v169
  %v813 = vunpack.c.l.b16 %v170
  %v814 = vunpack.c.h.b16 %v170
  %v815 = vunpack.c.l.b16 %v171
  %v816 = vunpack.c.h.b16 %v171
  %v817 = vunpack.c.l.b16 %v172
  %v818 = vunpack.c.h.b16 %v172
  %v819 = vunpack.c.l.b16 %v173
  %v820 = vunpack.c.h.b16 %v173
  %v821 = vunpack.c.l.b16 %v174
  %v822 = vunpack.c.h.b16 %v174
  %v823 = vunpack.c.l.b16 %v175
  %v824 = vunpack.c.h.b16 %v175
  %v825 = vunpack.c.l.b16 %v176
  %v826 = vunpack.c.h.b16 %v176
  %v827 = vunpack.c.l.b16 %v177
  %v828 = vunpack.c.h.b16 %v177
  %v829 = vunpack.c.l.b16 %v178
  %v830 = vunpack.c.h.b16 %v178
  %v831 = vunpack.c.l.b16 %v179
  %v832 = vunpack.c.h.b16 %v179
  %v833 = vunpack.c.l.b16 %v180
  %v834 = vunpack.c.h.b16 %v180
  %v835 = vunpack.c.l.b16 %v181
  %v836 = vunpack.c.h.b16 %v181
  %v837 = vunpack.c.l.b16 %v182
  %v838 = vunpack.c.h.b16 %v182
  %v839 = vunpack.c.l.b16 %v183
  %v840 = vunpack.c.h.b16 %v183
  %v841 = vunpack.c.l.b16 %v184
  %v842 = vunpack.c.h.b16 %v184
  %v843 = vunpack.c.l.b16 %v185
  %v844 = vunpack.c.h.b16 %v185
  %v845 = vunpack.c.l.b16 %v186
  %v846 = vunpack.c.h.b16 %v186
  %v847 = vunpack.c.l.b16 %v187
  %v848 = vunpack.c.h.b16 %v187
  %v849 = vunpack.c.l.b16 %v188
  %v850 = vunpack.c.h.b16 %v188
  %v851 = vunpack.c.l.b16 %v189
  %v852 = vunpack.c.h.b16 %v189
  %v853 = vunpack.c.l.b16 %v190
  %v854 = vunpack.c.h.b16 %v190
  %v855 = vunpack.c.l.b16 %v191
  %v856 = vunpack.c.h.b16 %v191
  %v857 = vunpack.c.l.b16 %v192
  %v858 = vunpack.c.h.b16 %v192
  %v859 = vunpack.c.l.b16 %v193
  %v860 = vunpack.c.h.b16 %v193
  %v861 = vunpack.c.l.b16 %v194
  %v862 = vunpack.c.h.b16 %v194
  %v863 = vunpack.c.l.b16 %v195
  %v864 = vunpack.c.h.b16 %v195
  %v865 = vunpack.c.l.b16 %v196
  %v866 = vunpack.c.h.b16 %v196
  %v867 = vpack.c.b16 %v797, %v795
  %v868 = vpack.c.b16 %v798, %v796
  %v869 = vpack.c.b16 %v801, %v799
  %v870 = vpack.c.b16 %v802, %v800
  %v871 = vpack.c.b16 %v805, %v803
  %v872 = vpack.c.b16 %v806, %v804
  %v873 = vpack.c.b16 %v809, %v807
  %v874 = vpack.c.b16 %v810, %v808
  %v875 = vpack.c.b16 %v813, %v811
  %v876 = vpack.c.b16 %v814, %v812
  %v877 = vpack.c.b16 %v817, %v815
  %v878 = vpack.c.b16 %v818, %v816
  %v879 = vpack.c.b16 %v821, %v819
  %v880 = vpack.c.b16 %v822, %v820
  %v881 = vpack.c.b16 %v825, %v823
  %v882 = vpack.c.b16 %v826, %v824
  %v883 = vpack.c.b16 %v829, %v827
  %v884 = vpack.c.b16 %v830, %v828
  %v885 = vpack.c.b16 %v833, %v831
  %v886 = vpack.c.b16 %v834, %v832
  %v887 = vpack.c.b16 %v837, %v835
  %v888 = vpack.c.b16 %v838, %v836
  %v889 = vpack.c.b16 %v841, %v839
  %v890 = vpack.c.b16 %v842, %v840
  %v891 = vpack.c.b16 %v845, %v843
  %v892 = vpack.c.b16 %v846, %v844
  %v893 = vpack.c.b16 %v849, %v847
  %v894 = vpack.c.b16 %v850, %v848
  %v895 = vpack.c.b16 %v853, %v851
  %v896 = vpack.c.b16 %v854, %v852
  %v897 = vpack.c.b16 %v857, %v855
  %v898 = vpack.c.b16 %v858, %v856
  %v899 = vpack.c.b16 %v861, %v859
  %v900 = vpack.c.b16 %v862, %v860
  %v901 = vpack.c.b16 %v865, %v863
  %v902 = vpack.c.b16 %v866, %v864
  %vm939 = vcmask 261120
  %v941 = vsel %vm939, %v576, 0
  %v944 = vsel %vm939, %v579, 0
  %v947 = vsel %vm939, %v582, 0
  %v950 = vsel %vm939, %v585, 0
  %v953 = vsel %vm939, %v588, 0
  %v956 = vsel %vm939, %v591, 0
  %v959 = vsel %vm939, %v594, 0
  %v962 = vsel %vm939, %v597, 0
  %v965 = vsel %vm939, %v600, 0
  %v968 = vsel %vm939, %v603, 0
  %v971 = vsel %vm939, %v606, 0
  %v974 = vsel %vm939, %v609, 0
  %v977 = vsel %vm939, %v612, 0
  %v980 = vsel %vm939, %v615, 0
  %v983 = vsel %vm939, %v618, 0
  %v986 = vsel %vm939, %v621, 0
  %v989 = vsel %vm939, %v624, 0
  %v992 = vsel %vm939, %v627, 0
  %v995 = vsel %vm939, %v630, 0
  %v998 = vsel %vm939, %v633, 0
  %v1001 = vsel %vm939, %v636, 0
  %v1004 = vsel %vm939, %v639, 0
  %v1007 = vsel %vm939, %v642, 0
  %v1010 = vsel %vm939, %v645, 0
  %v1013 = vsel %vm939, %v648, 0
  %v1016 = vsel %vm939, %v651, 0
  %v1019 = vsel %vm939, %v654, 0
  %v1022 = vsel %vm939, %v657, 0
  %v1025 = vsel %vm939, %v660, 0
  %v1028 = vsel %vm939, %v663, 0
  %v1031 = vsel %vm939, %v666, 0
  %v1034 = vsel %vm939, %v669, 0
  %v1037 = vsel %vm939, %v672, 0
  %v1040 = vsel %vm939, %v675, 0
  %v1043 = vsel %vm939, %v678, 0
  %v1046 = vsel %vm939, %v681, 0
  %v1049 = vsel %vm939, %v684, 0
  %1051 = vmatprep.subr.bf16.mxu0 %v882
  %1052 = vmatpush1.bf16.msra.mxu0 %v881
  %1053 = vmatprep.subr.bf16.mxu0 %v880
  %1054 = vmatpush1.bf16.msra.mxu0 %v879
  %1055 = vmatprep.subr.bf16.mxu0 %v878
  %1056 = vmatpush1.bf16.msra.mxu0 %v877
  %1057 = vmatprep.subr.bf16.mxu0 %v876
  %1058 = vmatpush1.bf16.msra.mxu0 %v875
  %1059 = vmatprep.subr.bf16.mxu0 %v874
  %1060 = vmatpush1.bf16.msra.mxu0 %v873
  %1061 = vmatprep.subr.bf16.mxu0 %v872
  %1062 = vmatpush1.bf16.msra.mxu0 %v871
  %1063 = vmatprep.subr.bf16.mxu0 %v870
  %1064 = vmatpush1.bf16.msra.mxu0 %v869
  %1065 = vmatprep.subr.bf16.mxu0 %v868
  %1066 = vmatpush1.bf16.msra.mxu0 %v867
  %1067 = vmatprep.subr.bf16.mxu0 %v898
  %1068 = vmatpush2.bf16.msra.mxu0 %v897
  %1069 = vmatprep.subr.bf16.mxu0 %v896
  %1070 = vmatpush2.bf16.msra.mxu0 %v895
  %1071 = vmatprep.subr.bf16.mxu0 %v894
  %1072 = vmatpush2.bf16.msra.mxu0 %v893
  %1073 = vmatprep.subr.bf16.mxu0 %v892
  %1074 = vmatpush2.bf16.msra.mxu0 %v891
  %1075 = vmatprep.subr.bf16.mxu0 %v890
  %1076 = vmatpush2.bf16.msra.mxu0 %v889
  %1077 = vmatprep.subr.bf16.mxu0 %v888
  %1078 = vmatpush2.bf16.msra.mxu0 %v887
  %1079 = vmatprep.subr.bf16.mxu0 %v886
  %1080 = vmatpush2.bf16.msra.mxu0 %v885
  %1081 = vmatprep.subr.bf16.mxu0 %v884
  %1082 = vmatpush2.bf16.msra.mxu0 %v883
  %1083 = vmatprep.mubr.bf16.mxu0 %v575
  %1084 = vmatmul.mubr.bf16.gmra.mxu0 %v574
  %v1085 = vpop.f32.mrf.mxu0
  %v1086 = vadd.f32 %v202, %v1085
  %v1087 = vpop.f32.mrf.mxu0
  %v1088 = vadd.f32 %v206, %v1087
  %v1089 = vpop.f32.mrf.mxu0
  %v1090 = vadd.f32 %v202, %v1089
  %v1091 = vpop.f32.mrf.mxu0
  %v1092 = vadd.f32 %v206, %v1091
  %1093 = vmatprep.mubr.bf16.mxu0 %v578
  %1094 = vmatmul.mubr.bf16.gmra.mxu0 %v577
  %v1095 = vpop.f32.mrf.mxu0
  %v1096 = vadd.f32 %v202, %v1095
  %v1097 = vpop.f32.mrf.mxu0
  %v1098 = vadd.f32 %v206, %v1097
  %v1099 = vpop.f32.mrf.mxu0
  %v1100 = vadd.f32 %v202, %v1099
  %v1101 = vpop.f32.mrf.mxu0
  %v1102 = vadd.f32 %v206, %v1101
  %1103 = vmatprep.mubr.bf16.mxu0 %v581
  %1104 = vmatmul.mubr.bf16.gmra.mxu0 %v580
  %v1105 = vpop.f32.mrf.mxu0
  %v1106 = vadd.f32 %v202, %v1105
  %v1107 = vpop.f32.mrf.mxu0
  %v1108 = vadd.f32 %v206, %v1107
  %v1109 = vpop.f32.mrf.mxu0
  %v1110 = vadd.f32 %v202, %v1109
  %v1111 = vpop.f32.mrf.mxu0
  %v1112 = vadd.f32 %v206, %v1111
  %1113 = vmatprep.mubr.bf16.mxu0 %v584
  %1114 = vmatmul.mubr.bf16.gmra.mxu0 %v583
  %v1115 = vpop.f32.mrf.mxu0
  %v1116 = vadd.f32 %v202, %v1115
  %v1117 = vpop.f32.mrf.mxu0
  %v1118 = vadd.f32 %v206, %v1117
  %v1119 = vpop.f32.mrf.mxu0
  %v1120 = vadd.f32 %v202, %v1119
  %v1121 = vpop.f32.mrf.mxu0
  %v1122 = vadd.f32 %v206, %v1121
  %1123 = vmatprep.mubr.bf16.mxu0 %v587
  %1124 = vmatmul.mubr.bf16.gmra.mxu0 %v586
  %v1125 = vpop.f32.mrf.mxu0
  %v1126 = vadd.f32 %v202, %v1125
  %v1127 = vpop.f32.mrf.mxu0
  %v1128 = vadd.f32 %v206, %v1127
  %v1129 = vpop.f32.mrf.mxu0
  %v1130 = vadd.f32 %v202, %v1129
  %v1131 = vpop.f32.mrf.mxu0
  %v1132 = vadd.f32 %v206, %v1131
  %1133 = vmatprep.mubr.bf16.mxu0 %v590
  %1134 = vmatmul.mubr.bf16.gmra.mxu0 %v589
  %v1135 = vpop.f32.mrf.mxu0
  %v1136 = vadd.f32 %v202, %v1135
  %v1137 = vpop.f32.mrf.mxu0
  %v1138 = vadd.f32 %v206, %v1137
  %v1139 = vpop.f32.mrf.mxu0
  %v1140 = vadd.f32 %v202, %v1139
  %v1141 = vpop.f32.mrf.mxu0
  %v1142 = vadd.f32 %v206, %v1141
  %1143 = vmatprep.mubr.bf16.mxu0 %v593
  %1144 = vmatmul.mubr.bf16.gmra.mxu0 %v592
  %v1145 = vpop.f32.mrf.mxu0
  %v1146 = vadd.f32 %v202, %v1145
  %v1147 = vpop.f32.mrf.mxu0
  %v1148 = vadd.f32 %v206, %v1147
  %v1149 = vpop.f32.mrf.mxu0
  %v1150 = vadd.f32 %v202, %v1149
  %v1151 = vpop.f32.mrf.mxu0
  %v1152 = vadd.f32 %v206, %v1151
  %1153 = vmatprep.mubr.bf16.mxu0 %v596
  %1154 = vmatmul.mubr.bf16.gmra.mxu0 %v595
  %v1155 = vpop.f32.mrf.mxu0
  %v1156 = vadd.f32 %v202, %v1155
  %v1157 = vpop.f32.mrf.mxu0
  %v1158 = vadd.f32 %v206, %v1157
  %v1159 = vpop.f32.mrf.mxu0
  %v1160 = vadd.f32 %v202, %v1159
  %v1161 = vpop.f32.mrf.mxu0
  %v1162 = vadd.f32 %v206, %v1161
  %1163 = vmatprep.mubr.bf16.mxu0 %v599
  %1164 = vmatmul.mubr.bf16.gmra.mxu0 %v598
  %v1165 = vpop.f32.mrf.mxu0
  %v1166 = vadd.f32 %v202, %v1165
  %v1167 = vpop.f32.mrf.mxu0
  %v1168 = vadd.f32 %v206, %v1167
  %v1169 = vpop.f32.mrf.mxu0
  %v1170 = vadd.f32 %v202, %v1169
  %v1171 = vpop.f32.mrf.mxu0
  %v1172 = vadd.f32 %v206, %v1171
  %1173 = vmatprep.mubr.bf16.mxu0 %v602
  %1174 = vmatmul.mubr.bf16.gmra.mxu0 %v601
  %v1175 = vpop.f32.mrf.mxu0
  %v1176 = vadd.f32 %v202, %v1175
  %v1177 = vpop.f32.mrf.mxu0
  %v1178 = vadd.f32 %v206, %v1177
  %v1179 = vpop.f32.mrf.mxu0
  %v1180 = vadd.f32 %v202, %v1179
  %v1181 = vpop.f32.mrf.mxu0
  %v1182 = vadd.f32 %v206, %v1181
  %1183 = vmatprep.mubr.bf16.mxu0 %v605
  %1184 = vmatmul.mubr.bf16.gmra.mxu0 %v604
  %v1185 = vpop.f32.mrf.mxu0
  %v1186 = vadd.f32 %v202, %v1185
  %v1187 = vpop.f32.mrf.mxu0
  %v1188 = vadd.f32 %v206, %v1187
  %v1189 = vpop.f32.mrf.mxu0
  %v1190 = vadd.f32 %v202, %v1189
  %v1191 = vpop.f32.mrf.mxu0
  %v1192 = vadd.f32 %v206, %v1191
  %1193 = vmatprep.mubr.bf16.mxu0 %v608
  %1194 = vmatmul.mubr.bf16.gmra.mxu0 %v607
  %v1195 = vpop.f32.mrf.mxu0
  %v1196 = vadd.f32 %v202, %v1195
  %v1197 = vpop.f32.mrf.mxu0
  %v1198 = vadd.f32 %v206, %v1197
  %v1199 = vpop.f32.mrf.mxu0
  %v1200 = vadd.f32 %v202, %v1199
  %v1201 = vpop.f32.mrf.mxu0
  %v1202 = vadd.f32 %v206, %v1201
  %1203 = vmatprep.mubr.bf16.mxu0 %v611
  %1204 = vmatmul.mubr.bf16.gmra.mxu0 %v610
  %v1205 = vpop.f32.mrf.mxu0
  %v1206 = vadd.f32 %v202, %v1205
  %v1207 = vpop.f32.mrf.mxu0
  %v1208 = vadd.f32 %v206, %v1207
  %v1209 = vpop.f32.mrf.mxu0
  %v1210 = vadd.f32 %v202, %v1209
  %v1211 = vpop.f32.mrf.mxu0
  %v1212 = vadd.f32 %v206, %v1211
  %1213 = vmatprep.mubr.bf16.mxu0 %v614
  %1214 = vmatmul.mubr.bf16.gmra.mxu0 %v613
  %v1215 = vpop.f32.mrf.mxu0
  %v1216 = vadd.f32 %v202, %v1215
  %v1217 = vpop.f32.mrf.mxu0
  %v1218 = vadd.f32 %v206, %v1217
  %v1219 = vpop.f32.mrf.mxu0
  %v1220 = vadd.f32 %v202, %v1219
  %v1221 = vpop.f32.mrf.mxu0
  %v1222 = vadd.f32 %v206, %v1221
  %1223 = vmatprep.mubr.bf16.mxu0 %v617
  %1224 = vmatmul.mubr.bf16.gmra.mxu0 %v616
  %v1225 = vpop.f32.mrf.mxu0
  %v1226 = vadd.f32 %v202, %v1225
  %v1227 = vpop.f32.mrf.mxu0
  %v1228 = vadd.f32 %v206, %v1227
  %v1229 = vpop.f32.mrf.mxu0
  %v1230 = vadd.f32 %v202, %v1229
  %v1231 = vpop.f32.mrf.mxu0
  %v1232 = vadd.f32 %v206, %v1231
  %1233 = vmatprep.mubr.bf16.mxu0 %v620
  %1234 = vmatmul.mubr.bf16.gmra.mxu0 %v619
  %v1235 = vpop.f32.mrf.mxu0
  %v1236 = vadd.f32 %v202, %v1235
  %v1237 = vpop.f32.mrf.mxu0
  %v1238 = vadd.f32 %v206, %v1237
  %v1239 = vpop.f32.mrf.mxu0
  %v1240 = vadd.f32 %v202, %v1239
  %v1241 = vpop.f32.mrf.mxu0
  %v1242 = vadd.f32 %v206, %v1241
  %1243 = vmatprep.mubr.bf16.mxu0 %v623
  %1244 = vmatmul.mubr.bf16.gmra.mxu0 %v622
  %v1245 = vpop.f32.mrf.mxu0
  %v1246 = vadd.f32 %v202, %v1245
  %v1247 = vpop.f32.mrf.mxu0
  %v1248 = vadd.f32 %v206, %v1247
  %v1249 = vpop.f32.mrf.mxu0
  %v1250 = vadd.f32 %v202, %v1249
  %v1251 = vpop.f32.mrf.mxu0
  %v1252 = vadd.f32 %v206, %v1251
  %1253 = vmatprep.mubr.bf16.mxu0 %v626
  %1254 = vmatmul.mubr.bf16.gmra.mxu0 %v625
  %v1255 = vpop.f32.mrf.mxu0
  %v1256 = vadd.f32 %v202, %v1255
  %v1257 = vpop.f32.mrf.mxu0
  %v1258 = vadd.f32 %v206, %v1257
  %v1259 = vpop.f32.mrf.mxu0
  %v1260 = vadd.f32 %v202, %v1259
  %v1261 = vpop.f32.mrf.mxu0
  %v1262 = vadd.f32 %v206, %v1261
  %1263 = vmatprep.mubr.bf16.mxu0 %v629
  %1264 = vmatmul.mubr.bf16.gmra.mxu0 %v628
  %v1265 = vpop.f32.mrf.mxu0
  %v1266 = vadd.f32 %v202, %v1265
  %v1267 = vpop.f32.mrf.mxu0
  %v1268 = vadd.f32 %v206, %v1267
  %v1269 = vpop.f32.mrf.mxu0
  %v1270 = vadd.f32 %v202, %v1269
  %v1271 = vpop.f32.mrf.mxu0
  %v1272 = vadd.f32 %v206, %v1271
  %1273 = vmatprep.mubr.bf16.mxu0 %v632
  %1274 = vmatmul.mubr.bf16.gmra.mxu0 %v631
  %v1275 = vpop.f32.mrf.mxu0
  %v1276 = vadd.f32 %v202, %v1275
  %v1277 = vpop.f32.mrf.mxu0
  %v1278 = vadd.f32 %v206, %v1277
  %v1279 = vpop.f32.mrf.mxu0
  %v1280 = vadd.f32 %v202, %v1279
  %v1281 = vpop.f32.mrf.mxu0
  %v1282 = vadd.f32 %v206, %v1281
  %1283 = vmatprep.mubr.bf16.mxu0 %v635
  %1284 = vmatmul.mubr.bf16.gmra.mxu0 %v634
  %v1285 = vpop.f32.mrf.mxu0
  %v1286 = vadd.f32 %v202, %v1285
  %v1287 = vpop.f32.mrf.mxu0
  %v1288 = vadd.f32 %v206, %v1287
  %v1289 = vpop.f32.mrf.mxu0
  %v1290 = vadd.f32 %v202, %v1289
  %v1291 = vpop.f32.mrf.mxu0
  %v1292 = vadd.f32 %v206, %v1291
  %1293 = vmatprep.mubr.bf16.mxu0 %v638
  %1294 = vmatmul.mubr.bf16.gmra.mxu0 %v637
  %v1295 = vpop.f32.mrf.mxu0
  %v1296 = vadd.f32 %v202, %v1295
  %v1297 = vpop.f32.mrf.mxu0
  %v1298 = vadd.f32 %v206, %v1297
  %v1299 = vpop.f32.mrf.mxu0
  %v1300 = vadd.f32 %v202, %v1299
  %v1301 = vpop.f32.mrf.mxu0
  %v1302 = vadd.f32 %v206, %v1301
  %1303 = vmatprep.mubr.bf16.mxu0 %v641
  %1304 = vmatmul.mubr.bf16.gmra.mxu0 %v640
  %v1305 = vpop.f32.mrf.mxu0
  %v1306 = vadd.f32 %v202, %v1305
  %v1307 = vpop.f32.mrf.mxu0
  %v1308 = vadd.f32 %v206, %v1307
  %v1309 = vpop.f32.mrf.mxu0
  %v1310 = vadd.f32 %v202, %v1309
  %v1311 = vpop.f32.mrf.mxu0
  %v1312 = vadd.f32 %v206, %v1311
  %1313 = vmatprep.mubr.bf16.mxu0 %v644
  %1314 = vmatmul.mubr.bf16.gmra.mxu0 %v643
  %v1315 = vpop.f32.mrf.mxu0
  %v1316 = vadd.f32 %v202, %v1315
  %v1317 = vpop.f32.mrf.mxu0
  %v1318 = vadd.f32 %v206, %v1317
  %v1319 = vpop.f32.mrf.mxu0
  %v1320 = vadd.f32 %v202, %v1319
  %v1321 = vpop.f32.mrf.mxu0
  %v1322 = vadd.f32 %v206, %v1321
  %1323 = vmatprep.mubr.bf16.mxu0 %v647
  %1324 = vmatmul.mubr.bf16.gmra.mxu0 %v646
  %v1325 = vpop.f32.mrf.mxu0
  %v1326 = vadd.f32 %v202, %v1325
  %v1327 = vpop.f32.mrf.mxu0
  %v1328 = vadd.f32 %v206, %v1327
  %v1329 = vpop.f32.mrf.mxu0
  %v1330 = vadd.f32 %v202, %v1329
  %v1331 = vpop.f32.mrf.mxu0
  %v1332 = vadd.f32 %v206, %v1331
  %1333 = vmatprep.mubr.bf16.mxu0 %v650
  %1334 = vmatmul.mubr.bf16.gmra.mxu0 %v649
  %v1335 = vpop.f32.mrf.mxu0
  %v1336 = vadd.f32 %v202, %v1335
  %v1337 = vpop.f32.mrf.mxu0
  %v1338 = vadd.f32 %v206, %v1337
  %v1339 = vpop.f32.mrf.mxu0
  %v1340 = vadd.f32 %v202, %v1339
  %v1341 = vpop.f32.mrf.mxu0
  %v1342 = vadd.f32 %v206, %v1341
  %1343 = vmatprep.mubr.bf16.mxu0 %v653
  %1344 = vmatmul.mubr.bf16.gmra.mxu0 %v652
  %v1345 = vpop.f32.mrf.mxu0
  %v1346 = vadd.f32 %v202, %v1345
  %v1347 = vpop.f32.mrf.mxu0
  %v1348 = vadd.f32 %v206, %v1347
  %v1349 = vpop.f32.mrf.mxu0
  %v1350 = vadd.f32 %v202, %v1349
  %v1351 = vpop.f32.mrf.mxu0
  %v1352 = vadd.f32 %v206, %v1351
  %1353 = vmatprep.mubr.bf16.mxu0 %v656
  %1354 = vmatmul.mubr.bf16.gmra.mxu0 %v655
  %v1355 = vpop.f32.mrf.mxu0
  %v1356 = vadd.f32 %v202, %v1355
  %v1357 = vpop.f32.mrf.mxu0
  %v1358 = vadd.f32 %v206, %v1357
  %v1359 = vpop.f32.mrf.mxu0
  %v1360 = vadd.f32 %v202, %v1359
  %v1361 = vpop.f32.mrf.mxu0
  %v1362 = vadd.f32 %v206, %v1361
  %1363 = vmatprep.mubr.bf16.mxu0 %v659
  %1364 = vmatmul.mubr.bf16.gmra.mxu0 %v658
  %v1365 = vpop.f32.mrf.mxu0
  %v1366 = vadd.f32 %v202, %v1365
  %v1367 = vpop.f32.mrf.mxu0
  %v1368 = vadd.f32 %v206, %v1367
  %v1369 = vpop.f32.mrf.mxu0
  %v1370 = vadd.f32 %v202, %v1369
  %v1371 = vpop.f32.mrf.mxu0
  %v1372 = vadd.f32 %v206, %v1371
  %1373 = vmatprep.mubr.bf16.mxu0 %v662
  %1374 = vmatmul.mubr.bf16.gmra.mxu0 %v661
  %v1375 = vpop.f32.mrf.mxu0
  %v1376 = vadd.f32 %v202, %v1375
  %v1377 = vpop.f32.mrf.mxu0
  %v1378 = vadd.f32 %v206, %v1377
  %v1379 = vpop.f32.mrf.mxu0
  %v1380 = vadd.f32 %v202, %v1379
  %v1381 = vpop.f32.mrf.mxu0
  %v1382 = vadd.f32 %v206, %v1381
  %1383 = vmatprep.mubr.bf16.mxu0 %v665
  %1384 = vmatmul.mubr.bf16.gmra.mxu0 %v664
  %v1385 = vpop.f32.mrf.mxu0
  %v1386 = vadd.f32 %v202, %v1385
  %v1387 = vpop.f32.mrf.mxu0
  %v1388 = vadd.f32 %v206, %v1387
  %v1389 = vpop.f32.mrf.mxu0
  %v1390 = vadd.f32 %v202, %v1389
  %v1391 = vpop.f32.mrf.mxu0
  %v1392 = vadd.f32 %v206, %v1391
  %1393 = vmatprep.mubr.bf16.mxu0 %v668
  %1394 = vmatmul.mubr.bf16.gmra.mxu0 %v667
  %v1395 = vpop.f32.mrf.mxu0
  %v1396 = vadd.f32 %v202, %v1395
  %v1397 = vpop.f32.mrf.mxu0
  %v1398 = vadd.f32 %v206, %v1397
  %v1399 = vpop.f32.mrf.mxu0
  %v1400 = vadd.f32 %v202, %v1399
  %v1401 = vpop.f32.mrf.mxu0
  %v1402 = vadd.f32 %v206, %v1401
  %1403 = vmatprep.mubr.bf16.mxu0 %v671
  %1404 = vmatmul.mubr.bf16.gmra.mxu0 %v670
  %v1405 = vpop.f32.mrf.mxu0
  %v1406 = vadd.f32 %v202, %v1405
  %v1407 = vpop.f32.mrf.mxu0
  %v1408 = vadd.f32 %v206, %v1407
  %v1409 = vpop.f32.mrf.mxu0
  %v1410 = vadd.f32 %v202, %v1409
  %v1411 = vpop.f32.mrf.mxu0
  %v1412 = vadd.f32 %v206, %v1411
  %1413 = vmatprep.mubr.bf16.mxu0 %v674
  %1414 = vmatmul.mubr.bf16.gmra.mxu0 %v673
  %v1415 = vpop.f32.mrf.mxu0
  %v1416 = vadd.f32 %v202, %v1415
  %v1417 = vpop.f32.mrf.mxu0
  %v1418 = vadd.f32 %v206, %v1417
  %v1419 = vpop.f32.mrf.mxu0
  %v1420 = vadd.f32 %v202, %v1419
  %v1421 = vpop.f32.mrf.mxu0
  %v1422 = vadd.f32 %v206, %v1421
  %1423 = vmatprep.mubr.bf16.mxu0 %v677
  %1424 = vmatmul.mubr.bf16.gmra.mxu0 %v676
  %v1425 = vpop.f32.mrf.mxu0
  %v1426 = vadd.f32 %v202, %v1425
  %v1427 = vpop.f32.mrf.mxu0
  %v1428 = vadd.f32 %v206, %v1427
  %v1429 = vpop.f32.mrf.mxu0
  %v1430 = vadd.f32 %v202, %v1429
  %v1431 = vpop.f32.mrf.mxu0
  %v1432 = vadd.f32 %v206, %v1431
  %1433 = vmatprep.mubr.bf16.mxu0 %v680
  %1434 = vmatmul.mubr.bf16.gmra.mxu0 %v679
  %v1435 = vpop.f32.mrf.mxu0
  %v1436 = vadd.f32 %v202, %v1435
  %v1437 = vpop.f32.mrf.mxu0
  %v1438 = vadd.f32 %v206, %v1437
  %v1439 = vpop.f32.mrf.mxu0
  %v1440 = vadd.f32 %v202, %v1439
  %v1441 = vpop.f32.mrf.mxu0
  %v1442 = vadd.f32 %v206, %v1441
  %1443 = vmatprep.mubr.bf16.mxu0 %v683
  %1444 = vmatmul.mubr.bf16.gmra.mxu0 %v682
  %v1445 = vpop.f32.mrf.mxu0
  %v1446 = vadd.f32 %v202, %v1445
  %v1447 = vpop.f32.mrf.mxu0
  %v1448 = vadd.f32 %v206, %v1447
  %v1449 = vpop.f32.mrf.mxu0
  %v1450 = vpop.f32.mrf.mxu0
  %1451 = vdwg.mxu0
  %1452 = vmatprep.subr.bf16.mxu0 0
  %1453 = vmatpush1.bf16.msra.mxu0 0
  %1454 = vmatprep.subr.bf16.mxu0 0
  %1455 = vmatpush1.bf16.msra.mxu0 0
  %1456 = vmatprep.subr.bf16.mxu0 0
  %1457 = vmatpush1.bf16.msra.mxu0 0
  %1458 = vmatprep.subr.bf16.mxu0 0
  %1459 = vmatpush1.bf16.msra.mxu0 0
  %1460 = vmatprep.subr.bf16.mxu0 0
  %1461 = vmatpush1.bf16.msra.mxu0 0
  %1462 = vmatprep.subr.bf16.mxu0 0
  %1463 = vmatpush1.bf16.msra.mxu0 0
  %1464 = vmatprep.subr.bf16.mxu0 %v902
  %1465 = vmatpush1.bf16.msra.mxu0 %v901
  %1466 = vmatprep.subr.bf16.mxu0 %v900
  %1467 = vmatpush1.bf16.msra.mxu0 %v899
  %1468 = vmatprep.subr.bf16.mxu0 0
  %1469 = vmatpush2.bf16.msra.mxu0 0
  %1470 = vmatprep.subr.bf16.mxu0 0
  %1471 = vmatpush2.bf16.msra.mxu0 0
  %1472 = vmatprep.subr.bf16.mxu0 0
  %1473 = vmatpush2.bf16.msra.mxu0 0
  %1474 = vmatprep.subr.bf16.mxu0 0
  %1475 = vmatpush2.bf16.msra.mxu0 0
  %1476 = vmatprep.subr.bf16.mxu0 0
  %1477 = vmatpush2.bf16.msra.mxu0 0
  %1478 = vmatprep.subr.bf16.mxu0 0
  %1479 = vmatpush2.bf16.msra.mxu0 0
  %1480 = vmatprep.subr.bf16.mxu0 0
  %1481 = vmatpush2.bf16.msra.mxu0 0
  %1482 = vmatprep.subr.bf16.mxu0 0
  %1483 = vmatpush2.bf16.msra.mxu0 0
  %1484 = vmatprep.mubr.bf16.mxu0 0
  %1485 = vmatmul.mubr.bf16.gmra.mxu0 %v941
  %v1486 = vpop.f32.mrf.mxu0
  %v1487 = vadd.f32 %v1086, %v1486
  %v1488 = vpop.f32.mrf.mxu0
  %v1489 = vadd.f32 %v1088, %v1488
  %v1490 = vpop.f32.mrf.mxu0
  %v1491 = vadd.f32 %v1090, %v1490
  %v1492 = vpop.f32.mrf.mxu0
  %v1493 = vadd.f32 %v1092, %v1492
  %1494 = vmatprep.mubr.bf16.mxu0 0
  %1495 = vmatmul.mubr.bf16.gmra.mxu0 %v944
  %v1496 = vpop.f32.mrf.mxu0
  %v1497 = vadd.f32 %v1096, %v1496
  %v1498 = vpop.f32.mrf.mxu0
  %v1499 = vadd.f32 %v1098, %v1498
  %v1500 = vpop.f32.mrf.mxu0
  %v1501 = vadd.f32 %v1100, %v1500
  %v1502 = vpop.f32.mrf.mxu0
  %v1503 = vadd.f32 %v1102, %v1502
  %1504 = vmatprep.mubr.bf16.mxu0 0
  %1505 = vmatmul.mubr.bf16.gmra.mxu0 %v947
  %v1506 = vpop.f32.mrf.mxu0
  %v1507 = vadd.f32 %v1106, %v1506
  %v1508 = vpop.f32.mrf.mxu0
  %v1509 = vadd.f32 %v1108, %v1508
  %v1510 = vpop.f32.mrf.mxu0
  %v1511 = vadd.f32 %v1110, %v1510
  %v1512 = vpop.f32.mrf.mxu0
  %v1513 = vadd.f32 %v1112, %v1512
  %1514 = vmatprep.mubr.bf16.mxu0 0
  %1515 = vmatmul.mubr.bf16.gmra.mxu0 %v950
  %v1516 = vpop.f32.mrf.mxu0
  %v1517 = vadd.f32 %v1116, %v1516
  %v1518 = vpop.f32.mrf.mxu0
  %v1519 = vadd.f32 %v1118, %v1518
  %v1520 = vpop.f32.mrf.mxu0
  %v1521 = vadd.f32 %v1120, %v1520
  %v1522 = vpop.f32.mrf.mxu0
  %v1523 = vadd.f32 %v1122, %v1522
  %1524 = vmatprep.mubr.bf16.mxu0 0
  %1525 = vmatmul.mubr.bf16.gmra.mxu0 %v953
  %v1526 = vpop.f32.mrf.mxu0
  %v1527 = vadd.f32 %v1126, %v1526
  %v1528 = vpop.f32.mrf.mxu0
  %v1529 = vadd.f32 %v1128, %v1528
  %v1530 = vpop.f32.mrf.mxu0
  %v1531 = vadd.f32 %v1130, %v1530
  %v1532 = vpop.f32.mrf.mxu0
  %v1533 = vadd.f32 %v1132, %v1532
  %1534 = vmatprep.mubr.bf16.mxu0 0
  %1535 = vmatmul.mubr.bf16.gmra.mxu0 %v956
  %v1536 = vpop.f32.mrf.mxu0
  %v1537 = vadd.f32 %v1136, %v1536
  %v1538 = vpop.f32.mrf.mxu0
  %v1539 = vadd.f32 %v1138, %v1538
  %v1540 = vpop.f32.mrf.mxu0
  %v1541 = vadd.f32 %v1140, %v1540
  %v1542 = vpop.f32.mrf.mxu0
  %v1543 = vadd.f32 %v1142, %v1542
  %1544 = vmatprep.mubr.bf16.mxu0 0
  %1545 = vmatmul.mubr.bf16.gmra.mxu0 %v959
  %v1546 = vpop.f32.mrf.mxu0
  %v1547 = vadd.f32 %v1146, %v1546
  %v1548 = vpop.f32.mrf.mxu0
  %v1549 = vadd.f32 %v1148, %v1548
  %v1550 = vpop.f32.mrf.mxu0
  %v1551 = vadd.f32 %v1150, %v1550
  %v1552 = vpop.f32.mrf.mxu0
  %v1553 = vadd.f32 %v1152, %v1552
  %1554 = vmatprep.mubr.bf16.mxu0 0
  %1555 = vmatmul.mubr.bf16.gmra.mxu0 %v962
  %v1556 = vpop.f32.mrf.mxu0
  %v1557 = vadd.f32 %v1156, %v1556
  %v1558 = vpop.f32.mrf.mxu0
  %v1559 = vadd.f32 %v1158, %v1558
  %v1560 = vpop.f32.mrf.mxu0
  %v1561 = vadd.f32 %v1160, %v1560
  %v1562 = vpop.f32.mrf.mxu0
  %v1563 = vadd.f32 %v1162, %v1562
  %1564 = vmatprep.mubr.bf16.mxu0 0
  %1565 = vmatmul.mubr.bf16.gmra.mxu0 %v965
  %v1566 = vpop.f32.mrf.mxu0
  %v1567 = vadd.f32 %v1166, %v1566
  %v1568 = vpop.f32.mrf.mxu0
  %v1569 = vadd.f32 %v1168, %v1568
  %v1570 = vpop.f32.mrf.mxu0
  %v1571 = vadd.f32 %v1170, %v1570
  %v1572 = vpop.f32.mrf.mxu0
  %v1573 = vadd.f32 %v1172, %v1572
  %1574 = vmatprep.mubr.bf16.mxu0 0
  %1575 = vmatmul.mubr.bf16.gmra.mxu0 %v968
  %v1576 = vpop.f32.mrf.mxu0
  %v1577 = vadd.f32 %v1176, %v1576
  %v1578 = vpop.f32.mrf.mxu0
  %v1579 = vadd.f32 %v1178, %v1578
  %v1580 = vpop.f32.mrf.mxu0
  %v1581 = vadd.f32 %v1180, %v1580
  %v1582 = vpop.f32.mrf.mxu0
  %v1583 = vadd.f32 %v1182, %v1582
  %1584 = vmatprep.mubr.bf16.mxu0 0
  %1585 = vmatmul.mubr.bf16.gmra.mxu0 %v971
  %v1586 = vpop.f32.mrf.mxu0
  %v1587 = vadd.f32 %v1186, %v1586
  %v1588 = vpop.f32.mrf.mxu0
  %v1589 = vadd.f32 %v1188, %v1588
  %v1590 = vpop.f32.mrf.mxu0
  %v1591 = vadd.f32 %v1190, %v1590
  %v1592 = vpop.f32.mrf.mxu0
  %v1593 = vadd.f32 %v1192, %v1592
  %1594 = vmatprep.mubr.bf16.mxu0 0
  %1595 = vmatmul.mubr.bf16.gmra.mxu0 %v974
  %v1596 = vpop.f32.mrf.mxu0
  %v1597 = vadd.f32 %v1196, %v1596
  %v1598 = vpop.f32.mrf.mxu0
  %v1599 = vadd.f32 %v1198, %v1598
  %v1600 = vpop.f32.mrf.mxu0
  %v1601 = vadd.f32 %v1200, %v1600
  %v1602 = vpop.f32.mrf.mxu0
  %v1603 = vadd.f32 %v1202, %v1602
  %1604 = vmatprep.mubr.bf16.mxu0 0
  %1605 = vmatmul.mubr.bf16.gmra.mxu0 %v977
  %v1606 = vpop.f32.mrf.mxu0
  %v1607 = vadd.f32 %v1206, %v1606
  %v1608 = vpop.f32.mrf.mxu0
  %v1609 = vadd.f32 %v1208, %v1608
  %v1610 = vpop.f32.mrf.mxu0
  %v1611 = vadd.f32 %v1210, %v1610
  %v1612 = vpop.f32.mrf.mxu0
  %v1613 = vadd.f32 %v1212, %v1612
  %1614 = vmatprep.mubr.bf16.mxu0 0
  %1615 = vmatmul.mubr.bf16.gmra.mxu0 %v980
  %v1616 = vpop.f32.mrf.mxu0
  %v1617 = vadd.f32 %v1216, %v1616
  %v1618 = vpop.f32.mrf.mxu0
  %v1619 = vadd.f32 %v1218, %v1618
  %v1620 = vpop.f32.mrf.mxu0
  %v1621 = vadd.f32 %v1220, %v1620
  %v1622 = vpop.f32.mrf.mxu0
  %v1623 = vadd.f32 %v1222, %v1622
  %1624 = vmatprep.mubr.bf16.mxu0 0
  %1625 = vmatmul.mubr.bf16.gmra.mxu0 %v983
  %v1626 = vpop.f32.mrf.mxu0
  %v1627 = vadd.f32 %v1226, %v1626
  %v1628 = vpop.f32.mrf.mxu0
  %v1629 = vadd.f32 %v1228, %v1628
  %v1630 = vpop.f32.mrf.mxu0
  %v1631 = vadd.f32 %v1230, %v1630
  %v1632 = vpop.f32.mrf.mxu0
  %v1633 = vadd.f32 %v1232, %v1632
  %1634 = vmatprep.mubr.bf16.mxu0 0
  %1635 = vmatmul.mubr.bf16.gmra.mxu0 %v986
  %v1636 = vpop.f32.mrf.mxu0
  %v1637 = vadd.f32 %v1236, %v1636
  %v1638 = vpop.f32.mrf.mxu0
  %v1639 = vadd.f32 %v1238, %v1638
  %v1640 = vpop.f32.mrf.mxu0
  %v1641 = vadd.f32 %v1240, %v1640
  %v1642 = vpop.f32.mrf.mxu0
  %v1643 = vadd.f32 %v1242, %v1642
  %1644 = vmatprep.mubr.bf16.mxu0 0
  %1645 = vmatmul.mubr.bf16.gmra.mxu0 %v989
  %v1646 = vpop.f32.mrf.mxu0
  %v1647 = vadd.f32 %v1246, %v1646
  %v1648 = vpop.f32.mrf.mxu0
  %v1649 = vadd.f32 %v1248, %v1648
  %v1650 = vpop.f32.mrf.mxu0
  %v1651 = vadd.f32 %v1250, %v1650
  %v1652 = vpop.f32.mrf.mxu0
  %v1653 = vadd.f32 %v1252, %v1652
  %1654 = vmatprep.mubr.bf16.mxu0 0
  %1655 = vmatmul.mubr.bf16.gmra.mxu0 %v992
  %v1656 = vpop.f32.mrf.mxu0
  %v1657 = vadd.f32 %v1256, %v1656
  %v1658 = vpop.f32.mrf.mxu0
  %v1659 = vadd.f32 %v1258, %v1658
  %v1660 = vpop.f32.mrf.mxu0
  %v1661 = vadd.f32 %v1260, %v1660
  %v1662 = vpop.f32.mrf.mxu0
  %v1663 = vadd.f32 %v1262, %v1662
  %1664 = vmatprep.mubr.bf16.mxu0 0
  %1665 = vmatmul.mubr.bf16.gmra.mxu0 %v995
  %v1666 = vpop.f32.mrf.mxu0
  %v1667 = vadd.f32 %v1266, %v1666
  %v1668 = vpop.f32.mrf.mxu0
  %v1669 = vadd.f32 %v1268, %v1668
  %v1670 = vpop.f32.mrf.mxu0
  %v1671 = vadd.f32 %v1270, %v1670
  %v1672 = vpop.f32.mrf.mxu0
  %v1673 = vadd.f32 %v1272, %v1672
  %1674 = vmatprep.mubr.bf16.mxu0 0
  %1675 = vmatmul.mubr.bf16.gmra.mxu0 %v998
  %v1676 = vpop.f32.mrf.mxu0
  %v1677 = vadd.f32 %v1276, %v1676
  %v1678 = vpop.f32.mrf.mxu0
  %v1679 = vadd.f32 %v1278, %v1678
  %v1680 = vpop.f32.mrf.mxu0
  %v1681 = vadd.f32 %v1280, %v1680
  %v1682 = vpop.f32.mrf.mxu0
  %v1683 = vadd.f32 %v1282, %v1682
  %1684 = vmatprep.mubr.bf16.mxu0 0
  %1685 = vmatmul.mubr.bf16.gmra.mxu0 %v1001
  %v1686 = vpop.f32.mrf.mxu0
  %v1687 = vadd.f32 %v1286, %v1686
  %v1688 = vpop.f32.mrf.mxu0
  %v1689 = vadd.f32 %v1288, %v1688
  %v1690 = vpop.f32.mrf.mxu0
  %v1691 = vadd.f32 %v1290, %v1690
  %v1692 = vpop.f32.mrf.mxu0
  %v1693 = vadd.f32 %v1292, %v1692
  %1694 = vmatprep.mubr.bf16.mxu0 0
  %1695 = vmatmul.mubr.bf16.gmra.mxu0 %v1004
  %v1696 = vpop.f32.mrf.mxu0
  %v1697 = vadd.f32 %v1296, %v1696
  %v1698 = vpop.f32.mrf.mxu0
  %v1699 = vadd.f32 %v1298, %v1698
  %v1700 = vpop.f32.mrf.mxu0
  %v1701 = vadd.f32 %v1300, %v1700
  %v1702 = vpop.f32.mrf.mxu0
  %v1703 = vadd.f32 %v1302, %v1702
  %1704 = vmatprep.mubr.bf16.mxu0 0
  %1705 = vmatmul.mubr.bf16.gmra.mxu0 %v1007
  %v1706 = vpop.f32.mrf.mxu0
  %v1707 = vadd.f32 %v1306, %v1706
  %v1708 = vpop.f32.mrf.mxu0
  %v1709 = vadd.f32 %v1308, %v1708
  %v1710 = vpop.f32.mrf.mxu0
  %v1711 = vadd.f32 %v1310, %v1710
  %v1712 = vpop.f32.mrf.mxu0
  %v1713 = vadd.f32 %v1312, %v1712
  %1714 = vmatprep.mubr.bf16.mxu0 0
  %1715 = vmatmul.mubr.bf16.gmra.mxu0 %v1010
  %v1716 = vpop.f32.mrf.mxu0
  %v1717 = vadd.f32 %v1316, %v1716
  %v1718 = vpop.f32.mrf.mxu0
  %v1719 = vadd.f32 %v1318, %v1718
  %v1720 = vpop.f32.mrf.mxu0
  %v1721 = vadd.f32 %v1320, %v1720
  %v1722 = vpop.f32.mrf.mxu0
  %v1723 = vadd.f32 %v1322, %v1722
  %1724 = vmatprep.mubr.bf16.mxu0 0
  %1725 = vmatmul.mubr.bf16.gmra.mxu0 %v1013
  %v1726 = vpop.f32.mrf.mxu0
  %v1727 = vadd.f32 %v1326, %v1726
  %v1728 = vpop.f32.mrf.mxu0
  %v1729 = vadd.f32 %v1328, %v1728
  %v1730 = vpop.f32.mrf.mxu0
  %v1731 = vadd.f32 %v1330, %v1730
  %v1732 = vpop.f32.mrf.mxu0
  %v1733 = vadd.f32 %v1332, %v1732
  %1734 = vmatprep.mubr.bf16.mxu0 0
  %1735 = vmatmul.mubr.bf16.gmra.mxu0 %v1016
  %v1736 = vpop.f32.mrf.mxu0
  %v1737 = vadd.f32 %v1336, %v1736
  %v1738 = vpop.f32.mrf.mxu0
  %v1739 = vadd.f32 %v1338, %v1738
  %v1740 = vpop.f32.mrf.mxu0
  %v1741 = vadd.f32 %v1340, %v1740
  %v1742 = vpop.f32.mrf.mxu0
  %v1743 = vadd.f32 %v1342, %v1742
  %1744 = vmatprep.mubr.bf16.mxu0 0
  %1745 = vmatmul.mubr.bf16.gmra.mxu0 %v1019
  %v1746 = vpop.f32.mrf.mxu0
  %v1747 = vadd.f32 %v1346, %v1746
  %v1748 = vpop.f32.mrf.mxu0
  %v1749 = vadd.f32 %v1348, %v1748
  %v1750 = vpop.f32.mrf.mxu0
  %v1751 = vadd.f32 %v1350, %v1750
  %v1752 = vpop.f32.mrf.mxu0
  %v1753 = vadd.f32 %v1352, %v1752
  %1754 = vmatprep.mubr.bf16.mxu0 0
  %1755 = vmatmul.mubr.bf16.gmra.mxu0 %v1022
  %v1756 = vpop.f32.mrf.mxu0
  %v1757 = vadd.f32 %v1356, %v1756
  %v1758 = vpop.f32.mrf.mxu0
  %v1759 = vadd.f32 %v1358, %v1758
  %v1760 = vpop.f32.mrf.mxu0
  %v1761 = vadd.f32 %v1360, %v1760
  %v1762 = vpop.f32.mrf.mxu0
  %v1763 = vadd.f32 %v1362, %v1762
  %1764 = vmatprep.mubr.bf16.mxu0 0
  %1765 = vmatmul.mubr.bf16.gmra.mxu0 %v1025
  %v1766 = vpop.f32.mrf.mxu0
  %v1767 = vadd.f32 %v1366, %v1766
  %v1768 = vpop.f32.mrf.mxu0
  %v1769 = vadd.f32 %v1368, %v1768
  %v1770 = vpop.f32.mrf.mxu0
  %v1771 = vadd.f32 %v1370, %v1770
  %v1772 = vpop.f32.mrf.mxu0
  %v1773 = vadd.f32 %v1372, %v1772
  %1774 = vmatprep.mubr.bf16.mxu0 0
  %1775 = vmatmul.mubr.bf16.gmra.mxu0 %v1028
  %v1776 = vpop.f32.mrf.mxu0
  %v1777 = vadd.f32 %v1376, %v1776
  %v1778 = vpop.f32.mrf.mxu0
  %v1779 = vadd.f32 %v1378, %v1778
  %v1780 = vpop.f32.mrf.mxu0
  %v1781 = vadd.f32 %v1380, %v1780
  %v1782 = vpop.f32.mrf.mxu0
  %v1783 = vadd.f32 %v1382, %v1782
  %1784 = vmatprep.mubr.bf16.mxu0 0
  %1785 = vmatmul.mubr.bf16.gmra.mxu0 %v1031
  %v1786 = vpop.f32.mrf.mxu0
  %v1787 = vadd.f32 %v1386, %v1786
  %v1788 = vpop.f32.mrf.mxu0
  %v1789 = vadd.f32 %v1388, %v1788
  %v1790 = vpop.f32.mrf.mxu0
  %v1791 = vadd.f32 %v1390, %v1790
  %v1792 = vpop.f32.mrf.mxu0
  %v1793 = vadd.f32 %v1392, %v1792
  %1794 = vmatprep.mubr.bf16.mxu0 0
  %1795 = vmatmul.mubr.bf16.gmra.mxu0 %v1034
  %v1796 = vpop.f32.mrf.mxu0
  %v1797 = vadd.f32 %v1396, %v1796
  %v1798 = vpop.f32.mrf.mxu0
  %v1799 = vadd.f32 %v1398, %v1798
  %v1800 = vpop.f32.mrf.mxu0
  %v1801 = vadd.f32 %v1400, %v1800
  %v1802 = vpop.f32.mrf.mxu0
  %v1803 = vadd.f32 %v1402, %v1802
  %1804 = vmatprep.mubr.bf16.mxu0 0
  %1805 = vmatmul.mubr.bf16.gmra.mxu0 %v1037
  %v1806 = vpop.f32.mrf.mxu0
  %v1807 = vadd.f32 %v1406, %v1806
  %v1808 = vpop.f32.mrf.mxu0
  %v1809 = vadd.f32 %v1408, %v1808
  %v1810 = vpop.f32.mrf.mxu0
  %v1811 = vadd.f32 %v1410, %v1810
  %v1812 = vpop.f32.mrf.mxu0
  %v1813 = vadd.f32 %v1412, %v1812
  %1814 = vmatprep.mubr.bf16.mxu0 0
  %1815 = vmatmul.mubr.bf16.gmra.mxu0 %v1040
  %v1816 = vpop.f32.mrf.mxu0
  %v1817 = vadd.f32 %v1416, %v1816
  %v1818 = vpop.f32.mrf.mxu0
  %v1819 = vadd.f32 %v1418, %v1818
  %v1820 = vpop.f32.mrf.mxu0
  %v1821 = vadd.f32 %v1420, %v1820
  %v1822 = vpop.f32.mrf.mxu0
  %v1823 = vadd.f32 %v1422, %v1822
  %1824 = vmatprep.mubr.bf16.mxu0 0
  %1825 = vmatmul.mubr.bf16.gmra.mxu0 %v1043
  %v1826 = vpop.f32.mrf.mxu0
  %v1827 = vadd.f32 %v1426, %v1826
  %v1828 = vpop.f32.mrf.mxu0
  %v1829 = vadd.f32 %v1428, %v1828
  %v1830 = vpop.f32.mrf.mxu0
  %v1831 = vadd.f32 %v1430, %v1830
  %v1832 = vpop.f32.mrf.mxu0
  %v1833 = vadd.f32 %v1432, %v1832
  %1834 = vmatprep.mubr.bf16.mxu0 0
  %1835 = vmatmul.mubr.bf16.gmra.mxu0 %v1046
  %v1836 = vpop.f32.mrf.mxu0
  %v1837 = vadd.f32 %v1436, %v1836
  %v1838 = vpop.f32.mrf.mxu0
  %v1839 = vadd.f32 %v1438, %v1838
  %v1840 = vpop.f32.mrf.mxu0
  %v1841 = vadd.f32 %v1440, %v1840
  %v1842 = vpop.f32.mrf.mxu0
  %v1843 = vadd.f32 %v1442, %v1842
  %1844 = vmatprep.mubr.bf16.mxu0 0
  %1845 = vmatmul.mubr.bf16.gmra.mxu0 %v1049
  %v1846 = vpop.f32.mrf.mxu0
  %v1847 = vadd.f32 %v1446, %v1846
  %v1848 = vpop.f32.mrf.mxu0
  %v1849 = vadd.f32 %v1448, %v1848
  %v1850 = vpop.f32.mrf.mxu0
  %v1851 = vpop.f32.mrf.mxu0
  %1852 = vdwg.mxu0
  %v1853 = vmax.f32 %v1487, 0.0
  %v1854 = vmax.f32 %v1489, 0.0
  %v1855 = vmax.f32 %v1491, 0.0
  %v1856 = vmax.f32 %v1493, 0.0
  %v1857 = vmax.f32 %v1497, 0.0
  %v1858 = vmax.f32 %v1499, 0.0
  %v1859 = vmax.f32 %v1501, 0.0
  %v1860 = vmax.f32 %v1503, 0.0
  %v1861 = vmax.f32 %v1507, 0.0
  %v1862 = vmax.f32 %v1509, 0.0
  %v1863 = vmax.f32 %v1511, 0.0
  %v1864 = vmax.f32 %v1513, 0.0
  %v1865 = vmax.f32 %v1517, 0.0
  %v1866 = vmax.f32 %v1519, 0.0
  %v1867 = vmax.f32 %v1521, 0.0
  %v1868 = vmax.f32 %v1523, 0.0
  %v1869 = vmax.f32 %v1527, 0.0
  %v1870 = vmax.f32 %v1529, 0.0
  %v1871 = vmax.f32 %v1531, 0.0
  %v1872 = vmax.f32 %v1533, 0.0
  %v1873 = vmax.f32 %v1537, 0.0
  %v1874 = vmax.f32 %v1539, 0.0
  %v1875 = vmax.f32 %v1541, 0.0
  %v1876 = vmax.f32 %v1543, 0.0
  %v1877 = vmax.f32 %v1547, 0.0
  %v1878 = vmax.f32 %v1549, 0.0
  %v1879 = vmax.f32 %v1551, 0.0
  %v1880 = vmax.f32 %v1553, 0.0
  %v1881 = vmax.f32 %v1557, 0.0
  %v1882 = vmax.f32 %v1559, 0.0
  %v1883 = vmax.f32 %v1561, 0.0
  %v1884 = vmax.f32 %v1563, 0.0
  %v1885 = vmax.f32 %v1567, 0.0
  %v1886 = vmax.f32 %v1569, 0.0
  %v1887 = vmax.f32 %v1571, 0.0
  %v1888 = vmax.f32 %v1573, 0.0
  %v1889 = vmax.f32 %v1577, 0.0
  %v1890 = vmax.f32 %v1579, 0.0
  %v1891 = vmax.f32 %v1581, 0.0
  %v1892 = vmax.f32 %v1583, 0.0
  %v1893 = vmax.f32 %v1587, 0.0
  %v1894 = vmax.f32 %v1589, 0.0
  %v1895 = vmax.f32 %v1591, 0.0
  %v1896 = vmax.f32 %v1593, 0.0
  %v1897 = vmax.f32 %v1597, 0.0
  %v1898 = vmax.f32 %v1599, 0.0
  %v1899 = vmax.f32 %v1601, 0.0
  %v1900 = vmax.f32 %v1603, 0.0
  %v1901 = vmax.f32 %v1607, 0.0
  %v1902 = vmax.f32 %v1609, 0.0
  %v1903 = vmax.f32 %v1611, 0.0
  %v1904 = vmax.f32 %v1613, 0.0
  %v1905 = vmax.f32 %v1617, 0.0
  %v1906 = vmax.f32 %v1619, 0.0
  %v1907 = vmax.f32 %v1621, 0.0
  %v1908 = vmax.f32 %v1623, 0.0
  %v1909 = vmax.f32 %v1627, 0.0
  %v1910 = vmax.f32 %v1629, 0.0
  %v1911 = vmax.f32 %v1631, 0.0
  %v1912 = vmax.f32 %v1633, 0.0
  %v1913 = vmax.f32 %v1637, 0.0
  %v1914 = vmax.f32 %v1639, 0.0
  %v1915 = vmax.f32 %v1641, 0.0
  %v1916 = vmax.f32 %v1643, 0.0
  %v1917 = vmax.f32 %v1647, 0.0
  %v1918 = vmax.f32 %v1649, 0.0
  %v1919 = vmax.f32 %v1651, 0.0
  %v1920 = vmax.f32 %v1653, 0.0
  %v1921 = vmax.f32 %v1657, 0.0
  %v1922 = vmax.f32 %v1659, 0.0
  %v1923 = vmax.f32 %v1661, 0.0
  %v1924 = vmax.f32 %v1663, 0.0
  %v1925 = vmax.f32 %v1667, 0.0
  %v1926 = vmax.f32 %v1669, 0.0
  %v1927 = vmax.f32 %v1671, 0.0
  %v1928 = vmax.f32 %v1673, 0.0
  %v1929 = vmax.f32 %v1677, 0.0
  %v1930 = vmax.f32 %v1679, 0.0
  %v1931 = vmax.f32 %v1681, 0.0
  %v1932 = vmax.f32 %v1683, 0.0
  %v1933 = vmax.f32 %v1687, 0.0
  %v1934 = vmax.f32 %v1689, 0.0
  %v1935 = vmax.f32 %v1691, 0.0
  %v1936 = vmax.f32 %v1693, 0.0
  %v1937 = vmax.f32 %v1697, 0.0
  %v1938 = vmax.f32 %v1699, 0.0
  %v1939 = vmax.f32 %v1701, 0.0
  %v1940 = vmax.f32 %v1703, 0.0
  %v1941 = vmax.f32 %v1707, 0.0
  %v1942 = vmax.f32 %v1709, 0.0
  %v1943 = vmax.f32 %v1711, 0.0
  %v1944 = vmax.f32 %v1713, 0.0
  %v1945 = vmax.f32 %v1717, 0.0
  %v1946 = vmax.f32 %v1719, 0.0
  %v1947 = vmax.f32 %v1721, 0.0
  %v1948 = vmax.f32 %v1723, 0.0
  %v1949 = vmax.f32 %v1727, 0.0
  %v1950 = vmax.f32 %v1729, 0.0
  %v1951 = vmax.f32 %v1731, 0.0
  %v1952 = vmax.f32 %v1733, 0.0
  %v1953 = vmax.f32 %v1737, 0.0
  %v1954 = vmax.f32 %v1739, 0.0
  %v1955 = vmax.f32 %v1741, 0.0
  %v1956 = vmax.f32 %v1743, 0.0
  %v1957 = vmax.f32 %v1747, 0.0
  %v1958 = vmax.f32 %v1749, 0.0
  %v1959 = vmax.f32 %v1751, 0.0
  %v1960 = vmax.f32 %v1753, 0.0
  %v1961 = vmax.f32 %v1757, 0.0
  %v1962 = vmax.f32 %v1759, 0.0
  %v1963 = vmax.f32 %v1761, 0.0
  %v1964 = vmax.f32 %v1763, 0.0
  %v1965 = vmax.f32 %v1767, 0.0
  %v1966 = vmax.f32 %v1769, 0.0
  %v1967 = vmax.f32 %v1771, 0.0
  %v1968 = vmax.f32 %v1773, 0.0
  %v1969 = vmax.f32 %v1777, 0.0
  %v1970 = vmax.f32 %v1779, 0.0
  %v1971 = vmax.f32 %v1781, 0.0
  %v1972 = vmax.f32 %v1783, 0.0
  %v1973 = vmax.f32 %v1787, 0.0
  %v1974 = vmax.f32 %v1789, 0.0
  %v1975 = vmax.f32 %v1791, 0.0
  %v1976 = vmax.f32 %v1793, 0.0
  %v1977 = vmax.f32 %v1797, 0.0
  %v1978 = vmax.f32 %v1799, 0.0
  %v1979 = vmax.f32 %v1801, 0.0
  %v1980 = vmax.f32 %v1803, 0.0
  %v1981 = vmax.f32 %v1807, 0.0
  %v1982 = vmax.f32 %v1809, 0.0
  %v1983 = vmax.f32 %v1811, 0.0
  %v1984 = vmax.f32 %v1813, 0.0
  %v1985 = vmax.f32 %v1817, 0.0
  %v1986 = vmax.f32 %v1819, 0.0
  %v1987 = vmax.f32 %v1821, 0.0
  %v1988 = vmax.f32 %v1823, 0.0
  %v1989 = vmax.f32 %v1827, 0.0
  %v1990 = vmax.f32 %v1829, 0.0
  %v1991 = vmax.f32 %v1831, 0.0
  %v1992 = vmax.f32 %v1833, 0.0
  %v1993 = vmax.f32 %v1837, 0.0
  %v1994 = vmax.f32 %v1839, 0.0
  %v1995 = vmax.f32 %v1841, 0.0
  %v1996 = vmax.f32 %v1843, 0.0
  %v1997 = vmax.f32 %v1847, 0.0
  %v1998 = vmax.f32 %v1849, 0.0
  %1999 = vst [vmem:[%s3] sm:$0xff] %v1853
  %2000 = vst [vmem:[%s3 + $0x8] sm:$0xff] %v1854
  %2001 = vst [vmem:[%s3 + $0x10] sm:$0xff] %v1855
  %2002 = vst [vmem:[%s3 + $0x18] sm:$0xff] %v1856
  %2003 = vst [vmem:[%s3 + $0x20] sm:$0xff] %v1857
  %2004 = vst [vmem:[%s3 + $0x28] sm:$0xff] %v1858
  %2005 = vst [vmem:[%s3 + $0x30] sm:$0xff] %v1859
  %2006 = vst [vmem:[%s3 + $0x38] sm:$0xff] %v1860
  %2007 = vst [vmem:[%s3 + $0x40] sm:$0xff] %v1861
  %2008 = vst [vmem:[%s3 + $0x48] sm:$0xff] %v1862
  %2009 = vst [vmem:[%s3 + $0x50] sm:$0xff] %v1863
  %2010 = vst [vmem:[%s3 + $0x58] sm:$0xff] %v1864
  %2011 = vst [vmem:[%s3 + $0x60] sm:$0xff] %v1865
  %2012 = vst [vmem:[%s3 + $0x68] sm:$0xff] %v1866
  %2013 = vst [vmem:[%s3 + $0x70] sm:$0xff] %v1867
  %2014 = vst [vmem:[%s3 + $0x78] sm:$0xff] %v1868
  %2015 = vst [vmem:[%s3 + $0x80] sm:$0xff] %v1869
  %2016 = vst [vmem:[%s3 + $0x88] sm:$0xff] %v1870
  %2017 = vst [vmem:[%s3 + $0x90] sm:$0xff] %v1871
  %2018 = vst [vmem:[%s3 + $0x98] sm:$0xff] %v1872
  %2019 = vst [vmem:[%s3 + $0xa0] sm:$0xff] %v1873
  %2020 = vst [vmem:[%s3 + $0xa8] sm:$0xff] %v1874
  %2021 = vst [vmem:[%s3 + $0xb0] sm:$0xff] %v1875
  %2022 = vst [vmem:[%s3 + $0xb8] sm:$0xff] %v1876
  %2023 = vst [vmem:[%s3 + $0xc0] sm:$0xff] %v1877
  %2024 = vst [vmem:[%s3 + $0xc8] sm:$0xff] %v1878
  %2025 = vst [vmem:[%s3 + $0xd0] sm:$0xff] %v1879
  %2026 = vst [vmem:[%s3 + $0xd8] sm:$0xff] %v1880
  %2027 = vst [vmem:[%s3 + $0xe0] sm:$0xff] %v1881
  %2028 = vst [vmem:[%s3 + $0xe8] sm:$0xff] %v1882
  %2029 = vst [vmem:[%s3 + $0xf0] sm:$0xff] %v1883
  %2030 = vst [vmem:[%s3 + $0xf8] sm:$0xff] %v1884
  %2031 = vst [vmem:[%s3 + $0x100] sm:$0xff] %v1885
  %2032 = vst [vmem:[%s3 + $0x108] sm:$0xff] %v1886
  %2033 = vst [vmem:[%s3 + $0x110] sm:$0xff] %v1887
  %2034 = vst [vmem:[%s3 + $0x118] sm:$0xff] %v1888
  %2035 = vst [vmem:[%s3 + $0x120] sm:$0xff] %v1889
  %2036 = vst [vmem:[%s3 + $0x128] sm:$0xff] %v1890
  %2037 = vst [vmem:[%s3 + $0x130] sm:$0xff] %v1891
  %2038 = vst [vmem:[%s3 + $0x138] sm:$0xff] %v1892
  %2039 = vst [vmem:[%s3 + $0x140] sm:$0xff] %v1893
  %2040 = vst [vmem:[%s3 + $0x148] sm:$0xff] %v1894
  %2041 = vst [vmem:[%s3 + $0x150] sm:$0xff] %v1895
  %2042 = vst [vmem:[%s3 + $0x158] sm:$0xff] %v1896
  %2043 = vst [vmem:[%s3 + $0x160] sm:$0xff] %v1897
  %2044 = vst [vmem:[%s3 + $0x168] sm:$0xff] %v1898
  %2045 = vst [vmem:[%s3 + $0x170] sm:$0xff] %v1899
  %2046 = vst [vmem:[%s3 + $0x178] sm:$0xff] %v1900
  %2047 = vst [vmem:[%s3 + $0x180] sm:$0xff] %v1901
  %2048 = vst [vmem:[%s3 + $0x188] sm:$0xff] %v1902
  %2049 = vst [vmem:[%s3 + $0x190] sm:$0xff] %v1903
  %2050 = vst [vmem:[%s3 + $0x198] sm:$0xff] %v1904
  %2051 = vst [vmem:[%s3 + $0x1a0] sm:$0xff] %v1905
  %2052 = vst [vmem:[%s3 + $0x1a8] sm:$0xff] %v1906
  %2053 = vst [vmem:[%s3 + $0x1b0] sm:$0xff] %v1907
  %2054 = vst [vmem:[%s3 + $0x1b8] sm:$0xff] %v1908
  %2055 = vst [vmem:[%s3 + $0x1c0] sm:$0xff] %v1909
  %2056 = vst [vmem:[%s3 + $0x1c8] sm:$0xff] %v1910
  %2057 = vst [vmem:[%s3 + $0x1d0] sm:$0xff] %v1911
  %2058 = vst [vmem:[%s3 + $0x1d8] sm:$0xff] %v1912
  %2059 = vst [vmem:[%s3 + $0x1e0] sm:$0xff] %v1913
  %2060 = vst [vmem:[%s3 + $0x1e8] sm:$0xff] %v1914
  %2061 = vst [vmem:[%s3 + $0x1f0] sm:$0xff] %v1915
  %2062 = vst [vmem:[%s3 + $0x1f8] sm:$0xff] %v1916
  %2063 = vst [vmem:[%s3 + $0x200] sm:$0xff] %v1917
  %2064 = vst [vmem:[%s3 + $0x208] sm:$0xff] %v1918
  %2065 = vst [vmem:[%s3 + $0x210] sm:$0xff] %v1919
  %2066 = vst [vmem:[%s3 + $0x218] sm:$0xff] %v1920
  %2067 = vst [vmem:[%s3 + $0x220] sm:$0xff] %v1921
  %2068 = vst [vmem:[%s3 + $0x228] sm:$0xff] %v1922
  %2069 = vst [vmem:[%s3 + $0x230] sm:$0xff] %v1923
  %2070 = vst [vmem:[%s3 + $0x238] sm:$0xff] %v1924
  %2071 = vst [vmem:[%s3 + $0x240] sm:$0xff] %v1925
  %2072 = vst [vmem:[%s3 + $0x248] sm:$0xff] %v1926
  %2073 = vst [vmem:[%s3 + $0x250] sm:$0xff] %v1927
  %2074 = vst [vmem:[%s3 + $0x258] sm:$0xff] %v1928
  %2075 = vst [vmem:[%s3 + $0x260] sm:$0xff] %v1929
  %2076 = vst [vmem:[%s3 + $0x268] sm:$0xff] %v1930
  %2077 = vst [vmem:[%s3 + $0x270] sm:$0xff] %v1931
  %2078 = vst [vmem:[%s3 + $0x278] sm:$0xff] %v1932
  %2079 = vst [vmem:[%s3 + $0x280] sm:$0xff] %v1933
  %2080 = vst [vmem:[%s3 + $0x288] sm:$0xff] %v1934
  %2081 = vst [vmem:[%s3 + $0x290] sm:$0xff] %v1935
  %2082 = vst [vmem:[%s3 + $0x298] sm:$0xff] %v1936
  %2083 = vst [vmem:[%s3 + $0x2a0] sm:$0xff] %v1937
  %2084 = vst [vmem:[%s3 + $0x2a8] sm:$0xff] %v1938
  %2085 = vst [vmem:[%s3 + $0x2b0] sm:$0xff] %v1939
  %2086 = vst [vmem:[%s3 + $0x2b8] sm:$0xff] %v1940
  %2087 = vst [vmem:[%s3 + $0x2c0] sm:$0xff] %v1941
  %2088 = vst [vmem:[%s3 + $0x2c8] sm:$0xff] %v1942
  %2089 = vst [vmem:[%s3 + $0x2d0] sm:$0xff] %v1943
  %2090 = vst [vmem:[%s3 + $0x2d8] sm:$0xff] %v1944
  %2091 = vst [vmem:[%s3 + $0x2e0] sm:$0xff] %v1945
  %2092 = vst [vmem:[%s3 + $0x2e8] sm:$0xff] %v1946
  %2093 = vst [vmem:[%s3 + $0x2f0] sm:$0xff] %v1947
  %2094 = vst [vmem:[%s3 + $0x2f8] sm:$0xff] %v1948
  %2095 = vst [vmem:[%s3 + $0x300] sm:$0xff] %v1949
  %2096 = vst [vmem:[%s3 + $0x308] sm:$0xff] %v1950
  %2097 = vst [vmem:[%s3 + $0x310] sm:$0xff] %v1951
  %2098 = vst [vmem:[%s3 + $0x318] sm:$0xff] %v1952
  %2099 = vst [vmem:[%s3 + $0x320] sm:$0xff] %v1953
  %2100 = vst [vmem:[%s3 + $0x328] sm:$0xff] %v1954
  %2101 = vst [vmem:[%s3 + $0x330] sm:$0xff] %v1955
  %2102 = vst [vmem:[%s3 + $0x338] sm:$0xff] %v1956
  %2103 = vst [vmem:[%s3 + $0x340] sm:$0xff] %v1957
  %2104 = vst [vmem:[%s3 + $0x348] sm:$0xff] %v1958
  %2105 = vst [vmem:[%s3 + $0x350] sm:$0xff] %v1959
  %2106 = vst [vmem:[%s3 + $0x358] sm:$0xff] %v1960
  %2107 = vst [vmem:[%s3 + $0x360] sm:$0xff] %v1961
  %2108 = vst [vmem:[%s3 + $0x368] sm:$0xff] %v1962
  %2109 = vst [vmem:[%s3 + $0x370] sm:$0xff] %v1963
  %2110 = vst [vmem:[%s3 + $0x378] sm:$0xff] %v1964
  %2111 = vst [vmem:[%s3 + $0x380] sm:$0xff] %v1965
  %2112 = vst [vmem:[%s3 + $0x388] sm:$0xff] %v1966
  %2113 = vst [vmem:[%s3 + $0x390] sm:$0xff] %v1967
  %2114 = vst [vmem:[%s3 + $0x398] sm:$0xff] %v1968
  %2115 = vst [vmem:[%s3 + $0x3a0] sm:$0xff] %v1969
  %2116 = vst [vmem:[%s3 + $0x3a8] sm:$0xff] %v1970
  %2117 = vst [vmem:[%s3 + $0x3b0] sm:$0xff] %v1971
  %2118 = vst [vmem:[%s3 + $0x3b8] sm:$0xff] %v1972
  %2119 = vst [vmem:[%s3 + $0x3c0] sm:$0xff] %v1973
  %2120 = vst [vmem:[%s3 + $0x3c8] sm:$0xff] %v1974
  %2121 = vst [vmem:[%s3 + $0x3d0] sm:$0xff] %v1975
  %2122 = vst [vmem:[%s3 + $0x3d8] sm:$0xff] %v1976
  %2123 = vst [vmem:[%s3 + $0x3e0] sm:$0xff] %v1977
  %2124 = vst [vmem:[%s3 + $0x3e8] sm:$0xff] %v1978
  %2125 = vst [vmem:[%s3 + $0x3f0] sm:$0xff] %v1979
  %2126 = vst [vmem:[%s3 + $0x3f8] sm:$0xff] %v1980
  %2127 = vst [vmem:[%s3 + $0x400] sm:$0xff] %v1981
  %2128 = vst [vmem:[%s3 + $0x408] sm:$0xff] %v1982
  %2129 = vst [vmem:[%s3 + $0x410] sm:$0xff] %v1983
  %2130 = vst [vmem:[%s3 + $0x418] sm:$0xff] %v1984
  %2131 = vst [vmem:[%s3 + $0x420] sm:$0xff] %v1985
  %2132 = vst [vmem:[%s3 + $0x428] sm:$0xff] %v1986
  %2133 = vst [vmem:[%s3 + $0x430] sm:$0xff] %v1987
  %2134 = vst [vmem:[%s3 + $0x438] sm:$0xff] %v1988
  %2135 = vst [vmem:[%s3 + $0x440] sm:$0xff] %v1989
  %2136 = vst [vmem:[%s3 + $0x448] sm:$0xff] %v1990
  %2137 = vst [vmem:[%s3 + $0x450] sm:$0xff] %v1991
  %2138 = vst [vmem:[%s3 + $0x458] sm:$0xff] %v1992
  %2139 = vst [vmem:[%s3 + $0x460] sm:$0xff] %v1993
  %2140 = vst [vmem:[%s3 + $0x468] sm:$0xff] %v1994
  %2141 = vst [vmem:[%s3 + $0x470] sm:$0xff] %v1995
  %2142 = vst [vmem:[%s3 + $0x478] sm:$0xff] %v1996
  %2143 = vst [vmem:[%s3 + $0x480] sm:$0x3] %v1997
  %2144 = vst [vmem:[%s3 + $0x488] sm:$0x3] %v1998
  // Predicated region
  $region14: #{reduction_b_forward.3} parent=0 // pred_check
    _
  $region15: #{reduction_b_forward.3} parent=0 // pred_check_branch
    %2146 = sbr.rel (0) target = $region17
  $region16: #{reduction_b_forward.3} parent=0 // pred_region
    _
  $region17: #{reduction_b_forward.3} parent=0 // pred_fallthru
    _
  // Predicated region
  $region18: #{reduction_b_forward.3} parent=0 // pred_check
    _
  $region19: #{reduction_b_forward.3} parent=0 // pred_check_branch
    %2148 = sbr.rel (0) target = $region21
  $region20: #{reduction_b_forward.3} parent=0 // pred_region
    _
  $region21: #{reduction_b_forward.3} parent=0 // pred_fallthru
    _

// kernel: reduction_b_forward.4
$region0: #{reduction_b_forward.4}
  #allocation0 [shape = 'u32[]', space=smem, size = 0x4, offset = 0x4, fixed_abs, tag = 'smem constant byte address 0x4 - core index']
  #allocation1 [shape = 'u32[144,128]{1,0:T(1,128)}', space=vmem, size = 0x12000, scoped, tag = 'internal scratch']
  %s0 = inlined_call_operand.vmem [shape: bf16[578,648], index: 0, kind: input, shape index: {}]
  %s1 = inlined_call_operand.vmem [shape: bf16[648,128], index: 1, kind: input, shape index: {}]
  %s2 = inlined_call_operand.vmem [shape: f32[1,128], index: 2, kind: input, shape index: {}]
  %s3 = inlined_call_operand.vmem [shape: f32[578,128], index: 3, kind: output, shape index: {}]
  %s4 = sld [smem:[#allocation0]]
  $region22: #{reduction_b_forward.4} parent=0
    _
  %s6 = ssub.s32 1, %s4
  %s7 = scalar_select 0, %s6, %s4
  // Predicated region
  $region2: #{reduction_b_forward.4} parent=0 // pred_check
    _
  $region3: #{reduction_b_forward.4} parent=0 // pred_check_branch
    %9 = sbr.rel (0) target = $region5
  $region4: #{reduction_b_forward.4} parent=0 // pred_region
    _
  $region5: #{reduction_b_forward.4} parent=0 // pred_fallthru
    _
  // Predicated region
  $region6: #{reduction_b_forward.4} parent=0 // pred_check
    _
  $region7: #{reduction_b_forward.4} parent=0 // pred_check_branch
    %11 = sbr.rel (0) target = $region9
  $region8: #{reduction_b_forward.4} parent=0 // pred_region
    _
  $region9: #{reduction_b_forward.4} parent=0 // pred_fallthru
    _
  // Predicated region
  $region10: #{reduction_b_forward.4} parent=0 // pred_check
    _
  $region11: #{reduction_b_forward.4} parent=0 // pred_check_branch
    %13 = sbr.rel (0) target = $region13
  $region12: #{reduction_b_forward.4} parent=0 // pred_region
    _
  $region13: #{reduction_b_forward.4} parent=0 // pred_fallthru
    _
  %v15 = vld [vmem:[%s0] sm:$0xff]
  %v16 = vld [vmem:[%s0 + $0x8] sm:$0xff]
  %v17 = vld [vmem:[%s0 + $0x10] sm:$0xff]
  %v18 = vld [vmem:[%s0 + $0x18] sm:$0xff]
  %v19 = vld [vmem:[%s0 + $0x20] sm:$0xff]
  %v20 = vld [vmem:[%s0 + $0x28] sm:$0xff]
  %v21 = vld [vmem:[%s0 + $0x30] sm:$0xff]
  %v22 = vld [vmem:[%s0 + $0x38] sm:$0xff]
  %v23 = vld [vmem:[%s0 + $0x40] sm:$0xff]
  %v24 = vld [vmem:[%s0 + $0x48] sm:$0xff]
  %v25 = vld [vmem:[%s0 + $0x50] sm:$0xff]
  %v26 = vld [vmem:[%s0 + $0x58] sm:$0xff]
  %v27 = vld [vmem:[%s0 + $0x60] sm:$0xff]
  %v28 = vld [vmem:[%s0 + $0x68] sm:$0xff]
  %v29 = vld [vmem:[%s0 + $0x70] sm:$0xff]
  %v30 = vld [vmem:[%s0 + $0x78] sm:$0xff]
  %v31 = vld [vmem:[%s0 + $0x80] sm:$0xff]
  %v32 = vld [vmem:[%s0 + $0x88] sm:$0xff]
  %v33 = vld [vmem:[%s0 + $0x90] sm:$0xff]
  %v34 = vld [vmem:[%s0 + $0x98] sm:$0xff]
  %v35 = vld [vmem:[%s0 + $0xa0] sm:$0xff]
  %v36 = vld [vmem:[%s0 + $0xa8] sm:$0xff]
  %v37 = vld [vmem:[%s0 + $0xb0] sm:$0xff]
  %v38 = vld [vmem:[%s0 + $0xb8] sm:$0xff]
  %v39 = vld [vmem:[%s0 + $0xc0] sm:$0xff]
  %v40 = vld [vmem:[%s0 + $0xc8] sm:$0xff]
  %v41 = vld [vmem:[%s0 + $0xd0] sm:$0xff]
  %v42 = vld [vmem:[%s0 + $0xd8] sm:$0xff]
  %v43 = vld [vmem:[%s0 + $0xe0] sm:$0xff]
  %v44 = vld [vmem:[%s0 + $0xe8] sm:$0xff]
  %v45 = vld [vmem:[%s0 + $0xf0] sm:$0xff]
  %v46 = vld [vmem:[%s0 + $0xf8] sm:$0xff]
  %v47 = vld [vmem:[%s0 + $0x100] sm:$0xff]
  %v48 = vld [vmem:[%s0 + $0x108] sm:$0xff]
  %v49 = vld [vmem:[%s0 + $0x110] sm:$0xff]
  %v50 = vld [vmem:[%s0 + $0x118] sm:$0xff]
  %v51 = vld [vmem:[%s0 + $0x120] sm:$0xff]
  %v52 = vld [vmem:[%s0 + $0x128] sm:$0xff]
  %v53 = vld [vmem:[%s0 + $0x130] sm:$0xff]
  %v54 = vld [vmem:[%s0 + $0x138] sm:$0xff]
  %v55 = vld [vmem:[%s0 + $0x140] sm:$0xff]
  %v56 = vld [vmem:[%s0 + $0x148] sm:$0xff]
  %v57 = vld [vmem:[%s0 + $0x150] sm:$0xff]
  %v58 = vld [vmem:[%s0 + $0x158] sm:$0xff]
  %v59 = vld [vmem:[%s0 + $0x160] sm:$0xff]
  %v60 = vld [vmem:[%s0 + $0x168] sm:$0xff]
  %v61 = vld [vmem:[%s0 + $0x170] sm:$0xff]
  %v62 = vld [vmem:[%s0 + $0x178] sm:$0xff]
  %v63 = vld [vmem:[%s0 + $0x180] sm:$0xff]
  %v64 = vld [vmem:[%s0 + $0x188] sm:$0xff]
  %v65 = vld [vmem:[%s0 + $0x190] sm:$0xff]
  %v66 = vld [vmem:[%s0 + $0x198] sm:$0xff]
  %v67 = vld [vmem:[%s0 + $0x1a0] sm:$0xff]
  %v68 = vld [vmem:[%s0 + $0x1a8] sm:$0xff]
  %v69 = vld [vmem:[%s0 + $0x1b0] sm:$0xff]
  %v70 = vld [vmem:[%s0 + $0x1b8] sm:$0xff]
  %v71 = vld [vmem:[%s0 + $0x1c0] sm:$0xff]
  %v72 = vld [vmem:[%s0 + $0x1c8] sm:$0xff]
  %v73 = vld [vmem:[%s0 + $0x1d0] sm:$0xff]
  %v74 = vld [vmem:[%s0 + $0x1d8] sm:$0xff]
  %v75 = vld [vmem:[%s0 + $0x1e0] sm:$0xff]
  %v76 = vld [vmem:[%s0 + $0x1e8] sm:$0xff]
  %v77 = vld [vmem:[%s0 + $0x1f0] sm:$0xff]
  %v78 = vld [vmem:[%s0 + $0x1f8] sm:$0xff]
  %v79 = vld [vmem:[%s0 + $0x200] sm:$0xff]
  %v80 = vld [vmem:[%s0 + $0x208] sm:$0xff]
  %v81 = vld [vmem:[%s0 + $0x210] sm:$0xff]
  %v82 = vld [vmem:[%s0 + $0x218] sm:$0xff]
  %v83 = vld [vmem:[%s0 + $0x220] sm:$0xff]
  %v84 = vld [vmem:[%s0 + $0x228] sm:$0xff]
  %v85 = vld [vmem:[%s0 + $0x230] sm:$0xff]
  %v86 = vld [vmem:[%s0 + $0x238] sm:$0xff]
  %v87 = vld [vmem:[%s0 + $0x240] sm:$0xff]
  %v88 = vld [vmem:[%s0 + $0x248] sm:$0xff]
  %v89 = vld [vmem:[%s0 + $0x250] sm:$0xff]
  %v90 = vld [vmem:[%s0 + $0x258] sm:$0xff]
  %v91 = vld [vmem:[%s0 + $0x260] sm:$0xff]
  %v92 = vld [vmem:[%s0 + $0x268] sm:$0xff]
  %v93 = vld [vmem:[%s0 + $0x270] sm:$0xff]
  %v94 = vld [vmem:[%s0 + $0x278] sm:$0xff]
  %v95 = vld [vmem:[%s0 + $0x280] sm:$0xff]
  %v96 = vld [vmem:[%s0 + $0x288] sm:$0xff]
  %v97 = vld [vmem:[%s0 + $0x290] sm:$0xff]
  %v98 = vld [vmem:[%s0 + $0x298] sm:$0xff]
  %v99 = vld [vmem:[%s0 + $0x2a0] sm:$0xff]
  %v100 = vld [vmem:[%s0 + $0x2a8] sm:$0xff]
  %v101 = vld [vmem:[%s0 + $0x2b0] sm:$0xff]
  %v102 = vld [vmem:[%s0 + $0x2b8] sm:$0xff]
  %v103 = vld [vmem:[%s0 + $0x2c0] sm:$0xff]
  %v104 = vld [vmem:[%s0 + $0x2c8] sm:$0xff]
  %v105 = vld [vmem:[%s0 + $0x2d0] sm:$0xff]
  %v106 = vld [vmem:[%s0 + $0x2d8] sm:$0xff]
  %v107 = vld [vmem:[%s0 + $0x2e0] sm:$0xff]
  %v108 = vld [vmem:[%s0 + $0x2e8] sm:$0xff]
  %v109 = vld [vmem:[%s0 + $0x2f0] sm:$0xff]
  %v110 = vld [vmem:[%s0 + $0x2f8] sm:$0xff]
  %v111 = vld [vmem:[%s0 + $0x300] sm:$0xff]
  %v112 = vld [vmem:[%s0 + $0x308] sm:$0xff]
  %v113 = vld [vmem:[%s0 + $0x310] sm:$0xff]
  %v114 = vld [vmem:[%s0 + $0x318] sm:$0xff]
  %v115 = vld [vmem:[%s0 + $0x320] sm:$0xff]
  %v116 = vld [vmem:[%s0 + $0x328] sm:$0xff]
  %v117 = vld [vmem:[%s0 + $0x330] sm:$0xff]
  %v118 = vld [vmem:[%s0 + $0x338] sm:$0xff]
  %v119 = vld [vmem:[%s0 + $0x340] sm:$0xff]
  %v120 = vld [vmem:[%s0 + $0x348] sm:$0xff]
  %v121 = vld [vmem:[%s0 + $0x350] sm:$0xff]
  %v122 = vld [vmem:[%s0 + $0x358] sm:$0xff]
  %v123 = vld [vmem:[%s0 + $0x360] sm:$0xff]
  %v124 = vld [vmem:[%s0 + $0x368] sm:$0xff]
  %v125 = vld [vmem:[%s0 + $0x370] sm:$0xff]
  %v126 = vld [vmem:[%s0 + $0x378] sm:$0xff]
  %v127 = vld [vmem:[%s0 + $0x380] sm:$0xff]
  %v128 = vld [vmem:[%s0 + $0x388] sm:$0xff]
  %v129 = vld [vmem:[%s0 + $0x390] sm:$0xff]
  %v130 = vld [vmem:[%s0 + $0x398] sm:$0xff]
  %v131 = vld [vmem:[%s0 + $0x3a0] sm:$0xff]
  %v132 = vld [vmem:[%s0 + $0x3a8] sm:$0xff]
  %v133 = vld [vmem:[%s0 + $0x3b0] sm:$0xff]
  %v134 = vld [vmem:[%s0 + $0x3b8] sm:$0xff]
  %v135 = vld [vmem:[%s0 + $0x3c0] sm:$0xff]
  %v136 = vld [vmem:[%s0 + $0x3c8] sm:$0xff]
  %v137 = vld [vmem:[%s0 + $0x3d0] sm:$0xff]
  %v138 = vld [vmem:[%s0 + $0x3d8] sm:$0xff]
  %v139 = vld [vmem:[%s0 + $0x3e0] sm:$0xff]
  %v140 = vld [vmem:[%s0 + $0x3e8] sm:$0xff]
  %v141 = vld [vmem:[%s0 + $0x3f0] sm:$0xff]
  %v142 = vld [vmem:[%s0 + $0x3f8] sm:$0xff]
  %v143 = vld [vmem:[%s0 + $0x400] sm:$0xff]
  %v144 = vld [vmem:[%s0 + $0x408] sm:$0xff]
  %v145 = vld [vmem:[%s0 + $0x410] sm:$0xff]
  %v146 = vld [vmem:[%s0 + $0x418] sm:$0xff]
  %v147 = vld [vmem:[%s0 + $0x420] sm:$0xff]
  %v148 = vld [vmem:[%s0 + $0x428] sm:$0xff]
  %v149 = vld [vmem:[%s0 + $0x430] sm:$0xff]
  %v150 = vld [vmem:[%s0 + $0x438] sm:$0xff]
  %v151 = vld [vmem:[%s0 + $0x440] sm:$0xff]
  %v152 = vld [vmem:[%s0 + $0x448] sm:$0xff]
  %v153 = vld [vmem:[%s0 + $0x450] sm:$0xff]
  %v154 = vld [vmem:[%s0 + $0x458] sm:$0xff]
  %v155 = vld [vmem:[%s0 + $0x460] sm:$0xff]
  %v156 = vld [vmem:[%s0 + $0x468] sm:$0xff]
  %v157 = vld [vmem:[%s0 + $0x470] sm:$0xff]
  %v158 = vld [vmem:[%s0 + $0x478] sm:$0xff]
  %v159 = vld [vmem:[%s0 + $0x480] sm:$0xff]
  %v160 = vld [vmem:[%s0 + $0x488] sm:$0xff]
  %v161 = vld [vmem:[%s0 + $0x490] sm:$0xff]
  %v162 = vld [vmem:[%s0 + $0x498] sm:$0xff]
  %v163 = vld [vmem:[%s0 + $0x4a0] sm:$0xff]
  %v164 = vld [vmem:[%s0 + $0x4a8] sm:$0xff]
  %v165 = vld [vmem:[%s0 + $0x4b0] sm:$0xff]
  %v166 = vld [vmem:[%s0 + $0x4b8] sm:$0xff]
  %v167 = vld [vmem:[%s0 + $0x4c0] sm:$0xff]
  %v168 = vld [vmem:[%s0 + $0x4c8] sm:$0xff]
  %v169 = vld [vmem:[%s0 + $0x4d0] sm:$0xff]
  %v170 = vld [vmem:[%s0 + $0x4d8] sm:$0xff]
  %v171 = vld [vmem:[%s0 + $0x4e0] sm:$0xff]
  %v172 = vld [vmem:[%s0 + $0x4e8] sm:$0xff]
  %v173 = vld [vmem:[%s0 + $0x4f0] sm:$0xff]
  %v174 = vld [vmem:[%s0 + $0x4f8] sm:$0xff]
  %v175 = vld [vmem:[%s0 + $0x500] sm:$0xff]
  %v176 = vld [vmem:[%s0 + $0x508] sm:$0xff]
  %v177 = vld [vmem:[%s0 + $0x510] sm:$0xff]
  %v178 = vld [vmem:[%s0 + $0x518] sm:$0xff]
  %v179 = vld [vmem:[%s0 + $0x520] sm:$0xff]
  %v180 = vld [vmem:[%s0 + $0x528] sm:$0xff]
  %v181 = vld [vmem:[%s0 + $0x530] sm:$0xff]
  %v182 = vld [vmem:[%s0 + $0x538] sm:$0xff]
  %v183 = vld [vmem:[%s0 + $0x540] sm:$0xff]
  %v184 = vld [vmem:[%s0 + $0x548] sm:$0xff]
  %v185 = vld [vmem:[%s0 + $0x550] sm:$0xff]
  %v186 = vld [vmem:[%s0 + $0x558] sm:$0xff]
  %v187 = vld [vmem:[%s0 + $0x560] sm:$0xff]
  %v188 = vld [vmem:[%s0 + $0x568] sm:$0xff]
  %v189 = vld [vmem:[%s0 + $0x570] sm:$0xff]
  %v190 = vld [vmem:[%s0 + $0x578] sm:$0xff]
  %v191 = vld [vmem:[%s0 + $0x580] sm:$0xff]
  %v192 = vld [vmem:[%s0 + $0x588] sm:$0xff]
  %v193 = vld [vmem:[%s0 + $0x590] sm:$0xff]
  %v194 = vld [vmem:[%s0 + $0x598] sm:$0xff]
  %v195 = vld [vmem:[%s0 + $0x5a0] sm:$0xff]
  %v196 = vld [vmem:[%s0 + $0x5a8] sm:$0xff]
  %v197 = vld [vmem:[%s0 + $0x5b0] sm:$0xff]
  %v198 = vld [vmem:[%s0 + $0x5b8] sm:$0xff]
  %v199 = vld [vmem:[%s0 + $0x5c0] sm:$0xff]
  %v200 = vld [vmem:[%s0 + $0x5c8] sm:$0xff]
  %v201 = vld [vmem:[%s0 + $0x5d0] sm:$0xff]
  %v202 = vld [vmem:[%s0 + $0x5d8] sm:$0xff]
  %v203 = vld [vmem:[%s0 + $0x5e0] sm:$0xff]
  %v204 = vld [vmem:[%s0 + $0x5e8] sm:$0xff]
  %v205 = vld [vmem:[%s0 + $0x5f0] sm:$0xff]
  %v206 = vld [vmem:[%s0 + $0x5f8] sm:$0xff]
  %v207 = vld [vmem:[%s0 + $0x600] sm:$0xff]
  %v208 = vld [vmem:[%s0 + $0x608] sm:$0xff]
  %v209 = vld [vmem:[%s0 + $0x610] sm:$0xff]
  %v210 = vld [vmem:[%s0 + $0x618] sm:$0xff]
  %v211 = vld [vmem:[%s0 + $0x620] sm:$0xff]
  %v212 = vld [vmem:[%s0 + $0x628] sm:$0xff]
  %v213 = vld [vmem:[%s0 + $0x630] sm:$0xff]
  %v214 = vld [vmem:[%s0 + $0x638] sm:$0xff]
  %v215 = vld [vmem:[%s0 + $0x640] sm:$0xff]
  %v216 = vld [vmem:[%s0 + $0x648] sm:$0xff]
  %v217 = vld [vmem:[%s0 + $0x650] sm:$0xff]
  %v218 = vld [vmem:[%s0 + $0x658] sm:$0xff]
  %v219 = vld [vmem:[%s0 + $0x660] sm:$0xff]
  %v220 = vld [vmem:[%s0 + $0x668] sm:$0xff]
  %v221 = vld [vmem:[%s0 + $0x670] sm:$0xff]
  %v222 = vld [vmem:[%s0 + $0x678] sm:$0xff]
  %v223 = vld [vmem:[%s0 + $0x680] sm:$0xff]
  %v224 = vld [vmem:[%s0 + $0x688] sm:$0xff]
  %v225 = vld [vmem:[%s0 + $0x690] sm:$0xff]
  %v226 = vld [vmem:[%s0 + $0x698] sm:$0xff]
  %v227 = vld [vmem:[%s0 + $0x6a0] sm:$0xff]
  %v228 = vld [vmem:[%s0 + $0x6a8] sm:$0xff]
  %v229 = vld [vmem:[%s0 + $0x6b0] sm:$0xff]
  %v230 = vld [vmem:[%s0 + $0x6b8] sm:$0xff]
  %v231 = vld [vmem:[%s0 + $0x6c0] sm:$0x11]
  %v232 = vld [vmem:[%s0 + $0x6c8] sm:$0x11]
  %v233 = vld [vmem:[%s0 + $0x6d0] sm:$0x11]
  %v234 = vld [vmem:[%s1] sm:$0xf]
  %v235 = vld [vmem:[%s1 + $0x4] sm:$0xf]
  %v236 = vld [vmem:[%s1 + $0x8] sm:$0xf]
  %v237 = vld [vmem:[%s1 + $0xc] sm:$0xf]
  %v238 = vld [vmem:[%s1 + $0x10] sm:$0xf]
  %v239 = vld [vmem:[%s1 + $0x14] sm:$0xf]
  %v240 = vld [vmem:[%s1 + $0x18] sm:$0xf]
  %v241 = vld [vmem:[%s1 + $0x1c] sm:$0xf]
  %v242 = vld [vmem:[%s1 + $0x20] sm:$0xf]
  %v243 = vld [vmem:[%s1 + $0x24] sm:$0xf]
  %v244 = vld [vmem:[%s1 + $0x28] sm:$0xf]
  %v245 = vld [vmem:[%s1 + $0x2c] sm:$0xf]
  %v246 = vld [vmem:[%s1 + $0x30] sm:$0xf]
  %v247 = vld [vmem:[%s1 + $0x34] sm:$0xf]
  %v248 = vld [vmem:[%s1 + $0x38] sm:$0xf]
  %v249 = vld [vmem:[%s1 + $0x3c] sm:$0xf]
  %v250 = vld [vmem:[%s1 + $0x40] sm:$0xf]
  %v251 = vld [vmem:[%s1 + $0x44] sm:$0xf]
  %v252 = vld [vmem:[%s1 + $0x48] sm:$0xf]
  %v253 = vld [vmem:[%s1 + $0x4c] sm:$0xf]
  %v254 = vld [vmem:[%s1 + $0x50] sm:$0xf]
  %v255 = vld [vmem:[%s1 + $0x54] sm:$0xf]
  %v256 = vld [vmem:[%s1 + $0x58] sm:$0xf]
  %v257 = vld [vmem:[%s1 + $0x5c] sm:$0xf]
  %v258 = vld [vmem:[%s1 + $0x60] sm:$0xf]
  %v259 = vld [vmem:[%s1 + $0x64] sm:$0xf]
  %v260 = vld [vmem:[%s1 + $0x68] sm:$0xf]
  %v261 = vld [vmem:[%s1 + $0x6c] sm:$0xf]
  %v262 = vld [vmem:[%s1 + $0x70] sm:$0xf]
  %v263 = vld [vmem:[%s1 + $0x74] sm:$0xf]
  %v264 = vld [vmem:[%s1 + $0x78] sm:$0xf]
  %v265 = vld [vmem:[%s1 + $0x7c] sm:$0xf]
  %v266 = vld [vmem:[%s1 + $0x80] sm:$0xf]
  %v267 = vld [vmem:[%s1 + $0x84] sm:$0xf]
  %v268 = vld [vmem:[%s1 + $0x88] sm:$0xf]
  %v269 = vld [vmem:[%s1 + $0x8c] sm:$0xf]
  %v270 = vld [vmem:[%s1 + $0x90] sm:$0xf]
  %v271 = vld [vmem:[%s1 + $0x94] sm:$0xf]
  %v272 = vld [vmem:[%s1 + $0x98] sm:$0xf]
  %v273 = vld [vmem:[%s1 + $0x9c] sm:$0xf]
  %v274 = vld [vmem:[%s1 + $0xa0] sm:$0xf]
  %v275 = vld [vmem:[%s1 + $0xa4] sm:$0xf]
  %v276 = vld [vmem:[%s1 + $0xa8] sm:$0xf]
  %v277 = vld [vmem:[%s1 + $0xac] sm:$0xf]
  %v278 = vld [vmem:[%s1 + $0xb0] sm:$0xf]
  %v279 = vld [vmem:[%s1 + $0xb4] sm:$0xf]
  %v280 = vld [vmem:[%s1 + $0xb8] sm:$0xf]
  %v281 = vld [vmem:[%s1 + $0xbc] sm:$0xf]
  %v282 = vld [vmem:[%s1 + $0xc0] sm:$0xf]
  %v283 = vld [vmem:[%s1 + $0xc4] sm:$0xf]
  %v284 = vld [vmem:[%s1 + $0xc8] sm:$0xf]
  %v285 = vld [vmem:[%s1 + $0xcc] sm:$0xf]
  %v286 = vld [vmem:[%s1 + $0xd0] sm:$0xf]
  %v287 = vld [vmem:[%s1 + $0xd4] sm:$0xf]
  %v288 = vld [vmem:[%s1 + $0xd8] sm:$0xf]
  %v289 = vld [vmem:[%s1 + $0xdc] sm:$0xf]
  %v290 = vld [vmem:[%s1 + $0xe0] sm:$0xf]
  %v291 = vld [vmem:[%s1 + $0xe4] sm:$0xf]
  %v292 = vld [vmem:[%s1 + $0xe8] sm:$0xf]
  %v293 = vld [vmem:[%s1 + $0xec] sm:$0xf]
  %v294 = vld [vmem:[%s1 + $0xf0] sm:$0xf]
  %v295 = vld [vmem:[%s1 + $0xf4] sm:$0xf]
  %v296 = vld [vmem:[%s1 + $0xf8] sm:$0xf]
  %v297 = vld [vmem:[%s1 + $0xfc] sm:$0xf]
  %v298 = vld [vmem:[%s1 + $0x100] sm:$0xf]
  %v299 = vld [vmem:[%s1 + $0x104] sm:$0xf]
  %v300 = vld [vmem:[%s1 + $0x108] sm:$0xf]
  %v301 = vld [vmem:[%s1 + $0x10c] sm:$0xf]
  %v302 = vld [vmem:[%s1 + $0x110] sm:$0xf]
  %v303 = vld [vmem:[%s1 + $0x114] sm:$0xf]
  %v304 = vld [vmem:[%s1 + $0x118] sm:$0xf]
  %v305 = vld [vmem:[%s1 + $0x11c] sm:$0xf]
  %v306 = vld [vmem:[%s1 + $0x120] sm:$0xf]
  %v307 = vld [vmem:[%s1 + $0x124] sm:$0xf]
  %v308 = vld [vmem:[%s1 + $0x128] sm:$0xf]
  %v309 = vld [vmem:[%s1 + $0x12c] sm:$0xf]
  %v310 = vld [vmem:[%s1 + $0x130] sm:$0xf]
  %v311 = vld [vmem:[%s1 + $0x134] sm:$0xf]
  %v312 = vld [vmem:[%s1 + $0x138] sm:$0xf]
  %v313 = vld [vmem:[%s1 + $0x13c] sm:$0xf]
  %v314 = vld [vmem:[%s1 + $0x140] sm:$0xf]
  %v315 = vld [vmem:[%s2] sm:$0x1]
  %v317 = vlaneseq
  %v318 = vshrl.u32 %v317, 7
  %v319 = vsub.s32 0, %v318
  %v320 = vrot.slane %v315, %v319
  %v541 = vunpack.c.l.b16 %v15
  %v542 = vunpack.c.h.b16 %v15
  %v543 = vunpack.c.l.b16 %v16
  %v544 = vunpack.c.h.b16 %v16
  %v545 = vunpack.c.l.b16 %v17
  %v546 = vunpack.c.h.b16 %v17
  %v547 = vunpack.c.l.b16 %v18
  %v548 = vunpack.c.h.b16 %v18
  %v549 = vunpack.c.l.b16 %v19
  %v550 = vunpack.c.h.b16 %v19
  %v551 = vunpack.c.l.b16 %v20
  %v552 = vunpack.c.h.b16 %v20
  %v553 = vunpack.c.l.b16 %v21
  %v554 = vunpack.c.h.b16 %v21
  %v555 = vunpack.c.l.b16 %v22
  %v556 = vunpack.c.h.b16 %v22
  %v557 = vunpack.c.l.b16 %v23
  %v558 = vunpack.c.h.b16 %v23
  %v559 = vunpack.c.l.b16 %v24
  %v560 = vunpack.c.h.b16 %v24
  %v561 = vunpack.c.l.b16 %v25
  %v562 = vunpack.c.h.b16 %v25
  %v563 = vunpack.c.l.b16 %v26
  %v564 = vunpack.c.h.b16 %v26
  %v565 = vunpack.c.l.b16 %v27
  %v566 = vunpack.c.h.b16 %v27
  %v567 = vunpack.c.l.b16 %v28
  %v568 = vunpack.c.h.b16 %v28
  %v569 = vunpack.c.l.b16 %v29
  %v570 = vunpack.c.h.b16 %v29
  %v571 = vunpack.c.l.b16 %v30
  %v572 = vunpack.c.h.b16 %v30
  %v573 = vunpack.c.l.b16 %v31
  %v574 = vunpack.c.h.b16 %v31
  %v575 = vunpack.c.l.b16 %v32
  %v576 = vunpack.c.h.b16 %v32
  %v577 = vunpack.c.l.b16 %v33
  %v578 = vunpack.c.h.b16 %v33
  %v579 = vunpack.c.l.b16 %v34
  %v580 = vunpack.c.h.b16 %v34
  %v581 = vunpack.c.l.b16 %v35
  %v582 = vunpack.c.h.b16 %v35
  %v583 = vunpack.c.l.b16 %v36
  %v584 = vunpack.c.h.b16 %v36
  %v585 = vunpack.c.l.b16 %v37
  %v586 = vunpack.c.h.b16 %v37
  %v587 = vunpack.c.l.b16 %v38
  %v588 = vunpack.c.h.b16 %v38
  %v589 = vunpack.c.l.b16 %v39
  %v590 = vunpack.c.h.b16 %v39
  %v591 = vunpack.c.l.b16 %v40
  %v592 = vunpack.c.h.b16 %v40
  %v593 = vunpack.c.l.b16 %v41
  %v594 = vunpack.c.h.b16 %v41
  %v595 = vunpack.c.l.b16 %v42
  %v596 = vunpack.c.h.b16 %v42
  %v597 = vunpack.c.l.b16 %v43
  %v598 = vunpack.c.h.b16 %v43
  %v599 = vunpack.c.l.b16 %v44
  %v600 = vunpack.c.h.b16 %v44
  %v601 = vunpack.c.l.b16 %v45
  %v602 = vunpack.c.h.b16 %v45
  %v603 = vunpack.c.l.b16 %v46
  %v604 = vunpack.c.h.b16 %v46
  %v605 = vunpack.c.l.b16 %v47
  %v606 = vunpack.c.h.b16 %v47
  %v607 = vunpack.c.l.b16 %v48
  %v608 = vunpack.c.h.b16 %v48
  %v609 = vunpack.c.l.b16 %v49
  %v610 = vunpack.c.h.b16 %v49
  %v611 = vunpack.c.l.b16 %v50
  %v612 = vunpack.c.h.b16 %v50
  %v613 = vunpack.c.l.b16 %v51
  %v614 = vunpack.c.h.b16 %v51
  %v615 = vunpack.c.l.b16 %v52
  %v616 = vunpack.c.h.b16 %v52
  %v617 = vunpack.c.l.b16 %v53
  %v618 = vunpack.c.h.b16 %v53
  %v619 = vunpack.c.l.b16 %v54
  %v620 = vunpack.c.h.b16 %v54
  %v621 = vunpack.c.l.b16 %v55
  %v622 = vunpack.c.h.b16 %v55
  %v623 = vunpack.c.l.b16 %v56
  %v624 = vunpack.c.h.b16 %v56
  %v625 = vunpack.c.l.b16 %v57
  %v626 = vunpack.c.h.b16 %v57
  %v627 = vunpack.c.l.b16 %v58
  %v628 = vunpack.c.h.b16 %v58
  %v629 = vunpack.c.l.b16 %v59
  %v630 = vunpack.c.h.b16 %v59
  %v631 = vunpack.c.l.b16 %v60
  %v632 = vunpack.c.h.b16 %v60
  %v633 = vunpack.c.l.b16 %v61
  %v634 = vunpack.c.h.b16 %v61
  %v635 = vunpack.c.l.b16 %v62
  %v636 = vunpack.c.h.b16 %v62
  %v637 = vunpack.c.l.b16 %v63
  %v638 = vunpack.c.h.b16 %v63
  %v639 = vunpack.c.l.b16 %v64
  %v640 = vunpack.c.h.b16 %v64
  %v641 = vunpack.c.l.b16 %v65
  %v642 = vunpack.c.h.b16 %v65
  %v643 = vunpack.c.l.b16 %v66
  %v644 = vunpack.c.h.b16 %v66
  %v645 = vunpack.c.l.b16 %v67
  %v646 = vunpack.c.h.b16 %v67
  %v647 = vunpack.c.l.b16 %v68
  %v648 = vunpack.c.h.b16 %v68
  %v649 = vunpack.c.l.b16 %v69
  %v650 = vunpack.c.h.b16 %v69
  %v651 = vunpack.c.l.b16 %v70
  %v652 = vunpack.c.h.b16 %v70
  %v653 = vunpack.c.l.b16 %v71
  %v654 = vunpack.c.h.b16 %v71
  %v655 = vunpack.c.l.b16 %v72
  %v656 = vunpack.c.h.b16 %v72
  %v657 = vunpack.c.l.b16 %v73
  %v658 = vunpack.c.h.b16 %v73
  %v659 = vunpack.c.l.b16 %v74
  %v660 = vunpack.c.h.b16 %v74
  %v661 = vunpack.c.l.b16 %v75
  %v662 = vunpack.c.h.b16 %v75
  %v663 = vunpack.c.l.b16 %v76
  %v664 = vunpack.c.h.b16 %v76
  %v665 = vunpack.c.l.b16 %v77
  %v666 = vunpack.c.h.b16 %v77
  %v667 = vunpack.c.l.b16 %v78
  %v668 = vunpack.c.h.b16 %v78
  %v669 = vunpack.c.l.b16 %v79
  %v670 = vunpack.c.h.b16 %v79
  %v671 = vunpack.c.l.b16 %v80
  %v672 = vunpack.c.h.b16 %v80
  %v673 = vunpack.c.l.b16 %v81
  %v674 = vunpack.c.h.b16 %v81
  %v675 = vunpack.c.l.b16 %v82
  %v676 = vunpack.c.h.b16 %v82
  %v677 = vunpack.c.l.b16 %v83
  %v678 = vunpack.c.h.b16 %v83
  %v679 = vunpack.c.l.b16 %v84
  %v680 = vunpack.c.h.b16 %v84
  %v681 = vunpack.c.l.b16 %v85
  %v682 = vunpack.c.h.b16 %v85
  %v683 = vunpack.c.l.b16 %v86
  %v684 = vunpack.c.h.b16 %v86
  %v685 = vunpack.c.l.b16 %v87
  %v686 = vunpack.c.h.b16 %v87
  %v687 = vunpack.c.l.b16 %v88
  %v688 = vunpack.c.h.b16 %v88
  %v689 = vunpack.c.l.b16 %v89
  %v690 = vunpack.c.h.b16 %v89
  %v691 = vunpack.c.l.b16 %v90
  %v692 = vunpack.c.h.b16 %v90
  %v693 = vunpack.c.l.b16 %v91
  %v694 = vunpack.c.h.b16 %v91
  %v695 = vunpack.c.l.b16 %v92
  %v696 = vunpack.c.h.b16 %v92
  %v697 = vunpack.c.l.b16 %v93
  %v698 = vunpack.c.h.b16 %v93
  %v699 = vunpack.c.l.b16 %v94
  %v700 = vunpack.c.h.b16 %v94
  %v701 = vunpack.c.l.b16 %v95
  %v702 = vunpack.c.h.b16 %v95
  %v703 = vunpack.c.l.b16 %v96
  %v704 = vunpack.c.h.b16 %v96
  %v705 = vunpack.c.l.b16 %v97
  %v706 = vunpack.c.h.b16 %v97
  %v707 = vunpack.c.l.b16 %v98
  %v708 = vunpack.c.h.b16 %v98
  %v709 = vunpack.c.l.b16 %v99
  %v710 = vunpack.c.h.b16 %v99
  %v711 = vunpack.c.l.b16 %v100
  %v712 = vunpack.c.h.b16 %v100
  %v713 = vunpack.c.l.b16 %v101
  %v714 = vunpack.c.h.b16 %v101
  %v715 = vunpack.c.l.b16 %v102
  %v716 = vunpack.c.h.b16 %v102
  %v717 = vunpack.c.l.b16 %v103
  %v718 = vunpack.c.h.b16 %v103
  %v719 = vunpack.c.l.b16 %v104
  %v720 = vunpack.c.h.b16 %v104
  %v721 = vunpack.c.l.b16 %v105
  %v722 = vunpack.c.h.b16 %v105
  %v723 = vunpack.c.l.b16 %v106
  %v724 = vunpack.c.h.b16 %v106
  %v725 = vunpack.c.l.b16 %v107
  %v726 = vunpack.c.h.b16 %v107
  %v727 = vunpack.c.l.b16 %v108
  %v728 = vunpack.c.h.b16 %v108
  %v729 = vunpack.c.l.b16 %v109
  %v730 = vunpack.c.h.b16 %v109
  %v731 = vunpack.c.l.b16 %v110
  %v732 = vunpack.c.h.b16 %v110
  %v733 = vunpack.c.l.b16 %v111
  %v734 = vunpack.c.h.b16 %v111
  %v735 = vunpack.c.l.b16 %v112
  %v736 = vunpack.c.h.b16 %v112
  %v737 = vunpack.c.l.b16 %v113
  %v738 = vunpack.c.h.b16 %v113
  %v739 = vunpack.c.l.b16 %v114
  %v740 = vunpack.c.h.b16 %v114
  %v741 = vunpack.c.l.b16 %v115
  %v742 = vunpack.c.h.b16 %v115
  %v743 = vunpack.c.l.b16 %v116
  %v744 = vunpack.c.h.b16 %v116
  %v745 = vunpack.c.l.b16 %v117
  %v746 = vunpack.c.h.b16 %v117
  %v747 = vunpack.c.l.b16 %v118
  %v748 = vunpack.c.h.b16 %v118
  %v749 = vunpack.c.l.b16 %v119
  %v750 = vunpack.c.h.b16 %v119
  %v751 = vunpack.c.l.b16 %v120
  %v752 = vunpack.c.h.b16 %v120
  %v753 = vunpack.c.l.b16 %v121
  %v754 = vunpack.c.h.b16 %v121
  %v755 = vunpack.c.l.b16 %v122
  %v756 = vunpack.c.h.b16 %v122
  %v757 = vunpack.c.l.b16 %v123
  %v758 = vunpack.c.h.b16 %v123
  %v759 = vunpack.c.l.b16 %v124
  %v760 = vunpack.c.h.b16 %v124
  %v761 = vunpack.c.l.b16 %v125
  %v762 = vunpack.c.h.b16 %v125
  %v763 = vunpack.c.l.b16 %v126
  %v764 = vunpack.c.h.b16 %v126
  %v765 = vunpack.c.l.b16 %v127
  %v766 = vunpack.c.h.b16 %v127
  %v767 = vunpack.c.l.b16 %v128
  %v768 = vunpack.c.h.b16 %v128
  %v769 = vunpack.c.l.b16 %v129
  %v770 = vunpack.c.h.b16 %v129
  %v771 = vunpack.c.l.b16 %v130
  %v772 = vunpack.c.h.b16 %v130
  %v773 = vunpack.c.l.b16 %v131
  %v774 = vunpack.c.h.b16 %v131
  %v775 = vunpack.c.l.b16 %v132
  %v776 = vunpack.c.h.b16 %v132
  %v777 = vunpack.c.l.b16 %v133
  %v778 = vunpack.c.h.b16 %v133
  %v779 = vunpack.c.l.b16 %v134
  %v780 = vunpack.c.h.b16 %v134
  %v781 = vunpack.c.l.b16 %v135
  %v782 = vunpack.c.h.b16 %v135
  %v783 = vunpack.c.l.b16 %v136
  %v784 = vunpack.c.h.b16 %v136
  %v785 = vunpack.c.l.b16 %v137
  %v786 = vunpack.c.h.b16 %v137
  %v787 = vunpack.c.l.b16 %v138
  %v788 = vunpack.c.h.b16 %v138
  %v789 = vunpack.c.l.b16 %v139
  %v790 = vunpack.c.h.b16 %v139
  %v791 = vunpack.c.l.b16 %v140
  %v792 = vunpack.c.h.b16 %v140
  %v793 = vunpack.c.l.b16 %v141
  %v794 = vunpack.c.h.b16 %v141
  %v795 = vunpack.c.l.b16 %v142
  %v796 = vunpack.c.h.b16 %v142
  %v797 = vunpack.c.l.b16 %v143
  %v798 = vunpack.c.h.b16 %v143
  %v799 = vunpack.c.l.b16 %v144
  %v800 = vunpack.c.h.b16 %v144
  %v801 = vunpack.c.l.b16 %v145
  %v802 = vunpack.c.h.b16 %v145
  %v803 = vunpack.c.l.b16 %v146
  %v804 = vunpack.c.h.b16 %v146
  %v805 = vunpack.c.l.b16 %v147
  %v806 = vunpack.c.h.b16 %v147
  %v807 = vunpack.c.l.b16 %v148
  %v808 = vunpack.c.h.b16 %v148
  %v809 = vunpack.c.l.b16 %v149
  %v810 = vunpack.c.h.b16 %v149
  %v811 = vunpack.c.l.b16 %v150
  %v812 = vunpack.c.h.b16 %v150
  %v813 = vunpack.c.l.b16 %v151
  %v814 = vunpack.c.h.b16 %v151
  %v815 = vunpack.c.l.b16 %v152
  %v816 = vunpack.c.h.b16 %v152
  %v817 = vunpack.c.l.b16 %v153
  %v818 = vunpack.c.h.b16 %v153
  %v819 = vunpack.c.l.b16 %v154
  %v820 = vunpack.c.h.b16 %v154
  %v821 = vunpack.c.l.b16 %v155
  %v822 = vunpack.c.h.b16 %v155
  %v823 = vunpack.c.l.b16 %v156
  %v824 = vunpack.c.h.b16 %v156
  %v825 = vunpack.c.l.b16 %v157
  %v826 = vunpack.c.h.b16 %v157
  %v827 = vunpack.c.l.b16 %v158
  %v828 = vunpack.c.h.b16 %v158
  %v829 = vunpack.c.l.b16 %v159
  %v830 = vunpack.c.h.b16 %v159
  %v831 = vunpack.c.l.b16 %v160
  %v832 = vunpack.c.h.b16 %v160
  %v833 = vunpack.c.l.b16 %v161
  %v834 = vunpack.c.h.b16 %v161
  %v835 = vunpack.c.l.b16 %v162
  %v836 = vunpack.c.h.b16 %v162
  %v837 = vunpack.c.l.b16 %v163
  %v838 = vunpack.c.h.b16 %v163
  %v839 = vunpack.c.l.b16 %v164
  %v840 = vunpack.c.h.b16 %v164
  %v841 = vunpack.c.l.b16 %v165
  %v842 = vunpack.c.h.b16 %v165
  %v843 = vunpack.c.l.b16 %v166
  %v844 = vunpack.c.h.b16 %v166
  %v845 = vunpack.c.l.b16 %v167
  %v846 = vunpack.c.h.b16 %v167
  %v847 = vunpack.c.l.b16 %v168
  %v848 = vunpack.c.h.b16 %v168
  %v849 = vunpack.c.l.b16 %v169
  %v850 = vunpack.c.h.b16 %v169
  %v851 = vunpack.c.l.b16 %v170
  %v852 = vunpack.c.h.b16 %v170
  %v853 = vunpack.c.l.b16 %v171
  %v854 = vunpack.c.h.b16 %v171
  %v855 = vunpack.c.l.b16 %v172
  %v856 = vunpack.c.h.b16 %v172
  %v857 = vunpack.c.l.b16 %v173
  %v858 = vunpack.c.h.b16 %v173
  %v859 = vunpack.c.l.b16 %v174
  %v860 = vunpack.c.h.b16 %v174
  %v861 = vunpack.c.l.b16 %v175
  %v862 = vunpack.c.h.b16 %v175
  %v863 = vunpack.c.l.b16 %v176
  %v864 = vunpack.c.h.b16 %v176
  %v865 = vunpack.c.l.b16 %v177
  %v866 = vunpack.c.h.b16 %v177
  %v867 = vunpack.c.l.b16 %v178
  %v868 = vunpack.c.h.b16 %v178
  %v869 = vunpack.c.l.b16 %v179
  %v870 = vunpack.c.h.b16 %v179
  %v871 = vunpack.c.l.b16 %v180
  %v872 = vunpack.c.h.b16 %v180
  %v873 = vunpack.c.l.b16 %v181
  %v874 = vunpack.c.h.b16 %v181
  %v875 = vunpack.c.l.b16 %v182
  %v876 = vunpack.c.h.b16 %v182
  %v877 = vunpack.c.l.b16 %v183
  %v878 = vunpack.c.h.b16 %v183
  %v879 = vunpack.c.l.b16 %v184
  %v880 = vunpack.c.h.b16 %v184
  %v881 = vunpack.c.l.b16 %v185
  %v882 = vunpack.c.h.b16 %v185
  %v883 = vunpack.c.l.b16 %v186
  %v884 = vunpack.c.h.b16 %v186
  %v885 = vunpack.c.l.b16 %v187
  %v886 = vunpack.c.h.b16 %v187
  %v887 = vunpack.c.l.b16 %v188
  %v888 = vunpack.c.h.b16 %v188
  %v889 = vunpack.c.l.b16 %v189
  %v890 = vunpack.c.h.b16 %v189
  %v891 = vunpack.c.l.b16 %v190
  %v892 = vunpack.c.h.b16 %v190
  %v893 = vunpack.c.l.b16 %v191
  %v894 = vunpack.c.h.b16 %v191
  %v895 = vunpack.c.l.b16 %v192
  %v896 = vunpack.c.h.b16 %v192
  %v897 = vunpack.c.l.b16 %v193
  %v898 = vunpack.c.h.b16 %v193
  %v899 = vunpack.c.l.b16 %v194
  %v900 = vunpack.c.h.b16 %v194
  %v901 = vunpack.c.l.b16 %v195
  %v902 = vunpack.c.h.b16 %v195
  %v903 = vunpack.c.l.b16 %v196
  %v904 = vunpack.c.h.b16 %v196
  %v905 = vunpack.c.l.b16 %v197
  %v906 = vunpack.c.h.b16 %v197
  %v907 = vunpack.c.l.b16 %v198
  %v908 = vunpack.c.h.b16 %v198
  %v909 = vunpack.c.l.b16 %v199
  %v910 = vunpack.c.h.b16 %v199
  %v911 = vunpack.c.l.b16 %v200
  %v912 = vunpack.c.h.b16 %v200
  %v913 = vunpack.c.l.b16 %v201
  %v914 = vunpack.c.h.b16 %v201
  %v915 = vunpack.c.l.b16 %v202
  %v916 = vunpack.c.h.b16 %v202
  %v917 = vunpack.c.l.b16 %v203
  %v918 = vunpack.c.h.b16 %v203
  %v919 = vunpack.c.l.b16 %v204
  %v920 = vunpack.c.h.b16 %v204
  %v921 = vunpack.c.l.b16 %v205
  %v922 = vunpack.c.h.b16 %v205
  %v923 = vunpack.c.l.b16 %v206
  %v924 = vunpack.c.h.b16 %v206
  %v925 = vunpack.c.l.b16 %v207
  %v926 = vunpack.c.h.b16 %v207
  %v927 = vunpack.c.l.b16 %v208
  %v928 = vunpack.c.h.b16 %v208
  %v929 = vunpack.c.l.b16 %v209
  %v930 = vunpack.c.h.b16 %v209
  %v931 = vunpack.c.l.b16 %v210
  %v932 = vunpack.c.h.b16 %v210
  %v933 = vunpack.c.l.b16 %v211
  %v934 = vunpack.c.h.b16 %v211
  %v935 = vunpack.c.l.b16 %v212
  %v936 = vunpack.c.h.b16 %v212
  %v937 = vunpack.c.l.b16 %v213
  %v938 = vunpack.c.h.b16 %v213
  %v939 = vunpack.c.l.b16 %v214
  %v940 = vunpack.c.h.b16 %v214
  %v941 = vunpack.c.l.b16 %v215
  %v942 = vunpack.c.h.b16 %v215
  %v943 = vunpack.c.l.b16 %v216
  %v944 = vunpack.c.h.b16 %v216
  %v945 = vunpack.c.l.b16 %v217
  %v946 = vunpack.c.h.b16 %v217
  %v947 = vunpack.c.l.b16 %v218
  %v948 = vunpack.c.h.b16 %v218
  %v949 = vunpack.c.l.b16 %v219
  %v950 = vunpack.c.h.b16 %v219
  %v951 = vunpack.c.l.b16 %v220
  %v952 = vunpack.c.h.b16 %v220
  %v953 = vunpack.c.l.b16 %v221
  %v954 = vunpack.c.h.b16 %v221
  %v955 = vunpack.c.l.b16 %v222
  %v956 = vunpack.c.h.b16 %v222
  %v957 = vunpack.c.l.b16 %v223
  %v958 = vunpack.c.h.b16 %v223
  %v959 = vunpack.c.l.b16 %v224
  %v960 = vunpack.c.h.b16 %v224
  %v961 = vunpack.c.l.b16 %v225
  %v962 = vunpack.c.h.b16 %v225
  %v963 = vunpack.c.l.b16 %v226
  %v964 = vunpack.c.h.b16 %v226
  %v965 = vunpack.c.l.b16 %v227
  %v966 = vunpack.c.h.b16 %v227
  %v967 = vunpack.c.l.b16 %v228
  %v968 = vunpack.c.h.b16 %v228
  %v969 = vunpack.c.l.b16 %v229
  %v970 = vunpack.c.h.b16 %v229
  %v971 = vunpack.c.l.b16 %v230
  %v972 = vunpack.c.h.b16 %v230
  %v973 = vunpack.c.l.b16 %v231
  %v974 = vunpack.c.h.b16 %v231
  %v975 = vunpack.c.l.b16 %v232
  %v976 = vunpack.c.h.b16 %v232
  %v977 = vunpack.c.l.b16 %v233
  %v978 = vunpack.c.h.b16 %v233
  %v979 = vpack.c.b16 %v547, %v541
  %v980 = vpack.c.b16 %v548, %v542
  %v981 = vpack.c.b16 %v549, %v543
  %v982 = vpack.c.b16 %v550, %v544
  %v983 = vpack.c.b16 %v551, %v545
  %v984 = vpack.c.b16 %v552, %v546
  %v985 = vpack.c.b16 %v559, %v553
  %v986 = vpack.c.b16 %v560, %v554
  %v987 = vpack.c.b16 %v561, %v555
  %v988 = vpack.c.b16 %v562, %v556
  %v989 = vpack.c.b16 %v563, %v557
  %v990 = vpack.c.b16 %v564, %v558
  %v991 = vpack.c.b16 %v571, %v565
  %v992 = vpack.c.b16 %v572, %v566
  %v993 = vpack.c.b16 %v573, %v567
  %v994 = vpack.c.b16 %v574, %v568
  %v995 = vpack.c.b16 %v575, %v569
  %v996 = vpack.c.b16 %v576, %v570
  %v997 = vpack.c.b16 %v583, %v577
  %v998 = vpack.c.b16 %v584, %v578
  %v999 = vpack.c.b16 %v585, %v579
  %v1000 = vpack.c.b16 %v586, %v580
  %v1001 = vpack.c.b16 %v587, %v581
  %v1002 = vpack.c.b16 %v588, %v582
  %v1003 = vpack.c.b16 %v595, %v589
  %v1004 = vpack.c.b16 %v596, %v590
  %v1005 = vpack.c.b16 %v597, %v591
  %v1006 = vpack.c.b16 %v598, %v592
  %v1007 = vpack.c.b16 %v599, %v593
  %v1008 = vpack.c.b16 %v600, %v594
  %v1009 = vpack.c.b16 %v607, %v601
  %v1010 = vpack.c.b16 %v608, %v602
  %v1011 = vpack.c.b16 %v609, %v603
  %v1012 = vpack.c.b16 %v610, %v604
  %v1013 = vpack.c.b16 %v611, %v605
  %v1014 = vpack.c.b16 %v612, %v606
  %v1015 = vpack.c.b16 %v619, %v613
  %v1016 = vpack.c.b16 %v620, %v614
  %v1017 = vpack.c.b16 %v621, %v615
  %v1018 = vpack.c.b16 %v622, %v616
  %v1019 = vpack.c.b16 %v623, %v617
  %v1020 = vpack.c.b16 %v624, %v618
  %v1021 = vpack.c.b16 %v631, %v625
  %v1022 = vpack.c.b16 %v632, %v626
  %v1023 = vpack.c.b16 %v633, %v627
  %v1024 = vpack.c.b16 %v634, %v628
  %v1025 = vpack.c.b16 %v635, %v629
  %v1026 = vpack.c.b16 %v636, %v630
  %v1027 = vpack.c.b16 %v643, %v637
  %v1028 = vpack.c.b16 %v644, %v638
  %v1029 = vpack.c.b16 %v645, %v639
  %v1030 = vpack.c.b16 %v646, %v640
  %v1031 = vpack.c.b16 %v647, %v641
  %v1032 = vpack.c.b16 %v648, %v642
  %v1033 = vpack.c.b16 %v655, %v649
  %v1034 = vpack.c.b16 %v656, %v650
  %v1035 = vpack.c.b16 %v657, %v651
  %v1036 = vpack.c.b16 %v658, %v652
  %v1037 = vpack.c.b16 %v659, %v653
  %v1038 = vpack.c.b16 %v660, %v654
  %v1039 = vpack.c.b16 %v667, %v661
  %v1040 = vpack.c.b16 %v668, %v662
  %v1041 = vpack.c.b16 %v669, %v663
  %v1042 = vpack.c.b16 %v670, %v664
  %v1043 = vpack.c.b16 %v671, %v665
  %v1044 = vpack.c.b16 %v672, %v666
  %v1045 = vpack.c.b16 %v679, %v673
  %v1046 = vpack.c.b16 %v680, %v674
  %v1047 = vpack.c.b16 %v681, %v675
  %v1048 = vpack.c.b16 %v682, %v676
  %v1049 = vpack.c.b16 %v683, %v677
  %v1050 = vpack.c.b16 %v684, %v678
  %v1051 = vpack.c.b16 %v691, %v685
  %v1052 = vpack.c.b16 %v692, %v686
  %v1053 = vpack.c.b16 %v693, %v687
  %v1054 = vpack.c.b16 %v694, %v688
  %v1055 = vpack.c.b16 %v695, %v689
  %v1056 = vpack.c.b16 %v696, %v690
  %v1057 = vpack.c.b16 %v703, %v697
  %v1058 = vpack.c.b16 %v704, %v698
  %v1059 = vpack.c.b16 %v705, %v699
  %v1060 = vpack.c.b16 %v706, %v700
  %v1061 = vpack.c.b16 %v707, %v701
  %v1062 = vpack.c.b16 %v708, %v702
  %v1063 = vpack.c.b16 %v715, %v709
  %v1064 = vpack.c.b16 %v716, %v710
  %v1065 = vpack.c.b16 %v717, %v711
  %v1066 = vpack.c.b16 %v718, %v712
  %v1067 = vpack.c.b16 %v719, %v713
  %v1068 = vpack.c.b16 %v720, %v714
  %v1069 = vpack.c.b16 %v727, %v721
  %v1070 = vpack.c.b16 %v728, %v722
  %v1071 = vpack.c.b16 %v729, %v723
  %v1072 = vpack.c.b16 %v730, %v724
  %v1073 = vpack.c.b16 %v731, %v725
  %v1074 = vpack.c.b16 %v732, %v726
  %v1075 = vpack.c.b16 %v739, %v733
  %v1076 = vpack.c.b16 %v740, %v734
  %v1077 = vpack.c.b16 %v741, %v735
  %v1078 = vpack.c.b16 %v742, %v736
  %v1079 = vpack.c.b16 %v743, %v737
  %v1080 = vpack.c.b16 %v744, %v738
  %v1081 = vpack.c.b16 %v751, %v745
  %v1082 = vpack.c.b16 %v752, %v746
  %v1083 = vpack.c.b16 %v753, %v747
  %v1084 = vpack.c.b16 %v754, %v748
  %v1085 = vpack.c.b16 %v755, %v749
  %v1086 = vpack.c.b16 %v756, %v750
  %v1087 = vpack.c.b16 %v763, %v757
  %v1088 = vpack.c.b16 %v764, %v758
  %v1089 = vpack.c.b16 %v765, %v759
  %v1090 = vpack.c.b16 %v766, %v760
  %v1091 = vpack.c.b16 %v767, %v761
  %v1092 = vpack.c.b16 %v768, %v762
  %v1093 = vpack.c.b16 %v775, %v769
  %v1094 = vpack.c.b16 %v776, %v770
  %v1095 = vpack.c.b16 %v777, %v771
  %v1096 = vpack.c.b16 %v778, %v772
  %v1097 = vpack.c.b16 %v779, %v773
  %v1098 = vpack.c.b16 %v780, %v774
  %v1099 = vpack.c.b16 %v787, %v781
  %v1100 = vpack.c.b16 %v788, %v782
  %v1101 = vpack.c.b16 %v789, %v783
  %v1102 = vpack.c.b16 %v790, %v784
  %v1103 = vpack.c.b16 %v791, %v785
  %v1104 = vpack.c.b16 %v792, %v786
  %v1105 = vpack.c.b16 %v799, %v793
  %v1106 = vpack.c.b16 %v800, %v794
  %v1107 = vpack.c.b16 %v801, %v795
  %v1108 = vpack.c.b16 %v802, %v796
  %v1109 = vpack.c.b16 %v803, %v797
  %v1110 = vpack.c.b16 %v804, %v798
  %v1111 = vpack.c.b16 %v811, %v805
  %v1112 = vpack.c.b16 %v812, %v806
  %v1113 = vpack.c.b16 %v813, %v807
  %v1114 = vpack.c.b16 %v814, %v808
  %v1115 = vpack.c.b16 %v815, %v809
  %v1116 = vpack.c.b16 %v816, %v810
  %v1117 = vpack.c.b16 %v823, %v817
  %v1118 = vpack.c.b16 %v824, %v818
  %v1119 = vpack.c.b16 %v825, %v819
  %v1120 = vpack.c.b16 %v826, %v820
  %v1121 = vpack.c.b16 %v827, %v821
  %v1122 = vpack.c.b16 %v828, %v822
  %v1123 = vpack.c.b16 %v835, %v829
  %v1124 = vpack.c.b16 %v836, %v830
  %v1125 = vpack.c.b16 %v837, %v831
  %v1126 = vpack.c.b16 %v838, %v832
  %v1127 = vpack.c.b16 %v839, %v833
  %v1128 = vpack.c.b16 %v840, %v834
  %v1129 = vpack.c.b16 %v847, %v841
  %v1130 = vpack.c.b16 %v848, %v842
  %v1131 = vpack.c.b16 %v849, %v843
  %v1132 = vpack.c.b16 %v850, %v844
  %v1133 = vpack.c.b16 %v851, %v845
  %v1134 = vpack.c.b16 %v852, %v846
  %v1135 = vpack.c.b16 %v859, %v853
  %v1136 = vpack.c.b16 %v860, %v854
  %v1137 = vpack.c.b16 %v861, %v855
  %v1138 = vpack.c.b16 %v862, %v856
  %v1139 = vpack.c.b16 %v863, %v857
  %v1140 = vpack.c.b16 %v864, %v858
  %v1141 = vpack.c.b16 %v871, %v865
  %v1142 = vpack.c.b16 %v872, %v866
  %v1143 = vpack.c.b16 %v873, %v867
  %v1144 = vpack.c.b16 %v874, %v868
  %v1145 = vpack.c.b16 %v875, %v869
  %v1146 = vpack.c.b16 %v876, %v870
  %v1147 = vpack.c.b16 %v883, %v877
  %v1148 = vpack.c.b16 %v884, %v878
  %v1149 = vpack.c.b16 %v885, %v879
  %v1150 = vpack.c.b16 %v886, %v880
  %v1151 = vpack.c.b16 %v887, %v881
  %v1152 = vpack.c.b16 %v888, %v882
  %v1153 = vpack.c.b16 %v895, %v889
  %v1154 = vpack.c.b16 %v896, %v890
  %v1155 = vpack.c.b16 %v897, %v891
  %v1156 = vpack.c.b16 %v898, %v892
  %v1157 = vpack.c.b16 %v899, %v893
  %v1158 = vpack.c.b16 %v900, %v894
  %v1159 = vpack.c.b16 %v907, %v901
  %v1160 = vpack.c.b16 %v908, %v902
  %v1161 = vpack.c.b16 %v909, %v903
  %v1162 = vpack.c.b16 %v910, %v904
  %v1163 = vpack.c.b16 %v911, %v905
  %v1164 = vpack.c.b16 %v912, %v906
  %v1165 = vpack.c.b16 %v919, %v913
  %v1166 = vpack.c.b16 %v920, %v914
  %v1167 = vpack.c.b16 %v921, %v915
  %v1168 = vpack.c.b16 %v922, %v916
  %v1169 = vpack.c.b16 %v923, %v917
  %v1170 = vpack.c.b16 %v924, %v918
  %v1171 = vpack.c.b16 %v931, %v925
  %v1172 = vpack.c.b16 %v932, %v926
  %v1173 = vpack.c.b16 %v933, %v927
  %v1174 = vpack.c.b16 %v934, %v928
  %v1175 = vpack.c.b16 %v935, %v929
  %v1176 = vpack.c.b16 %v936, %v930
  %v1177 = vpack.c.b16 %v943, %v937
  %v1178 = vpack.c.b16 %v944, %v938
  %v1179 = vpack.c.b16 %v945, %v939
  %v1180 = vpack.c.b16 %v946, %v940
  %v1181 = vpack.c.b16 %v947, %v941
  %v1182 = vpack.c.b16 %v948, %v942
  %v1183 = vpack.c.b16 %v955, %v949
  %v1184 = vpack.c.b16 %v956, %v950
  %v1185 = vpack.c.b16 %v957, %v951
  %v1186 = vpack.c.b16 %v958, %v952
  %v1187 = vpack.c.b16 %v959, %v953
  %v1188 = vpack.c.b16 %v960, %v954
  %v1189 = vpack.c.b16 %v967, %v961
  %v1190 = vpack.c.b16 %v968, %v962
  %v1191 = vpack.c.b16 %v969, %v963
  %v1192 = vpack.c.b16 %v970, %v964
  %v1193 = vpack.c.b16 %v971, %v965
  %v1194 = vpack.c.b16 %v972, %v966
  %v1195 = vpack.c.b16 %v973, %v973
  %v1196 = vpack.c.b16 %v974, %v974
  %v1197 = vpack.c.b16 %v975, %v975
  %v1198 = vpack.c.b16 %v976, %v976
  %v1199 = vpack.c.b16 %v977, %v977
  %v1200 = vpack.c.b16 %v978, %v978
  %v1467 = vunpack.c.l.b16 %v234
  %v1468 = vunpack.c.l.b16 %v235
  %v1469 = vunpack.c.l.b16 %v236
  %v1470 = vunpack.c.l.b16 %v237
  %v1471 = vunpack.c.l.b16 %v238
  %v1472 = vunpack.c.l.b16 %v239
  %v1473 = vunpack.c.l.b16 %v240
  %v1474 = vunpack.c.l.b16 %v241
  %v1475 = vunpack.c.l.b16 %v242
  %v1476 = vunpack.c.l.b16 %v243
  %v1477 = vunpack.c.l.b16 %v244
  %v1478 = vunpack.c.l.b16 %v245
  %v1479 = vunpack.c.l.b16 %v246
  %v1480 = vunpack.c.l.b16 %v247
  %v1481 = vunpack.c.l.b16 %v248
  %v1482 = vunpack.c.l.b16 %v249
  %v1483 = vunpack.c.l.b16 %v250
  %v1484 = vunpack.c.l.b16 %v251
  %v1485 = vunpack.c.l.b16 %v252
  %v1486 = vunpack.c.l.b16 %v253
  %v1487 = vunpack.c.l.b16 %v254
  %v1488 = vunpack.c.l.b16 %v255
  %v1489 = vunpack.c.l.b16 %v256
  %v1490 = vunpack.c.l.b16 %v257
  %v1491 = vunpack.c.l.b16 %v258
  %v1492 = vunpack.c.l.b16 %v259
  %v1493 = vunpack.c.l.b16 %v260
  %v1494 = vunpack.c.l.b16 %v261
  %v1495 = vunpack.c.l.b16 %v262
  %v1496 = vunpack.c.l.b16 %v263
  %v1497 = vunpack.c.l.b16 %v264
  %v1498 = vunpack.c.l.b16 %v265
  %v1499 = vunpack.c.l.b16 %v266
  %v1500 = vunpack.c.l.b16 %v267
  %v1501 = vunpack.c.l.b16 %v268
  %v1502 = vunpack.c.l.b16 %v269
  %v1503 = vunpack.c.l.b16 %v270
  %v1504 = vunpack.c.l.b16 %v271
  %v1505 = vunpack.c.l.b16 %v272
  %v1506 = vunpack.c.l.b16 %v273
  %v1507 = vunpack.c.l.b16 %v274
  %v1508 = vunpack.c.l.b16 %v275
  %v1509 = vunpack.c.l.b16 %v276
  %v1510 = vunpack.c.l.b16 %v277
  %v1511 = vunpack.c.l.b16 %v278
  %v1512 = vunpack.c.l.b16 %v279
  %v1513 = vunpack.c.l.b16 %v280
  %v1514 = vunpack.c.l.b16 %v281
  %v1515 = vunpack.c.l.b16 %v282
  %v1516 = vunpack.c.l.b16 %v283
  %v1517 = vunpack.c.l.b16 %v284
  %v1518 = vunpack.c.l.b16 %v285
  %v1519 = vunpack.c.l.b16 %v286
  %v1520 = vunpack.c.l.b16 %v287
  %v1521 = vunpack.c.l.b16 %v288
  %v1522 = vunpack.c.l.b16 %v289
  %v1523 = vunpack.c.l.b16 %v290
  %v1524 = vunpack.c.l.b16 %v291
  %v1525 = vunpack.c.l.b16 %v292
  %v1526 = vunpack.c.l.b16 %v293
  %v1527 = vunpack.c.l.b16 %v294
  %v1528 = vunpack.c.l.b16 %v295
  %v1529 = vunpack.c.l.b16 %v296
  %v1530 = vunpack.c.l.b16 %v297
  %v1531 = vunpack.c.l.b16 %v298
  %v1532 = vunpack.c.l.b16 %v299
  %v1533 = vunpack.c.l.b16 %v300
  %v1534 = vunpack.c.l.b16 %v301
  %v1535 = vunpack.c.l.b16 %v302
  %v1536 = vunpack.c.l.b16 %v303
  %v1537 = vunpack.c.l.b16 %v304
  %v1538 = vunpack.c.l.b16 %v305
  %v1539 = vunpack.c.l.b16 %v306
  %v1540 = vunpack.c.l.b16 %v307
  %v1541 = vunpack.c.l.b16 %v308
  %v1542 = vunpack.c.l.b16 %v309
  %v1543 = vunpack.c.l.b16 %v310
  %v1544 = vunpack.c.l.b16 %v311
  %v1545 = vunpack.c.l.b16 %v312
  %v1546 = vunpack.c.l.b16 %v313
  %v1547 = vunpack.c.l.b16 %v314
  %v1548 = vpack.c.b16 %v1468, %v1467
  %v1549 = vpack.c.b16 %v1470, %v1469
  %v1550 = vpack.c.b16 %v1472, %v1471
  %v1551 = vpack.c.b16 %v1474, %v1473
  %v1552 = vpack.c.b16 %v1476, %v1475
  %v1553 = vpack.c.b16 %v1478, %v1477
  %v1554 = vpack.c.b16 %v1480, %v1479
  %v1555 = vpack.c.b16 %v1482, %v1481
  %v1556 = vpack.c.b16 %v1484, %v1483
  %v1557 = vpack.c.b16 %v1486, %v1485
  %v1558 = vpack.c.b16 %v1488, %v1487
  %v1559 = vpack.c.b16 %v1490, %v1489
  %v1560 = vpack.c.b16 %v1492, %v1491
  %v1561 = vpack.c.b16 %v1494, %v1493
  %v1562 = vpack.c.b16 %v1496, %v1495
  %v1563 = vpack.c.b16 %v1498, %v1497
  %v1564 = vpack.c.b16 %v1500, %v1499
  %v1565 = vpack.c.b16 %v1502, %v1501
  %v1566 = vpack.c.b16 %v1504, %v1503
  %v1567 = vpack.c.b16 %v1506, %v1505
  %v1568 = vpack.c.b16 %v1508, %v1507
  %v1569 = vpack.c.b16 %v1510, %v1509
  %v1570 = vpack.c.b16 %v1512, %v1511
  %v1571 = vpack.c.b16 %v1514, %v1513
  %v1572 = vpack.c.b16 %v1516, %v1515
  %v1573 = vpack.c.b16 %v1518, %v1517
  %v1574 = vpack.c.b16 %v1520, %v1519
  %v1575 = vpack.c.b16 %v1522, %v1521
  %v1576 = vpack.c.b16 %v1524, %v1523
  %v1577 = vpack.c.b16 %v1526, %v1525
  %v1578 = vpack.c.b16 %v1528, %v1527
  %v1579 = vpack.c.b16 %v1530, %v1529
  %v1580 = vpack.c.b16 %v1532, %v1531
  %v1581 = vpack.c.b16 %v1534, %v1533
  %v1582 = vpack.c.b16 %v1536, %v1535
  %v1583 = vpack.c.b16 %v1538, %v1537
  %v1584 = vpack.c.b16 %v1540, %v1539
  %v1585 = vpack.c.b16 %v1542, %v1541
  %v1586 = vpack.c.b16 %v1544, %v1543
  %v1587 = vpack.c.b16 %v1546, %v1545
  %v1588 = vpack.c.b16 %v1547, %v1547
  %vm1629 = vcmask 64512
  %v1631 = vsel %vm1629, %v984, 0
  %v1634 = vsel %vm1629, %v990, 0
  %v1637 = vsel %vm1629, %v996, 0
  %v1640 = vsel %vm1629, %v1002, 0
  %v1643 = vsel %vm1629, %v1008, 0
  %v1646 = vsel %vm1629, %v1014, 0
  %v1649 = vsel %vm1629, %v1020, 0
  %v1652 = vsel %vm1629, %v1026, 0
  %v1655 = vsel %vm1629, %v1032, 0
  %v1658 = vsel %vm1629, %v1038, 0
  %v1661 = vsel %vm1629, %v1044, 0
  %v1664 = vsel %vm1629, %v1050, 0
  %v1667 = vsel %vm1629, %v1056, 0
  %v1670 = vsel %vm1629, %v1062, 0
  %v1673 = vsel %vm1629, %v1068, 0
  %v1676 = vsel %vm1629, %v1074, 0
  %v1679 = vsel %vm1629, %v1080, 0
  %v1682 = vsel %vm1629, %v1086, 0
  %v1685 = vsel %vm1629, %v1092, 0
  %v1688 = vsel %vm1629, %v1098, 0
  %v1691 = vsel %vm1629, %v1104, 0
  %v1694 = vsel %vm1629, %v1110, 0
  %v1697 = vsel %vm1629, %v1116, 0
  %v1700 = vsel %vm1629, %v1122, 0
  %v1703 = vsel %vm1629, %v1128, 0
  %v1706 = vsel %vm1629, %v1134, 0
  %v1709 = vsel %vm1629, %v1140, 0
  %v1712 = vsel %vm1629, %v1146, 0
  %v1715 = vsel %vm1629, %v1152, 0
  %v1718 = vsel %vm1629, %v1158, 0
  %v1721 = vsel %vm1629, %v1164, 0
  %v1724 = vsel %vm1629, %v1170, 0
  %v1727 = vsel %vm1629, %v1176, 0
  %v1730 = vsel %vm1629, %v1182, 0
  %v1733 = vsel %vm1629, %v1188, 0
  %v1736 = vsel %vm1629, %v1194, 0
  %v1739 = vsel %vm1629, %v1200, 0
  %vm1741 = vcmask 1043456
  %v1743 = vsel %vm1741, %v1588, 0
  %1745 = vmatprep.subr.bf16.mxu0 0
  %1746 = vmatpush1.bf16.msra.mxu0 %v1555
  %1747 = vmatprep.subr.bf16.mxu0 0
  %1748 = vmatpush1.bf16.msra.mxu0 %v1554
  %1749 = vmatprep.subr.bf16.mxu0 0
  %1750 = vmatpush1.bf16.msra.mxu0 %v1553
  %1751 = vmatprep.subr.bf16.mxu0 0
  %1752 = vmatpush1.bf16.msra.mxu0 %v1552
  %1753 = vmatprep.subr.bf16.mxu0 0
  %1754 = vmatpush1.bf16.msra.mxu0 %v1551
  %1755 = vmatprep.subr.bf16.mxu0 0
  %1756 = vmatpush1.bf16.msra.mxu0 %v1550
  %1757 = vmatprep.subr.bf16.mxu0 0
  %1758 = vmatpush1.bf16.msra.mxu0 %v1549
  %1759 = vmatprep.subr.bf16.mxu0 0
  %1760 = vmatpush1.bf16.msra.mxu0 %v1548
  %1761 = vmatprep.subr.bf16.mxu0 0
  %1762 = vmatpush2.bf16.msra.mxu0 %v1563
  %1763 = vmatprep.subr.bf16.mxu0 0
  %1764 = vmatpush2.bf16.msra.mxu0 %v1562
  %1765 = vmatprep.subr.bf16.mxu0 0
  %1766 = vmatpush2.bf16.msra.mxu0 %v1561
  %1767 = vmatprep.subr.bf16.mxu0 0
  %1768 = vmatpush2.bf16.msra.mxu0 %v1560
  %1769 = vmatprep.subr.bf16.mxu0 0
  %1770 = vmatpush2.bf16.msra.mxu0 %v1559
  %1771 = vmatprep.subr.bf16.mxu0 0
  %1772 = vmatpush2.bf16.msra.mxu0 %v1558
  %1773 = vmatprep.subr.bf16.mxu0 0
  %1774 = vmatpush2.bf16.msra.mxu0 %v1557
  %1775 = vmatprep.subr.bf16.mxu0 0
  %1776 = vmatpush2.bf16.msra.mxu0 %v1556
  %1777 = vmatprep.mubr.bf16.mxu0 %v980
  %1778 = vmatmul.mubr.bf16.gmra.mxu0 %v979
  %v1779 = vpop.f32.mrf.mxu0
  %v1780 = vadd.f32 %v320, %v1779
  %v1781 = vpop.f32.mrf.mxu0
  %v1782 = vpop.f32.mrf.mxu0
  %v1783 = vadd.f32 %v320, %v1782
  %v1784 = vpop.f32.mrf.mxu0
  %1785 = vmatprep.mubr.bf16.mxu0 %v986
  %1786 = vmatmul.mubr.bf16.gmra.mxu0 %v985
  %v1787 = vpop.f32.mrf.mxu0
  %v1788 = vadd.f32 %v320, %v1787
  %v1789 = vpop.f32.mrf.mxu0
  %v1790 = vpop.f32.mrf.mxu0
  %v1791 = vadd.f32 %v320, %v1790
  %v1792 = vpop.f32.mrf.mxu0
  %1793 = vmatprep.mubr.bf16.mxu0 %v992
  %1794 = vmatmul.mubr.bf16.gmra.mxu0 %v991
  %v1795 = vpop.f32.mrf.mxu0
  %v1796 = vadd.f32 %v320, %v1795
  %v1797 = vpop.f32.mrf.mxu0
  %v1798 = vpop.f32.mrf.mxu0
  %v1799 = vadd.f32 %v320, %v1798
  %v1800 = vpop.f32.mrf.mxu0
  %1801 = vmatprep.mubr.bf16.mxu0 %v998
  %1802 = vmatmul.mubr.bf16.gmra.mxu0 %v997
  %v1803 = vpop.f32.mrf.mxu0
  %v1804 = vadd.f32 %v320, %v1803
  %v1805 = vpop.f32.mrf.mxu0
  %v1806 = vpop.f32.mrf.mxu0
  %v1807 = vadd.f32 %v320, %v1806
  %v1808 = vpop.f32.mrf.mxu0
  %1809 = vmatprep.mubr.bf16.mxu0 %v1004
  %1810 = vmatmul.mubr.bf16.gmra.mxu0 %v1003
  %v1811 = vpop.f32.mrf.mxu0
  %v1812 = vadd.f32 %v320, %v1811
  %v1813 = vpop.f32.mrf.mxu0
  %v1814 = vpop.f32.mrf.mxu0
  %v1815 = vadd.f32 %v320, %v1814
  %v1816 = vpop.f32.mrf.mxu0
  %1817 = vmatprep.mubr.bf16.mxu0 %v1010
  %1818 = vmatmul.mubr.bf16.gmra.mxu0 %v1009
  %v1819 = vpop.f32.mrf.mxu0
  %v1820 = vadd.f32 %v320, %v1819
  %v1821 = vpop.f32.mrf.mxu0
  %v1822 = vpop.f32.mrf.mxu0
  %v1823 = vadd.f32 %v320, %v1822
  %v1824 = vpop.f32.mrf.mxu0
  %1825 = vmatprep.mubr.bf16.mxu0 %v1016
  %1826 = vmatmul.mubr.bf16.gmra.mxu0 %v1015
  %v1827 = vpop.f32.mrf.mxu0
  %v1828 = vadd.f32 %v320, %v1827
  %v1829 = vpop.f32.mrf.mxu0
  %v1830 = vpop.f32.mrf.mxu0
  %v1831 = vadd.f32 %v320, %v1830
  %v1832 = vpop.f32.mrf.mxu0
  %1833 = vmatprep.mubr.bf16.mxu0 %v1022
  %1834 = vmatmul.mubr.bf16.gmra.mxu0 %v1021
  %v1835 = vpop.f32.mrf.mxu0
  %v1836 = vadd.f32 %v320, %v1835
  %v1837 = vpop.f32.mrf.mxu0
  %v1838 = vpop.f32.mrf.mxu0
  %v1839 = vadd.f32 %v320, %v1838
  %v1840 = vpop.f32.mrf.mxu0
  %1841 = vmatprep.mubr.bf16.mxu0 %v1028
  %1842 = vmatmul.mubr.bf16.gmra.mxu0 %v1027
  %v1843 = vpop.f32.mrf.mxu0
  %v1844 = vadd.f32 %v320, %v1843
  %v1845 = vpop.f32.mrf.mxu0
  %v1846 = vpop.f32.mrf.mxu0
  %v1847 = vadd.f32 %v320, %v1846
  %v1848 = vpop.f32.mrf.mxu0
  %1849 = vmatprep.mubr.bf16.mxu0 %v1034
  %1850 = vmatmul.mubr.bf16.gmra.mxu0 %v1033
  %v1851 = vpop.f32.mrf.mxu0
  %v1852 = vadd.f32 %v320, %v1851
  %v1853 = vpop.f32.mrf.mxu0
  %v1854 = vpop.f32.mrf.mxu0
  %v1855 = vadd.f32 %v320, %v1854
  %v1856 = vpop.f32.mrf.mxu0
  %1857 = vmatprep.mubr.bf16.mxu0 %v1040
  %1858 = vmatmul.mubr.bf16.gmra.mxu0 %v1039
  %v1859 = vpop.f32.mrf.mxu0
  %v1860 = vadd.f32 %v320, %v1859
  %v1861 = vpop.f32.mrf.mxu0
  %v1862 = vpop.f32.mrf.mxu0
  %v1863 = vadd.f32 %v320, %v1862
  %v1864 = vpop.f32.mrf.mxu0
  %1865 = vmatprep.mubr.bf16.mxu0 %v1046
  %1866 = vmatmul.mubr.bf16.gmra.mxu0 %v1045
  %v1867 = vpop.f32.mrf.mxu0
  %v1868 = vadd.f32 %v320, %v1867
  %v1869 = vpop.f32.mrf.mxu0
  %v1870 = vpop.f32.mrf.mxu0
  %v1871 = vadd.f32 %v320, %v1870
  %v1872 = vpop.f32.mrf.mxu0
  %1873 = vmatprep.mubr.bf16.mxu0 %v1052
  %1874 = vmatmul.mubr.bf16.gmra.mxu0 %v1051
  %v1875 = vpop.f32.mrf.mxu0
  %v1876 = vadd.f32 %v320, %v1875
  %v1877 = vpop.f32.mrf.mxu0
  %v1878 = vpop.f32.mrf.mxu0
  %v1879 = vadd.f32 %v320, %v1878
  %v1880 = vpop.f32.mrf.mxu0
  %1881 = vmatprep.mubr.bf16.mxu0 %v1058
  %1882 = vmatmul.mubr.bf16.gmra.mxu0 %v1057
  %v1883 = vpop.f32.mrf.mxu0
  %v1884 = vadd.f32 %v320, %v1883
  %v1885 = vpop.f32.mrf.mxu0
  %v1886 = vpop.f32.mrf.mxu0
  %v1887 = vadd.f32 %v320, %v1886
  %v1888 = vpop.f32.mrf.mxu0
  %1889 = vmatprep.mubr.bf16.mxu0 %v1064
  %1890 = vmatmul.mubr.bf16.gmra.mxu0 %v1063
  %v1891 = vpop.f32.mrf.mxu0
  %v1892 = vadd.f32 %v320, %v1891
  %v1893 = vpop.f32.mrf.mxu0
  %v1894 = vpop.f32.mrf.mxu0
  %v1895 = vadd.f32 %v320, %v1894
  %v1896 = vpop.f32.mrf.mxu0
  %1897 = vmatprep.mubr.bf16.mxu0 %v1070
  %1898 = vmatmul.mubr.bf16.gmra.mxu0 %v1069
  %v1899 = vpop.f32.mrf.mxu0
  %v1900 = vadd.f32 %v320, %v1899
  %v1901 = vpop.f32.mrf.mxu0
  %v1902 = vpop.f32.mrf.mxu0
  %v1903 = vadd.f32 %v320, %v1902
  %v1904 = vpop.f32.mrf.mxu0
  %1905 = vmatprep.mubr.bf16.mxu0 %v1076
  %1906 = vmatmul.mubr.bf16.gmra.mxu0 %v1075
  %v1907 = vpop.f32.mrf.mxu0
  %v1908 = vadd.f32 %v320, %v1907
  %v1909 = vpop.f32.mrf.mxu0
  %v1910 = vpop.f32.mrf.mxu0
  %v1911 = vadd.f32 %v320, %v1910
  %v1912 = vpop.f32.mrf.mxu0
  %1913 = vmatprep.mubr.bf16.mxu0 %v1082
  %1914 = vmatmul.mubr.bf16.gmra.mxu0 %v1081
  %v1915 = vpop.f32.mrf.mxu0
  %v1916 = vadd.f32 %v320, %v1915
  %v1917 = vpop.f32.mrf.mxu0
  %v1918 = vpop.f32.mrf.mxu0
  %v1919 = vadd.f32 %v320, %v1918
  %v1920 = vpop.f32.mrf.mxu0
  %1921 = vmatprep.mubr.bf16.mxu0 %v1088
  %1922 = vmatmul.mubr.bf16.gmra.mxu0 %v1087
  %v1923 = vpop.f32.mrf.mxu0
  %v1924 = vadd.f32 %v320, %v1923
  %v1925 = vpop.f32.mrf.mxu0
  %v1926 = vpop.f32.mrf.mxu0
  %v1927 = vadd.f32 %v320, %v1926
  %v1928 = vpop.f32.mrf.mxu0
  %1929 = vmatprep.mubr.bf16.mxu0 %v1094
  %1930 = vmatmul.mubr.bf16.gmra.mxu0 %v1093
  %v1931 = vpop.f32.mrf.mxu0
  %v1932 = vadd.f32 %v320, %v1931
  %v1933 = vpop.f32.mrf.mxu0
  %v1934 = vpop.f32.mrf.mxu0
  %v1935 = vadd.f32 %v320, %v1934
  %v1936 = vpop.f32.mrf.mxu0
  %1937 = vmatprep.mubr.bf16.mxu0 %v1100
  %1938 = vmatmul.mubr.bf16.gmra.mxu0 %v1099
  %v1939 = vpop.f32.mrf.mxu0
  %v1940 = vadd.f32 %v320, %v1939
  %v1941 = vpop.f32.mrf.mxu0
  %v1942 = vpop.f32.mrf.mxu0
  %v1943 = vadd.f32 %v320, %v1942
  %v1944 = vpop.f32.mrf.mxu0
  %1945 = vmatprep.mubr.bf16.mxu0 %v1106
  %1946 = vmatmul.mubr.bf16.gmra.mxu0 %v1105
  %v1947 = vpop.f32.mrf.mxu0
  %v1948 = vadd.f32 %v320, %v1947
  %v1949 = vpop.f32.mrf.mxu0
  %v1950 = vpop.f32.mrf.mxu0
  %v1951 = vadd.f32 %v320, %v1950
  %v1952 = vpop.f32.mrf.mxu0
  %1953 = vmatprep.mubr.bf16.mxu0 %v1112
  %1954 = vmatmul.mubr.bf16.gmra.mxu0 %v1111
  %v1955 = vpop.f32.mrf.mxu0
  %v1956 = vadd.f32 %v320, %v1955
  %v1957 = vpop.f32.mrf.mxu0
  %v1958 = vpop.f32.mrf.mxu0
  %v1959 = vadd.f32 %v320, %v1958
  %v1960 = vpop.f32.mrf.mxu0
  %1961 = vmatprep.mubr.bf16.mxu0 %v1118
  %1962 = vmatmul.mubr.bf16.gmra.mxu0 %v1117
  %v1963 = vpop.f32.mrf.mxu0
  %v1964 = vadd.f32 %v320, %v1963
  %v1965 = vpop.f32.mrf.mxu0
  %v1966 = vpop.f32.mrf.mxu0
  %v1967 = vadd.f32 %v320, %v1966
  %v1968 = vpop.f32.mrf.mxu0
  %1969 = vmatprep.mubr.bf16.mxu0 %v1124
  %1970 = vmatmul.mubr.bf16.gmra.mxu0 %v1123
  %v1971 = vpop.f32.mrf.mxu0
  %v1972 = vadd.f32 %v320, %v1971
  %v1973 = vpop.f32.mrf.mxu0
  %v1974 = vpop.f32.mrf.mxu0
  %v1975 = vadd.f32 %v320, %v1974
  %v1976 = vpop.f32.mrf.mxu0
  %1977 = vmatprep.mubr.bf16.mxu0 %v1130
  %1978 = vmatmul.mubr.bf16.gmra.mxu0 %v1129
  %v1979 = vpop.f32.mrf.mxu0
  %v1980 = vadd.f32 %v320, %v1979
  %v1981 = vpop.f32.mrf.mxu0
  %v1982 = vpop.f32.mrf.mxu0
  %v1983 = vadd.f32 %v320, %v1982
  %v1984 = vpop.f32.mrf.mxu0
  %1985 = vmatprep.mubr.bf16.mxu0 %v1136
  %1986 = vmatmul.mubr.bf16.gmra.mxu0 %v1135
  %v1987 = vpop.f32.mrf.mxu0
  %v1988 = vadd.f32 %v320, %v1987
  %v1989 = vpop.f32.mrf.mxu0
  %v1990 = vpop.f32.mrf.mxu0
  %v1991 = vadd.f32 %v320, %v1990
  %v1992 = vpop.f32.mrf.mxu0
  %1993 = vmatprep.mubr.bf16.mxu0 %v1142
  %1994 = vmatmul.mubr.bf16.gmra.mxu0 %v1141
  %v1995 = vpop.f32.mrf.mxu0
  %v1996 = vadd.f32 %v320, %v1995
  %v1997 = vpop.f32.mrf.mxu0
  %v1998 = vpop.f32.mrf.mxu0
  %v1999 = vadd.f32 %v320, %v1998
  %v2000 = vpop.f32.mrf.mxu0
  %2001 = vmatprep.mubr.bf16.mxu0 %v1148
  %2002 = vmatmul.mubr.bf16.gmra.mxu0 %v1147
  %v2003 = vpop.f32.mrf.mxu0
  %v2004 = vadd.f32 %v320, %v2003
  %v2005 = vpop.f32.mrf.mxu0
  %v2006 = vpop.f32.mrf.mxu0
  %v2007 = vadd.f32 %v320, %v2006
  %v2008 = vpop.f32.mrf.mxu0
  %2009 = vmatprep.mubr.bf16.mxu0 %v1154
  %2010 = vmatmul.mubr.bf16.gmra.mxu0 %v1153
  %v2011 = vpop.f32.mrf.mxu0
  %v2012 = vadd.f32 %v320, %v2011
  %v2013 = vpop.f32.mrf.mxu0
  %v2014 = vpop.f32.mrf.mxu0
  %v2015 = vadd.f32 %v320, %v2014
  %v2016 = vpop.f32.mrf.mxu0
  %2017 = vmatprep.mubr.bf16.mxu0 %v1160
  %2018 = vmatmul.mubr.bf16.gmra.mxu0 %v1159
  %v2019 = vpop.f32.mrf.mxu0
  %v2020 = vadd.f32 %v320, %v2019
  %v2021 = vpop.f32.mrf.mxu0
  %v2022 = vpop.f32.mrf.mxu0
  %v2023 = vadd.f32 %v320, %v2022
  %v2024 = vpop.f32.mrf.mxu0
  %2025 = vmatprep.mubr.bf16.mxu0 %v1166
  %2026 = vmatmul.mubr.bf16.gmra.mxu0 %v1165
  %v2027 = vpop.f32.mrf.mxu0
  %v2028 = vadd.f32 %v320, %v2027
  %v2029 = vpop.f32.mrf.mxu0
  %v2030 = vpop.f32.mrf.mxu0
  %v2031 = vadd.f32 %v320, %v2030
  %v2032 = vpop.f32.mrf.mxu0
  %2033 = vmatprep.mubr.bf16.mxu0 %v1172
  %2034 = vmatmul.mubr.bf16.gmra.mxu0 %v1171
  %v2035 = vpop.f32.mrf.mxu0
  %v2036 = vadd.f32 %v320, %v2035
  %v2037 = vpop.f32.mrf.mxu0
  %v2038 = vpop.f32.mrf.mxu0
  %v2039 = vadd.f32 %v320, %v2038
  %v2040 = vpop.f32.mrf.mxu0
  %2041 = vmatprep.mubr.bf16.mxu0 %v1178
  %2042 = vmatmul.mubr.bf16.gmra.mxu0 %v1177
  %v2043 = vpop.f32.mrf.mxu0
  %v2044 = vadd.f32 %v320, %v2043
  %v2045 = vpop.f32.mrf.mxu0
  %v2046 = vpop.f32.mrf.mxu0
  %v2047 = vadd.f32 %v320, %v2046
  %v2048 = vpop.f32.mrf.mxu0
  %2049 = vmatprep.mubr.bf16.mxu0 %v1184
  %2050 = vmatmul.mubr.bf16.gmra.mxu0 %v1183
  %v2051 = vpop.f32.mrf.mxu0
  %v2052 = vadd.f32 %v320, %v2051
  %v2053 = vpop.f32.mrf.mxu0
  %v2054 = vpop.f32.mrf.mxu0
  %v2055 = vadd.f32 %v320, %v2054
  %v2056 = vpop.f32.mrf.mxu0
  %2057 = vmatprep.mubr.bf16.mxu0 %v1190
  %2058 = vmatmul.mubr.bf16.gmra.mxu0 %v1189
  %v2059 = vpop.f32.mrf.mxu0
  %v2060 = vadd.f32 %v320, %v2059
  %v2061 = vpop.f32.mrf.mxu0
  %v2062 = vpop.f32.mrf.mxu0
  %v2063 = vadd.f32 %v320, %v2062
  %v2064 = vpop.f32.mrf.mxu0
  %2065 = vmatprep.mubr.bf16.mxu0 %v1196
  %2066 = vmatmul.mubr.bf16.gmra.mxu0 %v1195
  %v2067 = vpop.f32.mrf.mxu0
  %v2068 = vadd.f32 %v320, %v2067
  %v2069 = vpop.f32.mrf.mxu0
  %v2070 = vpop.f32.mrf.mxu0
  %v2071 = vpop.f32.mrf.mxu0
  %2072 = vdwg.mxu0
  %2073 = vmatprep.subr.bf16.mxu0 0
  %2074 = vmatpush1.bf16.msra.mxu0 %v1571
  %2075 = vmatprep.subr.bf16.mxu0 0
  %2076 = vmatpush1.bf16.msra.mxu0 %v1570
  %2077 = vmatprep.subr.bf16.mxu0 0
  %2078 = vmatpush1.bf16.msra.mxu0 %v1569
  %2079 = vmatprep.subr.bf16.mxu0 0
  %2080 = vmatpush1.bf16.msra.mxu0 %v1568
  %2081 = vmatprep.subr.bf16.mxu0 0
  %2082 = vmatpush1.bf16.msra.mxu0 %v1567
  %2083 = vmatprep.subr.bf16.mxu0 0
  %2084 = vmatpush1.bf16.msra.mxu0 %v1566
  %2085 = vmatprep.subr.bf16.mxu0 0
  %2086 = vmatpush1.bf16.msra.mxu0 %v1565
  %2087 = vmatprep.subr.bf16.mxu0 0
  %2088 = vmatpush1.bf16.msra.mxu0 %v1564
  %2089 = vmatprep.subr.bf16.mxu0 0
  %2090 = vmatpush2.bf16.msra.mxu0 %v1579
  %2091 = vmatprep.subr.bf16.mxu0 0
  %2092 = vmatpush2.bf16.msra.mxu0 %v1578
  %2093 = vmatprep.subr.bf16.mxu0 0
  %2094 = vmatpush2.bf16.msra.mxu0 %v1577
  %2095 = vmatprep.subr.bf16.mxu0 0
  %2096 = vmatpush2.bf16.msra.mxu0 %v1576
  %2097 = vmatprep.subr.bf16.mxu0 0
  %2098 = vmatpush2.bf16.msra.mxu0 %v1575
  %2099 = vmatprep.subr.bf16.mxu0 0
  %2100 = vmatpush2.bf16.msra.mxu0 %v1574
  %2101 = vmatprep.subr.bf16.mxu0 0
  %2102 = vmatpush2.bf16.msra.mxu0 %v1573
  %2103 = vmatprep.subr.bf16.mxu0 0
  %2104 = vmatpush2.bf16.msra.mxu0 %v1572
  %2105 = vmatprep.mubr.bf16.mxu0 %v982
  %2106 = vmatmul.mubr.bf16.gmra.mxu0 %v981
  %v2107 = vpop.f32.mrf.mxu0
  %v2108 = vadd.f32 %v1780, %v2107
  %v2109 = vpop.f32.mrf.mxu0
  %v2110 = vpop.f32.mrf.mxu0
  %v2111 = vadd.f32 %v1783, %v2110
  %v2112 = vpop.f32.mrf.mxu0
  %2113 = vmatprep.mubr.bf16.mxu0 %v988
  %2114 = vmatmul.mubr.bf16.gmra.mxu0 %v987
  %v2115 = vpop.f32.mrf.mxu0
  %v2116 = vadd.f32 %v1788, %v2115
  %v2117 = vpop.f32.mrf.mxu0
  %v2118 = vpop.f32.mrf.mxu0
  %v2119 = vadd.f32 %v1791, %v2118
  %v2120 = vpop.f32.mrf.mxu0
  %2121 = vmatprep.mubr.bf16.mxu0 %v994
  %2122 = vmatmul.mubr.bf16.gmra.mxu0 %v993
  %v2123 = vpop.f32.mrf.mxu0
  %v2124 = vadd.f32 %v1796, %v2123
  %v2125 = vpop.f32.mrf.mxu0
  %v2126 = vpop.f32.mrf.mxu0
  %v2127 = vadd.f32 %v1799, %v2126
  %v2128 = vpop.f32.mrf.mxu0
  %2129 = vmatprep.mubr.bf16.mxu0 %v1000
  %2130 = vmatmul.mubr.bf16.gmra.mxu0 %v999
  %v2131 = vpop.f32.mrf.mxu0
  %v2132 = vadd.f32 %v1804, %v2131
  %v2133 = vpop.f32.mrf.mxu0
  %v2134 = vpop.f32.mrf.mxu0
  %v2135 = vadd.f32 %v1807, %v2134
  %v2136 = vpop.f32.mrf.mxu0
  %2137 = vmatprep.mubr.bf16.mxu0 %v1006
  %2138 = vmatmul.mubr.bf16.gmra.mxu0 %v1005
  %v2139 = vpop.f32.mrf.mxu0
  %v2140 = vadd.f32 %v1812, %v2139
  %v2141 = vpop.f32.mrf.mxu0
  %v2142 = vpop.f32.mrf.mxu0
  %v2143 = vadd.f32 %v1815, %v2142
  %v2144 = vpop.f32.mrf.mxu0
  %2145 = vmatprep.mubr.bf16.mxu0 %v1012
  %2146 = vmatmul.mubr.bf16.gmra.mxu0 %v1011
  %v2147 = vpop.f32.mrf.mxu0
  %v2148 = vadd.f32 %v1820, %v2147
  %v2149 = vpop.f32.mrf.mxu0
  %v2150 = vpop.f32.mrf.mxu0
  %v2151 = vadd.f32 %v1823, %v2150
  %v2152 = vpop.f32.mrf.mxu0
  %2153 = vmatprep.mubr.bf16.mxu0 %v1018
  %2154 = vmatmul.mubr.bf16.gmra.mxu0 %v1017
  %v2155 = vpop.f32.mrf.mxu0
  %v2156 = vadd.f32 %v1828, %v2155
  %v2157 = vpop.f32.mrf.mxu0
  %v2158 = vpop.f32.mrf.mxu0
  %v2159 = vadd.f32 %v1831, %v2158
  %v2160 = vpop.f32.mrf.mxu0
  %2161 = vmatprep.mubr.bf16.mxu0 %v1024
  %2162 = vmatmul.mubr.bf16.gmra.mxu0 %v1023
  %v2163 = vpop.f32.mrf.mxu0
  %v2164 = vadd.f32 %v1836, %v2163
  %v2165 = vpop.f32.mrf.mxu0
  %v2166 = vpop.f32.mrf.mxu0
  %v2167 = vadd.f32 %v1839, %v2166
  %v2168 = vpop.f32.mrf.mxu0
  %2169 = vmatprep.mubr.bf16.mxu0 %v1030
  %2170 = vmatmul.mubr.bf16.gmra.mxu0 %v1029
  %v2171 = vpop.f32.mrf.mxu0
  %v2172 = vadd.f32 %v1844, %v2171
  %v2173 = vpop.f32.mrf.mxu0
  %v2174 = vpop.f32.mrf.mxu0
  %v2175 = vadd.f32 %v1847, %v2174
  %v2176 = vpop.f32.mrf.mxu0
  %2177 = vmatprep.mubr.bf16.mxu0 %v1036
  %2178 = vmatmul.mubr.bf16.gmra.mxu0 %v1035
  %v2179 = vpop.f32.mrf.mxu0
  %v2180 = vadd.f32 %v1852, %v2179
  %v2181 = vpop.f32.mrf.mxu0
  %v2182 = vpop.f32.mrf.mxu0
  %v2183 = vadd.f32 %v1855, %v2182
  %v2184 = vpop.f32.mrf.mxu0
  %2185 = vmatprep.mubr.bf16.mxu0 %v1042
  %2186 = vmatmul.mubr.bf16.gmra.mxu0 %v1041
  %v2187 = vpop.f32.mrf.mxu0
  %v2188 = vadd.f32 %v1860, %v2187
  %v2189 = vpop.f32.mrf.mxu0
  %v2190 = vpop.f32.mrf.mxu0
  %v2191 = vadd.f32 %v1863, %v2190
  %v2192 = vpop.f32.mrf.mxu0
  %2193 = vmatprep.mubr.bf16.mxu0 %v1048
  %2194 = vmatmul.mubr.bf16.gmra.mxu0 %v1047
  %v2195 = vpop.f32.mrf.mxu0
  %v2196 = vadd.f32 %v1868, %v2195
  %v2197 = vpop.f32.mrf.mxu0
  %v2198 = vpop.f32.mrf.mxu0
  %v2199 = vadd.f32 %v1871, %v2198
  %v2200 = vpop.f32.mrf.mxu0
  %2201 = vmatprep.mubr.bf16.mxu0 %v1054
  %2202 = vmatmul.mubr.bf16.gmra.mxu0 %v1053
  %v2203 = vpop.f32.mrf.mxu0
  %v2204 = vadd.f32 %v1876, %v2203
  %v2205 = vpop.f32.mrf.mxu0
  %v2206 = vpop.f32.mrf.mxu0
  %v2207 = vadd.f32 %v1879, %v2206
  %v2208 = vpop.f32.mrf.mxu0
  %2209 = vmatprep.mubr.bf16.mxu0 %v1060
  %2210 = vmatmul.mubr.bf16.gmra.mxu0 %v1059
  %v2211 = vpop.f32.mrf.mxu0
  %v2212 = vadd.f32 %v1884, %v2211
  %v2213 = vpop.f32.mrf.mxu0
  %v2214 = vpop.f32.mrf.mxu0
  %v2215 = vadd.f32 %v1887, %v2214
  %v2216 = vpop.f32.mrf.mxu0
  %2217 = vmatprep.mubr.bf16.mxu0 %v1066
  %2218 = vmatmul.mubr.bf16.gmra.mxu0 %v1065
  %v2219 = vpop.f32.mrf.mxu0
  %v2220 = vadd.f32 %v1892, %v2219
  %v2221 = vpop.f32.mrf.mxu0
  %v2222 = vpop.f32.mrf.mxu0
  %v2223 = vadd.f32 %v1895, %v2222
  %v2224 = vpop.f32.mrf.mxu0
  %2225 = vmatprep.mubr.bf16.mxu0 %v1072
  %2226 = vmatmul.mubr.bf16.gmra.mxu0 %v1071
  %v2227 = vpop.f32.mrf.mxu0
  %v2228 = vadd.f32 %v1900, %v2227
  %v2229 = vpop.f32.mrf.mxu0
  %v2230 = vpop.f32.mrf.mxu0
  %v2231 = vadd.f32 %v1903, %v2230
  %v2232 = vpop.f32.mrf.mxu0
  %2233 = vmatprep.mubr.bf16.mxu0 %v1078
  %2234 = vmatmul.mubr.bf16.gmra.mxu0 %v1077
  %v2235 = vpop.f32.mrf.mxu0
  %v2236 = vadd.f32 %v1908, %v2235
  %v2237 = vpop.f32.mrf.mxu0
  %v2238 = vpop.f32.mrf.mxu0
  %v2239 = vadd.f32 %v1911, %v2238
  %v2240 = vpop.f32.mrf.mxu0
  %2241 = vmatprep.mubr.bf16.mxu0 %v1084
  %2242 = vmatmul.mubr.bf16.gmra.mxu0 %v1083
  %v2243 = vpop.f32.mrf.mxu0
  %v2244 = vadd.f32 %v1916, %v2243
  %v2245 = vpop.f32.mrf.mxu0
  %v2246 = vpop.f32.mrf.mxu0
  %v2247 = vadd.f32 %v1919, %v2246
  %v2248 = vpop.f32.mrf.mxu0
  %2249 = vmatprep.mubr.bf16.mxu0 %v1090
  %2250 = vmatmul.mubr.bf16.gmra.mxu0 %v1089
  %v2251 = vpop.f32.mrf.mxu0
  %v2252 = vadd.f32 %v1924, %v2251
  %v2253 = vpop.f32.mrf.mxu0
  %v2254 = vpop.f32.mrf.mxu0
  %v2255 = vadd.f32 %v1927, %v2254
  %v2256 = vpop.f32.mrf.mxu0
  %2257 = vmatprep.mubr.bf16.mxu0 %v1096
  %2258 = vmatmul.mubr.bf16.gmra.mxu0 %v1095
  %v2259 = vpop.f32.mrf.mxu0
  %v2260 = vadd.f32 %v1932, %v2259
  %v2261 = vpop.f32.mrf.mxu0
  %v2262 = vpop.f32.mrf.mxu0
  %v2263 = vadd.f32 %v1935, %v2262
  %v2264 = vpop.f32.mrf.mxu0
  %2265 = vmatprep.mubr.bf16.mxu0 %v1102
  %2266 = vmatmul.mubr.bf16.gmra.mxu0 %v1101
  %v2267 = vpop.f32.mrf.mxu0
  %v2268 = vadd.f32 %v1940, %v2267
  %v2269 = vpop.f32.mrf.mxu0
  %v2270 = vpop.f32.mrf.mxu0
  %v2271 = vadd.f32 %v1943, %v2270
  %v2272 = vpop.f32.mrf.mxu0
  %2273 = vmatprep.mubr.bf16.mxu0 %v1108
  %2274 = vmatmul.mubr.bf16.gmra.mxu0 %v1107
  %v2275 = vpop.f32.mrf.mxu0
  %v2276 = vadd.f32 %v1948, %v2275
  %v2277 = vpop.f32.mrf.mxu0
  %v2278 = vpop.f32.mrf.mxu0
  %v2279 = vadd.f32 %v1951, %v2278
  %v2280 = vpop.f32.mrf.mxu0
  %2281 = vmatprep.mubr.bf16.mxu0 %v1114
  %2282 = vmatmul.mubr.bf16.gmra.mxu0 %v1113
  %v2283 = vpop.f32.mrf.mxu0
  %v2284 = vadd.f32 %v1956, %v2283
  %v2285 = vpop.f32.mrf.mxu0
  %v2286 = vpop.f32.mrf.mxu0
  %v2287 = vadd.f32 %v1959, %v2286
  %v2288 = vpop.f32.mrf.mxu0
  %2289 = vmatprep.mubr.bf16.mxu0 %v1120
  %2290 = vmatmul.mubr.bf16.gmra.mxu0 %v1119
  %v2291 = vpop.f32.mrf.mxu0
  %v2292 = vadd.f32 %v1964, %v2291
  %v2293 = vpop.f32.mrf.mxu0
  %v2294 = vpop.f32.mrf.mxu0
  %v2295 = vadd.f32 %v1967, %v2294
  %v2296 = vpop.f32.mrf.mxu0
  %2297 = vmatprep.mubr.bf16.mxu0 %v1126
  %2298 = vmatmul.mubr.bf16.gmra.mxu0 %v1125
  %v2299 = vpop.f32.mrf.mxu0
  %v2300 = vadd.f32 %v1972, %v2299
  %v2301 = vpop.f32.mrf.mxu0
  %v2302 = vpop.f32.mrf.mxu0
  %v2303 = vadd.f32 %v1975, %v2302
  %v2304 = vpop.f32.mrf.mxu0
  %2305 = vmatprep.mubr.bf16.mxu0 %v1132
  %2306 = vmatmul.mubr.bf16.gmra.mxu0 %v1131
  %v2307 = vpop.f32.mrf.mxu0
  %v2308 = vadd.f32 %v1980, %v2307
  %v2309 = vpop.f32.mrf.mxu0
  %v2310 = vpop.f32.mrf.mxu0
  %v2311 = vadd.f32 %v1983, %v2310
  %v2312 = vpop.f32.mrf.mxu0
  %2313 = vmatprep.mubr.bf16.mxu0 %v1138
  %2314 = vmatmul.mubr.bf16.gmra.mxu0 %v1137
  %v2315 = vpop.f32.mrf.mxu0
  %v2316 = vadd.f32 %v1988, %v2315
  %v2317 = vpop.f32.mrf.mxu0
  %v2318 = vpop.f32.mrf.mxu0
  %v2319 = vadd.f32 %v1991, %v2318
  %v2320 = vpop.f32.mrf.mxu0
  %2321 = vmatprep.mubr.bf16.mxu0 %v1144
  %2322 = vmatmul.mubr.bf16.gmra.mxu0 %v1143
  %v2323 = vpop.f32.mrf.mxu0
  %v2324 = vadd.f32 %v1996, %v2323
  %v2325 = vpop.f32.mrf.mxu0
  %v2326 = vpop.f32.mrf.mxu0
  %v2327 = vadd.f32 %v1999, %v2326
  %v2328 = vpop.f32.mrf.mxu0
  %2329 = vmatprep.mubr.bf16.mxu0 %v1150
  %2330 = vmatmul.mubr.bf16.gmra.mxu0 %v1149
  %v2331 = vpop.f32.mrf.mxu0
  %v2332 = vadd.f32 %v2004, %v2331
  %v2333 = vpop.f32.mrf.mxu0
  %v2334 = vpop.f32.mrf.mxu0
  %v2335 = vadd.f32 %v2007, %v2334
  %v2336 = vpop.f32.mrf.mxu0
  %2337 = vmatprep.mubr.bf16.mxu0 %v1156
  %2338 = vmatmul.mubr.bf16.gmra.mxu0 %v1155
  %v2339 = vpop.f32.mrf.mxu0
  %v2340 = vadd.f32 %v2012, %v2339
  %v2341 = vpop.f32.mrf.mxu0
  %v2342 = vpop.f32.mrf.mxu0
  %v2343 = vadd.f32 %v2015, %v2342
  %v2344 = vpop.f32.mrf.mxu0
  %2345 = vmatprep.mubr.bf16.mxu0 %v1162
  %2346 = vmatmul.mubr.bf16.gmra.mxu0 %v1161
  %v2347 = vpop.f32.mrf.mxu0
  %v2348 = vadd.f32 %v2020, %v2347
  %v2349 = vpop.f32.mrf.mxu0
  %v2350 = vpop.f32.mrf.mxu0
  %v2351 = vadd.f32 %v2023, %v2350
  %v2352 = vpop.f32.mrf.mxu0
  %2353 = vmatprep.mubr.bf16.mxu0 %v1168
  %2354 = vmatmul.mubr.bf16.gmra.mxu0 %v1167
  %v2355 = vpop.f32.mrf.mxu0
  %v2356 = vadd.f32 %v2028, %v2355
  %v2357 = vpop.f32.mrf.mxu0
  %v2358 = vpop.f32.mrf.mxu0
  %v2359 = vadd.f32 %v2031, %v2358
  %v2360 = vpop.f32.mrf.mxu0
  %2361 = vmatprep.mubr.bf16.mxu0 %v1174
  %2362 = vmatmul.mubr.bf16.gmra.mxu0 %v1173
  %v2363 = vpop.f32.mrf.mxu0
  %v2364 = vadd.f32 %v2036, %v2363
  %v2365 = vpop.f32.mrf.mxu0
  %v2366 = vpop.f32.mrf.mxu0
  %v2367 = vadd.f32 %v2039, %v2366
  %v2368 = vpop.f32.mrf.mxu0
  %2369 = vmatprep.mubr.bf16.mxu0 %v1180
  %2370 = vmatmul.mubr.bf16.gmra.mxu0 %v1179
  %v2371 = vpop.f32.mrf.mxu0
  %v2372 = vadd.f32 %v2044, %v2371
  %v2373 = vpop.f32.mrf.mxu0
  %v2374 = vpop.f32.mrf.mxu0
  %v2375 = vadd.f32 %v2047, %v2374
  %v2376 = vpop.f32.mrf.mxu0
  %2377 = vmatprep.mubr.bf16.mxu0 %v1186
  %2378 = vmatmul.mubr.bf16.gmra.mxu0 %v1185
  %v2379 = vpop.f32.mrf.mxu0
  %v2380 = vadd.f32 %v2052, %v2379
  %v2381 = vpop.f32.mrf.mxu0
  %v2382 = vpop.f32.mrf.mxu0
  %v2383 = vadd.f32 %v2055, %v2382
  %v2384 = vpop.f32.mrf.mxu0
  %2385 = vmatprep.mubr.bf16.mxu0 %v1192
  %2386 = vmatmul.mubr.bf16.gmra.mxu0 %v1191
  %v2387 = vpop.f32.mrf.mxu0
  %v2388 = vadd.f32 %v2060, %v2387
  %v2389 = vpop.f32.mrf.mxu0
  %v2390 = vpop.f32.mrf.mxu0
  %v2391 = vadd.f32 %v2063, %v2390
  %v2392 = vpop.f32.mrf.mxu0
  %2393 = vmatprep.mubr.bf16.mxu0 %v1198
  %2394 = vmatmul.mubr.bf16.gmra.mxu0 %v1197
  %v2395 = vpop.f32.mrf.mxu0
  %v2396 = vadd.f32 %v2068, %v2395
  %v2397 = vpop.f32.mrf.mxu0
  %v2398 = vpop.f32.mrf.mxu0
  %v2399 = vpop.f32.mrf.mxu0
  %2400 = vdwg.mxu0
  %2401 = vmatprep.subr.bf16.mxu0 0
  %2402 = vmatpush1.bf16.msra.mxu0 %v1587
  %2403 = vmatprep.subr.bf16.mxu0 0
  %2404 = vmatpush1.bf16.msra.mxu0 %v1586
  %2405 = vmatprep.subr.bf16.mxu0 0
  %2406 = vmatpush1.bf16.msra.mxu0 %v1585
  %2407 = vmatprep.subr.bf16.mxu0 0
  %2408 = vmatpush1.bf16.msra.mxu0 %v1584
  %2409 = vmatprep.subr.bf16.mxu0 0
  %2410 = vmatpush1.bf16.msra.mxu0 %v1583
  %2411 = vmatprep.subr.bf16.mxu0 0
  %2412 = vmatpush1.bf16.msra.mxu0 %v1582
  %2413 = vmatprep.subr.bf16.mxu0 0
  %2414 = vmatpush1.bf16.msra.mxu0 %v1581
  %2415 = vmatprep.subr.bf16.mxu0 0
  %2416 = vmatpush1.bf16.msra.mxu0 %v1580
  %2417 = vmatprep.subr.bf16.mxu0 0
  %2418 = vmatpush2.bf16.msra.mxu0 0
  %2419 = vmatprep.subr.bf16.mxu0 0
  %2420 = vmatpush2.bf16.msra.mxu0 0
  %2421 = vmatprep.subr.bf16.mxu0 0
  %2422 = vmatpush2.bf16.msra.mxu0 0
  %2423 = vmatprep.subr.bf16.mxu0 0
  %2424 = vmatpush2.bf16.msra.mxu0 0
  %2425 = vmatprep.subr.bf16.mxu0 0
  %2426 = vmatpush2.bf16.msra.mxu0 0
  %2427 = vmatprep.subr.bf16.mxu0 0
  %2428 = vmatpush2.bf16.msra.mxu0 0
  %2429 = vmatprep.subr.bf16.mxu0 0
  %2430 = vmatpush2.bf16.msra.mxu0 0
  %2431 = vmatprep.subr.bf16.mxu0 0
  %2432 = vmatpush2.bf16.msra.mxu0 %v1743
  %2433 = vmatprep.mubr.bf16.mxu0 %v1631
  %2434 = vmatmul.mubr.bf16.gmra.mxu0 %v983
  %v2435 = vpop.f32.mrf.mxu0
  %v2436 = vadd.f32 %v2108, %v2435
  %v2437 = vpop.f32.mrf.mxu0
  %v2438 = vpop.f32.mrf.mxu0
  %v2439 = vadd.f32 %v2111, %v2438
  %v2440 = vpop.f32.mrf.mxu0
  %2441 = vmatprep.mubr.bf16.mxu0 %v1634
  %2442 = vmatmul.mubr.bf16.gmra.mxu0 %v989
  %v2443 = vpop.f32.mrf.mxu0
  %v2444 = vadd.f32 %v2116, %v2443
  %v2445 = vpop.f32.mrf.mxu0
  %v2446 = vpop.f32.mrf.mxu0
  %v2447 = vadd.f32 %v2119, %v2446
  %v2448 = vpop.f32.mrf.mxu0
  %2449 = vmatprep.mubr.bf16.mxu0 %v1637
  %2450 = vmatmul.mubr.bf16.gmra.mxu0 %v995
  %v2451 = vpop.f32.mrf.mxu0
  %v2452 = vadd.f32 %v2124, %v2451
  %v2453 = vpop.f32.mrf.mxu0
  %v2454 = vpop.f32.mrf.mxu0
  %v2455 = vadd.f32 %v2127, %v2454
  %v2456 = vpop.f32.mrf.mxu0
  %2457 = vmatprep.mubr.bf16.mxu0 %v1640
  %2458 = vmatmul.mubr.bf16.gmra.mxu0 %v1001
  %v2459 = vpop.f32.mrf.mxu0
  %v2460 = vadd.f32 %v2132, %v2459
  %v2461 = vpop.f32.mrf.mxu0
  %v2462 = vpop.f32.mrf.mxu0
  %v2463 = vadd.f32 %v2135, %v2462
  %v2464 = vpop.f32.mrf.mxu0
  %2465 = vmatprep.mubr.bf16.mxu0 %v1643
  %2466 = vmatmul.mubr.bf16.gmra.mxu0 %v1007
  %v2467 = vpop.f32.mrf.mxu0
  %v2468 = vadd.f32 %v2140, %v2467
  %v2469 = vpop.f32.mrf.mxu0
  %v2470 = vpop.f32.mrf.mxu0
  %v2471 = vadd.f32 %v2143, %v2470
  %v2472 = vpop.f32.mrf.mxu0
  %2473 = vmatprep.mubr.bf16.mxu0 %v1646
  %2474 = vmatmul.mubr.bf16.gmra.mxu0 %v1013
  %v2475 = vpop.f32.mrf.mxu0
  %v2476 = vadd.f32 %v2148, %v2475
  %v2477 = vpop.f32.mrf.mxu0
  %v2478 = vpop.f32.mrf.mxu0
  %v2479 = vadd.f32 %v2151, %v2478
  %v2480 = vpop.f32.mrf.mxu0
  %2481 = vmatprep.mubr.bf16.mxu0 %v1649
  %2482 = vmatmul.mubr.bf16.gmra.mxu0 %v1019
  %v2483 = vpop.f32.mrf.mxu0
  %v2484 = vadd.f32 %v2156, %v2483
  %v2485 = vpop.f32.mrf.mxu0
  %v2486 = vpop.f32.mrf.mxu0
  %v2487 = vadd.f32 %v2159, %v2486
  %v2488 = vpop.f32.mrf.mxu0
  %2489 = vmatprep.mubr.bf16.mxu0 %v1652
  %2490 = vmatmul.mubr.bf16.gmra.mxu0 %v1025
  %v2491 = vpop.f32.mrf.mxu0
  %v2492 = vadd.f32 %v2164, %v2491
  %v2493 = vpop.f32.mrf.mxu0
  %v2494 = vpop.f32.mrf.mxu0
  %v2495 = vadd.f32 %v2167, %v2494
  %v2496 = vpop.f32.mrf.mxu0
  %2497 = vmatprep.mubr.bf16.mxu0 %v1655
  %2498 = vmatmul.mubr.bf16.gmra.mxu0 %v1031
  %v2499 = vpop.f32.mrf.mxu0
  %v2500 = vadd.f32 %v2172, %v2499
  %v2501 = vpop.f32.mrf.mxu0
  %v2502 = vpop.f32.mrf.mxu0
  %v2503 = vadd.f32 %v2175, %v2502
  %v2504 = vpop.f32.mrf.mxu0
  %2505 = vmatprep.mubr.bf16.mxu0 %v1658
  %2506 = vmatmul.mubr.bf16.gmra.mxu0 %v1037
  %v2507 = vpop.f32.mrf.mxu0
  %v2508 = vadd.f32 %v2180, %v2507
  %v2509 = vpop.f32.mrf.mxu0
  %v2510 = vpop.f32.mrf.mxu0
  %v2511 = vadd.f32 %v2183, %v2510
  %v2512 = vpop.f32.mrf.mxu0
  %2513 = vmatprep.mubr.bf16.mxu0 %v1661
  %2514 = vmatmul.mubr.bf16.gmra.mxu0 %v1043
  %v2515 = vpop.f32.mrf.mxu0
  %v2516 = vadd.f32 %v2188, %v2515
  %v2517 = vpop.f32.mrf.mxu0
  %v2518 = vpop.f32.mrf.mxu0
  %v2519 = vadd.f32 %v2191, %v2518
  %v2520 = vpop.f32.mrf.mxu0
  %2521 = vmatprep.mubr.bf16.mxu0 %v1664
  %2522 = vmatmul.mubr.bf16.gmra.mxu0 %v1049
  %v2523 = vpop.f32.mrf.mxu0
  %v2524 = vadd.f32 %v2196, %v2523
  %v2525 = vpop.f32.mrf.mxu0
  %v2526 = vpop.f32.mrf.mxu0
  %v2527 = vadd.f32 %v2199, %v2526
  %v2528 = vpop.f32.mrf.mxu0
  %2529 = vmatprep.mubr.bf16.mxu0 %v1667
  %2530 = vmatmul.mubr.bf16.gmra.mxu0 %v1055
  %v2531 = vpop.f32.mrf.mxu0
  %v2532 = vadd.f32 %v2204, %v2531
  %v2533 = vpop.f32.mrf.mxu0
  %v2534 = vpop.f32.mrf.mxu0
  %v2535 = vadd.f32 %v2207, %v2534
  %v2536 = vpop.f32.mrf.mxu0
  %2537 = vmatprep.mubr.bf16.mxu0 %v1670
  %2538 = vmatmul.mubr.bf16.gmra.mxu0 %v1061
  %v2539 = vpop.f32.mrf.mxu0
  %v2540 = vadd.f32 %v2212, %v2539
  %v2541 = vpop.f32.mrf.mxu0
  %v2542 = vpop.f32.mrf.mxu0
  %v2543 = vadd.f32 %v2215, %v2542
  %v2544 = vpop.f32.mrf.mxu0
  %2545 = vmatprep.mubr.bf16.mxu0 %v1673
  %2546 = vmatmul.mubr.bf16.gmra.mxu0 %v1067
  %v2547 = vpop.f32.mrf.mxu0
  %v2548 = vadd.f32 %v2220, %v2547
  %v2549 = vpop.f32.mrf.mxu0
  %v2550 = vpop.f32.mrf.mxu0
  %v2551 = vadd.f32 %v2223, %v2550
  %v2552 = vpop.f32.mrf.mxu0
  %2553 = vmatprep.mubr.bf16.mxu0 %v1676
  %2554 = vmatmul.mubr.bf16.gmra.mxu0 %v1073
  %v2555 = vpop.f32.mrf.mxu0
  %v2556 = vadd.f32 %v2228, %v2555
  %v2557 = vpop.f32.mrf.mxu0
  %v2558 = vpop.f32.mrf.mxu0
  %v2559 = vadd.f32 %v2231, %v2558
  %v2560 = vpop.f32.mrf.mxu0
  %2561 = vmatprep.mubr.bf16.mxu0 %v1679
  %2562 = vmatmul.mubr.bf16.gmra.mxu0 %v1079
  %v2563 = vpop.f32.mrf.mxu0
  %v2564 = vadd.f32 %v2236, %v2563
  %v2565 = vpop.f32.mrf.mxu0
  %v2566 = vpop.f32.mrf.mxu0
  %v2567 = vadd.f32 %v2239, %v2566
  %v2568 = vpop.f32.mrf.mxu0
  %2569 = vmatprep.mubr.bf16.mxu0 %v1682
  %2570 = vmatmul.mubr.bf16.gmra.mxu0 %v1085
  %v2571 = vpop.f32.mrf.mxu0
  %v2572 = vadd.f32 %v2244, %v2571
  %v2573 = vpop.f32.mrf.mxu0
  %v2574 = vpop.f32.mrf.mxu0
  %v2575 = vadd.f32 %v2247, %v2574
  %v2576 = vpop.f32.mrf.mxu0
  %2577 = vmatprep.mubr.bf16.mxu0 %v1685
  %2578 = vmatmul.mubr.bf16.gmra.mxu0 %v1091
  %v2579 = vpop.f32.mrf.mxu0
  %v2580 = vadd.f32 %v2252, %v2579
  %v2581 = vpop.f32.mrf.mxu0
  %v2582 = vpop.f32.mrf.mxu0
  %v2583 = vadd.f32 %v2255, %v2582
  %v2584 = vpop.f32.mrf.mxu0
  %2585 = vmatprep.mubr.bf16.mxu0 %v1688
  %2586 = vmatmul.mubr.bf16.gmra.mxu0 %v1097
  %v2587 = vpop.f32.mrf.mxu0
  %v2588 = vadd.f32 %v2260, %v2587
  %v2589 = vpop.f32.mrf.mxu0
  %v2590 = vpop.f32.mrf.mxu0
  %v2591 = vadd.f32 %v2263, %v2590
  %v2592 = vpop.f32.mrf.mxu0
  %2593 = vmatprep.mubr.bf16.mxu0 %v1691
  %2594 = vmatmul.mubr.bf16.gmra.mxu0 %v1103
  %v2595 = vpop.f32.mrf.mxu0
  %v2596 = vadd.f32 %v2268, %v2595
  %v2597 = vpop.f32.mrf.mxu0
  %v2598 = vpop.f32.mrf.mxu0
  %v2599 = vadd.f32 %v2271, %v2598
  %v2600 = vpop.f32.mrf.mxu0
  %2601 = vmatprep.mubr.bf16.mxu0 %v1694
  %2602 = vmatmul.mubr.bf16.gmra.mxu0 %v1109
  %v2603 = vpop.f32.mrf.mxu0
  %v2604 = vadd.f32 %v2276, %v2603
  %v2605 = vpop.f32.mrf.mxu0
  %v2606 = vpop.f32.mrf.mxu0
  %v2607 = vadd.f32 %v2279, %v2606
  %v2608 = vpop.f32.mrf.mxu0
  %2609 = vmatprep.mubr.bf16.mxu0 %v1697
  %2610 = vmatmul.mubr.bf16.gmra.mxu0 %v1115
  %v2611 = vpop.f32.mrf.mxu0
  %v2612 = vadd.f32 %v2284, %v2611
  %v2613 = vpop.f32.mrf.mxu0
  %v2614 = vpop.f32.mrf.mxu0
  %v2615 = vadd.f32 %v2287, %v2614
  %v2616 = vpop.f32.mrf.mxu0
  %2617 = vmatprep.mubr.bf16.mxu0 %v1700
  %2618 = vmatmul.mubr.bf16.gmra.mxu0 %v1121
  %v2619 = vpop.f32.mrf.mxu0
  %v2620 = vadd.f32 %v2292, %v2619
  %v2621 = vpop.f32.mrf.mxu0
  %v2622 = vpop.f32.mrf.mxu0
  %v2623 = vadd.f32 %v2295, %v2622
  %v2624 = vpop.f32.mrf.mxu0
  %2625 = vmatprep.mubr.bf16.mxu0 %v1703
  %2626 = vmatmul.mubr.bf16.gmra.mxu0 %v1127
  %v2627 = vpop.f32.mrf.mxu0
  %v2628 = vadd.f32 %v2300, %v2627
  %v2629 = vpop.f32.mrf.mxu0
  %v2630 = vpop.f32.mrf.mxu0
  %v2631 = vadd.f32 %v2303, %v2630
  %v2632 = vpop.f32.mrf.mxu0
  %2633 = vmatprep.mubr.bf16.mxu0 %v1706
  %2634 = vmatmul.mubr.bf16.gmra.mxu0 %v1133
  %v2635 = vpop.f32.mrf.mxu0
  %v2636 = vadd.f32 %v2308, %v2635
  %v2637 = vpop.f32.mrf.mxu0
  %v2638 = vpop.f32.mrf.mxu0
  %v2639 = vadd.f32 %v2311, %v2638
  %v2640 = vpop.f32.mrf.mxu0
  %2641 = vmatprep.mubr.bf16.mxu0 %v1709
  %2642 = vmatmul.mubr.bf16.gmra.mxu0 %v1139
  %v2643 = vpop.f32.mrf.mxu0
  %v2644 = vadd.f32 %v2316, %v2643
  %v2645 = vpop.f32.mrf.mxu0
  %v2646 = vpop.f32.mrf.mxu0
  %v2647 = vadd.f32 %v2319, %v2646
  %v2648 = vpop.f32.mrf.mxu0
  %2649 = vmatprep.mubr.bf16.mxu0 %v1712
  %2650 = vmatmul.mubr.bf16.gmra.mxu0 %v1145
  %v2651 = vpop.f32.mrf.mxu0
  %v2652 = vadd.f32 %v2324, %v2651
  %v2653 = vpop.f32.mrf.mxu0
  %v2654 = vpop.f32.mrf.mxu0
  %v2655 = vadd.f32 %v2327, %v2654
  %v2656 = vpop.f32.mrf.mxu0
  %2657 = vmatprep.mubr.bf16.mxu0 %v1715
  %2658 = vmatmul.mubr.bf16.gmra.mxu0 %v1151
  %v2659 = vpop.f32.mrf.mxu0
  %v2660 = vadd.f32 %v2332, %v2659
  %v2661 = vpop.f32.mrf.mxu0
  %v2662 = vpop.f32.mrf.mxu0
  %v2663 = vadd.f32 %v2335, %v2662
  %v2664 = vpop.f32.mrf.mxu0
  %2665 = vmatprep.mubr.bf16.mxu0 %v1718
  %2666 = vmatmul.mubr.bf16.gmra.mxu0 %v1157
  %v2667 = vpop.f32.mrf.mxu0
  %v2668 = vadd.f32 %v2340, %v2667
  %v2669 = vpop.f32.mrf.mxu0
  %v2670 = vpop.f32.mrf.mxu0
  %v2671 = vadd.f32 %v2343, %v2670
  %v2672 = vpop.f32.mrf.mxu0
  %2673 = vmatprep.mubr.bf16.mxu0 %v1721
  %2674 = vmatmul.mubr.bf16.gmra.mxu0 %v1163
  %v2675 = vpop.f32.mrf.mxu0
  %v2676 = vadd.f32 %v2348, %v2675
  %v2677 = vpop.f32.mrf.mxu0
  %v2678 = vpop.f32.mrf.mxu0
  %v2679 = vadd.f32 %v2351, %v2678
  %v2680 = vpop.f32.mrf.mxu0
  %2681 = vmatprep.mubr.bf16.mxu0 %v1724
  %2682 = vmatmul.mubr.bf16.gmra.mxu0 %v1169
  %v2683 = vpop.f32.mrf.mxu0
  %v2684 = vadd.f32 %v2356, %v2683
  %v2685 = vpop.f32.mrf.mxu0
  %v2686 = vpop.f32.mrf.mxu0
  %v2687 = vadd.f32 %v2359, %v2686
  %v2688 = vpop.f32.mrf.mxu0
  %2689 = vmatprep.mubr.bf16.mxu0 %v1727
  %2690 = vmatmul.mubr.bf16.gmra.mxu0 %v1175
  %v2691 = vpop.f32.mrf.mxu0
  %v2692 = vadd.f32 %v2364, %v2691
  %v2693 = vpop.f32.mrf.mxu0
  %v2694 = vpop.f32.mrf.mxu0
  %v2695 = vadd.f32 %v2367, %v2694
  %v2696 = vpop.f32.mrf.mxu0
  %2697 = vmatprep.mubr.bf16.mxu0 %v1730
  %2698 = vmatmul.mubr.bf16.gmra.mxu0 %v1181
  %v2699 = vpop.f32.mrf.mxu0
  %v2700 = vadd.f32 %v2372, %v2699
  %v2701 = vpop.f32.mrf.mxu0
  %v2702 = vpop.f32.mrf.mxu0
  %v2703 = vadd.f32 %v2375, %v2702
  %v2704 = vpop.f32.mrf.mxu0
  %2705 = vmatprep.mubr.bf16.mxu0 %v1733
  %2706 = vmatmul.mubr.bf16.gmra.mxu0 %v1187
  %v2707 = vpop.f32.mrf.mxu0
  %v2708 = vadd.f32 %v2380, %v2707
  %v2709 = vpop.f32.mrf.mxu0
  %v2710 = vpop.f32.mrf.mxu0
  %v2711 = vadd.f32 %v2383, %v2710
  %v2712 = vpop.f32.mrf.mxu0
  %2713 = vmatprep.mubr.bf16.mxu0 %v1736
  %2714 = vmatmul.mubr.bf16.gmra.mxu0 %v1193
  %v2715 = vpop.f32.mrf.mxu0
  %v2716 = vadd.f32 %v2388, %v2715
  %v2717 = vpop.f32.mrf.mxu0
  %v2718 = vpop.f32.mrf.mxu0
  %v2719 = vadd.f32 %v2391, %v2718
  %v2720 = vpop.f32.mrf.mxu0
  %2721 = vmatprep.mubr.bf16.mxu0 %v1739
  %2722 = vmatmul.mubr.bf16.gmra.mxu0 %v1199
  %v2723 = vpop.f32.mrf.mxu0
  %v2724 = vadd.f32 %v2396, %v2723
  %v2725 = vpop.f32.mrf.mxu0
  %v2726 = vpop.f32.mrf.mxu0
  %v2727 = vpop.f32.mrf.mxu0
  %2728 = vdwg.mxu0
  %v2729 = vmax.f32 %v2436, 0.0
  %v2730 = vmax.f32 %v2439, 0.0
  %v2731 = vmax.f32 %v2444, 0.0
  %v2732 = vmax.f32 %v2447, 0.0
  %v2733 = vmax.f32 %v2452, 0.0
  %v2734 = vmax.f32 %v2455, 0.0
  %v2735 = vmax.f32 %v2460, 0.0
  %v2736 = vmax.f32 %v2463, 0.0
  %v2737 = vmax.f32 %v2468, 0.0
  %v2738 = vmax.f32 %v2471, 0.0
  %v2739 = vmax.f32 %v2476, 0.0
  %v2740 = vmax.f32 %v2479, 0.0
  %v2741 = vmax.f32 %v2484, 0.0
  %v2742 = vmax.f32 %v2487, 0.0
  %v2743 = vmax.f32 %v2492, 0.0
  %v2744 = vmax.f32 %v2495, 0.0
  %v2745 = vmax.f32 %v2500, 0.0
  %v2746 = vmax.f32 %v2503, 0.0
  %v2747 = vmax.f32 %v2508, 0.0
  %v2748 = vmax.f32 %v2511, 0.0
  %v2749 = vmax.f32 %v2516, 0.0
  %v2750 = vmax.f32 %v2519, 0.0
  %v2751 = vmax.f32 %v2524, 0.0
  %v2752 = vmax.f32 %v2527, 0.0
  %v2753 = vmax.f32 %v2532, 0.0
  %v2754 = vmax.f32 %v2535, 0.0
  %v2755 = vmax.f32 %v2540, 0.0
  %v2756 = vmax.f32 %v2543, 0.0
  %v2757 = vmax.f32 %v2548, 0.0
  %v2758 = vmax.f32 %v2551, 0.0
  %v2759 = vmax.f32 %v2556, 0.0
  %v2760 = vmax.f32 %v2559, 0.0
  %v2761 = vmax.f32 %v2564, 0.0
  %v2762 = vmax.f32 %v2567, 0.0
  %v2763 = vmax.f32 %v2572, 0.0
  %v2764 = vmax.f32 %v2575, 0.0
  %v2765 = vmax.f32 %v2580, 0.0
  %v2766 = vmax.f32 %v2583, 0.0
  %v2767 = vmax.f32 %v2588, 0.0
  %v2768 = vmax.f32 %v2591, 0.0
  %v2769 = vmax.f32 %v2596, 0.0
  %v2770 = vmax.f32 %v2599, 0.0
  %v2771 = vmax.f32 %v2604, 0.0
  %v2772 = vmax.f32 %v2607, 0.0
  %v2773 = vmax.f32 %v2612, 0.0
  %v2774 = vmax.f32 %v2615, 0.0
  %v2775 = vmax.f32 %v2620, 0.0
  %v2776 = vmax.f32 %v2623, 0.0
  %v2777 = vmax.f32 %v2628, 0.0
  %v2778 = vmax.f32 %v2631, 0.0
  %v2779 = vmax.f32 %v2636, 0.0
  %v2780 = vmax.f32 %v2639, 0.0
  %v2781 = vmax.f32 %v2644, 0.0
  %v2782 = vmax.f32 %v2647, 0.0
  %v2783 = vmax.f32 %v2652, 0.0
  %v2784 = vmax.f32 %v2655, 0.0
  %v2785 = vmax.f32 %v2660, 0.0
  %v2786 = vmax.f32 %v2663, 0.0
  %v2787 = vmax.f32 %v2668, 0.0
  %v2788 = vmax.f32 %v2671, 0.0
  %v2789 = vmax.f32 %v2676, 0.0
  %v2790 = vmax.f32 %v2679, 0.0
  %v2791 = vmax.f32 %v2684, 0.0
  %v2792 = vmax.f32 %v2687, 0.0
  %v2793 = vmax.f32 %v2692, 0.0
  %v2794 = vmax.f32 %v2695, 0.0
  %v2795 = vmax.f32 %v2700, 0.0
  %v2796 = vmax.f32 %v2703, 0.0
  %v2797 = vmax.f32 %v2708, 0.0
  %v2798 = vmax.f32 %v2711, 0.0
  %v2799 = vmax.f32 %v2716, 0.0
  %v2800 = vmax.f32 %v2719, 0.0
  %v2801 = vmax.f32 %v2724, 0.0
  %2802 = vst [vmem:[%s3] sm:$0xff] %v2729
  %2803 = vst [vmem:[%s3 + $0x8] sm:$0xff] %v2730
  %2804 = vst [vmem:[%s3 + $0x10] sm:$0xff] %v2731
  %2805 = vst [vmem:[%s3 + $0x18] sm:$0xff] %v2732
  %2806 = vst [vmem:[%s3 + $0x20] sm:$0xff] %v2733
  %2807 = vst [vmem:[%s3 + $0x28] sm:$0xff] %v2734
  %2808 = vst [vmem:[%s3 + $0x30] sm:$0xff] %v2735
  %2809 = vst [vmem:[%s3 + $0x38] sm:$0xff] %v2736
  %2810 = vst [vmem:[%s3 + $0x40] sm:$0xff] %v2737
  %2811 = vst [vmem:[%s3 + $0x48] sm:$0xff] %v2738
  %2812 = vst [vmem:[%s3 + $0x50] sm:$0xff] %v2739
  %2813 = vst [vmem:[%s3 + $0x58] sm:$0xff] %v2740
  %2814 = vst [vmem:[%s3 + $0x60] sm:$0xff] %v2741
  %2815 = vst [vmem:[%s3 + $0x68] sm:$0xff] %v2742
  %2816 = vst [vmem:[%s3 + $0x70] sm:$0xff] %v2743
  %2817 = vst [vmem:[%s3 + $0x78] sm:$0xff] %v2744
  %2818 = vst [vmem:[%s3 + $0x80] sm:$0xff] %v2745
  %2819 = vst [vmem:[%s3 + $0x88] sm:$0xff] %v2746
  %2820 = vst [vmem:[%s3 + $0x90] sm:$0xff] %v2747
  %2821 = vst [vmem:[%s3 + $0x98] sm:$0xff] %v2748
  %2822 = vst [vmem:[%s3 + $0xa0] sm:$0xff] %v2749
  %2823 = vst [vmem:[%s3 + $0xa8] sm:$0xff] %v2750
  %2824 = vst [vmem:[%s3 + $0xb0] sm:$0xff] %v2751
  %2825 = vst [vmem:[%s3 + $0xb8] sm:$0xff] %v2752
  %2826 = vst [vmem:[%s3 + $0xc0] sm:$0xff] %v2753
  %2827 = vst [vmem:[%s3 + $0xc8] sm:$0xff] %v2754
  %2828 = vst [vmem:[%s3 + $0xd0] sm:$0xff] %v2755
  %2829 = vst [vmem:[%s3 + $0xd8] sm:$0xff] %v2756
  %2830 = vst [vmem:[%s3 + $0xe0] sm:$0xff] %v2757
  %2831 = vst [vmem:[%s3 + $0xe8] sm:$0xff] %v2758
  %2832 = vst [vmem:[%s3 + $0xf0] sm:$0xff] %v2759
  %2833 = vst [vmem:[%s3 + $0xf8] sm:$0xff] %v2760
  %2834 = vst [vmem:[%s3 + $0x100] sm:$0xff] %v2761
  %2835 = vst [vmem:[%s3 + $0x108] sm:$0xff] %v2762
  %2836 = vst [vmem:[%s3 + $0x110] sm:$0xff] %v2763
  %2837 = vst [vmem:[%s3 + $0x118] sm:$0xff] %v2764
  %2838 = vst [vmem:[%s3 + $0x120] sm:$0xff] %v2765
  %2839 = vst [vmem:[%s3 + $0x128] sm:$0xff] %v2766
  %2840 = vst [vmem:[%s3 + $0x130] sm:$0xff] %v2767
  %2841 = vst [vmem:[%s3 + $0x138] sm:$0xff] %v2768
  %2842 = vst [vmem:[%s3 + $0x140] sm:$0xff] %v2769
  %2843 = vst [vmem:[%s3 + $0x148] sm:$0xff] %v2770
  %2844 = vst [vmem:[%s3 + $0x150] sm:$0xff] %v2771
  %2845 = vst [vmem:[%s3 + $0x158] sm:$0xff] %v2772
  %2846 = vst [vmem:[%s3 + $0x160] sm:$0xff] %v2773
  %2847 = vst [vmem:[%s3 + $0x168] sm:$0xff] %v2774
  %2848 = vst [vmem:[%s3 + $0x170] sm:$0xff] %v2775
  %2849 = vst [vmem:[%s3 + $0x178] sm:$0xff] %v2776
  %2850 = vst [vmem:[%s3 + $0x180] sm:$0xff] %v2777
  %2851 = vst [vmem:[%s3 + $0x188] sm:$0xff] %v2778
  %2852 = vst [vmem:[%s3 + $0x190] sm:$0xff] %v2779
  %2853 = vst [vmem:[%s3 + $0x198] sm:$0xff] %v2780
  %2854 = vst [vmem:[%s3 + $0x1a0] sm:$0xff] %v2781
  %2855 = vst [vmem:[%s3 + $0x1a8] sm:$0xff] %v2782
  %2856 = vst [vmem:[%s3 + $0x1b0] sm:$0xff] %v2783
  %2857 = vst [vmem:[%s3 + $0x1b8] sm:$0xff] %v2784
  %2858 = vst [vmem:[%s3 + $0x1c0] sm:$0xff] %v2785
  %2859 = vst [vmem:[%s3 + $0x1c8] sm:$0xff] %v2786
  %2860 = vst [vmem:[%s3 + $0x1d0] sm:$0xff] %v2787
  %2861 = vst [vmem:[%s3 + $0x1d8] sm:$0xff] %v2788
  %2862 = vst [vmem:[%s3 + $0x1e0] sm:$0xff] %v2789
  %2863 = vst [vmem:[%s3 + $0x1e8] sm:$0xff] %v2790
  %2864 = vst [vmem:[%s3 + $0x1f0] sm:$0xff] %v2791
  %2865 = vst [vmem:[%s3 + $0x1f8] sm:$0xff] %v2792
  %2866 = vst [vmem:[%s3 + $0x200] sm:$0xff] %v2793
  %2867 = vst [vmem:[%s3 + $0x208] sm:$0xff] %v2794
  %2868 = vst [vmem:[%s3 + $0x210] sm:$0xff] %v2795
  %2869 = vst [vmem:[%s3 + $0x218] sm:$0xff] %v2796
  %2870 = vst [vmem:[%s3 + $0x220] sm:$0xff] %v2797
  %2871 = vst [vmem:[%s3 + $0x228] sm:$0xff] %v2798
  %2872 = vst [vmem:[%s3 + $0x230] sm:$0xff] %v2799
  %2873 = vst [vmem:[%s3 + $0x238] sm:$0xff] %v2800
  %2874 = vst [vmem:[%s3 + $0x240] sm:$0x3] %v2801
  // Predicated region
  $region14: #{reduction_b_forward.4} parent=0 // pred_check
    _
  $region15: #{reduction_b_forward.4} parent=0 // pred_check_branch
    %2876 = sbr.rel (0) target = $region17
  $region16: #{reduction_b_forward.4} parent=0 // pred_region
    _
  $region17: #{reduction_b_forward.4} parent=0 // pred_fallthru
    _
  // Predicated region
  $region18: #{reduction_b_forward.4} parent=0 // pred_check
    _
  $region19: #{reduction_b_forward.4} parent=0 // pred_check_branch
    %2878 = sbr.rel (0) target = $region21
  $region20: #{reduction_b_forward.4} parent=0 // pred_region
    _
  $region21: #{reduction_b_forward.4} parent=0 // pred_fallthru
    _

// kernel: reduction_b_forward.5
$region0: #{reduction_b_forward.5}
  #allocation0 [shape = 'u32[]', space=smem, size = 0x4, offset = 0x4, fixed_abs, tag = 'smem constant byte address 0x4 - core index']
  #allocation1 [shape = 'u32[144,128]{1,0:T(1,128)}', space=vmem, size = 0x12000, scoped, tag = 'internal scratch']
  %s0 = inlined_call_operand.vmem [shape: f32[9,128,288], index: 0, kind: input, shape index: {}]
  %s1 = inlined_call_operand.vmem [shape: bf16[128,2448], index: 1, kind: input, shape index: {}]
  %s2 = inlined_call_operand.vmem [shape: bf16[2448,288], index: 2, kind: input, shape index: {}]
  %s3 = inlined_call_operand.vmem [shape: f32[1,288], index: 3, kind: input, shape index: {}]
  %s4 = inlined_call_operand.vmem [shape: f32[128,288], index: 4, kind: output, shape index: {0}]
  %s5 = inlined_call_operand.vmem [shape: f32[128,288], index: 5, kind: output, shape index: {1}]
  %6 = xla_tuple %s4, %s5
  %s7 = sld [smem:[#allocation0]]
  $region34: #{reduction_b_forward.5} parent=0
    _
  %s9 = ssub.s32 1, %s7
  %s10 = scalar_select 0, %s9, %s7
  // Predicated region
  $region2: #{reduction_b_forward.5} parent=0 // pred_check
    _
  $region3: #{reduction_b_forward.5} parent=0 // pred_check_branch
    %12 = sbr.rel (0) target = $region5
  $region4: #{reduction_b_forward.5} parent=0 // pred_region
    _
  $region5: #{reduction_b_forward.5} parent=0 // pred_fallthru
    _
  // Predicated region
  $region6: #{reduction_b_forward.5} parent=0 // pred_check
    _
  $region7: #{reduction_b_forward.5} parent=0 // pred_check_branch
    %14 = sbr.rel (0) target = $region9
  $region8: #{reduction_b_forward.5} parent=0 // pred_region
    _
  $region9: #{reduction_b_forward.5} parent=0 // pred_fallthru
    _
  // Predicated region
  $region10: #{reduction_b_forward.5} parent=0 // pred_check
    _
  $region11: #{reduction_b_forward.5} parent=0 // pred_check_branch
    %16 = sbr.rel (0) target = $region13
  $region12: #{reduction_b_forward.5} parent=0 // pred_region
    _
  $region13: #{reduction_b_forward.5} parent=0 // pred_fallthru
    _
  // Predicated region
  $region14: #{reduction_b_forward.5} parent=0 // pred_check
    _
  $region15: #{reduction_b_forward.5} parent=0 // pred_check_branch
    %18 = sbr.rel (0) target = $region17
  $region16: #{reduction_b_forward.5} parent=0 // pred_region
    _
  $region17: #{reduction_b_forward.5} parent=0 // pred_fallthru
    _
  %v20 = vld [vmem:[%s0] sm:$0xff]
  %v21 = vld [vmem:[%s0 + $0x8] sm:$0xff]
  %v22 = vld [vmem:[%s0 + $0x10] sm:$0xff]
  %v23 = vld [vmem:[%s0 + $0x18] sm:$0xff]
  %v24 = vld [vmem:[%s0 + $0x20] sm:$0xff]
  %v25 = vld [vmem:[%s0 + $0x28] sm:$0xff]
  %v26 = vld [vmem:[%s0 + $0x30] sm:$0xff]
  %v27 = vld [vmem:[%s0 + $0x38] sm:$0xff]
  %v28 = vld [vmem:[%s0 + $0x40] sm:$0xff]
  %v29 = vld [vmem:[%s0 + $0x48] sm:$0xff]
  %v30 = vld [vmem:[%s0 + $0x50] sm:$0xff]
  %v31 = vld [vmem:[%s0 + $0x58] sm:$0xff]
  %v32 = vld [vmem:[%s0 + $0x60] sm:$0xff]
  %v33 = vld [vmem:[%s0 + $0x68] sm:$0xff]
  %v34 = vld [vmem:[%s0 + $0x70] sm:$0xff]
  %v35 = vld [vmem:[%s0 + $0x78] sm:$0xff]
  %v36 = vld [vmem:[%s0 + $0x80] sm:$0xff]
  %v37 = vld [vmem:[%s0 + $0x88] sm:$0xff]
  %v38 = vld [vmem:[%s0 + $0x90] sm:$0xff]
  %v39 = vld [vmem:[%s0 + $0x98] sm:$0xff]
  %v40 = vld [vmem:[%s0 + $0xa0] sm:$0xff]
  %v41 = vld [vmem:[%s0 + $0xa8] sm:$0xff]
  %v42 = vld [vmem:[%s0 + $0xb0] sm:$0xff]
  %v43 = vld [vmem:[%s0 + $0xb8] sm:$0xff]
  %v44 = vld [vmem:[%s0 + $0xc0] sm:$0xff]
  %v45 = vld [vmem:[%s0 + $0xc8] sm:$0xff]
  %v46 = vld [vmem:[%s0 + $0xd0] sm:$0xff]
  %v47 = vld [vmem:[%s0 + $0xd8] sm:$0xff]
  %v48 = vld [vmem:[%s0 + $0xe0] sm:$0xff]
  %v49 = vld [vmem:[%s0 + $0xe8] sm:$0xff]
  %v50 = vld [vmem:[%s0 + $0xf0] sm:$0xff]
  %v51 = vld [vmem:[%s0 + $0xf8] sm:$0xff]
  %v52 = vld [vmem:[%s0 + $0x100] sm:$0xff]
  %v53 = vld [vmem:[%s0 + $0x108] sm:$0xff]
  %v54 = vld [vmem:[%s0 + $0x110] sm:$0xff]
  %v55 = vld [vmem:[%s0 + $0x118] sm:$0xff]
  %v56 = vld [vmem:[%s0 + $0x120] sm:$0xff]
  %v57 = vld [vmem:[%s0 + $0x128] sm:$0xff]
  %v58 = vld [vmem:[%s0 + $0x130] sm:$0xff]
  %v59 = vld [vmem:[%s0 + $0x138] sm:$0xff]
  %v60 = vld [vmem:[%s0 + $0x140] sm:$0xff]
  %v61 = vld [vmem:[%s0 + $0x148] sm:$0xff]
  %v62 = vld [vmem:[%s0 + $0x150] sm:$0xff]
  %v63 = vld [vmem:[%s0 + $0x158] sm:$0xff]
  %v64 = vld [vmem:[%s0 + $0x160] sm:$0xff]
  %v65 = vld [vmem:[%s0 + $0x168] sm:$0xff]
  %v66 = vld [vmem:[%s0 + $0x170] sm:$0xff]
  %v67 = vld [vmem:[%s0 + $0x178] sm:$0xff]
  %v68 = vld [vmem:[%s0 + $0x180] sm:$0xff]
  %v69 = vld [vmem:[%s0 + $0x188] sm:$0xff]
  %v70 = vld [vmem:[%s0 + $0x190] sm:$0xff]
  %v71 = vld [vmem:[%s0 + $0x198] sm:$0xff]
  %v72 = vld [vmem:[%s0 + $0x1a0] sm:$0xff]
  %v73 = vld [vmem:[%s0 + $0x1a8] sm:$0xff]
  %v74 = vld [vmem:[%s0 + $0x1b0] sm:$0xff]
  %v75 = vld [vmem:[%s0 + $0x1b8] sm:$0xff]
  %v76 = vld [vmem:[%s0 + $0x1c0] sm:$0xff]
  %v77 = vld [vmem:[%s0 + $0x1c8] sm:$0xff]
  %v78 = vld [vmem:[%s0 + $0x1d0] sm:$0xff]
  %v79 = vld [vmem:[%s0 + $0x1d8] sm:$0xff]
  %v80 = vld [vmem:[%s0 + $0x1e0] sm:$0xff]
  %v81 = vld [vmem:[%s0 + $0x1e8] sm:$0xff]
  %v82 = vld [vmem:[%s0 + $0x1f0] sm:$0xff]
  %v83 = vld [vmem:[%s0 + $0x1f8] sm:$0xff]
  %v84 = vld [vmem:[%s0 + $0x200] sm:$0xff]
  %v85 = vld [vmem:[%s0 + $0x208] sm:$0xff]
  %v86 = vld [vmem:[%s0 + $0x210] sm:$0xff]
  %v87 = vld [vmem:[%s0 + $0x218] sm:$0xff]
  %v88 = vld [vmem:[%s0 + $0x220] sm:$0xff]
  %v89 = vld [vmem:[%s0 + $0x228] sm:$0xff]
  %v90 = vld [vmem:[%s0 + $0x230] sm:$0xff]
  %v91 = vld [vmem:[%s0 + $0x238] sm:$0xff]
  %v92 = vld [vmem:[%s0 + $0x240] sm:$0xff]
  %v93 = vld [vmem:[%s0 + $0x248] sm:$0xff]
  %v94 = vld [vmem:[%s0 + $0x250] sm:$0xff]
  %v95 = vld [vmem:[%s0 + $0x258] sm:$0xff]
  %v96 = vld [vmem:[%s0 + $0x260] sm:$0xff]
  %v97 = vld [vmem:[%s0 + $0x268] sm:$0xff]
  %v98 = vld [vmem:[%s0 + $0x270] sm:$0xff]
  %v99 = vld [vmem:[%s0 + $0x278] sm:$0xff]
  %v100 = vld [vmem:[%s0 + $0x280] sm:$0xff]
  %v101 = vld [vmem:[%s0 + $0x288] sm:$0xff]
  %v102 = vld [vmem:[%s0 + $0x290] sm:$0xff]
  %v103 = vld [vmem:[%s0 + $0x298] sm:$0xff]
  %v104 = vld [vmem:[%s0 + $0x2a0] sm:$0xff]
  %v105 = vld [vmem:[%s0 + $0x2a8] sm:$0xff]
  %v106 = vld [vmem:[%s0 + $0x2b0] sm:$0xff]
  %v107 = vld [vmem:[%s0 + $0x2b8] sm:$0xff]
  %v108 = vld [vmem:[%s0 + $0x2c0] sm:$0xff]
  %v109 = vld [vmem:[%s0 + $0x2c8] sm:$0xff]
  %v110 = vld [vmem:[%s0 + $0x2d0] sm:$0xff]
  %v111 = vld [vmem:[%s0 + $0x2d8] sm:$0xff]
  %v112 = vld [vmem:[%s0 + $0x2e0] sm:$0xff]
  %v113 = vld [vmem:[%s0 + $0x2e8] sm:$0xff]
  %v114 = vld [vmem:[%s0 + $0x2f0] sm:$0xff]
  %v115 = vld [vmem:[%s0 + $0x2f8] sm:$0xff]
  %v116 = vld [vmem:[%s0 + $0x300] sm:$0xff]
  %v117 = vld [vmem:[%s0 + $0x308] sm:$0xff]
  %v118 = vld [vmem:[%s0 + $0x310] sm:$0xff]
  %v119 = vld [vmem:[%s0 + $0x318] sm:$0xff]
  %v120 = vld [vmem:[%s0 + $0x320] sm:$0xff]
  %v121 = vld [vmem:[%s0 + $0x328] sm:$0xff]
  %v122 = vld [vmem:[%s0 + $0x330] sm:$0xff]
  %v123 = vld [vmem:[%s0 + $0x338] sm:$0xff]
  %v124 = vld [vmem:[%s0 + $0x340] sm:$0xff]
  %v125 = vld [vmem:[%s0 + $0x348] sm:$0xff]
  %v126 = vld [vmem:[%s0 + $0x350] sm:$0xff]
  %v127 = vld [vmem:[%s0 + $0x358] sm:$0xff]
  %v128 = vld [vmem:[%s0 + $0x360] sm:$0xff]
  %v129 = vld [vmem:[%s0 + $0x368] sm:$0xff]
  %v130 = vld [vmem:[%s0 + $0x370] sm:$0xff]
  %v131 = vld [vmem:[%s0 + $0x378] sm:$0xff]
  %v132 = vld [vmem:[%s0 + $0x380] sm:$0xff]
  %v133 = vld [vmem:[%s0 + $0x388] sm:$0xff]
  %v134 = vld [vmem:[%s0 + $0x390] sm:$0xff]
  %v135 = vld [vmem:[%s0 + $0x398] sm:$0xff]
  %v136 = vld [vmem:[%s0 + $0x3a0] sm:$0xff]
  %v137 = vld [vmem:[%s0 + $0x3a8] sm:$0xff]
  %v138 = vld [vmem:[%s0 + $0x3b0] sm:$0xff]
  %v139 = vld [vmem:[%s0 + $0x3b8] sm:$0xff]
  %v140 = vld [vmem:[%s0 + $0x3c0] sm:$0xff]
  %v141 = vld [vmem:[%s0 + $0x3c8] sm:$0xff]
  %v142 = vld [vmem:[%s0 + $0x3d0] sm:$0xff]
  %v143 = vld [vmem:[%s0 + $0x3d8] sm:$0xff]
  %v144 = vld [vmem:[%s0 + $0x3e0] sm:$0xff]
  %v145 = vld [vmem:[%s0 + $0x3e8] sm:$0xff]
  %v146 = vld [vmem:[%s0 + $0x3f0] sm:$0xff]
  %v147 = vld [vmem:[%s0 + $0x3f8] sm:$0xff]
  %v148 = vld [vmem:[%s0 + $0x400] sm:$0xff]
  %v149 = vld [vmem:[%s0 + $0x408] sm:$0xff]
  %v150 = vld [vmem:[%s0 + $0x410] sm:$0xff]
  %v151 = vld [vmem:[%s0 + $0x418] sm:$0xff]
  %v152 = vld [vmem:[%s0 + $0x420] sm:$0xff]
  %v153 = vld [vmem:[%s0 + $0x428] sm:$0xff]
  %v154 = vld [vmem:[%s0 + $0x430] sm:$0xff]
  %v155 = vld [vmem:[%s0 + $0x438] sm:$0xff]
  %v156 = vld [vmem:[%s0 + $0x440] sm:$0xff]
  %v157 = vld [vmem:[%s0 + $0x448] sm:$0xff]
  %v158 = vld [vmem:[%s0 + $0x450] sm:$0xff]
  %v159 = vld [vmem:[%s0 + $0x458] sm:$0xff]
  %v160 = vld [vmem:[%s0 + $0x460] sm:$0xff]
  %v161 = vld [vmem:[%s0 + $0x468] sm:$0xff]
  %v162 = vld [vmem:[%s0 + $0x470] sm:$0xff]
  %v163 = vld [vmem:[%s0 + $0x478] sm:$0xff]
  %v164 = vld [vmem:[%s0 + $0x480] sm:$0xff]
  %v165 = vld [vmem:[%s0 + $0x488] sm:$0xff]
  %v166 = vld [vmem:[%s0 + $0x490] sm:$0xff]
  %v167 = vld [vmem:[%s0 + $0x498] sm:$0xff]
  %v168 = vld [vmem:[%s0 + $0x4a0] sm:$0xff]
  %v169 = vld [vmem:[%s0 + $0x4a8] sm:$0xff]
  %v170 = vld [vmem:[%s0 + $0x4b0] sm:$0xff]
  %v171 = vld [vmem:[%s0 + $0x4b8] sm:$0xff]
  %v172 = vld [vmem:[%s0 + $0x4c0] sm:$0xff]
  %v173 = vld [vmem:[%s0 + $0x4c8] sm:$0xff]
  %v174 = vld [vmem:[%s0 + $0x4d0] sm:$0xff]
  %v175 = vld [vmem:[%s0 + $0x4d8] sm:$0xff]
  %v176 = vld [vmem:[%s0 + $0x4e0] sm:$0xff]
  %v177 = vld [vmem:[%s0 + $0x4e8] sm:$0xff]
  %v178 = vld [vmem:[%s0 + $0x4f0] sm:$0xff]
  %v179 = vld [vmem:[%s0 + $0x4f8] sm:$0xff]
  %v180 = vld [vmem:[%s0 + $0x500] sm:$0xff]
  %v181 = vld [vmem:[%s0 + $0x508] sm:$0xff]
  %v182 = vld [vmem:[%s0 + $0x510] sm:$0xff]
  %v183 = vld [vmem:[%s0 + $0x518] sm:$0xff]
  %v184 = vld [vmem:[%s0 + $0x520] sm:$0xff]
  %v185 = vld [vmem:[%s0 + $0x528] sm:$0xff]
  %v186 = vld [vmem:[%s0 + $0x530] sm:$0xff]
  %v187 = vld [vmem:[%s0 + $0x538] sm:$0xff]
  %v188 = vld [vmem:[%s0 + $0x540] sm:$0xff]
  %v189 = vld [vmem:[%s0 + $0x548] sm:$0xff]
  %v190 = vld [vmem:[%s0 + $0x550] sm:$0xff]
  %v191 = vld [vmem:[%s0 + $0x558] sm:$0xff]
  %v192 = vld [vmem:[%s0 + $0x560] sm:$0xff]
  %v193 = vld [vmem:[%s0 + $0x568] sm:$0xff]
  %v194 = vld [vmem:[%s0 + $0x570] sm:$0xff]
  %v195 = vld [vmem:[%s0 + $0x578] sm:$0xff]
  %v196 = vld [vmem:[%s0 + $0x580] sm:$0xff]
  %v197 = vld [vmem:[%s0 + $0x588] sm:$0xff]
  %v198 = vld [vmem:[%s0 + $0x590] sm:$0xff]
  %v199 = vld [vmem:[%s0 + $0x598] sm:$0xff]
  %v200 = vld [vmem:[%s0 + $0x5a0] sm:$0xff]
  %v201 = vld [vmem:[%s0 + $0x5a8] sm:$0xff]
  %v202 = vld [vmem:[%s0 + $0x5b0] sm:$0xff]
  %v203 = vld [vmem:[%s0 + $0x5b8] sm:$0xff]
  %v204 = vld [vmem:[%s0 + $0x5c0] sm:$0xff]
  %v205 = vld [vmem:[%s0 + $0x5c8] sm:$0xff]
  %v206 = vld [vmem:[%s0 + $0x5d0] sm:$0xff]
  %v207 = vld [vmem:[%s0 + $0x5d8] sm:$0xff]
  %v208 = vld [vmem:[%s0 + $0x5e0] sm:$0xff]
  %v209 = vld [vmem:[%s0 + $0x5e8] sm:$0xff]
  %v210 = vld [vmem:[%s0 + $0x5f0] sm:$0xff]
  %v211 = vld [vmem:[%s0 + $0x5f8] sm:$0xff]
  %v212 = vld [vmem:[%s0 + $0x600] sm:$0xff]
  %v213 = vld [vmem:[%s0 + $0x608] sm:$0xff]
  %v214 = vld [vmem:[%s0 + $0x610] sm:$0xff]
  %v215 = vld [vmem:[%s0 + $0x618] sm:$0xff]
  %v216 = vld [vmem:[%s0 + $0x620] sm:$0xff]
  %v217 = vld [vmem:[%s0 + $0x628] sm:$0xff]
  %v218 = vld [vmem:[%s0 + $0x630] sm:$0xff]
  %v219 = vld [vmem:[%s0 + $0x638] sm:$0xff]
  %v220 = vld [vmem:[%s0 + $0x640] sm:$0xff]
  %v221 = vld [vmem:[%s0 + $0x648] sm:$0xff]
  %v222 = vld [vmem:[%s0 + $0x650] sm:$0xff]
  %v223 = vld [vmem:[%s0 + $0x658] sm:$0xff]
  %v224 = vld [vmem:[%s0 + $0x660] sm:$0xff]
  %v225 = vld [vmem:[%s0 + $0x668] sm:$0xff]
  %v226 = vld [vmem:[%s0 + $0x670] sm:$0xff]
  %v227 = vld [vmem:[%s0 + $0x678] sm:$0xff]
  %v228 = vld [vmem:[%s0 + $0x680] sm:$0xff]
  %v229 = vld [vmem:[%s0 + $0x688] sm:$0xff]
  %v230 = vld [vmem:[%s0 + $0x690] sm:$0xff]
  %v231 = vld [vmem:[%s0 + $0x698] sm:$0xff]
  %v232 = vld [vmem:[%s0 + $0x6a0] sm:$0xff]
  %v233 = vld [vmem:[%s0 + $0x6a8] sm:$0xff]
  %v234 = vld [vmem:[%s0 + $0x6b0] sm:$0xff]
  %v235 = vld [vmem:[%s0 + $0x6b8] sm:$0xff]
  %v236 = vld [vmem:[%s0 + $0x6c0] sm:$0xff]
  %v237 = vld [vmem:[%s0 + $0x6c8] sm:$0xff]
  %v238 = vld [vmem:[%s0 + $0x6d0] sm:$0xff]
  %v239 = vld [vmem:[%s0 + $0x6d8] sm:$0xff]
  %v240 = vld [vmem:[%s0 + $0x6e0] sm:$0xff]
  %v241 = vld [vmem:[%s0 + $0x6e8] sm:$0xff]
  %v242 = vld [vmem:[%s0 + $0x6f0] sm:$0xff]
  %v243 = vld [vmem:[%s0 + $0x6f8] sm:$0xff]
  %v244 = vld [vmem:[%s0 + $0x700] sm:$0xff]
  %v245 = vld [vmem:[%s0 + $0x708] sm:$0xff]
  %v246 = vld [vmem:[%s0 + $0x710] sm:$0xff]
  %v247 = vld [vmem:[%s0 + $0x718] sm:$0xff]
  %v248 = vld [vmem:[%s0 + $0x720] sm:$0xff]
  %v249 = vld [vmem:[%s0 + $0x728] sm:$0xff]
  %v250 = vld [vmem:[%s0 + $0x730] sm:$0xff]
  %v251 = vld [vmem:[%s0 + $0x738] sm:$0xff]
  %v252 = vld [vmem:[%s0 + $0x740] sm:$0xff]
  %v253 = vld [vmem:[%s0 + $0x748] sm:$0xff]
  %v254 = vld [vmem:[%s0 + $0x750] sm:$0xff]
  %v255 = vld [vmem:[%s0 + $0x758] sm:$0xff]
  %v256 = vld [vmem:[%s0 + $0x760] sm:$0xff]
  %v257 = vld [vmem:[%s0 + $0x768] sm:$0xff]
  %v258 = vld [vmem:[%s0 + $0x770] sm:$0xff]
  %v259 = vld [vmem:[%s0 + $0x778] sm:$0xff]
  %v260 = vld [vmem:[%s0 + $0x780] sm:$0xff]
  %v261 = vld [vmem:[%s0 + $0x788] sm:$0xff]
  %v262 = vld [vmem:[%s0 + $0x790] sm:$0xff]
  %v263 = vld [vmem:[%s0 + $0x798] sm:$0xff]
  %v264 = vld [vmem:[%s0 + $0x7a0] sm:$0xff]
  %v265 = vld [vmem:[%s0 + $0x7a8] sm:$0xff]
  %v266 = vld [vmem:[%s0 + $0x7b0] sm:$0xff]
  %v267 = vld [vmem:[%s0 + $0x7b8] sm:$0xff]
  %v268 = vld [vmem:[%s0 + $0x7c0] sm:$0xff]
  %v269 = vld [vmem:[%s0 + $0x7c8] sm:$0xff]
  %v270 = vld [vmem:[%s0 + $0x7d0] sm:$0xff]
  %v271 = vld [vmem:[%s0 + $0x7d8] sm:$0xff]
  %v272 = vld [vmem:[%s0 + $0x7e0] sm:$0xff]
  %v273 = vld [vmem:[%s0 + $0x7e8] sm:$0xff]
  %v274 = vld [vmem:[%s0 + $0x7f0] sm:$0xff]
  %v275 = vld [vmem:[%s0 + $0x7f8] sm:$0xff]
  %v276 = vld [vmem:[%s0 + $0x800] sm:$0xff]
  %v277 = vld [vmem:[%s0 + $0x808] sm:$0xff]
  %v278 = vld [vmem:[%s0 + $0x810] sm:$0xff]
  %v279 = vld [vmem:[%s0 + $0x818] sm:$0xff]
  %v280 = vld [vmem:[%s0 + $0x820] sm:$0xff]
  %v281 = vld [vmem:[%s0 + $0x828] sm:$0xff]
  %v282 = vld [vmem:[%s0 + $0x830] sm:$0xff]
  %v283 = vld [vmem:[%s0 + $0x838] sm:$0xff]
  %v284 = vld [vmem:[%s0 + $0x840] sm:$0xff]
  %v285 = vld [vmem:[%s0 + $0x848] sm:$0xff]
  %v286 = vld [vmem:[%s0 + $0x850] sm:$0xff]
  %v287 = vld [vmem:[%s0 + $0x858] sm:$0xff]
  %v288 = vld [vmem:[%s0 + $0x860] sm:$0xff]
  %v289 = vld [vmem:[%s0 + $0x868] sm:$0xff]
  %v290 = vld [vmem:[%s0 + $0x870] sm:$0xff]
  %v291 = vld [vmem:[%s0 + $0x878] sm:$0xff]
  %v292 = vld [vmem:[%s0 + $0x880] sm:$0xff]
  %v293 = vld [vmem:[%s0 + $0x888] sm:$0xff]
  %v294 = vld [vmem:[%s0 + $0x890] sm:$0xff]
  %v295 = vld [vmem:[%s0 + $0x898] sm:$0xff]
  %v296 = vld [vmem:[%s0 + $0x8a0] sm:$0xff]
  %v297 = vld [vmem:[%s0 + $0x8a8] sm:$0xff]
  %v298 = vld [vmem:[%s0 + $0x8b0] sm:$0xff]
  %v299 = vld [vmem:[%s0 + $0x8b8] sm:$0xff]
  %v300 = vld [vmem:[%s0 + $0x8c0] sm:$0xff]
  %v301 = vld [vmem:[%s0 + $0x8c8] sm:$0xff]
  %v302 = vld [vmem:[%s0 + $0x8d0] sm:$0xff]
  %v303 = vld [vmem:[%s0 + $0x8d8] sm:$0xff]
  %v304 = vld [vmem:[%s0 + $0x8e0] sm:$0xff]
  %v305 = vld [vmem:[%s0 + $0x8e8] sm:$0xff]
  %v306 = vld [vmem:[%s0 + $0x8f0] sm:$0xff]
  %v307 = vld [vmem:[%s0 + $0x8f8] sm:$0xff]
  %v308 = vld [vmem:[%s0 + $0x900] sm:$0xff]
  %v309 = vld [vmem:[%s0 + $0x908] sm:$0xff]
  %v310 = vld [vmem:[%s0 + $0x910] sm:$0xff]
  %v311 = vld [vmem:[%s0 + $0x918] sm:$0xff]
  %v312 = vld [vmem:[%s0 + $0x920] sm:$0xff]
  %v313 = vld [vmem:[%s0 + $0x928] sm:$0xff]
  %v314 = vld [vmem:[%s0 + $0x930] sm:$0xff]
  %v315 = vld [vmem:[%s0 + $0x938] sm:$0xff]
  %v316 = vld [vmem:[%s0 + $0x940] sm:$0xff]
  %v317 = vld [vmem:[%s0 + $0x948] sm:$0xff]
  %v318 = vld [vmem:[%s0 + $0x950] sm:$0xff]
  %v319 = vld [vmem:[%s0 + $0x958] sm:$0xff]
  %v320 = vld [vmem:[%s0 + $0x960] sm:$0xff]
  %v321 = vld [vmem:[%s0 + $0x968] sm:$0xff]
  %v322 = vld [vmem:[%s0 + $0x970] sm:$0xff]
  %v323 = vld [vmem:[%s0 + $0x978] sm:$0xff]
  %v324 = vld [vmem:[%s0 + $0x980] sm:$0xff]
  %v325 = vld [vmem:[%s0 + $0x988] sm:$0xff]
  %v326 = vld [vmem:[%s0 + $0x990] sm:$0xff]
  %v327 = vld [vmem:[%s0 + $0x998] sm:$0xff]
  %v328 = vld [vmem:[%s0 + $0x9a0] sm:$0xff]
  %v329 = vld [vmem:[%s0 + $0x9a8] sm:$0xff]
  %v330 = vld [vmem:[%s0 + $0x9b0] sm:$0xff]
  %v331 = vld [vmem:[%s0 + $0x9b8] sm:$0xff]
  %v332 = vld [vmem:[%s0 + $0x9c0] sm:$0xff]
  %v333 = vld [vmem:[%s0 + $0x9c8] sm:$0xff]
  %v334 = vld [vmem:[%s0 + $0x9d0] sm:$0xff]
  %v335 = vld [vmem:[%s0 + $0x9d8] sm:$0xff]
  %v336 = vld [vmem:[%s0 + $0x9e0] sm:$0xff]
  %v337 = vld [vmem:[%s0 + $0x9e8] sm:$0xff]
  %v338 = vld [vmem:[%s0 + $0x9f0] sm:$0xff]
  %v339 = vld [vmem:[%s0 + $0x9f8] sm:$0xff]
  %v340 = vld [vmem:[%s0 + $0xa00] sm:$0xff]
  %v341 = vld [vmem:[%s0 + $0xa08] sm:$0xff]
  %v342 = vld [vmem:[%s0 + $0xa10] sm:$0xff]
  %v343 = vld [vmem:[%s0 + $0xa18] sm:$0xff]
  %v344 = vld [vmem:[%s0 + $0xa20] sm:$0xff]
  %v345 = vld [vmem:[%s0 + $0xa28] sm:$0xff]
  %v346 = vld [vmem:[%s0 + $0xa30] sm:$0xff]
  %v347 = vld [vmem:[%s0 + $0xa38] sm:$0xff]
  %v348 = vld [vmem:[%s0 + $0xa40] sm:$0xff]
  %v349 = vld [vmem:[%s0 + $0xa48] sm:$0xff]
  %v350 = vld [vmem:[%s0 + $0xa50] sm:$0xff]
  %v351 = vld [vmem:[%s0 + $0xa58] sm:$0xff]
  %v352 = vld [vmem:[%s0 + $0xa60] sm:$0xff]
  %v353 = vld [vmem:[%s0 + $0xa68] sm:$0xff]
  %v354 = vld [vmem:[%s0 + $0xa70] sm:$0xff]
  %v355 = vld [vmem:[%s0 + $0xa78] sm:$0xff]
  %v356 = vld [vmem:[%s0 + $0xa80] sm:$0xff]
  %v357 = vld [vmem:[%s0 + $0xa88] sm:$0xff]
  %v358 = vld [vmem:[%s0 + $0xa90] sm:$0xff]
  %v359 = vld [vmem:[%s0 + $0xa98] sm:$0xff]
  %v360 = vld [vmem:[%s0 + $0xaa0] sm:$0xff]
  %v361 = vld [vmem:[%s0 + $0xaa8] sm:$0xff]
  %v362 = vld [vmem:[%s0 + $0xab0] sm:$0xff]
  %v363 = vld [vmem:[%s0 + $0xab8] sm:$0xff]
  %v364 = vld [vmem:[%s0 + $0xac0] sm:$0xff]
  %v365 = vld [vmem:[%s0 + $0xac8] sm:$0xff]
  %v366 = vld [vmem:[%s0 + $0xad0] sm:$0xff]
  %v367 = vld [vmem:[%s0 + $0xad8] sm:$0xff]
  %v368 = vld [vmem:[%s0 + $0xae0] sm:$0xff]
  %v369 = vld [vmem:[%s0 + $0xae8] sm:$0xff]
  %v370 = vld [vmem:[%s0 + $0xaf0] sm:$0xff]
  %v371 = vld [vmem:[%s0 + $0xaf8] sm:$0xff]
  %v372 = vld [vmem:[%s0 + $0xb00] sm:$0xff]
  %v373 = vld [vmem:[%s0 + $0xb08] sm:$0xff]
  %v374 = vld [vmem:[%s0 + $0xb10] sm:$0xff]
  %v375 = vld [vmem:[%s0 + $0xb18] sm:$0xff]
  %v376 = vld [vmem:[%s0 + $0xb20] sm:$0xff]
  %v377 = vld [vmem:[%s0 + $0xb28] sm:$0xff]
  %v378 = vld [vmem:[%s0 + $0xb30] sm:$0xff]
  %v379 = vld [vmem:[%s0 + $0xb38] sm:$0xff]
  %v380 = vld [vmem:[%s0 + $0xb40] sm:$0xff]
  %v381 = vld [vmem:[%s0 + $0xb48] sm:$0xff]
  %v382 = vld [vmem:[%s0 + $0xb50] sm:$0xff]
  %v383 = vld [vmem:[%s0 + $0xb58] sm:$0xff]
  %v384 = vld [vmem:[%s0 + $0xb60] sm:$0xff]
  %v385 = vld [vmem:[%s0 + $0xb68] sm:$0xff]
  %v386 = vld [vmem:[%s0 + $0xb70] sm:$0xff]
  %v387 = vld [vmem:[%s0 + $0xb78] sm:$0xff]
  %v388 = vld [vmem:[%s0 + $0xb80] sm:$0xff]
  %v389 = vld [vmem:[%s0 + $0xb88] sm:$0xff]
  %v390 = vld [vmem:[%s0 + $0xb90] sm:$0xff]
  %v391 = vld [vmem:[%s0 + $0xb98] sm:$0xff]
  %v392 = vld [vmem:[%s0 + $0xba0] sm:$0xff]
  %v393 = vld [vmem:[%s0 + $0xba8] sm:$0xff]
  %v394 = vld [vmem:[%s0 + $0xbb0] sm:$0xff]
  %v395 = vld [vmem:[%s0 + $0xbb8] sm:$0xff]
  %v396 = vld [vmem:[%s0 + $0xbc0] sm:$0xff]
  %v397 = vld [vmem:[%s0 + $0xbc8] sm:$0xff]
  %v398 = vld [vmem:[%s0 + $0xbd0] sm:$0xff]
  %v399 = vld [vmem:[%s0 + $0xbd8] sm:$0xff]
  %v400 = vld [vmem:[%s0 + $0xbe0] sm:$0xff]
  %v401 = vld [vmem:[%s0 + $0xbe8] sm:$0xff]
  %v402 = vld [vmem:[%s0 + $0xbf0] sm:$0xff]
  %v403 = vld [vmem:[%s0 + $0xbf8] sm:$0xff]
  %v404 = vld [vmem:[%s0 + $0xc00] sm:$0xff]
  %v405 = vld [vmem:[%s0 + $0xc08] sm:$0xff]
  %v406 = vld [vmem:[%s0 + $0xc10] sm:$0xff]
  %v407 = vld [vmem:[%s0 + $0xc18] sm:$0xff]
  %v408 = vld [vmem:[%s0 + $0xc20] sm:$0xff]
  %v409 = vld [vmem:[%s0 + $0xc28] sm:$0xff]
  %v410 = vld [vmem:[%s0 + $0xc30] sm:$0xff]
  %v411 = vld [vmem:[%s0 + $0xc38] sm:$0xff]
  %v412 = vld [vmem:[%s0 + $0xc40] sm:$0xff]
  %v413 = vld [vmem:[%s0 + $0xc48] sm:$0xff]
  %v414 = vld [vmem:[%s0 + $0xc50] sm:$0xff]
  %v415 = vld [vmem:[%s0 + $0xc58] sm:$0xff]
  %v416 = vld [vmem:[%s0 + $0xc60] sm:$0xff]
  %v417 = vld [vmem:[%s0 + $0xc68] sm:$0xff]
  %v418 = vld [vmem:[%s0 + $0xc70] sm:$0xff]
  %v419 = vld [vmem:[%s0 + $0xc78] sm:$0xff]
  %v420 = vld [vmem:[%s0 + $0xc80] sm:$0xff]
  %v421 = vld [vmem:[%s0 + $0xc88] sm:$0xff]
  %v422 = vld [vmem:[%s0 + $0xc90] sm:$0xff]
  %v423 = vld [vmem:[%s0 + $0xc98] sm:$0xff]
  %v424 = vld [vmem:[%s0 + $0xca0] sm:$0xff]
  %v425 = vld [vmem:[%s0 + $0xca8] sm:$0xff]
  %v426 = vld [vmem:[%s0 + $0xcb0] sm:$0xff]
  %v427 = vld [vmem:[%s0 + $0xcb8] sm:$0xff]
  %v428 = vld [vmem:[%s0 + $0xcc0] sm:$0xff]
  %v429 = vld [vmem:[%s0 + $0xcc8] sm:$0xff]
  %v430 = vld [vmem:[%s0 + $0xcd0] sm:$0xff]
  %v431 = vld [vmem:[%s0 + $0xcd8] sm:$0xff]
  %v432 = vld [vmem:[%s0 + $0xce0] sm:$0xff]
  %v433 = vld [vmem:[%s0 + $0xce8] sm:$0xff]
  %v434 = vld [vmem:[%s0 + $0xcf0] sm:$0xff]
  %v435 = vld [vmem:[%s0 + $0xcf8] sm:$0xff]
  %v436 = vld [vmem:[%s0 + $0xd00] sm:$0xff]
  %v437 = vld [vmem:[%s0 + $0xd08] sm:$0xff]
  %v438 = vld [vmem:[%s0 + $0xd10] sm:$0xff]
  %v439 = vld [vmem:[%s0 + $0xd18] sm:$0xff]
  %v440 = vld [vmem:[%s0 + $0xd20] sm:$0xff]
  %v441 = vld [vmem:[%s0 + $0xd28] sm:$0xff]
  %v442 = vld [vmem:[%s0 + $0xd30] sm:$0xff]
  %v443 = vld [vmem:[%s0 + $0xd38] sm:$0xff]
  %v444 = vld [vmem:[%s0 + $0xd40] sm:$0xff]
  %v445 = vld [vmem:[%s0 + $0xd48] sm:$0xff]
  %v446 = vld [vmem:[%s0 + $0xd50] sm:$0xff]
  %v447 = vld [vmem:[%s0 + $0xd58] sm:$0xff]
  %v448 = vld [vmem:[%s0 + $0xd60] sm:$0xff]
  %v449 = vld [vmem:[%s0 + $0xd68] sm:$0xff]
  %v450 = vld [vmem:[%s0 + $0xd70] sm:$0xff]
  %v451 = vld [vmem:[%s0 + $0xd78] sm:$0xff]
  %v452 = vmax.f32 %v20, %v68
  %v453 = vmax.f32 %v452, %v116
  %v454 = vmax.f32 %v453, %v164
  %v455 = vmax.f32 %v454, %v212
  %v456 = vmax.f32 %v455, %v260
  %v457 = vmax.f32 %v456, %v308
  %v458 = vmax.f32 %v457, %v356
  %v459 = vmax.f32 %v458, %v404
  %v460 = vmax.f32 %v21, %v69
  %v461 = vmax.f32 %v460, %v117
  %v462 = vmax.f32 %v461, %v165
  %v463 = vmax.f32 %v462, %v213
  %v464 = vmax.f32 %v463, %v261
  %v465 = vmax.f32 %v464, %v309
  %v466 = vmax.f32 %v465, %v357
  %v467 = vmax.f32 %v466, %v405
  %vm468 = vcmask 261120
  %v469 = vsel %vm468, %v22, -inf
  %v470 = vsel %vm468, %v70, -inf
  %v471 = vmax.f32 %v469, %v470
  %v472 = vsel %vm468, %v118, -inf
  %v473 = vmax.f32 %v471, %v472
  %v474 = vsel %vm468, %v166, -inf
  %v475 = vmax.f32 %v473, %v474
  %v476 = vsel %vm468, %v214, -inf
  %v477 = vmax.f32 %v475, %v476
  %v478 = vsel %vm468, %v262, -inf
  %v479 = vmax.f32 %v477, %v478
  %v480 = vsel %vm468, %v310, -inf
  %v481 = vmax.f32 %v479, %v480
  %v482 = vsel %vm468, %v358, -inf
  %v483 = vmax.f32 %v481, %v482
  %v484 = vsel %vm468, %v406, -inf
  %v485 = vmax.f32 %v483, %v484
  %v486 = vmax.f32 %v23, %v71
  %v487 = vmax.f32 %v486, %v119
  %v488 = vmax.f32 %v487, %v167
  %v489 = vmax.f32 %v488, %v215
  %v490 = vmax.f32 %v489, %v263
  %v491 = vmax.f32 %v490, %v311
  %v492 = vmax.f32 %v491, %v359
  %v493 = vmax.f32 %v492, %v407
  %v494 = vmax.f32 %v24, %v72
  %v495 = vmax.f32 %v494, %v120
  %v496 = vmax.f32 %v495, %v168
  %v497 = vmax.f32 %v496, %v216
  %v498 = vmax.f32 %v497, %v264
  %v499 = vmax.f32 %v498, %v312
  %v500 = vmax.f32 %v499, %v360
  %v501 = vmax.f32 %v500, %v408
  %v502 = vsel %vm468, %v25, -inf
  %v503 = vsel %vm468, %v73, -inf
  %v504 = vmax.f32 %v502, %v503
  %v505 = vsel %vm468, %v121, -inf
  %v506 = vmax.f32 %v504, %v505
  %v507 = vsel %vm468, %v169, -inf
  %v508 = vmax.f32 %v506, %v507
  %v509 = vsel %vm468, %v217, -inf
  %v510 = vmax.f32 %v508, %v509
  %v511 = vsel %vm468, %v265, -inf
  %v512 = vmax.f32 %v510, %v511
  %v513 = vsel %vm468, %v313, -inf
  %v514 = vmax.f32 %v512, %v513
  %v515 = vsel %vm468, %v361, -inf
  %v516 = vmax.f32 %v514, %v515
  %v517 = vsel %vm468, %v409, -inf
  %v518 = vmax.f32 %v516, %v517
  %v519 = vmax.f32 %v26, %v74
  %v520 = vmax.f32 %v519, %v122
  %v521 = vmax.f32 %v520, %v170
  %v522 = vmax.f32 %v521, %v218
  %v523 = vmax.f32 %v522, %v266
  %v524 = vmax.f32 %v523, %v314
  %v525 = vmax.f32 %v524, %v362
  %v526 = vmax.f32 %v525, %v410
  %v527 = vmax.f32 %v27, %v75
  %v528 = vmax.f32 %v527, %v123
  %v529 = vmax.f32 %v528, %v171
  %v530 = vmax.f32 %v529, %v219
  %v531 = vmax.f32 %v530, %v267
  %v532 = vmax.f32 %v531, %v315
  %v533 = vmax.f32 %v532, %v363
  %v534 = vmax.f32 %v533, %v411
  %v535 = vsel %vm468, %v28, -inf
  %v536 = vsel %vm468, %v76, -inf
  %v537 = vmax.f32 %v535, %v536
  %v538 = vsel %vm468, %v124, -inf
  %v539 = vmax.f32 %v537, %v538
  %v540 = vsel %vm468, %v172, -inf
  %v541 = vmax.f32 %v539, %v540
  %v542 = vsel %vm468, %v220, -inf
  %v543 = vmax.f32 %v541, %v542
  %v544 = vsel %vm468, %v268, -inf
  %v545 = vmax.f32 %v543, %v544
  %v546 = vsel %vm468, %v316, -inf
  %v547 = vmax.f32 %v545, %v546
  %v548 = vsel %vm468, %v364, -inf
  %v549 = vmax.f32 %v547, %v548
  %v550 = vsel %vm468, %v412, -inf
  %v551 = vmax.f32 %v549, %v550
  %v552 = vmax.f32 %v29, %v77
  %v553 = vmax.f32 %v552, %v125
  %v554 = vmax.f32 %v553, %v173
  %v555 = vmax.f32 %v554, %v221
  %v556 = vmax.f32 %v555, %v269
  %v557 = vmax.f32 %v556, %v317
  %v558 = vmax.f32 %v557, %v365
  %v559 = vmax.f32 %v558, %v413
  %v560 = vmax.f32 %v30, %v78
  %v561 = vmax.f32 %v560, %v126
  %v562 = vmax.f32 %v561, %v174
  %v563 = vmax.f32 %v562, %v222
  %v564 = vmax.f32 %v563, %v270
  %v565 = vmax.f32 %v564, %v318
  %v566 = vmax.f32 %v565, %v366
  %v567 = vmax.f32 %v566, %v414
  %v568 = vsel %vm468, %v31, -inf
  %v569 = vsel %vm468, %v79, -inf
  %v570 = vmax.f32 %v568, %v569
  %v571 = vsel %vm468, %v127, -inf
  %v572 = vmax.f32 %v570, %v571
  %v573 = vsel %vm468, %v175, -inf
  %v574 = vmax.f32 %v572, %v573
  %v575 = vsel %vm468, %v223, -inf
  %v576 = vmax.f32 %v574, %v575
  %v577 = vsel %vm468, %v271, -inf
  %v578 = vmax.f32 %v576, %v577
  %v579 = vsel %vm468, %v319, -inf
  %v580 = vmax.f32 %v578, %v579
  %v581 = vsel %vm468, %v367, -inf
  %v582 = vmax.f32 %v580, %v581
  %v583 = vsel %vm468, %v415, -inf
  %v584 = vmax.f32 %v582, %v583
  %v585 = vmax.f32 %v32, %v80
  %v586 = vmax.f32 %v585, %v128
  %v587 = vmax.f32 %v586, %v176
  %v588 = vmax.f32 %v587, %v224
  %v589 = vmax.f32 %v588, %v272
  %v590 = vmax.f32 %v589, %v320
  %v591 = vmax.f32 %v590, %v368
  %v592 = vmax.f32 %v591, %v416
  %v593 = vmax.f32 %v33, %v81
  %v594 = vmax.f32 %v593, %v129
  %v595 = vmax.f32 %v594, %v177
  %v596 = vmax.f32 %v595, %v225
  %v597 = vmax.f32 %v596, %v273
  %v598 = vmax.f32 %v597, %v321
  %v599 = vmax.f32 %v598, %v369
  %v600 = vmax.f32 %v599, %v417
  %v601 = vsel %vm468, %v34, -inf
  %v602 = vsel %vm468, %v82, -inf
  %v603 = vmax.f32 %v601, %v602
  %v604 = vsel %vm468, %v130, -inf
  %v605 = vmax.f32 %v603, %v604
  %v606 = vsel %vm468, %v178, -inf
  %v607 = vmax.f32 %v605, %v606
  %v608 = vsel %vm468, %v226, -inf
  %v609 = vmax.f32 %v607, %v608
  %v610 = vsel %vm468, %v274, -inf
  %v611 = vmax.f32 %v609, %v610
  %v612 = vsel %vm468, %v322, -inf
  %v613 = vmax.f32 %v611, %v612
  %v614 = vsel %vm468, %v370, -inf
  %v615 = vmax.f32 %v613, %v614
  %v616 = vsel %vm468, %v418, -inf
  %v617 = vmax.f32 %v615, %v616
  %v618 = vmax.f32 %v35, %v83
  %v619 = vmax.f32 %v618, %v131
  %v620 = vmax.f32 %v619, %v179
  %v621 = vmax.f32 %v620, %v227
  %v622 = vmax.f32 %v621, %v275
  %v623 = vmax.f32 %v622, %v323
  %v624 = vmax.f32 %v623, %v371
  %v625 = vmax.f32 %v624, %v419
  %v626 = vmax.f32 %v36, %v84
  %v627 = vmax.f32 %v626, %v132
  %v628 = vmax.f32 %v627, %v180
  %v629 = vmax.f32 %v628, %v228
  %v630 = vmax.f32 %v629, %v276
  %v631 = vmax.f32 %v630, %v324
  %v632 = vmax.f32 %v631, %v372
  %v633 = vmax.f32 %v632, %v420
  %v634 = vsel %vm468, %v37, -inf
  %v635 = vsel %vm468, %v85, -inf
  %v636 = vmax.f32 %v634, %v635
  %v637 = vsel %vm468, %v133, -inf
  %v638 = vmax.f32 %v636, %v637
  %v639 = vsel %vm468, %v181, -inf
  %v640 = vmax.f32 %v638, %v639
  %v641 = vsel %vm468, %v229, -inf
  %v642 = vmax.f32 %v640, %v641
  %v643 = vsel %vm468, %v277, -inf
  %v644 = vmax.f32 %v642, %v643
  %v645 = vsel %vm468, %v325, -inf
  %v646 = vmax.f32 %v644, %v645
  %v647 = vsel %vm468, %v373, -inf
  %v648 = vmax.f32 %v646, %v647
  %v649 = vsel %vm468, %v421, -inf
  %v650 = vmax.f32 %v648, %v649
  %v651 = vmax.f32 %v38, %v86
  %v652 = vmax.f32 %v651, %v134
  %v653 = vmax.f32 %v652, %v182
  %v654 = vmax.f32 %v653, %v230
  %v655 = vmax.f32 %v654, %v278
  %v656 = vmax.f32 %v655, %v326
  %v657 = vmax.f32 %v656, %v374
  %v658 = vmax.f32 %v657, %v422
  %v659 = vmax.f32 %v39, %v87
  %v660 = vmax.f32 %v659, %v135
  %v661 = vmax.f32 %v660, %v183
  %v662 = vmax.f32 %v661, %v231
  %v663 = vmax.f32 %v662, %v279
  %v664 = vmax.f32 %v663, %v327
  %v665 = vmax.f32 %v664, %v375
  %v666 = vmax.f32 %v665, %v423
  %v667 = vsel %vm468, %v40, -inf
  %v668 = vsel %vm468, %v88, -inf
  %v669 = vmax.f32 %v667, %v668
  %v670 = vsel %vm468, %v136, -inf
  %v671 = vmax.f32 %v669, %v670
  %v672 = vsel %vm468, %v184, -inf
  %v673 = vmax.f32 %v671, %v672
  %v674 = vsel %vm468, %v232, -inf
  %v675 = vmax.f32 %v673, %v674
  %v676 = vsel %vm468, %v280, -inf
  %v677 = vmax.f32 %v675, %v676
  %v678 = vsel %vm468, %v328, -inf
  %v679 = vmax.f32 %v677, %v678
  %v680 = vsel %vm468, %v376, -inf
  %v681 = vmax.f32 %v679, %v680
  %v682 = vsel %vm468, %v424, -inf
  %v683 = vmax.f32 %v681, %v682
  %v684 = vmax.f32 %v41, %v89
  %v685 = vmax.f32 %v684, %v137
  %v686 = vmax.f32 %v685, %v185
  %v687 = vmax.f32 %v686, %v233
  %v688 = vmax.f32 %v687, %v281
  %v689 = vmax.f32 %v688, %v329
  %v690 = vmax.f32 %v689, %v377
  %v691 = vmax.f32 %v690, %v425
  %v692 = vmax.f32 %v42, %v90
  %v693 = vmax.f32 %v692, %v138
  %v694 = vmax.f32 %v693, %v186
  %v695 = vmax.f32 %v694, %v234
  %v696 = vmax.f32 %v695, %v282
  %v697 = vmax.f32 %v696, %v330
  %v698 = vmax.f32 %v697, %v378
  %v699 = vmax.f32 %v698, %v426
  %v700 = vsel %vm468, %v43, -inf
  %v701 = vsel %vm468, %v91, -inf
  %v702 = vmax.f32 %v700, %v701
  %v703 = vsel %vm468, %v139, -inf
  %v704 = vmax.f32 %v702, %v703
  %v705 = vsel %vm468, %v187, -inf
  %v706 = vmax.f32 %v704, %v705
  %v707 = vsel %vm468, %v235, -inf
  %v708 = vmax.f32 %v706, %v707
  %v709 = vsel %vm468, %v283, -inf
  %v710 = vmax.f32 %v708, %v709
  %v711 = vsel %vm468, %v331, -inf
  %v712 = vmax.f32 %v710, %v711
  %v713 = vsel %vm468, %v379, -inf
  %v714 = vmax.f32 %v712, %v713
  %v715 = vsel %vm468, %v427, -inf
  %v716 = vmax.f32 %v714, %v715
  %v717 = vmax.f32 %v44, %v92
  %v718 = vmax.f32 %v717, %v140
  %v719 = vmax.f32 %v718, %v188
  %v720 = vmax.f32 %v719, %v236
  %v721 = vmax.f32 %v720, %v284
  %v722 = vmax.f32 %v721, %v332
  %v723 = vmax.f32 %v722, %v380
  %v724 = vmax.f32 %v723, %v428
  %v725 = vmax.f32 %v45, %v93
  %v726 = vmax.f32 %v725, %v141
  %v727 = vmax.f32 %v726, %v189
  %v728 = vmax.f32 %v727, %v237
  %v729 = vmax.f32 %v728, %v285
  %v730 = vmax.f32 %v729, %v333
  %v731 = vmax.f32 %v730, %v381
  %v732 = vmax.f32 %v731, %v429
  %v733 = vsel %vm468, %v46, -inf
  %v734 = vsel %vm468, %v94, -inf
  %v735 = vmax.f32 %v733, %v734
  %v736 = vsel %vm468, %v142, -inf
  %v737 = vmax.f32 %v735, %v736
  %v738 = vsel %vm468, %v190, -inf
  %v739 = vmax.f32 %v737, %v738
  %v740 = vsel %vm468, %v238, -inf
  %v741 = vmax.f32 %v739, %v740
  %v742 = vsel %vm468, %v286, -inf
  %v743 = vmax.f32 %v741, %v742
  %v744 = vsel %vm468, %v334, -inf
  %v745 = vmax.f32 %v743, %v744
  %v746 = vsel %vm468, %v382, -inf
  %v747 = vmax.f32 %v745, %v746
  %v748 = vsel %vm468, %v430, -inf
  %v749 = vmax.f32 %v747, %v748
  %v750 = vmax.f32 %v47, %v95
  %v751 = vmax.f32 %v750, %v143
  %v752 = vmax.f32 %v751, %v191
  %v753 = vmax.f32 %v752, %v239
  %v754 = vmax.f32 %v753, %v287
  %v755 = vmax.f32 %v754, %v335
  %v756 = vmax.f32 %v755, %v383
  %v757 = vmax.f32 %v756, %v431
  %v758 = vmax.f32 %v48, %v96
  %v759 = vmax.f32 %v758, %v144
  %v760 = vmax.f32 %v759, %v192
  %v761 = vmax.f32 %v760, %v240
  %v762 = vmax.f32 %v761, %v288
  %v763 = vmax.f32 %v762, %v336
  %v764 = vmax.f32 %v763, %v384
  %v765 = vmax.f32 %v764, %v432
  %v766 = vsel %vm468, %v49, -inf
  %v767 = vsel %vm468, %v97, -inf
  %v768 = vmax.f32 %v766, %v767
  %v769 = vsel %vm468, %v145, -inf
  %v770 = vmax.f32 %v768, %v769
  %v771 = vsel %vm468, %v193, -inf
  %v772 = vmax.f32 %v770, %v771
  %v773 = vsel %vm468, %v241, -inf
  %v774 = vmax.f32 %v772, %v773
  %v775 = vsel %vm468, %v289, -inf
  %v776 = vmax.f32 %v774, %v775
  %v777 = vsel %vm468, %v337, -inf
  %v778 = vmax.f32 %v776, %v777
  %v779 = vsel %vm468, %v385, -inf
  %v780 = vmax.f32 %v778, %v779
  %v781 = vsel %vm468, %v433, -inf
  %v782 = vmax.f32 %v780, %v781
  %v783 = vmax.f32 %v50, %v98
  %v784 = vmax.f32 %v783, %v146
  %v785 = vmax.f32 %v784, %v194
  %v786 = vmax.f32 %v785, %v242
  %v787 = vmax.f32 %v786, %v290
  %v788 = vmax.f32 %v787, %v338
  %v789 = vmax.f32 %v788, %v386
  %v790 = vmax.f32 %v789, %v434
  %v791 = vmax.f32 %v51, %v99
  %v792 = vmax.f32 %v791, %v147
  %v793 = vmax.f32 %v792, %v195
  %v794 = vmax.f32 %v793, %v243
  %v795 = vmax.f32 %v794, %v291
  %v796 = vmax.f32 %v795, %v339
  %v797 = vmax.f32 %v796, %v387
  %v798 = vmax.f32 %v797, %v435
  %v799 = vsel %vm468, %v52, -inf
  %v800 = vsel %vm468, %v100, -inf
  %v801 = vmax.f32 %v799, %v800
  %v802 = vsel %vm468, %v148, -inf
  %v803 = vmax.f32 %v801, %v802
  %v804 = vsel %vm468, %v196, -inf
  %v805 = vmax.f32 %v803, %v804
  %v806 = vsel %vm468, %v244, -inf
  %v807 = vmax.f32 %v805, %v806
  %v808 = vsel %vm468, %v292, -inf
  %v809 = vmax.f32 %v807, %v808
  %v810 = vsel %vm468, %v340, -inf
  %v811 = vmax.f32 %v809, %v810
  %v812 = vsel %vm468, %v388, -inf
  %v813 = vmax.f32 %v811, %v812
  %v814 = vsel %vm468, %v436, -inf
  %v815 = vmax.f32 %v813, %v814
  %v816 = vmax.f32 %v53, %v101
  %v817 = vmax.f32 %v816, %v149
  %v818 = vmax.f32 %v817, %v197
  %v819 = vmax.f32 %v818, %v245
  %v820 = vmax.f32 %v819, %v293
  %v821 = vmax.f32 %v820, %v341
  %v822 = vmax.f32 %v821, %v389
  %v823 = vmax.f32 %v822, %v437
  %v824 = vmax.f32 %v54, %v102
  %v825 = vmax.f32 %v824, %v150
  %v826 = vmax.f32 %v825, %v198
  %v827 = vmax.f32 %v826, %v246
  %v828 = vmax.f32 %v827, %v294
  %v829 = vmax.f32 %v828, %v342
  %v830 = vmax.f32 %v829, %v390
  %v831 = vmax.f32 %v830, %v438
  %v832 = vsel %vm468, %v55, -inf
  %v833 = vsel %vm468, %v103, -inf
  %v834 = vmax.f32 %v832, %v833
  %v835 = vsel %vm468, %v151, -inf
  %v836 = vmax.f32 %v834, %v835
  %v837 = vsel %vm468, %v199, -inf
  %v838 = vmax.f32 %v836, %v837
  %v839 = vsel %vm468, %v247, -inf
  %v840 = vmax.f32 %v838, %v839
  %v841 = vsel %vm468, %v295, -inf
  %v842 = vmax.f32 %v840, %v841
  %v843 = vsel %vm468, %v343, -inf
  %v844 = vmax.f32 %v842, %v843
  %v845 = vsel %vm468, %v391, -inf
  %v846 = vmax.f32 %v844, %v845
  %v847 = vsel %vm468, %v439, -inf
  %v848 = vmax.f32 %v846, %v847
  %v849 = vmax.f32 %v56, %v104
  %v850 = vmax.f32 %v849, %v152
  %v851 = vmax.f32 %v850, %v200
  %v852 = vmax.f32 %v851, %v248
  %v853 = vmax.f32 %v852, %v296
  %v854 = vmax.f32 %v853, %v344
  %v855 = vmax.f32 %v854, %v392
  %v856 = vmax.f32 %v855, %v440
  %v857 = vmax.f32 %v57, %v105
  %v858 = vmax.f32 %v857, %v153
  %v859 = vmax.f32 %v858, %v201
  %v860 = vmax.f32 %v859, %v249
  %v861 = vmax.f32 %v860, %v297
  %v862 = vmax.f32 %v861, %v345
  %v863 = vmax.f32 %v862, %v393
  %v864 = vmax.f32 %v863, %v441
  %v865 = vsel %vm468, %v58, -inf
  %v866 = vsel %vm468, %v106, -inf
  %v867 = vmax.f32 %v865, %v866
  %v868 = vsel %vm468, %v154, -inf
  %v869 = vmax.f32 %v867, %v868
  %v870 = vsel %vm468, %v202, -inf
  %v871 = vmax.f32 %v869, %v870
  %v872 = vsel %vm468, %v250, -inf
  %v873 = vmax.f32 %v871, %v872
  %v874 = vsel %vm468, %v298, -inf
  %v875 = vmax.f32 %v873, %v874
  %v876 = vsel %vm468, %v346, -inf
  %v877 = vmax.f32 %v875, %v876
  %v878 = vsel %vm468, %v394, -inf
  %v879 = vmax.f32 %v877, %v878
  %v880 = vsel %vm468, %v442, -inf
  %v881 = vmax.f32 %v879, %v880
  %v882 = vmax.f32 %v59, %v107
  %v883 = vmax.f32 %v882, %v155
  %v884 = vmax.f32 %v883, %v203
  %v885 = vmax.f32 %v884, %v251
  %v886 = vmax.f32 %v885, %v299
  %v887 = vmax.f32 %v886, %v347
  %v888 = vmax.f32 %v887, %v395
  %v889 = vmax.f32 %v888, %v443
  %v890 = vmax.f32 %v60, %v108
  %v891 = vmax.f32 %v890, %v156
  %v892 = vmax.f32 %v891, %v204
  %v893 = vmax.f32 %v892, %v252
  %v894 = vmax.f32 %v893, %v300
  %v895 = vmax.f32 %v894, %v348
  %v896 = vmax.f32 %v895, %v396
  %v897 = vmax.f32 %v896, %v444
  %v898 = vsel %vm468, %v61, -inf
  %v899 = vsel %vm468, %v109, -inf
  %v900 = vmax.f32 %v898, %v899
  %v901 = vsel %vm468, %v157, -inf
  %v902 = vmax.f32 %v900, %v901
  %v903 = vsel %vm468, %v205, -inf
  %v904 = vmax.f32 %v902, %v903
  %v905 = vsel %vm468, %v253, -inf
  %v906 = vmax.f32 %v904, %v905
  %v907 = vsel %vm468, %v301, -inf
  %v908 = vmax.f32 %v906, %v907
  %v909 = vsel %vm468, %v349, -inf
  %v910 = vmax.f32 %v908, %v909
  %v911 = vsel %vm468, %v397, -inf
  %v912 = vmax.f32 %v910, %v911
  %v913 = vsel %vm468, %v445, -inf
  %v914 = vmax.f32 %v912, %v913
  %v915 = vmax.f32 %v62, %v110
  %v916 = vmax.f32 %v915, %v158
  %v917 = vmax.f32 %v916, %v206
  %v918 = vmax.f32 %v917, %v254
  %v919 = vmax.f32 %v918, %v302
  %v920 = vmax.f32 %v919, %v350
  %v921 = vmax.f32 %v920, %v398
  %v922 = vmax.f32 %v921, %v446
  %v923 = vmax.f32 %v63, %v111
  %v924 = vmax.f32 %v923, %v159
  %v925 = vmax.f32 %v924, %v207
  %v926 = vmax.f32 %v925, %v255
  %v927 = vmax.f32 %v926, %v303
  %v928 = vmax.f32 %v927, %v351
  %v929 = vmax.f32 %v928, %v399
  %v930 = vmax.f32 %v929, %v447
  %v931 = vsel %vm468, %v64, -inf
  %v932 = vsel %vm468, %v112, -inf
  %v933 = vmax.f32 %v931, %v932
  %v934 = vsel %vm468, %v160, -inf
  %v935 = vmax.f32 %v933, %v934
  %v936 = vsel %vm468, %v208, -inf
  %v937 = vmax.f32 %v935, %v936
  %v938 = vsel %vm468, %v256, -inf
  %v939 = vmax.f32 %v937, %v938
  %v940 = vsel %vm468, %v304, -inf
  %v941 = vmax.f32 %v939, %v940
  %v942 = vsel %vm468, %v352, -inf
  %v943 = vmax.f32 %v941, %v942
  %v944 = vsel %vm468, %v400, -inf
  %v945 = vmax.f32 %v943, %v944
  %v946 = vsel %vm468, %v448, -inf
  %v947 = vmax.f32 %v945, %v946
  %v948 = vmax.f32 %v65, %v113
  %v949 = vmax.f32 %v948, %v161
  %v950 = vmax.f32 %v949, %v209
  %v951 = vmax.f32 %v950, %v257
  %v952 = vmax.f32 %v951, %v305
  %v953 = vmax.f32 %v952, %v353
  %v954 = vmax.f32 %v953, %v401
  %v955 = vmax.f32 %v954, %v449
  %v956 = vmax.f32 %v66, %v114
  %v957 = vmax.f32 %v956, %v162
  %v958 = vmax.f32 %v957, %v210
  %v959 = vmax.f32 %v958, %v258
  %v960 = vmax.f32 %v959, %v306
  %v961 = vmax.f32 %v960, %v354
  %v962 = vmax.f32 %v961, %v402
  %v963 = vmax.f32 %v962, %v450
  %v964 = vsel %vm468, %v67, -inf
  %v965 = vsel %vm468, %v115, -inf
  %v966 = vmax.f32 %v964, %v965
  %v967 = vsel %vm468, %v163, -inf
  %v968 = vmax.f32 %v966, %v967
  %v969 = vsel %vm468, %v211, -inf
  %v970 = vmax.f32 %v968, %v969
  %v971 = vsel %vm468, %v259, -inf
  %v972 = vmax.f32 %v970, %v971
  %v973 = vsel %vm468, %v307, -inf
  %v974 = vmax.f32 %v972, %v973
  %v975 = vsel %vm468, %v355, -inf
  %v976 = vmax.f32 %v974, %v975
  %v977 = vsel %vm468, %v403, -inf
  %v978 = vmax.f32 %v976, %v977
  %v979 = vsel %vm468, %v451, -inf
  %v980 = vmax.f32 %v978, %v979
  %981 = vst [vmem:[%s4] sm:$0xff] %v459
  %982 = vst [vmem:[%s4 + $0x8] sm:$0xff] %v467
  %983 = vst.msk [vmem:[%s4 + $0x10] sm:$0xff] %vm468, %v485
  %984 = vst [vmem:[%s4 + $0x18] sm:$0xff] %v493
  %985 = vst [vmem:[%s4 + $0x20] sm:$0xff] %v501
  %986 = vst.msk [vmem:[%s4 + $0x28] sm:$0xff] %vm468, %v518
  %987 = vst [vmem:[%s4 + $0x30] sm:$0xff] %v526
  %988 = vst [vmem:[%s4 + $0x38] sm:$0xff] %v534
  %989 = vst.msk [vmem:[%s4 + $0x40] sm:$0xff] %vm468, %v551
  %990 = vst [vmem:[%s4 + $0x48] sm:$0xff] %v559
  %991 = vst [vmem:[%s4 + $0x50] sm:$0xff] %v567
  %992 = vst.msk [vmem:[%s4 + $0x58] sm:$0xff] %vm468, %v584
  %993 = vst [vmem:[%s4 + $0x60] sm:$0xff] %v592
  %994 = vst [vmem:[%s4 + $0x68] sm:$0xff] %v600
  %995 = vst.msk [vmem:[%s4 + $0x70] sm:$0xff] %vm468, %v617
  %996 = vst [vmem:[%s4 + $0x78] sm:$0xff] %v625
  %997 = vst [vmem:[%s4 + $0x80] sm:$0xff] %v633
  %998 = vst.msk [vmem:[%s4 + $0x88] sm:$0xff] %vm468, %v650
  %999 = vst [vmem:[%s4 + $0x90] sm:$0xff] %v658
  %1000 = vst [vmem:[%s4 + $0x98] sm:$0xff] %v666
  %1001 = vst.msk [vmem:[%s4 + $0xa0] sm:$0xff] %vm468, %v683
  %1002 = vst [vmem:[%s4 + $0xa8] sm:$0xff] %v691
  %1003 = vst [vmem:[%s4 + $0xb0] sm:$0xff] %v699
  %1004 = vst.msk [vmem:[%s4 + $0xb8] sm:$0xff] %vm468, %v716
  %1005 = vst [vmem:[%s4 + $0xc0] sm:$0xff] %v724
  %1006 = vst [vmem:[%s4 + $0xc8] sm:$0xff] %v732
  %1007 = vst.msk [vmem:[%s4 + $0xd0] sm:$0xff] %vm468, %v749
  %1008 = vst [vmem:[%s4 + $0xd8] sm:$0xff] %v757
  %1009 = vst [vmem:[%s4 + $0xe0] sm:$0xff] %v765
  %1010 = vst.msk [vmem:[%s4 + $0xe8] sm:$0xff] %vm468, %v782
  %1011 = vst [vmem:[%s4 + $0xf0] sm:$0xff] %v790
  %1012 = vst [vmem:[%s4 + $0xf8] sm:$0xff] %v798
  %1013 = vst.msk [vmem:[%s4 + $0x100] sm:$0xff] %vm468, %v815
  %1014 = vst [vmem:[%s4 + $0x108] sm:$0xff] %v823
  %1015 = vst [vmem:[%s4 + $0x110] sm:$0xff] %v831
  %1016 = vst.msk [vmem:[%s4 + $0x118] sm:$0xff] %vm468, %v848
  %1017 = vst [vmem:[%s4 + $0x120] sm:$0xff] %v856
  %1018 = vst [vmem:[%s4 + $0x128] sm:$0xff] %v864
  %1019 = vst.msk [vmem:[%s4 + $0x130] sm:$0xff] %vm468, %v881
  %1020 = vst [vmem:[%s4 + $0x138] sm:$0xff] %v889
  %1021 = vst [vmem:[%s4 + $0x140] sm:$0xff] %v897
  %1022 = vst.msk [vmem:[%s4 + $0x148] sm:$0xff] %vm468, %v914
  %1023 = vst [vmem:[%s4 + $0x150] sm:$0xff] %v922
  %1024 = vst [vmem:[%s4 + $0x158] sm:$0xff] %v930
  %1025 = vst.msk [vmem:[%s4 + $0x160] sm:$0xff] %vm468, %v947
  %1026 = vst [vmem:[%s4 + $0x168] sm:$0xff] %v955
  %1027 = vst [vmem:[%s4 + $0x170] sm:$0xff] %v963
  %1028 = vst.msk [vmem:[%s4 + $0x178] sm:$0xff] %vm468, %v980
  %v1029 = vld [vmem:[%s1] sm:$0xff]
  %v1030 = vld [vmem:[%s1 + $0x8] sm:$0xff]
  %v1031 = vld [vmem:[%s1 + $0x10] sm:$0xff]
  %v1032 = vld [vmem:[%s1 + $0x18] sm:$0xff]
  %v1033 = vld [vmem:[%s1 + $0x20] sm:$0xff]
  %v1034 = vld [vmem:[%s1 + $0x28] sm:$0xff]
  %v1035 = vld [vmem:[%s1 + $0x30] sm:$0xff]
  %v1036 = vld [vmem:[%s1 + $0x38] sm:$0xff]
  %v1037 = vld [vmem:[%s1 + $0x40] sm:$0xff]
  %v1038 = vld [vmem:[%s1 + $0x48] sm:$0xff]
  %v1039 = vld [vmem:[%s1 + $0x50] sm:$0xff]
  %v1040 = vld [vmem:[%s1 + $0x58] sm:$0xff]
  %v1041 = vld [vmem:[%s1 + $0x60] sm:$0xff]
  %v1042 = vld [vmem:[%s1 + $0x68] sm:$0xff]
  %v1043 = vld [vmem:[%s1 + $0x70] sm:$0xff]
  %v1044 = vld [vmem:[%s1 + $0x78] sm:$0xff]
  %v1045 = vld [vmem:[%s1 + $0x80] sm:$0xff]
  %v1046 = vld [vmem:[%s1 + $0x88] sm:$0xff]
  %v1047 = vld [vmem:[%s1 + $0x90] sm:$0xff]
  %v1048 = vld [vmem:[%s1 + $0x98] sm:$0xff]
  %v1049 = vld [vmem:[%s1 + $0xa0] sm:$0xff]
  %v1050 = vld [vmem:[%s1 + $0xa8] sm:$0xff]
  %v1051 = vld [vmem:[%s1 + $0xb0] sm:$0xff]
  %v1052 = vld [vmem:[%s1 + $0xb8] sm:$0xff]
  %v1053 = vld [vmem:[%s1 + $0xc0] sm:$0xff]
  %v1054 = vld [vmem:[%s1 + $0xc8] sm:$0xff]
  %v1055 = vld [vmem:[%s1 + $0xd0] sm:$0xff]
  %v1056 = vld [vmem:[%s1 + $0xd8] sm:$0xff]
  %v1057 = vld [vmem:[%s1 + $0xe0] sm:$0xff]
  %v1058 = vld [vmem:[%s1 + $0xe8] sm:$0xff]
  %v1059 = vld [vmem:[%s1 + $0xf0] sm:$0xff]
  %v1060 = vld [vmem:[%s1 + $0xf8] sm:$0xff]
  %v1061 = vld [vmem:[%s1 + $0x100] sm:$0xff]
  %v1062 = vld [vmem:[%s1 + $0x108] sm:$0xff]
  %v1063 = vld [vmem:[%s1 + $0x110] sm:$0xff]
  %v1064 = vld [vmem:[%s1 + $0x118] sm:$0xff]
  %v1065 = vld [vmem:[%s1 + $0x120] sm:$0xff]
  %v1066 = vld [vmem:[%s1 + $0x128] sm:$0xff]
  %v1067 = vld [vmem:[%s1 + $0x130] sm:$0xff]
  %v1068 = vld [vmem:[%s1 + $0x138] sm:$0xff]
  %v1069 = vld [vmem:[%s1 + $0x140] sm:$0xff]
  %v1070 = vld [vmem:[%s1 + $0x148] sm:$0xff]
  %v1071 = vld [vmem:[%s1 + $0x150] sm:$0xff]
  %v1072 = vld [vmem:[%s1 + $0x158] sm:$0xff]
  %v1073 = vld [vmem:[%s1 + $0x160] sm:$0xff]
  %v1074 = vld [vmem:[%s1 + $0x168] sm:$0xff]
  %v1075 = vld [vmem:[%s1 + $0x170] sm:$0xff]
  %v1076 = vld [vmem:[%s1 + $0x178] sm:$0xff]
  %v1077 = vld [vmem:[%s1 + $0x180] sm:$0xff]
  %v1078 = vld [vmem:[%s1 + $0x188] sm:$0xff]
  %v1079 = vld [vmem:[%s1 + $0x190] sm:$0xff]
  %v1080 = vld [vmem:[%s1 + $0x198] sm:$0xff]
  %v1081 = vld [vmem:[%s1 + $0x1a0] sm:$0xff]
  %v1082 = vld [vmem:[%s1 + $0x1a8] sm:$0xff]
  %v1083 = vld [vmem:[%s1 + $0x1b0] sm:$0xff]
  %v1084 = vld [vmem:[%s1 + $0x1b8] sm:$0xff]
  %v1085 = vld [vmem:[%s1 + $0x1c0] sm:$0xff]
  %v1086 = vld [vmem:[%s1 + $0x1c8] sm:$0xff]
  %v1087 = vld [vmem:[%s1 + $0x1d0] sm:$0xff]
  %v1088 = vld [vmem:[%s1 + $0x1d8] sm:$0xff]
  %v1089 = vld [vmem:[%s1 + $0x1e0] sm:$0xff]
  %v1090 = vld [vmem:[%s1 + $0x1e8] sm:$0xff]
  %v1091 = vld [vmem:[%s1 + $0x1f0] sm:$0xff]
  %v1092 = vld [vmem:[%s1 + $0x1f8] sm:$0xff]
  %v1093 = vld [vmem:[%s1 + $0x200] sm:$0xff]
  %v1094 = vld [vmem:[%s1 + $0x208] sm:$0xff]
  %v1095 = vld [vmem:[%s1 + $0x210] sm:$0xff]
  %v1096 = vld [vmem:[%s1 + $0x218] sm:$0xff]
  %v1097 = vld [vmem:[%s1 + $0x220] sm:$0xff]
  %v1098 = vld [vmem:[%s1 + $0x228] sm:$0xff]
  %v1099 = vld [vmem:[%s1 + $0x230] sm:$0xff]
  %v1100 = vld [vmem:[%s1 + $0x238] sm:$0xff]
  %v1101 = vld [vmem:[%s1 + $0x240] sm:$0xff]
  %v1102 = vld [vmem:[%s1 + $0x248] sm:$0xff]
  %v1103 = vld [vmem:[%s1 + $0x250] sm:$0xff]
  %v1104 = vld [vmem:[%s1 + $0x258] sm:$0xff]
  %v1105 = vld [vmem:[%s1 + $0x260] sm:$0xff]
  %v1106 = vld [vmem:[%s1 + $0x268] sm:$0xff]
  %v1107 = vld [vmem:[%s1 + $0x270] sm:$0xff]
  %v1108 = vld [vmem:[%s1 + $0x278] sm:$0xff]
  %v1109 = vld [vmem:[%s1 + $0x280] sm:$0xff]
  %v1110 = vld [vmem:[%s1 + $0x288] sm:$0xff]
  %v1111 = vld [vmem:[%s1 + $0x290] sm:$0xff]
  %v1112 = vld [vmem:[%s1 + $0x298] sm:$0xff]
  %v1113 = vld [vmem:[%s1 + $0x2a0] sm:$0xff]
  %v1114 = vld [vmem:[%s1 + $0x2a8] sm:$0xff]
  %v1115 = vld [vmem:[%s1 + $0x2b0] sm:$0xff]
  %v1116 = vld [vmem:[%s1 + $0x2b8] sm:$0xff]
  %v1117 = vld [vmem:[%s1 + $0x2c0] sm:$0xff]
  %v1118 = vld [vmem:[%s1 + $0x2c8] sm:$0xff]
  %v1119 = vld [vmem:[%s1 + $0x2d0] sm:$0xff]
  %v1120 = vld [vmem:[%s1 + $0x2d8] sm:$0xff]
  %v1121 = vld [vmem:[%s1 + $0x2e0] sm:$0xff]
  %v1122 = vld [vmem:[%s1 + $0x2e8] sm:$0xff]
  %v1123 = vld [vmem:[%s1 + $0x2f0] sm:$0xff]
  %v1124 = vld [vmem:[%s1 + $0x2f8] sm:$0xff]
  %v1125 = vld [vmem:[%s1 + $0x300] sm:$0xff]
  %v1126 = vld [vmem:[%s1 + $0x308] sm:$0xff]
  %v1127 = vld [vmem:[%s1 + $0x310] sm:$0xff]
  %v1128 = vld [vmem:[%s1 + $0x318] sm:$0xff]
  %v1129 = vld [vmem:[%s1 + $0x320] sm:$0xff]
  %v1130 = vld [vmem:[%s1 + $0x328] sm:$0xff]
  %v1131 = vld [vmem:[%s1 + $0x330] sm:$0xff]
  %v1132 = vld [vmem:[%s1 + $0x338] sm:$0xff]
  %v1133 = vld [vmem:[%s1 + $0x340] sm:$0xff]
  %v1134 = vld [vmem:[%s1 + $0x348] sm:$0xff]
  %v1135 = vld [vmem:[%s1 + $0x350] sm:$0xff]
  %v1136 = vld [vmem:[%s1 + $0x358] sm:$0xff]
  %v1137 = vld [vmem:[%s1 + $0x360] sm:$0xff]
  %v1138 = vld [vmem:[%s1 + $0x368] sm:$0xff]
  %v1139 = vld [vmem:[%s1 + $0x370] sm:$0xff]
  %v1140 = vld [vmem:[%s1 + $0x378] sm:$0xff]
  %v1141 = vld [vmem:[%s1 + $0x380] sm:$0xff]
  %v1142 = vld [vmem:[%s1 + $0x388] sm:$0xff]
  %v1143 = vld [vmem:[%s1 + $0x390] sm:$0xff]
  %v1144 = vld [vmem:[%s1 + $0x398] sm:$0xff]
  %v1145 = vld [vmem:[%s1 + $0x3a0] sm:$0xff]
  %v1146 = vld [vmem:[%s1 + $0x3a8] sm:$0xff]
  %v1147 = vld [vmem:[%s1 + $0x3b0] sm:$0xff]
  %v1148 = vld [vmem:[%s1 + $0x3b8] sm:$0xff]
  %v1149 = vld [vmem:[%s1 + $0x3c0] sm:$0xff]
  %v1150 = vld [vmem:[%s1 + $0x3c8] sm:$0xff]
  %v1151 = vld [vmem:[%s1 + $0x3d0] sm:$0xff]
  %v1152 = vld [vmem:[%s1 + $0x3d8] sm:$0xff]
  %v1153 = vld [vmem:[%s1 + $0x3e0] sm:$0xff]
  %v1154 = vld [vmem:[%s1 + $0x3e8] sm:$0xff]
  %v1155 = vld [vmem:[%s1 + $0x3f0] sm:$0xff]
  %v1156 = vld [vmem:[%s1 + $0x3f8] sm:$0xff]
  %v1157 = vld [vmem:[%s1 + $0x400] sm:$0xff]
  %v1158 = vld [vmem:[%s1 + $0x408] sm:$0xff]
  %v1159 = vld [vmem:[%s1 + $0x410] sm:$0xff]
  %v1160 = vld [vmem:[%s1 + $0x418] sm:$0xff]
  %v1161 = vld [vmem:[%s1 + $0x420] sm:$0xff]
  %v1162 = vld [vmem:[%s1 + $0x428] sm:$0xff]
  %v1163 = vld [vmem:[%s1 + $0x430] sm:$0xff]
  %v1164 = vld [vmem:[%s1 + $0x438] sm:$0xff]
  %v1165 = vld [vmem:[%s1 + $0x440] sm:$0xff]
  %v1166 = vld [vmem:[%s1 + $0x448] sm:$0xff]
  %v1167 = vld [vmem:[%s1 + $0x450] sm:$0xff]
  %v1168 = vld [vmem:[%s1 + $0x458] sm:$0xff]
  %v1169 = vld [vmem:[%s1 + $0x460] sm:$0xff]
  %v1170 = vld [vmem:[%s1 + $0x468] sm:$0xff]
  %v1171 = vld [vmem:[%s1 + $0x470] sm:$0xff]
  %v1172 = vld [vmem:[%s1 + $0x478] sm:$0xff]
  %v1173 = vld [vmem:[%s1 + $0x480] sm:$0xff]
  %v1174 = vld [vmem:[%s1 + $0x488] sm:$0xff]
  %v1175 = vld [vmem:[%s1 + $0x490] sm:$0xff]
  %v1176 = vld [vmem:[%s1 + $0x498] sm:$0xff]
  %v1177 = vld [vmem:[%s1 + $0x4a0] sm:$0xff]
  %v1178 = vld [vmem:[%s1 + $0x4a8] sm:$0xff]
  %v1179 = vld [vmem:[%s1 + $0x4b0] sm:$0xff]
  %v1180 = vld [vmem:[%s1 + $0x4b8] sm:$0xff]
  %v1181 = vld [vmem:[%s1 + $0x4c0] sm:$0xff]
  %v1182 = vld [vmem:[%s1 + $0x4c8] sm:$0xff]
  %v1183 = vld [vmem:[%s1 + $0x4d0] sm:$0xff]
  %v1184 = vld [vmem:[%s1 + $0x4d8] sm:$0xff]
  %v1185 = vld [vmem:[%s1 + $0x4e0] sm:$0xff]
  %v1186 = vld [vmem:[%s1 + $0x4e8] sm:$0xff]
  %v1187 = vld [vmem:[%s1 + $0x4f0] sm:$0xff]
  %v1188 = vld [vmem:[%s1 + $0x4f8] sm:$0xff]
  %v1189 = vld [vmem:[%s2] sm:$0xff]
  %v1190 = vld [vmem:[%s2 + $0x8] sm:$0xf]
  %v1191 = vld [vmem:[%s2 + $0xc] sm:$0xff]
  %v1192 = vld [vmem:[%s2 + $0x14] sm:$0xf]
  %v1193 = vld [vmem:[%s2 + $0x18] sm:$0xff]
  %v1194 = vld [vmem:[%s2 + $0x20] sm:$0xf]
  %v1195 = vld [vmem:[%s2 + $0x24] sm:$0xff]
  %v1196 = vld [vmem:[%s2 + $0x2c] sm:$0xf]
  %v1197 = vld [vmem:[%s2 + $0x30] sm:$0xff]
  %v1198 = vld [vmem:[%s2 + $0x38] sm:$0xf]
  %v1199 = vld [vmem:[%s2 + $0x3c] sm:$0xff]
  %v1200 = vld [vmem:[%s2 + $0x44] sm:$0xf]
  %v1201 = vld [vmem:[%s2 + $0x48] sm:$0xff]
  %v1202 = vld [vmem:[%s2 + $0x50] sm:$0xf]
  %v1203 = vld [vmem:[%s2 + $0x54] sm:$0xff]
  %v1204 = vld [vmem:[%s2 + $0x5c] sm:$0xf]
  %v1205 = vld [vmem:[%s2 + $0x60] sm:$0xff]
  %v1206 = vld [vmem:[%s2 + $0x68] sm:$0xf]
  %v1207 = vld [vmem:[%s2 + $0x6c] sm:$0xff]
  %v1208 = vld [vmem:[%s2 + $0x74] sm:$0xf]
  %v1209 = vld [vmem:[%s2 + $0x78] sm:$0xff]
  %v1210 = vld [vmem:[%s2 + $0x80] sm:$0xf]
  %v1211 = vld [vmem:[%s2 + $0x84] sm:$0xff]
  %v1212 = vld [vmem:[%s2 + $0x8c] sm:$0xf]
  %v1213 = vld [vmem:[%s2 + $0x90] sm:$0xff]
  %v1214 = vld [vmem:[%s2 + $0x98] sm:$0xf]
  %v1215 = vld [vmem:[%s2 + $0x9c] sm:$0xff]
  %v1216 = vld [vmem:[%s2 + $0xa4] sm:$0xf]
  %v1217 = vld [vmem:[%s2 + $0xa8] sm:$0xff]
  %v1218 = vld [vmem:[%s2 + $0xb0] sm:$0xf]
  %v1219 = vld [vmem:[%s2 + $0xb4] sm:$0xff]
  %v1220 = vld [vmem:[%s2 + $0xbc] sm:$0xf]
  %v1221 = vld [vmem:[%s2 + $0xc0] sm:$0xff]
  %v1222 = vld [vmem:[%s2 + $0xc8] sm:$0xf]
  %v1223 = vld [vmem:[%s2 + $0xcc] sm:$0xff]
  %v1224 = vld [vmem:[%s2 + $0xd4] sm:$0xf]
  %v1225 = vld [vmem:[%s2 + $0xd8] sm:$0xff]
  %v1226 = vld [vmem:[%s2 + $0xe0] sm:$0xf]
  %v1227 = vld [vmem:[%s2 + $0xe4] sm:$0xff]
  %v1228 = vld [vmem:[%s2 + $0xec] sm:$0xf]
  %v1229 = vld [vmem:[%s2 + $0xf0] sm:$0xff]
  %v1230 = vld [vmem:[%s2 + $0xf8] sm:$0xf]
  %v1231 = vld [vmem:[%s2 + $0xfc] sm:$0xff]
  %v1232 = vld [vmem:[%s2 + $0x104] sm:$0xf]
  %v1233 = vld [vmem:[%s2 + $0x108] sm:$0xff]
  %v1234 = vld [vmem:[%s2 + $0x110] sm:$0xf]
  %v1235 = vld [vmem:[%s2 + $0x114] sm:$0xff]
  %v1236 = vld [vmem:[%s2 + $0x11c] sm:$0xf]
  %v1237 = vld [vmem:[%s2 + $0x120] sm:$0xff]
  %v1238 = vld [vmem:[%s2 + $0x128] sm:$0xf]
  %v1239 = vld [vmem:[%s2 + $0x12c] sm:$0xff]
  %v1240 = vld [vmem:[%s2 + $0x134] sm:$0xf]
  %v1241 = vld [vmem:[%s2 + $0x138] sm:$0xff]
  %v1242 = vld [vmem:[%s2 + $0x140] sm:$0xf]
  %v1243 = vld [vmem:[%s2 + $0x144] sm:$0xff]
  %v1244 = vld [vmem:[%s2 + $0x14c] sm:$0xf]
  %v1245 = vld [vmem:[%s2 + $0x150] sm:$0xff]
  %v1246 = vld [vmem:[%s2 + $0x158] sm:$0xf]
  %v1247 = vld [vmem:[%s2 + $0x15c] sm:$0xff]
  %v1248 = vld [vmem:[%s2 + $0x164] sm:$0xf]
  %v1249 = vld [vmem:[%s2 + $0x168] sm:$0xff]
  %v1250 = vld [vmem:[%s2 + $0x170] sm:$0xf]
  %v1251 = vld [vmem:[%s2 + $0x174] sm:$0xff]
  %v1252 = vld [vmem:[%s2 + $0x17c] sm:$0xf]
  %v1253 = vld [vmem:[%s2 + $0x180] sm:$0xff]
  %v1254 = vld [vmem:[%s2 + $0x188] sm:$0xf]
  %v1255 = vld [vmem:[%s2 + $0x18c] sm:$0xff]
  %v1256 = vld [vmem:[%s2 + $0x194] sm:$0xf]
  %v1257 = vld [vmem:[%s2 + $0x198] sm:$0xff]
  %v1258 = vld [vmem:[%s2 + $0x1a0] sm:$0xf]
  %v1259 = vld [vmem:[%s2 + $0x1a4] sm:$0xff]
  %v1260 = vld [vmem:[%s2 + $0x1ac] sm:$0xf]
  %v1261 = vld [vmem:[%s2 + $0x1b0] sm:$0xff]
  %v1262 = vld [vmem:[%s2 + $0x1b8] sm:$0xf]
  %v1263 = vld [vmem:[%s2 + $0x1bc] sm:$0xff]
  %v1264 = vld [vmem:[%s2 + $0x1c4] sm:$0xf]
  %v1265 = vld [vmem:[%s2 + $0x1c8] sm:$0xff]
  %v1266 = vld [vmem:[%s2 + $0x1d0] sm:$0xf]
  %v1267 = vld [vmem:[%s2 + $0x1d4] sm:$0xff]
  %v1268 = vld [vmem:[%s2 + $0x1dc] sm:$0xf]
  %v1269 = vld [vmem:[%s2 + $0x1e0] sm:$0xff]
  %v1270 = vld [vmem:[%s2 + $0x1e8] sm:$0xf]
  %v1271 = vld [vmem:[%s2 + $0x1ec] sm:$0xff]
  %v1272 = vld [vmem:[%s2 + $0x1f4] sm:$0xf]
  %v1273 = vld [vmem:[%s2 + $0x1f8] sm:$0xff]
  %v1274 = vld [vmem:[%s2 + $0x200] sm:$0xf]
  %v1275 = vld [vmem:[%s2 + $0x204] sm:$0xff]
  %v1276 = vld [vmem:[%s2 + $0x20c] sm:$0xf]
  %v1277 = vld [vmem:[%s2 + $0x210] sm:$0xff]
  %v1278 = vld [vmem:[%s2 + $0x218] sm:$0xf]
  %v1279 = vld [vmem:[%s2 + $0x21c] sm:$0xff]
  %v1280 = vld [vmem:[%s2 + $0x224] sm:$0xf]
  %v1281 = vld [vmem:[%s2 + $0x228] sm:$0xff]
  %v1282 = vld [vmem:[%s2 + $0x230] sm:$0xf]
  %v1283 = vld [vmem:[%s2 + $0x234] sm:$0xff]
  %v1284 = vld [vmem:[%s2 + $0x23c] sm:$0xf]
  %v1285 = vld [vmem:[%s2 + $0x240] sm:$0xff]
  %v1286 = vld [vmem:[%s2 + $0x248] sm:$0xf]
  %v1287 = vld [vmem:[%s2 + $0x24c] sm:$0xff]
  %v1288 = vld [vmem:[%s2 + $0x254] sm:$0xf]
  %v1289 = vld [vmem:[%s2 + $0x258] sm:$0xff]
  %v1290 = vld [vmem:[%s2 + $0x260] sm:$0xf]
  %v1291 = vld [vmem:[%s2 + $0x264] sm:$0xff]
  %v1292 = vld [vmem:[%s2 + $0x26c] sm:$0xf]
  %v1293 = vld [vmem:[%s2 + $0x270] sm:$0xff]
  %v1294 = vld [vmem:[%s2 + $0x278] sm:$0xf]
  %v1295 = vld [vmem:[%s2 + $0x27c] sm:$0xff]
  %v1296 = vld [vmem:[%s2 + $0x284] sm:$0xf]
  %v1297 = vld [vmem:[%s2 + $0x288] sm:$0xff]
  %v1298 = vld [vmem:[%s2 + $0x290] sm:$0xf]
  %v1299 = vld [vmem:[%s2 + $0x294] sm:$0xff]
  %v1300 = vld [vmem:[%s2 + $0x29c] sm:$0xf]
  %v1301 = vld [vmem:[%s2 + $0x2a0] sm:$0xff]
  %v1302 = vld [vmem:[%s2 + $0x2a8] sm:$0xf]
  %v1303 = vld [vmem:[%s2 + $0x2ac] sm:$0xff]
  %v1304 = vld [vmem:[%s2 + $0x2b4] sm:$0xf]
  %v1305 = vld [vmem:[%s2 + $0x2b8] sm:$0xff]
  %v1306 = vld [vmem:[%s2 + $0x2c0] sm:$0xf]
  %v1307 = vld [vmem:[%s2 + $0x2c4] sm:$0xff]
  %v1308 = vld [vmem:[%s2 + $0x2cc] sm:$0xf]
  %v1309 = vld [vmem:[%s2 + $0x2d0] sm:$0xff]
  %v1310 = vld [vmem:[%s2 + $0x2d8] sm:$0xf]
  %v1311 = vld [vmem:[%s2 + $0x2dc] sm:$0xff]
  %v1312 = vld [vmem:[%s2 + $0x2e4] sm:$0xf]
  %v1313 = vld [vmem:[%s2 + $0x2e8] sm:$0xff]
  %v1314 = vld [vmem:[%s2 + $0x2f0] sm:$0xf]
  %v1315 = vld [vmem:[%s2 + $0x2f4] sm:$0xff]
  %v1316 = vld [vmem:[%s2 + $0x2fc] sm:$0xf]
  %v1317 = vld [vmem:[%s2 + $0x300] sm:$0xff]
  %v1318 = vld [vmem:[%s2 + $0x308] sm:$0xf]
  %v1319 = vld [vmem:[%s2 + $0x30c] sm:$0xff]
  %v1320 = vld [vmem:[%s2 + $0x314] sm:$0xf]
  %v1321 = vld [vmem:[%s2 + $0x318] sm:$0xff]
  %v1322 = vld [vmem:[%s2 + $0x320] sm:$0xf]
  %v1323 = vld [vmem:[%s2 + $0x324] sm:$0xff]
  %v1324 = vld [vmem:[%s2 + $0x32c] sm:$0xf]
  %v1325 = vld [vmem:[%s2 + $0x330] sm:$0xff]
  %v1326 = vld [vmem:[%s2 + $0x338] sm:$0xf]
  %v1327 = vld [vmem:[%s2 + $0x33c] sm:$0xff]
  %v1328 = vld [vmem:[%s2 + $0x344] sm:$0xf]
  %v1329 = vld [vmem:[%s2 + $0x348] sm:$0xff]
  %v1330 = vld [vmem:[%s2 + $0x350] sm:$0xf]
  %v1331 = vld [vmem:[%s2 + $0x354] sm:$0xff]
  %v1332 = vld [vmem:[%s2 + $0x35c] sm:$0xf]
  %v1333 = vld [vmem:[%s2 + $0x360] sm:$0xff]
  %v1334 = vld [vmem:[%s2 + $0x368] sm:$0xf]
  %v1335 = vld [vmem:[%s2 + $0x36c] sm:$0xff]
  %v1336 = vld [vmem:[%s2 + $0x374] sm:$0xf]
  %v1337 = vld [vmem:[%s2 + $0x378] sm:$0xff]
  %v1338 = vld [vmem:[%s2 + $0x380] sm:$0xf]
  %v1339 = vld [vmem:[%s2 + $0x384] sm:$0xff]
  %v1340 = vld [vmem:[%s2 + $0x38c] sm:$0xf]
  %v1341 = vld [vmem:[%s2 + $0x390] sm:$0xff]
  %v1342 = vld [vmem:[%s2 + $0x398] sm:$0xf]
  %v1343 = vld [vmem:[%s2 + $0x39c] sm:$0xff]
  %v1344 = vld [vmem:[%s2 + $0x3a4] sm:$0xf]
  %v1345 = vld [vmem:[%s2 + $0x3a8] sm:$0xff]
  %v1346 = vld [vmem:[%s2 + $0x3b0] sm:$0xf]
  %v1347 = vld [vmem:[%s2 + $0x3b4] sm:$0xff]
  %v1348 = vld [vmem:[%s2 + $0x3bc] sm:$0xf]
  %v1349 = vld [vmem:[%s2 + $0x3c0] sm:$0xff]
  %v1350 = vld [vmem:[%s2 + $0x3c8] sm:$0xf]
  %v1351 = vld [vmem:[%s2 + $0x3cc] sm:$0xff]
  %v1352 = vld [vmem:[%s2 + $0x3d4] sm:$0xf]
  %v1353 = vld [vmem:[%s2 + $0x3d8] sm:$0xff]
  %v1354 = vld [vmem:[%s2 + $0x3e0] sm:$0xf]
  %v1355 = vld [vmem:[%s2 + $0x3e4] sm:$0xff]
  %v1356 = vld [vmem:[%s2 + $0x3ec] sm:$0xf]
  %v1357 = vld [vmem:[%s2 + $0x3f0] sm:$0xff]
  %v1358 = vld [vmem:[%s2 + $0x3f8] sm:$0xf]
  %v1359 = vld [vmem:[%s2 + $0x3fc] sm:$0xff]
  %v1360 = vld [vmem:[%s2 + $0x404] sm:$0xf]
  %v1361 = vld [vmem:[%s2 + $0x408] sm:$0xff]
  %v1362 = vld [vmem:[%s2 + $0x410] sm:$0xf]
  %v1363 = vld [vmem:[%s2 + $0x414] sm:$0xff]
  %v1364 = vld [vmem:[%s2 + $0x41c] sm:$0xf]
  %v1365 = vld [vmem:[%s2 + $0x420] sm:$0xff]
  %v1366 = vld [vmem:[%s2 + $0x428] sm:$0xf]
  %v1367 = vld [vmem:[%s2 + $0x42c] sm:$0xff]
  %v1368 = vld [vmem:[%s2 + $0x434] sm:$0xf]
  %v1369 = vld [vmem:[%s2 + $0x438] sm:$0xff]
  %v1370 = vld [vmem:[%s2 + $0x440] sm:$0xf]
  %v1371 = vld [vmem:[%s2 + $0x444] sm:$0xff]
  %v1372 = vld [vmem:[%s2 + $0x44c] sm:$0xf]
  %v1373 = vld [vmem:[%s2 + $0x450] sm:$0xff]
  %v1374 = vld [vmem:[%s2 + $0x458] sm:$0xf]
  %v1375 = vld [vmem:[%s2 + $0x45c] sm:$0xff]
  %v1376 = vld [vmem:[%s2 + $0x464] sm:$0xf]
  %v1377 = vld [vmem:[%s2 + $0x468] sm:$0xff]
  %v1378 = vld [vmem:[%s2 + $0x470] sm:$0xf]
  %v1379 = vld [vmem:[%s2 + $0x474] sm:$0xff]
  %v1380 = vld [vmem:[%s2 + $0x47c] sm:$0xf]
  %v1381 = vld [vmem:[%s2 + $0x480] sm:$0xff]
  %v1382 = vld [vmem:[%s2 + $0x488] sm:$0xf]
  %v1383 = vld [vmem:[%s2 + $0x48c] sm:$0xff]
  %v1384 = vld [vmem:[%s2 + $0x494] sm:$0xf]
  %v1385 = vld [vmem:[%s2 + $0x498] sm:$0xff]
  %v1386 = vld [vmem:[%s2 + $0x4a0] sm:$0xf]
  %v1387 = vld [vmem:[%s2 + $0x4a4] sm:$0xff]
  %v1388 = vld [vmem:[%s2 + $0x4ac] sm:$0xf]
  %v1389 = vld [vmem:[%s2 + $0x4b0] sm:$0xff]
  %v1390 = vld [vmem:[%s2 + $0x4b8] sm:$0xf]
  %v1391 = vld [vmem:[%s2 + $0x4bc] sm:$0xff]
  %v1392 = vld [vmem:[%s2 + $0x4c4] sm:$0xf]
  %v1393 = vld [vmem:[%s2 + $0x4c8] sm:$0xff]
  %v1394 = vld [vmem:[%s2 + $0x4d0] sm:$0xf]
  %v1395 = vld [vmem:[%s2 + $0x4d4] sm:$0xff]
  %v1396 = vld [vmem:[%s2 + $0x4dc] sm:$0xf]
  %v1397 = vld [vmem:[%s2 + $0x4e0] sm:$0xff]
  %v1398 = vld [vmem:[%s2 + $0x4e8] sm:$0xf]
  %v1399 = vld [vmem:[%s2 + $0x4ec] sm:$0xff]
  %v1400 = vld [vmem:[%s2 + $0x4f4] sm:$0xf]
  %v1401 = vld [vmem:[%s2 + $0x4f8] sm:$0xff]
  %v1402 = vld [vmem:[%s2 + $0x500] sm:$0xf]
  %v1403 = vld [vmem:[%s2 + $0x504] sm:$0xff]
  %v1404 = vld [vmem:[%s2 + $0x50c] sm:$0xf]
  %v1405 = vld [vmem:[%s2 + $0x510] sm:$0xff]
  %v1406 = vld [vmem:[%s2 + $0x518] sm:$0xf]
  %v1407 = vld [vmem:[%s2 + $0x51c] sm:$0xff]
  %v1408 = vld [vmem:[%s2 + $0x524] sm:$0xf]
  %v1409 = vld [vmem:[%s2 + $0x528] sm:$0xff]
  %v1410 = vld [vmem:[%s2 + $0x530] sm:$0xf]
  %v1411 = vld [vmem:[%s2 + $0x534] sm:$0xff]
  %v1412 = vld [vmem:[%s2 + $0x53c] sm:$0xf]
  %v1413 = vld [vmem:[%s2 + $0x540] sm:$0xff]
  %v1414 = vld [vmem:[%s2 + $0x548] sm:$0xf]
  %v1415 = vld [vmem:[%s2 + $0x54c] sm:$0xff]
  %v1416 = vld [vmem:[%s2 + $0x554] sm:$0xf]
  %v1417 = vld [vmem:[%s2 + $0x558] sm:$0xff]
  %v1418 = vld [vmem:[%s2 + $0x560] sm:$0xf]
  %v1419 = vld [vmem:[%s2 + $0x564] sm:$0xff]
  %v1420 = vld [vmem:[%s2 + $0x56c] sm:$0xf]
  %v1421 = vld [vmem:[%s2 + $0x570] sm:$0xff]
  %v1422 = vld [vmem:[%s2 + $0x578] sm:$0xf]
  %v1423 = vld [vmem:[%s2 + $0x57c] sm:$0xff]
  %v1424 = vld [vmem:[%s2 + $0x584] sm:$0xf]
  %v1425 = vld [vmem:[%s2 + $0x588] sm:$0xff]
  %v1426 = vld [vmem:[%s2 + $0x590] sm:$0xf]
  %v1427 = vld [vmem:[%s2 + $0x594] sm:$0xff]
  %v1428 = vld [vmem:[%s2 + $0x59c] sm:$0xf]
  %v1429 = vld [vmem:[%s2 + $0x5a0] sm:$0xff]
  %v1430 = vld [vmem:[%s2 + $0x5a8] sm:$0xf]
  %v1431 = vld [vmem:[%s2 + $0x5ac] sm:$0xff]
  %v1432 = vld [vmem:[%s2 + $0x5b4] sm:$0xf]
  %v1433 = vld [vmem:[%s2 + $0x5b8] sm:$0xff]
  %v1434 = vld [vmem:[%s2 + $0x5c0] sm:$0xf]
  %v1435 = vld [vmem:[%s2 + $0x5c4] sm:$0xff]
  %v1436 = vld [vmem:[%s2 + $0x5cc] sm:$0xf]
  %v1437 = vld [vmem:[%s2 + $0x5d0] sm:$0xff]
  %v1438 = vld [vmem:[%s2 + $0x5d8] sm:$0xf]
  %v1439 = vld [vmem:[%s2 + $0x5dc] sm:$0xff]
  %v1440 = vld [vmem:[%s2 + $0x5e4] sm:$0xf]
  %v1441 = vld [vmem:[%s2 + $0x5e8] sm:$0xff]
  %v1442 = vld [vmem:[%s2 + $0x5f0] sm:$0xf]
  %v1443 = vld [vmem:[%s2 + $0x5f4] sm:$0xff]
  %v1444 = vld [vmem:[%s2 + $0x5fc] sm:$0xf]
  %v1445 = vld [vmem:[%s2 + $0x600] sm:$0xff]
  %v1446 = vld [vmem:[%s2 + $0x608] sm:$0xf]
  %v1447 = vld [vmem:[%s2 + $0x60c] sm:$0xff]
  %v1448 = vld [vmem:[%s2 + $0x614] sm:$0xf]
  %v1449 = vld [vmem:[%s2 + $0x618] sm:$0xff]
  %v1450 = vld [vmem:[%s2 + $0x620] sm:$0xf]
  %v1451 = vld [vmem:[%s2 + $0x624] sm:$0xff]
  %v1452 = vld [vmem:[%s2 + $0x62c] sm:$0xf]
  %v1453 = vld [vmem:[%s2 + $0x630] sm:$0xff]
  %v1454 = vld [vmem:[%s2 + $0x638] sm:$0xf]
  %v1455 = vld [vmem:[%s2 + $0x63c] sm:$0xff]
  %v1456 = vld [vmem:[%s2 + $0x644] sm:$0xf]
  %v1457 = vld [vmem:[%s2 + $0x648] sm:$0xff]
  %v1458 = vld [vmem:[%s2 + $0x650] sm:$0xf]
  %v1459 = vld [vmem:[%s2 + $0x654] sm:$0xff]
  %v1460 = vld [vmem:[%s2 + $0x65c] sm:$0xf]
  %v1461 = vld [vmem:[%s2 + $0x660] sm:$0xff]
  %v1462 = vld [vmem:[%s2 + $0x668] sm:$0xf]
  %v1463 = vld [vmem:[%s2 + $0x66c] sm:$0xff]
  %v1464 = vld [vmem:[%s2 + $0x674] sm:$0xf]
  %v1465 = vld [vmem:[%s2 + $0x678] sm:$0xff]
  %v1466 = vld [vmem:[%s2 + $0x680] sm:$0xf]
  %v1467 = vld [vmem:[%s2 + $0x684] sm:$0xff]
  %v1468 = vld [vmem:[%s2 + $0x68c] sm:$0xf]
  %v1469 = vld [vmem:[%s2 + $0x690] sm:$0xff]
  %v1470 = vld [vmem:[%s2 + $0x698] sm:$0xf]
  %v1471 = vld [vmem:[%s2 + $0x69c] sm:$0xff]
  %v1472 = vld [vmem:[%s2 + $0x6a4] sm:$0xf]
  %v1473 = vld [vmem:[%s2 + $0x6a8] sm:$0xff]
  %v1474 = vld [vmem:[%s2 + $0x6b0] sm:$0xf]
  %v1475 = vld [vmem:[%s2 + $0x6b4] sm:$0xff]
  %v1476 = vld [vmem:[%s2 + $0x6bc] sm:$0xf]
  %v1477 = vld [vmem:[%s2 + $0x6c0] sm:$0xff]
  %v1478 = vld [vmem:[%s2 + $0x6c8] sm:$0xf]
  %v1479 = vld [vmem:[%s2 + $0x6cc] sm:$0xff]
  %v1480 = vld [vmem:[%s2 + $0x6d4] sm:$0xf]
  %v1481 = vld [vmem:[%s2 + $0x6d8] sm:$0xff]
  %v1482 = vld [vmem:[%s2 + $0x6e0] sm:$0xf]
  %v1483 = vld [vmem:[%s2 + $0x6e4] sm:$0xff]
  %v1484 = vld [vmem:[%s2 + $0x6ec] sm:$0xf]
  %v1485 = vld [vmem:[%s2 + $0x6f0] sm:$0xff]
  %v1486 = vld [vmem:[%s2 + $0x6f8] sm:$0xf]
  %v1487 = vld [vmem:[%s2 + $0x6fc] sm:$0xff]
  %v1488 = vld [vmem:[%s2 + $0x704] sm:$0xf]
  %v1489 = vld [vmem:[%s2 + $0x708] sm:$0xff]
  %v1490 = vld [vmem:[%s2 + $0x710] sm:$0xf]
  %v1491 = vld [vmem:[%s2 + $0x714] sm:$0xff]
  %v1492 = vld [vmem:[%s2 + $0x71c] sm:$0xf]
  %v1493 = vld [vmem:[%s2 + $0x720] sm:$0xff]
  %v1494 = vld [vmem:[%s2 + $0x728] sm:$0xf]
  %v1495 = vld [vmem:[%s2 + $0x72c] sm:$0xff]
  %v1496 = vld [vmem:[%s2 + $0x734] sm:$0xf]
  %v1497 = vld [vmem:[%s2 + $0x738] sm:$0xff]
  %v1498 = vld [vmem:[%s2 + $0x740] sm:$0xf]
  %v1499 = vld [vmem:[%s2 + $0x744] sm:$0xff]
  %v1500 = vld [vmem:[%s2 + $0x74c] sm:$0xf]
  %v1501 = vld [vmem:[%s2 + $0x750] sm:$0xff]
  %v1502 = vld [vmem:[%s2 + $0x758] sm:$0xf]
  %v1503 = vld [vmem:[%s2 + $0x75c] sm:$0xff]
  %v1504 = vld [vmem:[%s2 + $0x764] sm:$0xf]
  %v1505 = vld [vmem:[%s2 + $0x768] sm:$0xff]
  %v1506 = vld [vmem:[%s2 + $0x770] sm:$0xf]
  %v1507 = vld [vmem:[%s2 + $0x774] sm:$0xff]
  %v1508 = vld [vmem:[%s2 + $0x77c] sm:$0xf]
  %v1509 = vld [vmem:[%s2 + $0x780] sm:$0xff]
  %v1510 = vld [vmem:[%s2 + $0x788] sm:$0xf]
  %v1511 = vld [vmem:[%s2 + $0x78c] sm:$0xff]
  %v1512 = vld [vmem:[%s2 + $0x794] sm:$0xf]
  %v1513 = vld [vmem:[%s2 + $0x798] sm:$0xff]
  %v1514 = vld [vmem:[%s2 + $0x7a0] sm:$0xf]
  %v1515 = vld [vmem:[%s2 + $0x7a4] sm:$0xff]
  %v1516 = vld [vmem:[%s2 + $0x7ac] sm:$0xf]
  %v1517 = vld [vmem:[%s2 + $0x7b0] sm:$0xff]
  %v1518 = vld [vmem:[%s2 + $0x7b8] sm:$0xf]
  %v1519 = vld [vmem:[%s2 + $0x7bc] sm:$0xff]
  %v1520 = vld [vmem:[%s2 + $0x7c4] sm:$0xf]
  %v1521 = vld [vmem:[%s2 + $0x7c8] sm:$0xff]
  %v1522 = vld [vmem:[%s2 + $0x7d0] sm:$0xf]
  %v1523 = vld [vmem:[%s2 + $0x7d4] sm:$0xff]
  %v1524 = vld [vmem:[%s2 + $0x7dc] sm:$0xf]
  %v1525 = vld [vmem:[%s2 + $0x7e0] sm:$0xff]
  %v1526 = vld [vmem:[%s2 + $0x7e8] sm:$0xf]
  %v1527 = vld [vmem:[%s2 + $0x7ec] sm:$0xff]
  %v1528 = vld [vmem:[%s2 + $0x7f4] sm:$0xf]
  %v1529 = vld [vmem:[%s2 + $0x7f8] sm:$0xff]
  %v1530 = vld [vmem:[%s2 + $0x800] sm:$0xf]
  %v1531 = vld [vmem:[%s2 + $0x804] sm:$0xff]
  %v1532 = vld [vmem:[%s2 + $0x80c] sm:$0xf]
  %v1533 = vld [vmem:[%s2 + $0x810] sm:$0xff]
  %v1534 = vld [vmem:[%s2 + $0x818] sm:$0xf]
  %v1535 = vld [vmem:[%s2 + $0x81c] sm:$0xff]
  %v1536 = vld [vmem:[%s2 + $0x824] sm:$0xf]
  %v1537 = vld [vmem:[%s2 + $0x828] sm:$0xff]
  %v1538 = vld [vmem:[%s2 + $0x830] sm:$0xf]
  %v1539 = vld [vmem:[%s2 + $0x834] sm:$0xff]
  %v1540 = vld [vmem:[%s2 + $0x83c] sm:$0xf]
  %v1541 = vld [vmem:[%s2 + $0x840] sm:$0xff]
  %v1542 = vld [vmem:[%s2 + $0x848] sm:$0xf]
  %v1543 = vld [vmem:[%s2 + $0x84c] sm:$0xff]
  %v1544 = vld [vmem:[%s2 + $0x854] sm:$0xf]
  %v1545 = vld [vmem:[%s2 + $0x858] sm:$0xff]
  %v1546 = vld [vmem:[%s2 + $0x860] sm:$0xf]
  %v1547 = vld [vmem:[%s2 + $0x864] sm:$0xff]
  %v1548 = vld [vmem:[%s2 + $0x86c] sm:$0xf]
  %v1549 = vld [vmem:[%s2 + $0x870] sm:$0xff]
  %v1550 = vld [vmem:[%s2 + $0x878] sm:$0xf]
  %v1551 = vld [vmem:[%s2 + $0x87c] sm:$0xff]
  %v1552 = vld [vmem:[%s2 + $0x884] sm:$0xf]
  %v1553 = vld [vmem:[%s2 + $0x888] sm:$0xff]
  %v1554 = vld [vmem:[%s2 + $0x890] sm:$0xf]
  %v1555 = vld [vmem:[%s2 + $0x894] sm:$0xff]
  %v1556 = vld [vmem:[%s2 + $0x89c] sm:$0xf]
  %v1557 = vld [vmem:[%s2 + $0x8a0] sm:$0xff]
  %v1558 = vld [vmem:[%s2 + $0x8a8] sm:$0xf]
  %v1559 = vld [vmem:[%s2 + $0x8ac] sm:$0xff]
  %v1560 = vld [vmem:[%s2 + $0x8b4] sm:$0xf]
  %v1561 = vld [vmem:[%s2 + $0x8b8] sm:$0xff]
  %v1562 = vld [vmem:[%s2 + $0x8c0] sm:$0xf]
  %v1563 = vld [vmem:[%s2 + $0x8c4] sm:$0xff]
  %v1564 = vld [vmem:[%s2 + $0x8cc] sm:$0xf]
  %v1565 = vld [vmem:[%s2 + $0x8d0] sm:$0xff]
  %v1566 = vld [vmem:[%s2 + $0x8d8] sm:$0xf]
  %v1567 = vld [vmem:[%s2 + $0x8dc] sm:$0xff]
  %v1568 = vld [vmem:[%s2 + $0x8e4] sm:$0xf]
  %v1569 = vld [vmem:[%s2 + $0x8e8] sm:$0xff]
  %v1570 = vld [vmem:[%s2 + $0x8f0] sm:$0xf]
  %v1571 = vld [vmem:[%s2 + $0x8f4] sm:$0xff]
  %v1572 = vld [vmem:[%s2 + $0x8fc] sm:$0xf]
  %v1573 = vld [vmem:[%s2 + $0x900] sm:$0xff]
  %v1574 = vld [vmem:[%s2 + $0x908] sm:$0xf]
  %v1575 = vld [vmem:[%s2 + $0x90c] sm:$0xff]
  %v1576 = vld [vmem:[%s2 + $0x914] sm:$0xf]
  %v1577 = vld [vmem:[%s2 + $0x918] sm:$0xff]
  %v1578 = vld [vmem:[%s2 + $0x920] sm:$0xf]
  %v1579 = vld [vmem:[%s2 + $0x924] sm:$0xff]
  %v1580 = vld [vmem:[%s2 + $0x92c] sm:$0xf]
  %v1581 = vld [vmem:[%s2 + $0x930] sm:$0xff]
  %v1582 = vld [vmem:[%s2 + $0x938] sm:$0xf]
  %v1583 = vld [vmem:[%s2 + $0x93c] sm:$0xff]
  %v1584 = vld [vmem:[%s2 + $0x944] sm:$0xf]
  %v1585 = vld [vmem:[%s2 + $0x948] sm:$0xff]
  %v1586 = vld [vmem:[%s2 + $0x950] sm:$0xf]
  %v1587 = vld [vmem:[%s2 + $0x954] sm:$0xff]
  %v1588 = vld [vmem:[%s2 + $0x95c] sm:$0xf]
  %v1589 = vld [vmem:[%s2 + $0x960] sm:$0xff]
  %v1590 = vld [vmem:[%s2 + $0x968] sm:$0xf]
  %v1591 = vld [vmem:[%s2 + $0x96c] sm:$0xff]
  %v1592 = vld [vmem:[%s2 + $0x974] sm:$0xf]
  %v1593 = vld [vmem:[%s2 + $0x978] sm:$0xff]
  %v1594 = vld [vmem:[%s2 + $0x980] sm:$0xf]
  %v1595 = vld [vmem:[%s2 + $0x984] sm:$0xff]
  %v1596 = vld [vmem:[%s2 + $0x98c] sm:$0xf]
  %v1597 = vld [vmem:[%s2 + $0x990] sm:$0xff]
  %v1598 = vld [vmem:[%s2 + $0x998] sm:$0xf]
  %v1599 = vld [vmem:[%s2 + $0x99c] sm:$0xff]
  %v1600 = vld [vmem:[%s2 + $0x9a4] sm:$0xf]
  %v1601 = vld [vmem:[%s2 + $0x9a8] sm:$0xff]
  %v1602 = vld [vmem:[%s2 + $0x9b0] sm:$0xf]
  %v1603 = vld [vmem:[%s2 + $0x9b4] sm:$0xff]
  %v1604 = vld [vmem:[%s2 + $0x9bc] sm:$0xf]
  %v1605 = vld [vmem:[%s2 + $0x9c0] sm:$0xff]
  %v1606 = vld [vmem:[%s2 + $0x9c8] sm:$0xf]
  %v1607 = vld [vmem:[%s2 + $0x9cc] sm:$0xff]
  %v1608 = vld [vmem:[%s2 + $0x9d4] sm:$0xf]
  %v1609 = vld [vmem:[%s2 + $0x9d8] sm:$0xff]
  %v1610 = vld [vmem:[%s2 + $0x9e0] sm:$0xf]
  %v1611 = vld [vmem:[%s2 + $0x9e4] sm:$0xff]
  %v1612 = vld [vmem:[%s2 + $0x9ec] sm:$0xf]
  %v1613 = vld [vmem:[%s2 + $0x9f0] sm:$0xff]
  %v1614 = vld [vmem:[%s2 + $0x9f8] sm:$0xf]
  %v1615 = vld [vmem:[%s2 + $0x9fc] sm:$0xff]
  %v1616 = vld [vmem:[%s2 + $0xa04] sm:$0xf]
  %v1617 = vld [vmem:[%s2 + $0xa08] sm:$0xff]
  %v1618 = vld [vmem:[%s2 + $0xa10] sm:$0xf]
  %v1619 = vld [vmem:[%s2 + $0xa14] sm:$0xff]
  %v1620 = vld [vmem:[%s2 + $0xa1c] sm:$0xf]
  %v1621 = vld [vmem:[%s2 + $0xa20] sm:$0xff]
  %v1622 = vld [vmem:[%s2 + $0xa28] sm:$0xf]
  %v1623 = vld [vmem:[%s2 + $0xa2c] sm:$0xff]
  %v1624 = vld [vmem:[%s2 + $0xa34] sm:$0xf]
  %v1625 = vld [vmem:[%s2 + $0xa38] sm:$0xff]
  %v1626 = vld [vmem:[%s2 + $0xa40] sm:$0xf]
  %v1627 = vld [vmem:[%s2 + $0xa44] sm:$0xff]
  %v1628 = vld [vmem:[%s2 + $0xa4c] sm:$0xf]
  %v1629 = vld [vmem:[%s2 + $0xa50] sm:$0xff]
  %v1630 = vld [vmem:[%s2 + $0xa58] sm:$0xf]
  %v1631 = vld [vmem:[%s2 + $0xa5c] sm:$0xff]
  %v1632 = vld [vmem:[%s2 + $0xa64] sm:$0xf]
  %v1633 = vld [vmem:[%s2 + $0xa68] sm:$0xff]
  %v1634 = vld [vmem:[%s2 + $0xa70] sm:$0xf]
  %v1635 = vld [vmem:[%s2 + $0xa74] sm:$0xff]
  %v1636 = vld [vmem:[%s2 + $0xa7c] sm:$0xf]
  %v1637 = vld [vmem:[%s2 + $0xa80] sm:$0xff]
  %v1638 = vld [vmem:[%s2 + $0xa88] sm:$0xf]
  %v1639 = vld [vmem:[%s2 + $0xa8c] sm:$0xff]
  %v1640 = vld [vmem:[%s2 + $0xa94] sm:$0xf]
  %v1641 = vld [vmem:[%s2 + $0xa98] sm:$0xff]
  %v1642 = vld [vmem:[%s2 + $0xaa0] sm:$0xf]
  %v1643 = vld [vmem:[%s2 + $0xaa4] sm:$0xff]
  %v1644 = vld [vmem:[%s2 + $0xaac] sm:$0xf]
  %v1645 = vld [vmem:[%s2 + $0xab0] sm:$0xff]
  %v1646 = vld [vmem:[%s2 + $0xab8] sm:$0xf]
  %v1647 = vld [vmem:[%s2 + $0xabc] sm:$0xff]
  %v1648 = vld [vmem:[%s2 + $0xac4] sm:$0xf]
  %v1649 = vld [vmem:[%s2 + $0xac8] sm:$0xff]
  %v1650 = vld [vmem:[%s2 + $0xad0] sm:$0xf]
  %v1651 = vld [vmem:[%s2 + $0xad4] sm:$0xff]
  %v1652 = vld [vmem:[%s2 + $0xadc] sm:$0xf]
  %v1653 = vld [vmem:[%s2 + $0xae0] sm:$0xff]
  %v1654 = vld [vmem:[%s2 + $0xae8] sm:$0xf]
  %v1655 = vld [vmem:[%s2 + $0xaec] sm:$0xff]
  %v1656 = vld [vmem:[%s2 + $0xaf4] sm:$0xf]
  %v1657 = vld [vmem:[%s2 + $0xaf8] sm:$0xff]
  %v1658 = vld [vmem:[%s2 + $0xb00] sm:$0xf]
  %v1659 = vld [vmem:[%s2 + $0xb04] sm:$0xff]
  %v1660 = vld [vmem:[%s2 + $0xb0c] sm:$0xf]
  %v1661 = vld [vmem:[%s2 + $0xb10] sm:$0xff]
  %v1662 = vld [vmem:[%s2 + $0xb18] sm:$0xf]
  %v1663 = vld [vmem:[%s2 + $0xb1c] sm:$0xff]
  %v1664 = vld [vmem:[%s2 + $0xb24] sm:$0xf]
  %v1665 = vld [vmem:[%s2 + $0xb28] sm:$0xff]
  %v1666 = vld [vmem:[%s2 + $0xb30] sm:$0xf]
  %v1667 = vld [vmem:[%s2 + $0xb34] sm:$0xff]
  %v1668 = vld [vmem:[%s2 + $0xb3c] sm:$0xf]
  %v1669 = vld [vmem:[%s2 + $0xb40] sm:$0xff]
  %v1670 = vld [vmem:[%s2 + $0xb48] sm:$0xf]
  %v1671 = vld [vmem:[%s2 + $0xb4c] sm:$0xff]
  %v1672 = vld [vmem:[%s2 + $0xb54] sm:$0xf]
  %v1673 = vld [vmem:[%s2 + $0xb58] sm:$0xff]
  %v1674 = vld [vmem:[%s2 + $0xb60] sm:$0xf]
  %v1675 = vld [vmem:[%s2 + $0xb64] sm:$0xff]
  %v1676 = vld [vmem:[%s2 + $0xb6c] sm:$0xf]
  %v1677 = vld [vmem:[%s2 + $0xb70] sm:$0xff]
  %v1678 = vld [vmem:[%s2 + $0xb78] sm:$0xf]
  %v1679 = vld [vmem:[%s2 + $0xb7c] sm:$0xff]
  %v1680 = vld [vmem:[%s2 + $0xb84] sm:$0xf]
  %v1681 = vld [vmem:[%s2 + $0xb88] sm:$0xff]
  %v1682 = vld [vmem:[%s2 + $0xb90] sm:$0xf]
  %v1683 = vld [vmem:[%s2 + $0xb94] sm:$0xff]
  %v1684 = vld [vmem:[%s2 + $0xb9c] sm:$0xf]
  %v1685 = vld [vmem:[%s2 + $0xba0] sm:$0xff]
  %v1686 = vld [vmem:[%s2 + $0xba8] sm:$0xf]
  %v1687 = vld [vmem:[%s2 + $0xbac] sm:$0xff]
  %v1688 = vld [vmem:[%s2 + $0xbb4] sm:$0xf]
  %v1689 = vld [vmem:[%s2 + $0xbb8] sm:$0xff]
  %v1690 = vld [vmem:[%s2 + $0xbc0] sm:$0xf]
  %v1691 = vld [vmem:[%s2 + $0xbc4] sm:$0xff]
  %v1692 = vld [vmem:[%s2 + $0xbcc] sm:$0xf]
  %v1693 = vld [vmem:[%s2 + $0xbd0] sm:$0xff]
  %v1694 = vld [vmem:[%s2 + $0xbd8] sm:$0xf]
  %v1695 = vld [vmem:[%s2 + $0xbdc] sm:$0xff]
  %v1696 = vld [vmem:[%s2 + $0xbe4] sm:$0xf]
  %v1697 = vld [vmem:[%s2 + $0xbe8] sm:$0xff]
  %v1698 = vld [vmem:[%s2 + $0xbf0] sm:$0xf]
  %v1699 = vld [vmem:[%s2 + $0xbf4] sm:$0xff]
  %v1700 = vld [vmem:[%s2 + $0xbfc] sm:$0xf]
  %v1701 = vld [vmem:[%s2 + $0xc00] sm:$0xff]
  %v1702 = vld [vmem:[%s2 + $0xc08] sm:$0xf]
  %v1703 = vld [vmem:[%s2 + $0xc0c] sm:$0xff]
  %v1704 = vld [vmem:[%s2 + $0xc14] sm:$0xf]
  %v1705 = vld [vmem:[%s2 + $0xc18] sm:$0xff]
  %v1706 = vld [vmem:[%s2 + $0xc20] sm:$0xf]
  %v1707 = vld [vmem:[%s2 + $0xc24] sm:$0xff]
  %v1708 = vld [vmem:[%s2 + $0xc2c] sm:$0xf]
  %v1709 = vld [vmem:[%s2 + $0xc30] sm:$0xff]
  %v1710 = vld [vmem:[%s2 + $0xc38] sm:$0xf]
  %v1711 = vld [vmem:[%s2 + $0xc3c] sm:$0xff]
  %v1712 = vld [vmem:[%s2 + $0xc44] sm:$0xf]
  %v1713 = vld [vmem:[%s2 + $0xc48] sm:$0xff]
  %v1714 = vld [vmem:[%s2 + $0xc50] sm:$0xf]
  %v1715 = vld [vmem:[%s2 + $0xc54] sm:$0xff]
  %v1716 = vld [vmem:[%s2 + $0xc5c] sm:$0xf]
  %v1717 = vld [vmem:[%s2 + $0xc60] sm:$0xff]
  %v1718 = vld [vmem:[%s2 + $0xc68] sm:$0xf]
  %v1719 = vld [vmem:[%s2 + $0xc6c] sm:$0xff]
  %v1720 = vld [vmem:[%s2 + $0xc74] sm:$0xf]
  %v1721 = vld [vmem:[%s2 + $0xc78] sm:$0xff]
  %v1722 = vld [vmem:[%s2 + $0xc80] sm:$0xf]
  %v1723 = vld [vmem:[%s2 + $0xc84] sm:$0xff]
  %v1724 = vld [vmem:[%s2 + $0xc8c] sm:$0xf]
  %v1725 = vld [vmem:[%s2 + $0xc90] sm:$0xff]
  %v1726 = vld [vmem:[%s2 + $0xc98] sm:$0xf]
  %v1727 = vld [vmem:[%s2 + $0xc9c] sm:$0xff]
  %v1728 = vld [vmem:[%s2 + $0xca4] sm:$0xf]
  %v1729 = vld [vmem:[%s2 + $0xca8] sm:$0xff]
  %v1730 = vld [vmem:[%s2 + $0xcb0] sm:$0xf]
  %v1731 = vld [vmem:[%s2 + $0xcb4] sm:$0xff]
  %v1732 = vld [vmem:[%s2 + $0xcbc] sm:$0xf]
  %v1733 = vld [vmem:[%s2 + $0xcc0] sm:$0xff]
  %v1734 = vld [vmem:[%s2 + $0xcc8] sm:$0xf]
  %v1735 = vld [vmem:[%s2 + $0xccc] sm:$0xff]
  %v1736 = vld [vmem:[%s2 + $0xcd4] sm:$0xf]
  %v1737 = vld [vmem:[%s2 + $0xcd8] sm:$0xff]
  %v1738 = vld [vmem:[%s2 + $0xce0] sm:$0xf]
  %v1739 = vld [vmem:[%s2 + $0xce4] sm:$0xff]
  %v1740 = vld [vmem:[%s2 + $0xcec] sm:$0xf]
  %v1741 = vld [vmem:[%s2 + $0xcf0] sm:$0xff]
  %v1742 = vld [vmem:[%s2 + $0xcf8] sm:$0xf]
  %v1743 = vld [vmem:[%s2 + $0xcfc] sm:$0xff]
  %v1744 = vld [vmem:[%s2 + $0xd04] sm:$0xf]
  %v1745 = vld [vmem:[%s2 + $0xd08] sm:$0xff]
  %v1746 = vld [vmem:[%s2 + $0xd10] sm:$0xf]
  %v1747 = vld [vmem:[%s2 + $0xd14] sm:$0xff]
  %v1748 = vld [vmem:[%s2 + $0xd1c] sm:$0xf]
  %v1749 = vld [vmem:[%s2 + $0xd20] sm:$0xff]
  %v1750 = vld [vmem:[%s2 + $0xd28] sm:$0xf]
  %v1751 = vld [vmem:[%s2 + $0xd2c] sm:$0xff]
  %v1752 = vld [vmem:[%s2 + $0xd34] sm:$0xf]
  %v1753 = vld [vmem:[%s2 + $0xd38] sm:$0xff]
  %v1754 = vld [vmem:[%s2 + $0xd40] sm:$0xf]
  %v1755 = vld [vmem:[%s2 + $0xd44] sm:$0xff]
  %v1756 = vld [vmem:[%s2 + $0xd4c] sm:$0xf]
  %v1757 = vld [vmem:[%s2 + $0xd50] sm:$0xff]
  %v1758 = vld [vmem:[%s2 + $0xd58] sm:$0xf]
  %v1759 = vld [vmem:[%s2 + $0xd5c] sm:$0xff]
  %v1760 = vld [vmem:[%s2 + $0xd64] sm:$0xf]
  %v1761 = vld [vmem:[%s2 + $0xd68] sm:$0xff]
  %v1762 = vld [vmem:[%s2 + $0xd70] sm:$0xf]
  %v1763 = vld [vmem:[%s2 + $0xd74] sm:$0xff]
  %v1764 = vld [vmem:[%s2 + $0xd7c] sm:$0xf]
  %v1765 = vld [vmem:[%s2 + $0xd80] sm:$0xff]
  %v1766 = vld [vmem:[%s2 + $0xd88] sm:$0xf]
  %v1767 = vld [vmem:[%s2 + $0xd8c] sm:$0xff]
  %v1768 = vld [vmem:[%s2 + $0xd94] sm:$0xf]
  %v1769 = vld [vmem:[%s2 + $0xd98] sm:$0xff]
  %v1770 = vld [vmem:[%s2 + $0xda0] sm:$0xf]
  %v1771 = vld [vmem:[%s2 + $0xda4] sm:$0xff]
  %v1772 = vld [vmem:[%s2 + $0xdac] sm:$0xf]
  %v1773 = vld [vmem:[%s2 + $0xdb0] sm:$0xff]
  %v1774 = vld [vmem:[%s2 + $0xdb8] sm:$0xf]
  %v1775 = vld [vmem:[%s2 + $0xdbc] sm:$0xff]
  %v1776 = vld [vmem:[%s2 + $0xdc4] sm:$0xf]
  %v1777 = vld [vmem:[%s2 + $0xdc8] sm:$0xff]
  %v1778 = vld [vmem:[%s2 + $0xdd0] sm:$0xf]
  %v1779 = vld [vmem:[%s2 + $0xdd4] sm:$0xff]
  %v1780 = vld [vmem:[%s2 + $0xddc] sm:$0xf]
  %v1781 = vld [vmem:[%s2 + $0xde0] sm:$0xff]
  %v1782 = vld [vmem:[%s2 + $0xde8] sm:$0xf]
  %v1783 = vld [vmem:[%s2 + $0xdec] sm:$0xff]
  %v1784 = vld [vmem:[%s2 + $0xdf4] sm:$0xf]
  %v1785 = vld [vmem:[%s2 + $0xdf8] sm:$0xff]
  %v1786 = vld [vmem:[%s2 + $0xe00] sm:$0xf]
  %v1787 = vld [vmem:[%s2 + $0xe04] sm:$0xff]
  %v1788 = vld [vmem:[%s2 + $0xe0c] sm:$0xf]
  %v1789 = vld [vmem:[%s2 + $0xe10] sm:$0xff]
  %v1790 = vld [vmem:[%s2 + $0xe18] sm:$0xf]
  %v1791 = vld [vmem:[%s2 + $0xe1c] sm:$0xff]
  %v1792 = vld [vmem:[%s2 + $0xe24] sm:$0xf]
  %v1793 = vld [vmem:[%s2 + $0xe28] sm:$0xff]
  %v1794 = vld [vmem:[%s2 + $0xe30] sm:$0xf]
  %v1795 = vld [vmem:[%s2 + $0xe34] sm:$0xff]
  %v1796 = vld [vmem:[%s2 + $0xe3c] sm:$0xf]
  %v1797 = vld [vmem:[%s2 + $0xe40] sm:$0xff]
  %v1798 = vld [vmem:[%s2 + $0xe48] sm:$0xf]
  %v1799 = vld [vmem:[%s2 + $0xe4c] sm:$0xff]
  %v1800 = vld [vmem:[%s2 + $0xe54] sm:$0xf]
  %v1801 = vld [vmem:[%s3] sm:$0x7]
  %v1803 = vlaneseq
  %v1804 = vshrl.u32 %v1803, 7
  %v1805 = vsub.s32 0, %v1804
  %v1806 = vrot.slane %v1801, %v1805
  %v1807 = vlaneseq
  %v1808 = vshrl.u32 %v1807, 7
  %v1809 = vsub.s32 1, %v1808
  %v1810 = vrot.slane %v1801, %v1809
  %v1811 = vlaneseq
  %v1812 = vshrl.u32 %v1811, 7
  %v1813 = vsub.s32 2, %v1812
  %v1814 = vrot.slane %v1801, %v1813
  %v1978 = vunpack.c.l.b16 %v1029
  %v1979 = vunpack.c.h.b16 %v1029
  %v1980 = vunpack.c.l.b16 %v1030
  %v1981 = vunpack.c.h.b16 %v1030
  %v1982 = vunpack.c.l.b16 %v1031
  %v1983 = vunpack.c.h.b16 %v1031
  %v1984 = vunpack.c.l.b16 %v1032
  %v1985 = vunpack.c.h.b16 %v1032
  %v1986 = vunpack.c.l.b16 %v1033
  %v1987 = vunpack.c.h.b16 %v1033
  %v1988 = vunpack.c.l.b16 %v1034
  %v1989 = vunpack.c.h.b16 %v1034
  %v1990 = vunpack.c.l.b16 %v1035
  %v1991 = vunpack.c.h.b16 %v1035
  %v1992 = vunpack.c.l.b16 %v1036
  %v1993 = vunpack.c.h.b16 %v1036
  %v1994 = vunpack.c.l.b16 %v1037
  %v1995 = vunpack.c.h.b16 %v1037
  %v1996 = vunpack.c.l.b16 %v1038
  %v1997 = vunpack.c.h.b16 %v1038
  %v1998 = vunpack.c.l.b16 %v1039
  %v1999 = vunpack.c.h.b16 %v1039
  %v2000 = vunpack.c.l.b16 %v1040
  %v2001 = vunpack.c.h.b16 %v1040
  %v2002 = vunpack.c.l.b16 %v1041
  %v2003 = vunpack.c.h.b16 %v1041
  %v2004 = vunpack.c.l.b16 %v1042
  %v2005 = vunpack.c.h.b16 %v1042
  %v2006 = vunpack.c.l.b16 %v1043
  %v2007 = vunpack.c.h.b16 %v1043
  %v2008 = vunpack.c.l.b16 %v1044
  %v2009 = vunpack.c.h.b16 %v1044
  %v2010 = vunpack.c.l.b16 %v1045
  %v2011 = vunpack.c.h.b16 %v1045
  %v2012 = vunpack.c.l.b16 %v1046
  %v2013 = vunpack.c.h.b16 %v1046
  %v2014 = vunpack.c.l.b16 %v1047
  %v2015 = vunpack.c.h.b16 %v1047
  %v2016 = vunpack.c.l.b16 %v1048
  %v2017 = vunpack.c.h.b16 %v1048
  %v2018 = vunpack.c.l.b16 %v1049
  %v2019 = vunpack.c.h.b16 %v1049
  %v2020 = vunpack.c.l.b16 %v1050
  %v2021 = vunpack.c.h.b16 %v1050
  %v2022 = vunpack.c.l.b16 %v1051
  %v2023 = vunpack.c.h.b16 %v1051
  %v2024 = vunpack.c.l.b16 %v1052
  %v2025 = vunpack.c.h.b16 %v1052
  %v2026 = vunpack.c.l.b16 %v1053
  %v2027 = vunpack.c.h.b16 %v1053
  %v2028 = vunpack.c.l.b16 %v1054
  %v2029 = vunpack.c.h.b16 %v1054
  %v2030 = vunpack.c.l.b16 %v1055
  %v2031 = vunpack.c.h.b16 %v1055
  %v2032 = vunpack.c.l.b16 %v1056
  %v2033 = vunpack.c.h.b16 %v1056
  %v2034 = vunpack.c.l.b16 %v1057
  %v2035 = vunpack.c.h.b16 %v1057
  %v2036 = vunpack.c.l.b16 %v1058
  %v2037 = vunpack.c.h.b16 %v1058
  %v2038 = vunpack.c.l.b16 %v1059
  %v2039 = vunpack.c.h.b16 %v1059
  %v2040 = vunpack.c.l.b16 %v1060
  %v2041 = vunpack.c.h.b16 %v1060
  %v2042 = vunpack.c.l.b16 %v1061
  %v2043 = vunpack.c.h.b16 %v1061
  %v2044 = vunpack.c.l.b16 %v1062
  %v2045 = vunpack.c.h.b16 %v1062
  %v2046 = vunpack.c.l.b16 %v1063
  %v2047 = vunpack.c.h.b16 %v1063
  %v2048 = vunpack.c.l.b16 %v1064
  %v2049 = vunpack.c.h.b16 %v1064
  %v2050 = vunpack.c.l.b16 %v1065
  %v2051 = vunpack.c.h.b16 %v1065
  %v2052 = vunpack.c.l.b16 %v1066
  %v2053 = vunpack.c.h.b16 %v1066
  %v2054 = vunpack.c.l.b16 %v1067
  %v2055 = vunpack.c.h.b16 %v1067
  %v2056 = vunpack.c.l.b16 %v1068
  %v2057 = vunpack.c.h.b16 %v1068
  %v2058 = vunpack.c.l.b16 %v1069
  %v2059 = vunpack.c.h.b16 %v1069
  %v2060 = vunpack.c.l.b16 %v1070
  %v2061 = vunpack.c.h.b16 %v1070
  %v2062 = vunpack.c.l.b16 %v1071
  %v2063 = vunpack.c.h.b16 %v1071
  %v2064 = vunpack.c.l.b16 %v1072
  %v2065 = vunpack.c.h.b16 %v1072
  %v2066 = vunpack.c.l.b16 %v1073
  %v2067 = vunpack.c.h.b16 %v1073
  %v2068 = vunpack.c.l.b16 %v1074
  %v2069 = vunpack.c.h.b16 %v1074
  %v2070 = vunpack.c.l.b16 %v1075
  %v2071 = vunpack.c.h.b16 %v1075
  %v2072 = vunpack.c.l.b16 %v1076
  %v2073 = vunpack.c.h.b16 %v1076
  %v2074 = vunpack.c.l.b16 %v1077
  %v2075 = vunpack.c.h.b16 %v1077
  %v2076 = vunpack.c.l.b16 %v1078
  %v2077 = vunpack.c.h.b16 %v1078
  %v2078 = vunpack.c.l.b16 %v1079
  %v2079 = vunpack.c.h.b16 %v1079
  %v2080 = vunpack.c.l.b16 %v1080
  %v2081 = vunpack.c.h.b16 %v1080
  %v2082 = vunpack.c.l.b16 %v1081
  %v2083 = vunpack.c.h.b16 %v1081
  %v2084 = vunpack.c.l.b16 %v1082
  %v2085 = vunpack.c.h.b16 %v1082
  %v2086 = vunpack.c.l.b16 %v1083
  %v2087 = vunpack.c.h.b16 %v1083
  %v2088 = vunpack.c.l.b16 %v1084
  %v2089 = vunpack.c.h.b16 %v1084
  %v2090 = vunpack.c.l.b16 %v1085
  %v2091 = vunpack.c.h.b16 %v1085
  %v2092 = vunpack.c.l.b16 %v1086
  %v2093 = vunpack.c.h.b16 %v1086
  %v2094 = vunpack.c.l.b16 %v1087
  %v2095 = vunpack.c.h.b16 %v1087
  %v2096 = vunpack.c.l.b16 %v1088
  %v2097 = vunpack.c.h.b16 %v1088
  %v2098 = vunpack.c.l.b16 %v1089
  %v2099 = vunpack.c.h.b16 %v1089
  %v2100 = vunpack.c.l.b16 %v1090
  %v2101 = vunpack.c.h.b16 %v1090
  %v2102 = vunpack.c.l.b16 %v1091
  %v2103 = vunpack.c.h.b16 %v1091
  %v2104 = vunpack.c.l.b16 %v1092
  %v2105 = vunpack.c.h.b16 %v1092
  %v2106 = vunpack.c.l.b16 %v1093
  %v2107 = vunpack.c.h.b16 %v1093
  %v2108 = vunpack.c.l.b16 %v1094
  %v2109 = vunpack.c.h.b16 %v1094
  %v2110 = vunpack.c.l.b16 %v1095
  %v2111 = vunpack.c.h.b16 %v1095
  %v2112 = vunpack.c.l.b16 %v1096
  %v2113 = vunpack.c.h.b16 %v1096
  %v2114 = vunpack.c.l.b16 %v1097
  %v2115 = vunpack.c.h.b16 %v1097
  %v2116 = vunpack.c.l.b16 %v1098
  %v2117 = vunpack.c.h.b16 %v1098
  %v2118 = vunpack.c.l.b16 %v1099
  %v2119 = vunpack.c.h.b16 %v1099
  %v2120 = vunpack.c.l.b16 %v1100
  %v2121 = vunpack.c.h.b16 %v1100
  %v2122 = vunpack.c.l.b16 %v1101
  %v2123 = vunpack.c.h.b16 %v1101
  %v2124 = vunpack.c.l.b16 %v1102
  %v2125 = vunpack.c.h.b16 %v1102
  %v2126 = vunpack.c.l.b16 %v1103
  %v2127 = vunpack.c.h.b16 %v1103
  %v2128 = vunpack.c.l.b16 %v1104
  %v2129 = vunpack.c.h.b16 %v1104
  %v2130 = vunpack.c.l.b16 %v1105
  %v2131 = vunpack.c.h.b16 %v1105
  %v2132 = vunpack.c.l.b16 %v1106
  %v2133 = vunpack.c.h.b16 %v1106
  %v2134 = vunpack.c.l.b16 %v1107
  %v2135 = vunpack.c.h.b16 %v1107
  %v2136 = vunpack.c.l.b16 %v1108
  %v2137 = vunpack.c.h.b16 %v1108
  %v2138 = vunpack.c.l.b16 %v1109
  %v2139 = vunpack.c.h.b16 %v1109
  %v2140 = vunpack.c.l.b16 %v1110
  %v2141 = vunpack.c.h.b16 %v1110
  %v2142 = vunpack.c.l.b16 %v1111
  %v2143 = vunpack.c.h.b16 %v1111
  %v2144 = vunpack.c.l.b16 %v1112
  %v2145 = vunpack.c.h.b16 %v1112
  %v2146 = vunpack.c.l.b16 %v1113
  %v2147 = vunpack.c.h.b16 %v1113
  %v2148 = vunpack.c.l.b16 %v1114
  %v2149 = vunpack.c.h.b16 %v1114
  %v2150 = vunpack.c.l.b16 %v1115
  %v2151 = vunpack.c.h.b16 %v1115
  %v2152 = vunpack.c.l.b16 %v1116
  %v2153 = vunpack.c.h.b16 %v1116
  %v2154 = vunpack.c.l.b16 %v1117
  %v2155 = vunpack.c.h.b16 %v1117
  %v2156 = vunpack.c.l.b16 %v1118
  %v2157 = vunpack.c.h.b16 %v1118
  %v2158 = vunpack.c.l.b16 %v1119
  %v2159 = vunpack.c.h.b16 %v1119
  %v2160 = vunpack.c.l.b16 %v1120
  %v2161 = vunpack.c.h.b16 %v1120
  %v2162 = vunpack.c.l.b16 %v1121
  %v2163 = vunpack.c.h.b16 %v1121
  %v2164 = vunpack.c.l.b16 %v1122
  %v2165 = vunpack.c.h.b16 %v1122
  %v2166 = vunpack.c.l.b16 %v1123
  %v2167 = vunpack.c.h.b16 %v1123
  %v2168 = vunpack.c.l.b16 %v1124
  %v2169 = vunpack.c.h.b16 %v1124
  %v2170 = vunpack.c.l.b16 %v1125
  %v2171 = vunpack.c.h.b16 %v1125
  %v2172 = vunpack.c.l.b16 %v1126
  %v2173 = vunpack.c.h.b16 %v1126
  %v2174 = vunpack.c.l.b16 %v1127
  %v2175 = vunpack.c.h.b16 %v1127
  %v2176 = vunpack.c.l.b16 %v1128
  %v2177 = vunpack.c.h.b16 %v1128
  %v2178 = vunpack.c.l.b16 %v1129
  %v2179 = vunpack.c.h.b16 %v1129
  %v2180 = vunpack.c.l.b16 %v1130
  %v2181 = vunpack.c.h.b16 %v1130
  %v2182 = vunpack.c.l.b16 %v1131
  %v2183 = vunpack.c.h.b16 %v1131
  %v2184 = vunpack.c.l.b16 %v1132
  %v2185 = vunpack.c.h.b16 %v1132
  %v2186 = vunpack.c.l.b16 %v1133
  %v2187 = vunpack.c.h.b16 %v1133
  %v2188 = vunpack.c.l.b16 %v1134
  %v2189 = vunpack.c.h.b16 %v1134
  %v2190 = vunpack.c.l.b16 %v1135
  %v2191 = vunpack.c.h.b16 %v1135
  %v2192 = vunpack.c.l.b16 %v1136
  %v2193 = vunpack.c.h.b16 %v1136
  %v2194 = vunpack.c.l.b16 %v1137
  %v2195 = vunpack.c.h.b16 %v1137
  %v2196 = vunpack.c.l.b16 %v1138
  %v2197 = vunpack.c.h.b16 %v1138
  %v2198 = vunpack.c.l.b16 %v1139
  %v2199 = vunpack.c.h.b16 %v1139
  %v2200 = vunpack.c.l.b16 %v1140
  %v2201 = vunpack.c.h.b16 %v1140
  %v2202 = vunpack.c.l.b16 %v1141
  %v2203 = vunpack.c.h.b16 %v1141
  %v2204 = vunpack.c.l.b16 %v1142
  %v2205 = vunpack.c.h.b16 %v1142
  %v2206 = vunpack.c.l.b16 %v1143
  %v2207 = vunpack.c.h.b16 %v1143
  %v2208 = vunpack.c.l.b16 %v1144
  %v2209 = vunpack.c.h.b16 %v1144
  %v2210 = vunpack.c.l.b16 %v1145
  %v2211 = vunpack.c.h.b16 %v1145
  %v2212 = vunpack.c.l.b16 %v1146
  %v2213 = vunpack.c.h.b16 %v1146
  %v2214 = vunpack.c.l.b16 %v1147
  %v2215 = vunpack.c.h.b16 %v1147
  %v2216 = vunpack.c.l.b16 %v1148
  %v2217 = vunpack.c.h.b16 %v1148
  %v2218 = vunpack.c.l.b16 %v1149
  %v2219 = vunpack.c.h.b16 %v1149
  %v2220 = vunpack.c.l.b16 %v1150
  %v2221 = vunpack.c.h.b16 %v1150
  %v2222 = vunpack.c.l.b16 %v1151
  %v2223 = vunpack.c.h.b16 %v1151
  %v2224 = vunpack.c.l.b16 %v1152
  %v2225 = vunpack.c.h.b16 %v1152
  %v2226 = vunpack.c.l.b16 %v1153
  %v2227 = vunpack.c.h.b16 %v1153
  %v2228 = vunpack.c.l.b16 %v1154
  %v2229 = vunpack.c.h.b16 %v1154
  %v2230 = vunpack.c.l.b16 %v1155
  %v2231 = vunpack.c.h.b16 %v1155
  %v2232 = vunpack.c.l.b16 %v1156
  %v2233 = vunpack.c.h.b16 %v1156
  %v2234 = vunpack.c.l.b16 %v1157
  %v2235 = vunpack.c.h.b16 %v1157
  %v2236 = vunpack.c.l.b16 %v1158
  %v2237 = vunpack.c.h.b16 %v1158
  %v2238 = vunpack.c.l.b16 %v1159
  %v2239 = vunpack.c.h.b16 %v1159
  %v2240 = vunpack.c.l.b16 %v1160
  %v2241 = vunpack.c.h.b16 %v1160
  %v2242 = vunpack.c.l.b16 %v1161
  %v2243 = vunpack.c.h.b16 %v1161
  %v2244 = vunpack.c.l.b16 %v1162
  %v2245 = vunpack.c.h.b16 %v1162
  %v2246 = vunpack.c.l.b16 %v1163
  %v2247 = vunpack.c.h.b16 %v1163
  %v2248 = vunpack.c.l.b16 %v1164
  %v2249 = vunpack.c.h.b16 %v1164
  %v2250 = vunpack.c.l.b16 %v1165
  %v2251 = vunpack.c.h.b16 %v1165
  %v2252 = vunpack.c.l.b16 %v1166
  %v2253 = vunpack.c.h.b16 %v1166
  %v2254 = vunpack.c.l.b16 %v1167
  %v2255 = vunpack.c.h.b16 %v1167
  %v2256 = vunpack.c.l.b16 %v1168
  %v2257 = vunpack.c.h.b16 %v1168
  %v2258 = vunpack.c.l.b16 %v1169
  %v2259 = vunpack.c.h.b16 %v1169
  %v2260 = vunpack.c.l.b16 %v1170
  %v2261 = vunpack.c.h.b16 %v1170
  %v2262 = vunpack.c.l.b16 %v1171
  %v2263 = vunpack.c.h.b16 %v1171
  %v2264 = vunpack.c.l.b16 %v1172
  %v2265 = vunpack.c.h.b16 %v1172
  %v2266 = vunpack.c.l.b16 %v1173
  %v2267 = vunpack.c.h.b16 %v1173
  %v2268 = vunpack.c.l.b16 %v1174
  %v2269 = vunpack.c.h.b16 %v1174
  %v2270 = vunpack.c.l.b16 %v1175
  %v2271 = vunpack.c.h.b16 %v1175
  %v2272 = vunpack.c.l.b16 %v1176
  %v2273 = vunpack.c.h.b16 %v1176
  %v2274 = vunpack.c.l.b16 %v1177
  %v2275 = vunpack.c.h.b16 %v1177
  %v2276 = vunpack.c.l.b16 %v1178
  %v2277 = vunpack.c.h.b16 %v1178
  %v2278 = vunpack.c.l.b16 %v1179
  %v2279 = vunpack.c.h.b16 %v1179
  %v2280 = vunpack.c.l.b16 %v1180
  %v2281 = vunpack.c.h.b16 %v1180
  %v2282 = vunpack.c.l.b16 %v1181
  %v2283 = vunpack.c.h.b16 %v1181
  %v2284 = vunpack.c.l.b16 %v1182
  %v2285 = vunpack.c.h.b16 %v1182
  %v2286 = vunpack.c.l.b16 %v1183
  %v2287 = vunpack.c.h.b16 %v1183
  %v2288 = vunpack.c.l.b16 %v1184
  %v2289 = vunpack.c.h.b16 %v1184
  %v2290 = vunpack.c.l.b16 %v1185
  %v2291 = vunpack.c.h.b16 %v1185
  %v2292 = vunpack.c.l.b16 %v1186
  %v2293 = vunpack.c.h.b16 %v1186
  %v2294 = vunpack.c.l.b16 %v1187
  %v2295 = vunpack.c.h.b16 %v1187
  %v2296 = vunpack.c.l.b16 %v1188
  %v2297 = vunpack.c.h.b16 %v1188
  %v2298 = vpack.c.b16 %v1998, %v1978
  %v2299 = vpack.c.b16 %v1999, %v1979
  %v2300 = vpack.c.b16 %v2000, %v1980
  %v2301 = vpack.c.b16 %v2001, %v1981
  %v2302 = vpack.c.b16 %v2002, %v1982
  %v2303 = vpack.c.b16 %v2003, %v1983
  %v2304 = vpack.c.b16 %v2004, %v1984
  %v2305 = vpack.c.b16 %v2005, %v1985
  %v2306 = vpack.c.b16 %v2006, %v1986
  %v2307 = vpack.c.b16 %v2007, %v1987
  %v2308 = vpack.c.b16 %v2008, %v1988
  %v2309 = vpack.c.b16 %v2009, %v1989
  %v2310 = vpack.c.b16 %v2010, %v1990
  %v2311 = vpack.c.b16 %v2011, %v1991
  %v2312 = vpack.c.b16 %v2012, %v1992
  %v2313 = vpack.c.b16 %v2013, %v1993
  %v2314 = vpack.c.b16 %v2014, %v1994
  %v2315 = vpack.c.b16 %v2015, %v1995
  %v2316 = vpack.c.b16 %v2016, %v1996
  %v2317 = vpack.c.b16 %v2017, %v1997
  %v2318 = vpack.c.b16 %v2038, %v2018
  %v2319 = vpack.c.b16 %v2039, %v2019
  %v2320 = vpack.c.b16 %v2040, %v2020
  %v2321 = vpack.c.b16 %v2041, %v2021
  %v2322 = vpack.c.b16 %v2042, %v2022
  %v2323 = vpack.c.b16 %v2043, %v2023
  %v2324 = vpack.c.b16 %v2044, %v2024
  %v2325 = vpack.c.b16 %v2045, %v2025
  %v2326 = vpack.c.b16 %v2046, %v2026
  %v2327 = vpack.c.b16 %v2047, %v2027
  %v2328 = vpack.c.b16 %v2048, %v2028
  %v2329 = vpack.c.b16 %v2049, %v2029
  %v2330 = vpack.c.b16 %v2050, %v2030
  %v2331 = vpack.c.b16 %v2051, %v2031
  %v2332 = vpack.c.b16 %v2052, %v2032
  %v2333 = vpack.c.b16 %v2053, %v2033
  %v2334 = vpack.c.b16 %v2054, %v2034
  %v2335 = vpack.c.b16 %v2055, %v2035
  %v2336 = vpack.c.b16 %v2056, %v2036
  %v2337 = vpack.c.b16 %v2057, %v2037
  %v2338 = vpack.c.b16 %v2078, %v2058
  %v2339 = vpack.c.b16 %v2079, %v2059
  %v2340 = vpack.c.b16 %v2080, %v2060
  %v2341 = vpack.c.b16 %v2081, %v2061
  %v2342 = vpack.c.b16 %v2082, %v2062
  %v2343 = vpack.c.b16 %v2083, %v2063
  %v2344 = vpack.c.b16 %v2084, %v2064
  %v2345 = vpack.c.b16 %v2085, %v2065
  %v2346 = vpack.c.b16 %v2086, %v2066
  %v2347 = vpack.c.b16 %v2087, %v2067
  %v2348 = vpack.c.b16 %v2088, %v2068
  %v2349 = vpack.c.b16 %v2089, %v2069
  %v2350 = vpack.c.b16 %v2090, %v2070
  %v2351 = vpack.c.b16 %v2091, %v2071
  %v2352 = vpack.c.b16 %v2092, %v2072
  %v2353 = vpack.c.b16 %v2093, %v2073
  %v2354 = vpack.c.b16 %v2094, %v2074
  %v2355 = vpack.c.b16 %v2095, %v2075
  %v2356 = vpack.c.b16 %v2096, %v2076
  %v2357 = vpack.c.b16 %v2097, %v2077
  %v2358 = vpack.c.b16 %v2118, %v2098
  %v2359 = vpack.c.b16 %v2119, %v2099
  %v2360 = vpack.c.b16 %v2120, %v2100
  %v2361 = vpack.c.b16 %v2121, %v2101
  %v2362 = vpack.c.b16 %v2122, %v2102
  %v2363 = vpack.c.b16 %v2123, %v2103
  %v2364 = vpack.c.b16 %v2124, %v2104
  %v2365 = vpack.c.b16 %v2125, %v2105
  %v2366 = vpack.c.b16 %v2126, %v2106
  %v2367 = vpack.c.b16 %v2127, %v2107
  %v2368 = vpack.c.b16 %v2128, %v2108
  %v2369 = vpack.c.b16 %v2129, %v2109
  %v2370 = vpack.c.b16 %v2130, %v2110
  %v2371 = vpack.c.b16 %v2131, %v2111
  %v2372 = vpack.c.b16 %v2132, %v2112
  %v2373 = vpack.c.b16 %v2133, %v2113
  %v2374 = vpack.c.b16 %v2134, %v2114
  %v2375 = vpack.c.b16 %v2135, %v2115
  %v2376 = vpack.c.b16 %v2136, %v2116
  %v2377 = vpack.c.b16 %v2137, %v2117
  %v2378 = vpack.c.b16 %v2158, %v2138
  %v2379 = vpack.c.b16 %v2159, %v2139
  %v2380 = vpack.c.b16 %v2160, %v2140
  %v2381 = vpack.c.b16 %v2161, %v2141
  %v2382 = vpack.c.b16 %v2162, %v2142
  %v2383 = vpack.c.b16 %v2163, %v2143
  %v2384 = vpack.c.b16 %v2164, %v2144
  %v2385 = vpack.c.b16 %v2165, %v2145
  %v2386 = vpack.c.b16 %v2166, %v2146
  %v2387 = vpack.c.b16 %v2167, %v2147
  %v2388 = vpack.c.b16 %v2168, %v2148
  %v2389 = vpack.c.b16 %v2169, %v2149
  %v2390 = vpack.c.b16 %v2170, %v2150
  %v2391 = vpack.c.b16 %v2171, %v2151
  %v2392 = vpack.c.b16 %v2172, %v2152
  %v2393 = vpack.c.b16 %v2173, %v2153
  %v2394 = vpack.c.b16 %v2174, %v2154
  %v2395 = vpack.c.b16 %v2175, %v2155
  %v2396 = vpack.c.b16 %v2176, %v2156
  %v2397 = vpack.c.b16 %v2177, %v2157
  %v2398 = vpack.c.b16 %v2198, %v2178
  %v2399 = vpack.c.b16 %v2199, %v2179
  %v2400 = vpack.c.b16 %v2200, %v2180
  %v2401 = vpack.c.b16 %v2201, %v2181
  %v2402 = vpack.c.b16 %v2202, %v2182
  %v2403 = vpack.c.b16 %v2203, %v2183
  %v2404 = vpack.c.b16 %v2204, %v2184
  %v2405 = vpack.c.b16 %v2205, %v2185
  %v2406 = vpack.c.b16 %v2206, %v2186
  %v2407 = vpack.c.b16 %v2207, %v2187
  %v2408 = vpack.c.b16 %v2208, %v2188
  %v2409 = vpack.c.b16 %v2209, %v2189
  %v2410 = vpack.c.b16 %v2210, %v2190
  %v2411 = vpack.c.b16 %v2211, %v2191
  %v2412 = vpack.c.b16 %v2212, %v2192
  %v2413 = vpack.c.b16 %v2213, %v2193
  %v2414 = vpack.c.b16 %v2214, %v2194
  %v2415 = vpack.c.b16 %v2215, %v2195
  %v2416 = vpack.c.b16 %v2216, %v2196
  %v2417 = vpack.c.b16 %v2217, %v2197
  %v2418 = vpack.c.b16 %v2238, %v2218
  %v2419 = vpack.c.b16 %v2239, %v2219
  %v2420 = vpack.c.b16 %v2240, %v2220
  %v2421 = vpack.c.b16 %v2241, %v2221
  %v2422 = vpack.c.b16 %v2242, %v2222
  %v2423 = vpack.c.b16 %v2243, %v2223
  %v2424 = vpack.c.b16 %v2244, %v2224
  %v2425 = vpack.c.b16 %v2245, %v2225
  %v2426 = vpack.c.b16 %v2246, %v2226
  %v2427 = vpack.c.b16 %v2247, %v2227
  %v2428 = vpack.c.b16 %v2248, %v2228
  %v2429 = vpack.c.b16 %v2249, %v2229
  %v2430 = vpack.c.b16 %v2250, %v2230
  %v2431 = vpack.c.b16 %v2251, %v2231
  %v2432 = vpack.c.b16 %v2252, %v2232
  %v2433 = vpack.c.b16 %v2253, %v2233
  %v2434 = vpack.c.b16 %v2254, %v2234
  %v2435 = vpack.c.b16 %v2255, %v2235
  %v2436 = vpack.c.b16 %v2256, %v2236
  %v2437 = vpack.c.b16 %v2257, %v2237
  %v2438 = vpack.c.b16 %v2278, %v2258
  %v2439 = vpack.c.b16 %v2279, %v2259
  %v2440 = vpack.c.b16 %v2280, %v2260
  %v2441 = vpack.c.b16 %v2281, %v2261
  %v2442 = vpack.c.b16 %v2282, %v2262
  %v2443 = vpack.c.b16 %v2283, %v2263
  %v2444 = vpack.c.b16 %v2284, %v2264
  %v2445 = vpack.c.b16 %v2285, %v2265
  %v2446 = vpack.c.b16 %v2286, %v2266
  %v2447 = vpack.c.b16 %v2287, %v2267
  %v2448 = vpack.c.b16 %v2288, %v2268
  %v2449 = vpack.c.b16 %v2289, %v2269
  %v2450 = vpack.c.b16 %v2290, %v2270
  %v2451 = vpack.c.b16 %v2291, %v2271
  %v2452 = vpack.c.b16 %v2292, %v2272
  %v2453 = vpack.c.b16 %v2293, %v2273
  %v2454 = vpack.c.b16 %v2294, %v2274
  %v2455 = vpack.c.b16 %v2295, %v2275
  %v2456 = vpack.c.b16 %v2296, %v2276
  %v2457 = vpack.c.b16 %v2297, %v2277
  %v3222 = vunpack.c.l.b16 %v1189
  %v3223 = vunpack.c.h.b16 %v1189
  %v3224 = vunpack.c.l.b16 %v1190
  %v3225 = vunpack.c.l.b16 %v1191
  %v3226 = vunpack.c.h.b16 %v1191
  %v3227 = vunpack.c.l.b16 %v1192
  %v3228 = vunpack.c.l.b16 %v1193
  %v3229 = vunpack.c.h.b16 %v1193
  %v3230 = vunpack.c.l.b16 %v1194
  %v3231 = vunpack.c.l.b16 %v1195
  %v3232 = vunpack.c.h.b16 %v1195
  %v3233 = vunpack.c.l.b16 %v1196
  %v3234 = vunpack.c.l.b16 %v1197
  %v3235 = vunpack.c.h.b16 %v1197
  %v3236 = vunpack.c.l.b16 %v1198
  %v3237 = vunpack.c.l.b16 %v1199
  %v3238 = vunpack.c.h.b16 %v1199
  %v3239 = vunpack.c.l.b16 %v1200
  %v3240 = vunpack.c.l.b16 %v1201
  %v3241 = vunpack.c.h.b16 %v1201
  %v3242 = vunpack.c.l.b16 %v1202
  %v3243 = vunpack.c.l.b16 %v1203
  %v3244 = vunpack.c.h.b16 %v1203
  %v3245 = vunpack.c.l.b16 %v1204
  %v3246 = vunpack.c.l.b16 %v1205
  %v3247 = vunpack.c.h.b16 %v1205
  %v3248 = vunpack.c.l.b16 %v1206
  %v3249 = vunpack.c.l.b16 %v1207
  %v3250 = vunpack.c.h.b16 %v1207
  %v3251 = vunpack.c.l.b16 %v1208
  %v3252 = vunpack.c.l.b16 %v1209
  %v3253 = vunpack.c.h.b16 %v1209
  %v3254 = vunpack.c.l.b16 %v1210
  %v3255 = vunpack.c.l.b16 %v1211
  %v3256 = vunpack.c.h.b16 %v1211
  %v3257 = vunpack.c.l.b16 %v1212
  %v3258 = vunpack.c.l.b16 %v1213
  %v3259 = vunpack.c.h.b16 %v1213
  %v3260 = vunpack.c.l.b16 %v1214
  %v3261 = vunpack.c.l.b16 %v1215
  %v3262 = vunpack.c.h.b16 %v1215
  %v3263 = vunpack.c.l.b16 %v1216
  %v3264 = vunpack.c.l.b16 %v1217
  %v3265 = vunpack.c.h.b16 %v1217
  %v3266 = vunpack.c.l.b16 %v1218
  %v3267 = vunpack.c.l.b16 %v1219
  %v3268 = vunpack.c.h.b16 %v1219
  %v3269 = vunpack.c.l.b16 %v1220
  %v3270 = vunpack.c.l.b16 %v1221
  %v3271 = vunpack.c.h.b16 %v1221
  %v3272 = vunpack.c.l.b16 %v1222
  %v3273 = vunpack.c.l.b16 %v1223
  %v3274 = vunpack.c.h.b16 %v1223
  %v3275 = vunpack.c.l.b16 %v1224
  %v3276 = vunpack.c.l.b16 %v1225
  %v3277 = vunpack.c.h.b16 %v1225
  %v3278 = vunpack.c.l.b16 %v1226
  %v3279 = vunpack.c.l.b16 %v1227
  %v3280 = vunpack.c.h.b16 %v1227
  %v3281 = vunpack.c.l.b16 %v1228
  %v3282 = vunpack.c.l.b16 %v1229
  %v3283 = vunpack.c.h.b16 %v1229
  %v3284 = vunpack.c.l.b16 %v1230
  %v3285 = vunpack.c.l.b16 %v1231
  %v3286 = vunpack.c.h.b16 %v1231
  %v3287 = vunpack.c.l.b16 %v1232
  %v3288 = vunpack.c.l.b16 %v1233
  %v3289 = vunpack.c.h.b16 %v1233
  %v3290 = vunpack.c.l.b16 %v1234
  %v3291 = vunpack.c.l.b16 %v1235
  %v3292 = vunpack.c.h.b16 %v1235
  %v3293 = vunpack.c.l.b16 %v1236
  %v3294 = vunpack.c.l.b16 %v1237
  %v3295 = vunpack.c.h.b16 %v1237
  %v3296 = vunpack.c.l.b16 %v1238
  %v3297 = vunpack.c.l.b16 %v1239
  %v3298 = vunpack.c.h.b16 %v1239
  %v3299 = vunpack.c.l.b16 %v1240
  %v3300 = vunpack.c.l.b16 %v1241
  %v3301 = vunpack.c.h.b16 %v1241
  %v3302 = vunpack.c.l.b16 %v1242
  %v3303 = vunpack.c.l.b16 %v1243
  %v3304 = vunpack.c.h.b16 %v1243
  %v3305 = vunpack.c.l.b16 %v1244
  %v3306 = vunpack.c.l.b16 %v1245
  %v3307 = vunpack.c.h.b16 %v1245
  %v3308 = vunpack.c.l.b16 %v1246
  %v3309 = vunpack.c.l.b16 %v1247
  %v3310 = vunpack.c.h.b16 %v1247
  %v3311 = vunpack.c.l.b16 %v1248
  %v3312 = vunpack.c.l.b16 %v1249
  %v3313 = vunpack.c.h.b16 %v1249
  %v3314 = vunpack.c.l.b16 %v1250
  %v3315 = vunpack.c.l.b16 %v1251
  %v3316 = vunpack.c.h.b16 %v1251
  %v3317 = vunpack.c.l.b16 %v1252
  %v3318 = vunpack.c.l.b16 %v1253
  %v3319 = vunpack.c.h.b16 %v1253
  %v3320 = vunpack.c.l.b16 %v1254
  %v3321 = vunpack.c.l.b16 %v1255
  %v3322 = vunpack.c.h.b16 %v1255
  %v3323 = vunpack.c.l.b16 %v1256
  %v3324 = vunpack.c.l.b16 %v1257
  %v3325 = vunpack.c.h.b16 %v1257
  %v3326 = vunpack.c.l.b16 %v1258
  %v3327 = vunpack.c.l.b16 %v1259
  %v3328 = vunpack.c.h.b16 %v1259
  %v3329 = vunpack.c.l.b16 %v1260
  %v3330 = vunpack.c.l.b16 %v1261
  %v3331 = vunpack.c.h.b16 %v1261
  %v3332 = vunpack.c.l.b16 %v1262
  %v3333 = vunpack.c.l.b16 %v1263
  %v3334 = vunpack.c.h.b16 %v1263
  %v3335 = vunpack.c.l.b16 %v1264
  %v3336 = vunpack.c.l.b16 %v1265
  %v3337 = vunpack.c.h.b16 %v1265
  %v3338 = vunpack.c.l.b16 %v1266
  %v3339 = vunpack.c.l.b16 %v1267
  %v3340 = vunpack.c.h.b16 %v1267
  %v3341 = vunpack.c.l.b16 %v1268
  %v3342 = vunpack.c.l.b16 %v1269
  %v3343 = vunpack.c.h.b16 %v1269
  %v3344 = vunpack.c.l.b16 %v1270
  %v3345 = vunpack.c.l.b16 %v1271
  %v3346 = vunpack.c.h.b16 %v1271
  %v3347 = vunpack.c.l.b16 %v1272
  %v3348 = vunpack.c.l.b16 %v1273
  %v3349 = vunpack.c.h.b16 %v1273
  %v3350 = vunpack.c.l.b16 %v1274
  %v3351 = vunpack.c.l.b16 %v1275
  %v3352 = vunpack.c.h.b16 %v1275
  %v3353 = vunpack.c.l.b16 %v1276
  %v3354 = vunpack.c.l.b16 %v1277
  %v3355 = vunpack.c.h.b16 %v1277
  %v3356 = vunpack.c.l.b16 %v1278
  %v3357 = vunpack.c.l.b16 %v1279
  %v3358 = vunpack.c.h.b16 %v1279
  %v3359 = vunpack.c.l.b16 %v1280
  %v3360 = vunpack.c.l.b16 %v1281
  %v3361 = vunpack.c.h.b16 %v1281
  %v3362 = vunpack.c.l.b16 %v1282
  %v3363 = vunpack.c.l.b16 %v1283
  %v3364 = vunpack.c.h.b16 %v1283
  %v3365 = vunpack.c.l.b16 %v1284
  %v3366 = vunpack.c.l.b16 %v1285
  %v3367 = vunpack.c.h.b16 %v1285
  %v3368 = vunpack.c.l.b16 %v1286
  %v3369 = vunpack.c.l.b16 %v1287
  %v3370 = vunpack.c.h.b16 %v1287
  %v3371 = vunpack.c.l.b16 %v1288
  %v3372 = vunpack.c.l.b16 %v1289
  %v3373 = vunpack.c.h.b16 %v1289
  %v3374 = vunpack.c.l.b16 %v1290
  %v3375 = vunpack.c.l.b16 %v1291
  %v3376 = vunpack.c.h.b16 %v1291
  %v3377 = vunpack.c.l.b16 %v1292
  %v3378 = vunpack.c.l.b16 %v1293
  %v3379 = vunpack.c.h.b16 %v1293
  %v3380 = vunpack.c.l.b16 %v1294
  %v3381 = vunpack.c.l.b16 %v1295
  %v3382 = vunpack.c.h.b16 %v1295
  %v3383 = vunpack.c.l.b16 %v1296
  %v3384 = vunpack.c.l.b16 %v1297
  %v3385 = vunpack.c.h.b16 %v1297
  %v3386 = vunpack.c.l.b16 %v1298
  %v3387 = vunpack.c.l.b16 %v1299
  %v3388 = vunpack.c.h.b16 %v1299
  %v3389 = vunpack.c.l.b16 %v1300
  %v3390 = vunpack.c.l.b16 %v1301
  %v3391 = vunpack.c.h.b16 %v1301
  %v3392 = vunpack.c.l.b16 %v1302
  %v3393 = vunpack.c.l.b16 %v1303
  %v3394 = vunpack.c.h.b16 %v1303
  %v3395 = vunpack.c.l.b16 %v1304
  %v3396 = vunpack.c.l.b16 %v1305
  %v3397 = vunpack.c.h.b16 %v1305
  %v3398 = vunpack.c.l.b16 %v1306
  %v3399 = vunpack.c.l.b16 %v1307
  %v3400 = vunpack.c.h.b16 %v1307
  %v3401 = vunpack.c.l.b16 %v1308
  %v3402 = vunpack.c.l.b16 %v1309
  %v3403 = vunpack.c.h.b16 %v1309
  %v3404 = vunpack.c.l.b16 %v1310
  %v3405 = vunpack.c.l.b16 %v1311
  %v3406 = vunpack.c.h.b16 %v1311
  %v3407 = vunpack.c.l.b16 %v1312
  %v3408 = vunpack.c.l.b16 %v1313
  %v3409 = vunpack.c.h.b16 %v1313
  %v3410 = vunpack.c.l.b16 %v1314
  %v3411 = vunpack.c.l.b16 %v1315
  %v3412 = vunpack.c.h.b16 %v1315
  %v3413 = vunpack.c.l.b16 %v1316
  %v3414 = vunpack.c.l.b16 %v1317
  %v3415 = vunpack.c.h.b16 %v1317
  %v3416 = vunpack.c.l.b16 %v1318
  %v3417 = vunpack.c.l.b16 %v1319
  %v3418 = vunpack.c.h.b16 %v1319
  %v3419 = vunpack.c.l.b16 %v1320
  %v3420 = vunpack.c.l.b16 %v1321
  %v3421 = vunpack.c.h.b16 %v1321
  %v3422 = vunpack.c.l.b16 %v1322
  %v3423 = vunpack.c.l.b16 %v1323
  %v3424 = vunpack.c.h.b16 %v1323
  %v3425 = vunpack.c.l.b16 %v1324
  %v3426 = vunpack.c.l.b16 %v1325
  %v3427 = vunpack.c.h.b16 %v1325
  %v3428 = vunpack.c.l.b16 %v1326
  %v3429 = vunpack.c.l.b16 %v1327
  %v3430 = vunpack.c.h.b16 %v1327
  %v3431 = vunpack.c.l.b16 %v1328
  %v3432 = vunpack.c.l.b16 %v1329
  %v3433 = vunpack.c.h.b16 %v1329
  %v3434 = vunpack.c.l.b16 %v1330
  %v3435 = vunpack.c.l.b16 %v1331
  %v3436 = vunpack.c.h.b16 %v1331
  %v3437 = vunpack.c.l.b16 %v1332
  %v3438 = vunpack.c.l.b16 %v1333
  %v3439 = vunpack.c.h.b16 %v1333
  %v3440 = vunpack.c.l.b16 %v1334
  %v3441 = vunpack.c.l.b16 %v1335
  %v3442 = vunpack.c.h.b16 %v1335
  %v3443 = vunpack.c.l.b16 %v1336
  %v3444 = vunpack.c.l.b16 %v1337
  %v3445 = vunpack.c.h.b16 %v1337
  %v3446 = vunpack.c.l.b16 %v1338
  %v3447 = vunpack.c.l.b16 %v1339
  %v3448 = vunpack.c.h.b16 %v1339
  %v3449 = vunpack.c.l.b16 %v1340
  %v3450 = vunpack.c.l.b16 %v1341
  %v3451 = vunpack.c.h.b16 %v1341
  %v3452 = vunpack.c.l.b16 %v1342
  %v3453 = vunpack.c.l.b16 %v1343
  %v3454 = vunpack.c.h.b16 %v1343
  %v3455 = vunpack.c.l.b16 %v1344
  %v3456 = vunpack.c.l.b16 %v1345
  %v3457 = vunpack.c.h.b16 %v1345
  %v3458 = vunpack.c.l.b16 %v1346
  %v3459 = vunpack.c.l.b16 %v1347
  %v3460 = vunpack.c.h.b16 %v1347
  %v3461 = vunpack.c.l.b16 %v1348
  %v3462 = vunpack.c.l.b16 %v1349
  %v3463 = vunpack.c.h.b16 %v1349
  %v3464 = vunpack.c.l.b16 %v1350
  %v3465 = vunpack.c.l.b16 %v1351
  %v3466 = vunpack.c.h.b16 %v1351
  %v3467 = vunpack.c.l.b16 %v1352
  %v3468 = vunpack.c.l.b16 %v1353
  %v3469 = vunpack.c.h.b16 %v1353
  %v3470 = vunpack.c.l.b16 %v1354
  %v3471 = vunpack.c.l.b16 %v1355
  %v3472 = vunpack.c.h.b16 %v1355
  %v3473 = vunpack.c.l.b16 %v1356
  %v3474 = vunpack.c.l.b16 %v1357
  %v3475 = vunpack.c.h.b16 %v1357
  %v3476 = vunpack.c.l.b16 %v1358
  %v3477 = vunpack.c.l.b16 %v1359
  %v3478 = vunpack.c.h.b16 %v1359
  %v3479 = vunpack.c.l.b16 %v1360
  %v3480 = vunpack.c.l.b16 %v1361
  %v3481 = vunpack.c.h.b16 %v1361
  %v3482 = vunpack.c.l.b16 %v1362
  %v3483 = vunpack.c.l.b16 %v1363
  %v3484 = vunpack.c.h.b16 %v1363
  %v3485 = vunpack.c.l.b16 %v1364
  %v3486 = vunpack.c.l.b16 %v1365
  %v3487 = vunpack.c.h.b16 %v1365
  %v3488 = vunpack.c.l.b16 %v1366
  %v3489 = vunpack.c.l.b16 %v1367
  %v3490 = vunpack.c.h.b16 %v1367
  %v3491 = vunpack.c.l.b16 %v1368
  %v3492 = vunpack.c.l.b16 %v1369
  %v3493 = vunpack.c.h.b16 %v1369
  %v3494 = vunpack.c.l.b16 %v1370
  %v3495 = vunpack.c.l.b16 %v1371
  %v3496 = vunpack.c.h.b16 %v1371
  %v3497 = vunpack.c.l.b16 %v1372
  %v3498 = vunpack.c.l.b16 %v1373
  %v3499 = vunpack.c.h.b16 %v1373
  %v3500 = vunpack.c.l.b16 %v1374
  %v3501 = vunpack.c.l.b16 %v1375
  %v3502 = vunpack.c.h.b16 %v1375
  %v3503 = vunpack.c.l.b16 %v1376
  %v3504 = vunpack.c.l.b16 %v1377
  %v3505 = vunpack.c.h.b16 %v1377
  %v3506 = vunpack.c.l.b16 %v1378
  %v3507 = vunpack.c.l.b16 %v1379
  %v3508 = vunpack.c.h.b16 %v1379
  %v3509 = vunpack.c.l.b16 %v1380
  %v3510 = vunpack.c.l.b16 %v1381
  %v3511 = vunpack.c.h.b16 %v1381
  %v3512 = vunpack.c.l.b16 %v1382
  %v3513 = vunpack.c.l.b16 %v1383
  %v3514 = vunpack.c.h.b16 %v1383
  %v3515 = vunpack.c.l.b16 %v1384
  %v3516 = vunpack.c.l.b16 %v1385
  %v3517 = vunpack.c.h.b16 %v1385
  %v3518 = vunpack.c.l.b16 %v1386
  %v3519 = vunpack.c.l.b16 %v1387
  %v3520 = vunpack.c.h.b16 %v1387
  %v3521 = vunpack.c.l.b16 %v1388
  %v3522 = vunpack.c.l.b16 %v1389
  %v3523 = vunpack.c.h.b16 %v1389
  %v3524 = vunpack.c.l.b16 %v1390
  %v3525 = vunpack.c.l.b16 %v1391
  %v3526 = vunpack.c.h.b16 %v1391
  %v3527 = vunpack.c.l.b16 %v1392
  %v3528 = vunpack.c.l.b16 %v1393
  %v3529 = vunpack.c.h.b16 %v1393
  %v3530 = vunpack.c.l.b16 %v1394
  %v3531 = vunpack.c.l.b16 %v1395
  %v3532 = vunpack.c.h.b16 %v1395
  %v3533 = vunpack.c.l.b16 %v1396
  %v3534 = vunpack.c.l.b16 %v1397
  %v3535 = vunpack.c.h.b16 %v1397
  %v3536 = vunpack.c.l.b16 %v1398
  %v3537 = vunpack.c.l.b16 %v1399
  %v3538 = vunpack.c.h.b16 %v1399
  %v3539 = vunpack.c.l.b16 %v1400
  %v3540 = vunpack.c.l.b16 %v1401
  %v3541 = vunpack.c.h.b16 %v1401
  %v3542 = vunpack.c.l.b16 %v1402
  %v3543 = vunpack.c.l.b16 %v1403
  %v3544 = vunpack.c.h.b16 %v1403
  %v3545 = vunpack.c.l.b16 %v1404
  %v3546 = vunpack.c.l.b16 %v1405
  %v3547 = vunpack.c.h.b16 %v1405
  %v3548 = vunpack.c.l.b16 %v1406
  %v3549 = vunpack.c.l.b16 %v1407
  %v3550 = vunpack.c.h.b16 %v1407
  %v3551 = vunpack.c.l.b16 %v1408
  %v3552 = vunpack.c.l.b16 %v1409
  %v3553 = vunpack.c.h.b16 %v1409
  %v3554 = vunpack.c.l.b16 %v1410
  %v3555 = vunpack.c.l.b16 %v1411
  %v3556 = vunpack.c.h.b16 %v1411
  %v3557 = vunpack.c.l.b16 %v1412
  %v3558 = vunpack.c.l.b16 %v1413
  %v3559 = vunpack.c.h.b16 %v1413
  %v3560 = vunpack.c.l.b16 %v1414
  %v3561 = vunpack.c.l.b16 %v1415
  %v3562 = vunpack.c.h.b16 %v1415
  %v3563 = vunpack.c.l.b16 %v1416
  %v3564 = vunpack.c.l.b16 %v1417
  %v3565 = vunpack.c.h.b16 %v1417
  %v3566 = vunpack.c.l.b16 %v1418
  %v3567 = vunpack.c.l.b16 %v1419
  %v3568 = vunpack.c.h.b16 %v1419
  %v3569 = vunpack.c.l.b16 %v1420
  %v3570 = vunpack.c.l.b16 %v1421
  %v3571 = vunpack.c.h.b16 %v1421
  %v3572 = vunpack.c.l.b16 %v1422
  %v3573 = vunpack.c.l.b16 %v1423
  %v3574 = vunpack.c.h.b16 %v1423
  %v3575 = vunpack.c.l.b16 %v1424
  %v3576 = vunpack.c.l.b16 %v1425
  %v3577 = vunpack.c.h.b16 %v1425
  %v3578 = vunpack.c.l.b16 %v1426
  %v3579 = vunpack.c.l.b16 %v1427
  %v3580 = vunpack.c.h.b16 %v1427
  %v3581 = vunpack.c.l.b16 %v1428
  %v3582 = vunpack.c.l.b16 %v1429
  %v3583 = vunpack.c.h.b16 %v1429
  %v3584 = vunpack.c.l.b16 %v1430
  %v3585 = vunpack.c.l.b16 %v1431
  %v3586 = vunpack.c.h.b16 %v1431
  %v3587 = vunpack.c.l.b16 %v1432
  %v3588 = vunpack.c.l.b16 %v1433
  %v3589 = vunpack.c.h.b16 %v1433
  %v3590 = vunpack.c.l.b16 %v1434
  %v3591 = vunpack.c.l.b16 %v1435
  %v3592 = vunpack.c.h.b16 %v1435
  %v3593 = vunpack.c.l.b16 %v1436
  %v3594 = vunpack.c.l.b16 %v1437
  %v3595 = vunpack.c.h.b16 %v1437
  %v3596 = vunpack.c.l.b16 %v1438
  %v3597 = vunpack.c.l.b16 %v1439
  %v3598 = vunpack.c.h.b16 %v1439
  %v3599 = vunpack.c.l.b16 %v1440
  %v3600 = vunpack.c.l.b16 %v1441
  %v3601 = vunpack.c.h.b16 %v1441
  %v3602 = vunpack.c.l.b16 %v1442
  %v3603 = vunpack.c.l.b16 %v1443
  %v3604 = vunpack.c.h.b16 %v1443
  %v3605 = vunpack.c.l.b16 %v1444
  %v3606 = vunpack.c.l.b16 %v1445
  %v3607 = vunpack.c.h.b16 %v1445
  %v3608 = vunpack.c.l.b16 %v1446
  %v3609 = vunpack.c.l.b16 %v1447
  %v3610 = vunpack.c.h.b16 %v1447
  %v3611 = vunpack.c.l.b16 %v1448
  %v3612 = vunpack.c.l.b16 %v1449
  %v3613 = vunpack.c.h.b16 %v1449
  %v3614 = vunpack.c.l.b16 %v1450
  %v3615 = vunpack.c.l.b16 %v1451
  %v3616 = vunpack.c.h.b16 %v1451
  %v3617 = vunpack.c.l.b16 %v1452
  %v3618 = vunpack.c.l.b16 %v1453
  %v3619 = vunpack.c.h.b16 %v1453
  %v3620 = vunpack.c.l.b16 %v1454
  %v3621 = vunpack.c.l.b16 %v1455
  %v3622 = vunpack.c.h.b16 %v1455
  %v3623 = vunpack.c.l.b16 %v1456
  %v3624 = vunpack.c.l.b16 %v1457
  %v3625 = vunpack.c.h.b16 %v1457
  %v3626 = vunpack.c.l.b16 %v1458
  %v3627 = vunpack.c.l.b16 %v1459
  %v3628 = vunpack.c.h.b16 %v1459
  %v3629 = vunpack.c.l.b16 %v1460
  %v3630 = vunpack.c.l.b16 %v1461
  %v3631 = vunpack.c.h.b16 %v1461
  %v3632 = vunpack.c.l.b16 %v1462
  %v3633 = vunpack.c.l.b16 %v1463
  %v3634 = vunpack.c.h.b16 %v1463
  %v3635 = vunpack.c.l.b16 %v1464
  %v3636 = vunpack.c.l.b16 %v1465
  %v3637 = vunpack.c.h.b16 %v1465
  %v3638 = vunpack.c.l.b16 %v1466
  %v3639 = vunpack.c.l.b16 %v1467
  %v3640 = vunpack.c.h.b16 %v1467
  %v3641 = vunpack.c.l.b16 %v1468
  %v3642 = vunpack.c.l.b16 %v1469
  %v3643 = vunpack.c.h.b16 %v1469
  %v3644 = vunpack.c.l.b16 %v1470
  %v3645 = vunpack.c.l.b16 %v1471
  %v3646 = vunpack.c.h.b16 %v1471
  %v3647 = vunpack.c.l.b16 %v1472
  %v3648 = vunpack.c.l.b16 %v1473
  %v3649 = vunpack.c.h.b16 %v1473
  %v3650 = vunpack.c.l.b16 %v1474
  %v3651 = vunpack.c.l.b16 %v1475
  %v3652 = vunpack.c.h.b16 %v1475
  %v3653 = vunpack.c.l.b16 %v1476
  %v3654 = vunpack.c.l.b16 %v1477
  %v3655 = vunpack.c.h.b16 %v1477
  %v3656 = vunpack.c.l.b16 %v1478
  %v3657 = vunpack.c.l.b16 %v1479
  %v3658 = vunpack.c.h.b16 %v1479
  %v3659 = vunpack.c.l.b16 %v1480
  %v3660 = vunpack.c.l.b16 %v1481
  %v3661 = vunpack.c.h.b16 %v1481
  %v3662 = vunpack.c.l.b16 %v1482
  %v3663 = vunpack.c.l.b16 %v1483
  %v3664 = vunpack.c.h.b16 %v1483
  %v3665 = vunpack.c.l.b16 %v1484
  %v3666 = vunpack.c.l.b16 %v1485
  %v3667 = vunpack.c.h.b16 %v1485
  %v3668 = vunpack.c.l.b16 %v1486
  %v3669 = vunpack.c.l.b16 %v1487
  %v3670 = vunpack.c.h.b16 %v1487
  %v3671 = vunpack.c.l.b16 %v1488
  %v3672 = vunpack.c.l.b16 %v1489
  %v3673 = vunpack.c.h.b16 %v1489
  %v3674 = vunpack.c.l.b16 %v1490
  %v3675 = vunpack.c.l.b16 %v1491
  %v3676 = vunpack.c.h.b16 %v1491
  %v3677 = vunpack.c.l.b16 %v1492
  %v3678 = vunpack.c.l.b16 %v1493
  %v3679 = vunpack.c.h.b16 %v1493
  %v3680 = vunpack.c.l.b16 %v1494
  %v3681 = vunpack.c.l.b16 %v1495
  %v3682 = vunpack.c.h.b16 %v1495
  %v3683 = vunpack.c.l.b16 %v1496
  %v3684 = vunpack.c.l.b16 %v1497
  %v3685 = vunpack.c.h.b16 %v1497
  %v3686 = vunpack.c.l.b16 %v1498
  %v3687 = vunpack.c.l.b16 %v1499
  %v3688 = vunpack.c.h.b16 %v1499
  %v3689 = vunpack.c.l.b16 %v1500
  %v3690 = vunpack.c.l.b16 %v1501
  %v3691 = vunpack.c.h.b16 %v1501
  %v3692 = vunpack.c.l.b16 %v1502
  %v3693 = vunpack.c.l.b16 %v1503
  %v3694 = vunpack.c.h.b16 %v1503
  %v3695 = vunpack.c.l.b16 %v1504
  %v3696 = vunpack.c.l.b16 %v1505
  %v3697 = vunpack.c.h.b16 %v1505
  %v3698 = vunpack.c.l.b16 %v1506
  %v3699 = vunpack.c.l.b16 %v1507
  %v3700 = vunpack.c.h.b16 %v1507
  %v3701 = vunpack.c.l.b16 %v1508
  %v3702 = vunpack.c.l.b16 %v1509
  %v3703 = vunpack.c.h.b16 %v1509
  %v3704 = vunpack.c.l.b16 %v1510
  %v3705 = vunpack.c.l.b16 %v1511
  %v3706 = vunpack.c.h.b16 %v1511
  %v3707 = vunpack.c.l.b16 %v1512
  %v3708 = vunpack.c.l.b16 %v1513
  %v3709 = vunpack.c.h.b16 %v1513
  %v3710 = vunpack.c.l.b16 %v1514
  %v3711 = vunpack.c.l.b16 %v1515
  %v3712 = vunpack.c.h.b16 %v1515
  %v3713 = vunpack.c.l.b16 %v1516
  %v3714 = vunpack.c.l.b16 %v1517
  %v3715 = vunpack.c.h.b16 %v1517
  %v3716 = vunpack.c.l.b16 %v1518
  %v3717 = vunpack.c.l.b16 %v1519
  %v3718 = vunpack.c.h.b16 %v1519
  %v3719 = vunpack.c.l.b16 %v1520
  %v3720 = vunpack.c.l.b16 %v1521
  %v3721 = vunpack.c.h.b16 %v1521
  %v3722 = vunpack.c.l.b16 %v1522
  %v3723 = vunpack.c.l.b16 %v1523
  %v3724 = vunpack.c.h.b16 %v1523
  %v3725 = vunpack.c.l.b16 %v1524
  %v3726 = vunpack.c.l.b16 %v1525
  %v3727 = vunpack.c.h.b16 %v1525
  %v3728 = vunpack.c.l.b16 %v1526
  %v3729 = vunpack.c.l.b16 %v1527
  %v3730 = vunpack.c.h.b16 %v1527
  %v3731 = vunpack.c.l.b16 %v1528
  %v3732 = vunpack.c.l.b16 %v1529
  %v3733 = vunpack.c.h.b16 %v1529
  %v3734 = vunpack.c.l.b16 %v1530
  %v3735 = vunpack.c.l.b16 %v1531
  %v3736 = vunpack.c.h.b16 %v1531
  %v3737 = vunpack.c.l.b16 %v1532
  %v3738 = vunpack.c.l.b16 %v1533
  %v3739 = vunpack.c.h.b16 %v1533
  %v3740 = vunpack.c.l.b16 %v1534
  %v3741 = vunpack.c.l.b16 %v1535
  %v3742 = vunpack.c.h.b16 %v1535
  %v3743 = vunpack.c.l.b16 %v1536
  %v3744 = vunpack.c.l.b16 %v1537
  %v3745 = vunpack.c.h.b16 %v1537
  %v3746 = vunpack.c.l.b16 %v1538
  %v3747 = vunpack.c.l.b16 %v1539
  %v3748 = vunpack.c.h.b16 %v1539
  %v3749 = vunpack.c.l.b16 %v1540
  %v3750 = vunpack.c.l.b16 %v1541
  %v3751 = vunpack.c.h.b16 %v1541
  %v3752 = vunpack.c.l.b16 %v1542
  %v3753 = vunpack.c.l.b16 %v1543
  %v3754 = vunpack.c.h.b16 %v1543
  %v3755 = vunpack.c.l.b16 %v1544
  %v3756 = vunpack.c.l.b16 %v1545
  %v3757 = vunpack.c.h.b16 %v1545
  %v3758 = vunpack.c.l.b16 %v1546
  %v3759 = vunpack.c.l.b16 %v1547
  %v3760 = vunpack.c.h.b16 %v1547
  %v3761 = vunpack.c.l.b16 %v1548
  %v3762 = vunpack.c.l.b16 %v1549
  %v3763 = vunpack.c.h.b16 %v1549
  %v3764 = vunpack.c.l.b16 %v1550
  %v3765 = vunpack.c.l.b16 %v1551
  %v3766 = vunpack.c.h.b16 %v1551
  %v3767 = vunpack.c.l.b16 %v1552
  %v3768 = vunpack.c.l.b16 %v1553
  %v3769 = vunpack.c.h.b16 %v1553
  %v3770 = vunpack.c.l.b16 %v1554
  %v3771 = vunpack.c.l.b16 %v1555
  %v3772 = vunpack.c.h.b16 %v1555
  %v3773 = vunpack.c.l.b16 %v1556
  %v3774 = vunpack.c.l.b16 %v1557
  %v3775 = vunpack.c.h.b16 %v1557
  %v3776 = vunpack.c.l.b16 %v1558
  %v3777 = vunpack.c.l.b16 %v1559
  %v3778 = vunpack.c.h.b16 %v1559
  %v3779 = vunpack.c.l.b16 %v1560
  %v3780 = vunpack.c.l.b16 %v1561
  %v3781 = vunpack.c.h.b16 %v1561
  %v3782 = vunpack.c.l.b16 %v1562
  %v3783 = vunpack.c.l.b16 %v1563
  %v3784 = vunpack.c.h.b16 %v1563
  %v3785 = vunpack.c.l.b16 %v1564
  %v3786 = vunpack.c.l.b16 %v1565
  %v3787 = vunpack.c.h.b16 %v1565
  %v3788 = vunpack.c.l.b16 %v1566
  %v3789 = vunpack.c.l.b16 %v1567
  %v3790 = vunpack.c.h.b16 %v1567
  %v3791 = vunpack.c.l.b16 %v1568
  %v3792 = vunpack.c.l.b16 %v1569
  %v3793 = vunpack.c.h.b16 %v1569
  %v3794 = vunpack.c.l.b16 %v1570
  %v3795 = vunpack.c.l.b16 %v1571
  %v3796 = vunpack.c.h.b16 %v1571
  %v3797 = vunpack.c.l.b16 %v1572
  %v3798 = vunpack.c.l.b16 %v1573
  %v3799 = vunpack.c.h.b16 %v1573
  %v3800 = vunpack.c.l.b16 %v1574
  %v3801 = vunpack.c.l.b16 %v1575
  %v3802 = vunpack.c.h.b16 %v1575
  %v3803 = vunpack.c.l.b16 %v1576
  %v3804 = vunpack.c.l.b16 %v1577
  %v3805 = vunpack.c.h.b16 %v1577
  %v3806 = vunpack.c.l.b16 %v1578
  %v3807 = vunpack.c.l.b16 %v1579
  %v3808 = vunpack.c.h.b16 %v1579
  %v3809 = vunpack.c.l.b16 %v1580
  %v3810 = vunpack.c.l.b16 %v1581
  %v3811 = vunpack.c.h.b16 %v1581
  %v3812 = vunpack.c.l.b16 %v1582
  %v3813 = vunpack.c.l.b16 %v1583
  %v3814 = vunpack.c.h.b16 %v1583
  %v3815 = vunpack.c.l.b16 %v1584
  %v3816 = vunpack.c.l.b16 %v1585
  %v3817 = vunpack.c.h.b16 %v1585
  %v3818 = vunpack.c.l.b16 %v1586
  %v3819 = vunpack.c.l.b16 %v1587
  %v3820 = vunpack.c.h.b16 %v1587
  %v3821 = vunpack.c.l.b16 %v1588
  %v3822 = vunpack.c.l.b16 %v1589
  %v3823 = vunpack.c.h.b16 %v1589
  %v3824 = vunpack.c.l.b16 %v1590
  %v3825 = vunpack.c.l.b16 %v1591
  %v3826 = vunpack.c.h.b16 %v1591
  %v3827 = vunpack.c.l.b16 %v1592
  %v3828 = vunpack.c.l.b16 %v1593
  %v3829 = vunpack.c.h.b16 %v1593
  %v3830 = vunpack.c.l.b16 %v1594
  %v3831 = vunpack.c.l.b16 %v1595
  %v3832 = vunpack.c.h.b16 %v1595
  %v3833 = vunpack.c.l.b16 %v1596
  %v3834 = vunpack.c.l.b16 %v1597
  %v3835 = vunpack.c.h.b16 %v1597
  %v3836 = vunpack.c.l.b16 %v1598
  %v3837 = vunpack.c.l.b16 %v1599
  %v3838 = vunpack.c.h.b16 %v1599
  %v3839 = vunpack.c.l.b16 %v1600
  %v3840 = vunpack.c.l.b16 %v1601
  %v3841 = vunpack.c.h.b16 %v1601
  %v3842 = vunpack.c.l.b16 %v1602
  %v3843 = vunpack.c.l.b16 %v1603
  %v3844 = vunpack.c.h.b16 %v1603
  %v3845 = vunpack.c.l.b16 %v1604
  %v3846 = vunpack.c.l.b16 %v1605
  %v3847 = vunpack.c.h.b16 %v1605
  %v3848 = vunpack.c.l.b16 %v1606
  %v3849 = vunpack.c.l.b16 %v1607
  %v3850 = vunpack.c.h.b16 %v1607
  %v3851 = vunpack.c.l.b16 %v1608
  %v3852 = vunpack.c.l.b16 %v1609
  %v3853 = vunpack.c.h.b16 %v1609
  %v3854 = vunpack.c.l.b16 %v1610
  %v3855 = vunpack.c.l.b16 %v1611
  %v3856 = vunpack.c.h.b16 %v1611
  %v3857 = vunpack.c.l.b16 %v1612
  %v3858 = vunpack.c.l.b16 %v1613
  %v3859 = vunpack.c.h.b16 %v1613
  %v3860 = vunpack.c.l.b16 %v1614
  %v3861 = vunpack.c.l.b16 %v1615
  %v3862 = vunpack.c.h.b16 %v1615
  %v3863 = vunpack.c.l.b16 %v1616
  %v3864 = vunpack.c.l.b16 %v1617
  %v3865 = vunpack.c.h.b16 %v1617
  %v3866 = vunpack.c.l.b16 %v1618
  %v3867 = vunpack.c.l.b16 %v1619
  %v3868 = vunpack.c.h.b16 %v1619
  %v3869 = vunpack.c.l.b16 %v1620
  %v3870 = vunpack.c.l.b16 %v1621
  %v3871 = vunpack.c.h.b16 %v1621
  %v3872 = vunpack.c.l.b16 %v1622
  %v3873 = vunpack.c.l.b16 %v1623
  %v3874 = vunpack.c.h.b16 %v1623
  %v3875 = vunpack.c.l.b16 %v1624
  %v3876 = vunpack.c.l.b16 %v1625
  %v3877 = vunpack.c.h.b16 %v1625
  %v3878 = vunpack.c.l.b16 %v1626
  %v3879 = vunpack.c.l.b16 %v1627
  %v3880 = vunpack.c.h.b16 %v1627
  %v3881 = vunpack.c.l.b16 %v1628
  %v3882 = vunpack.c.l.b16 %v1629
  %v3883 = vunpack.c.h.b16 %v1629
  %v3884 = vunpack.c.l.b16 %v1630
  %v3885 = vunpack.c.l.b16 %v1631
  %v3886 = vunpack.c.h.b16 %v1631
  %v3887 = vunpack.c.l.b16 %v1632
  %v3888 = vunpack.c.l.b16 %v1633
  %v3889 = vunpack.c.h.b16 %v1633
  %v3890 = vunpack.c.l.b16 %v1634
  %v3891 = vunpack.c.l.b16 %v1635
  %v3892 = vunpack.c.h.b16 %v1635
  %v3893 = vunpack.c.l.b16 %v1636
  %v3894 = vunpack.c.l.b16 %v1637
  %v3895 = vunpack.c.h.b16 %v1637
  %v3896 = vunpack.c.l.b16 %v1638
  %v3897 = vunpack.c.l.b16 %v1639
  %v3898 = vunpack.c.h.b16 %v1639
  %v3899 = vunpack.c.l.b16 %v1640
  %v3900 = vunpack.c.l.b16 %v1641
  %v3901 = vunpack.c.h.b16 %v1641
  %v3902 = vunpack.c.l.b16 %v1642
  %v3903 = vunpack.c.l.b16 %v1643
  %v3904 = vunpack.c.h.b16 %v1643
  %v3905 = vunpack.c.l.b16 %v1644
  %v3906 = vunpack.c.l.b16 %v1645
  %v3907 = vunpack.c.h.b16 %v1645
  %v3908 = vunpack.c.l.b16 %v1646
  %v3909 = vunpack.c.l.b16 %v1647
  %v3910 = vunpack.c.h.b16 %v1647
  %v3911 = vunpack.c.l.b16 %v1648
  %v3912 = vunpack.c.l.b16 %v1649
  %v3913 = vunpack.c.h.b16 %v1649
  %v3914 = vunpack.c.l.b16 %v1650
  %v3915 = vunpack.c.l.b16 %v1651
  %v3916 = vunpack.c.h.b16 %v1651
  %v3917 = vunpack.c.l.b16 %v1652
  %v3918 = vunpack.c.l.b16 %v1653
  %v3919 = vunpack.c.h.b16 %v1653
  %v3920 = vunpack.c.l.b16 %v1654
  %v3921 = vunpack.c.l.b16 %v1655
  %v3922 = vunpack.c.h.b16 %v1655
  %v3923 = vunpack.c.l.b16 %v1656
  %v3924 = vunpack.c.l.b16 %v1657
  %v3925 = vunpack.c.h.b16 %v1657
  %v3926 = vunpack.c.l.b16 %v1658
  %v3927 = vunpack.c.l.b16 %v1659
  %v3928 = vunpack.c.h.b16 %v1659
  %v3929 = vunpack.c.l.b16 %v1660
  %v3930 = vunpack.c.l.b16 %v1661
  %v3931 = vunpack.c.h.b16 %v1661
  %v3932 = vunpack.c.l.b16 %v1662
  %v3933 = vunpack.c.l.b16 %v1663
  %v3934 = vunpack.c.h.b16 %v1663
  %v3935 = vunpack.c.l.b16 %v1664
  %v3936 = vunpack.c.l.b16 %v1665
  %v3937 = vunpack.c.h.b16 %v1665
  %v3938 = vunpack.c.l.b16 %v1666
  %v3939 = vunpack.c.l.b16 %v1667
  %v3940 = vunpack.c.h.b16 %v1667
  %v3941 = vunpack.c.l.b16 %v1668
  %v3942 = vunpack.c.l.b16 %v1669
  %v3943 = vunpack.c.h.b16 %v1669
  %v3944 = vunpack.c.l.b16 %v1670
  %v3945 = vunpack.c.l.b16 %v1671
  %v3946 = vunpack.c.h.b16 %v1671
  %v3947 = vunpack.c.l.b16 %v1672
  %v3948 = vunpack.c.l.b16 %v1673
  %v3949 = vunpack.c.h.b16 %v1673
  %v3950 = vunpack.c.l.b16 %v1674
  %v3951 = vunpack.c.l.b16 %v1675
  %v3952 = vunpack.c.h.b16 %v1675
  %v3953 = vunpack.c.l.b16 %v1676
  %v3954 = vunpack.c.l.b16 %v1677
  %v3955 = vunpack.c.h.b16 %v1677
  %v3956 = vunpack.c.l.b16 %v1678
  %v3957 = vunpack.c.l.b16 %v1679
  %v3958 = vunpack.c.h.b16 %v1679
  %v3959 = vunpack.c.l.b16 %v1680
  %v3960 = vunpack.c.l.b16 %v1681
  %v3961 = vunpack.c.h.b16 %v1681
  %v3962 = vunpack.c.l.b16 %v1682
  %v3963 = vunpack.c.l.b16 %v1683
  %v3964 = vunpack.c.h.b16 %v1683
  %v3965 = vunpack.c.l.b16 %v1684
  %v3966 = vunpack.c.l.b16 %v1685
  %v3967 = vunpack.c.h.b16 %v1685
  %v3968 = vunpack.c.l.b16 %v1686
  %v3969 = vunpack.c.l.b16 %v1687
  %v3970 = vunpack.c.h.b16 %v1687
  %v3971 = vunpack.c.l.b16 %v1688
  %v3972 = vunpack.c.l.b16 %v1689
  %v3973 = vunpack.c.h.b16 %v1689
  %v3974 = vunpack.c.l.b16 %v1690
  %v3975 = vunpack.c.l.b16 %v1691
  %v3976 = vunpack.c.h.b16 %v1691
  %v3977 = vunpack.c.l.b16 %v1692
  %v3978 = vunpack.c.l.b16 %v1693
  %v3979 = vunpack.c.h.b16 %v1693
  %v3980 = vunpack.c.l.b16 %v1694
  %v3981 = vunpack.c.l.b16 %v1695
  %v3982 = vunpack.c.h.b16 %v1695
  %v3983 = vunpack.c.l.b16 %v1696
  %v3984 = vunpack.c.l.b16 %v1697
  %v3985 = vunpack.c.h.b16 %v1697
  %v3986 = vunpack.c.l.b16 %v1698
  %v3987 = vunpack.c.l.b16 %v1699
  %v3988 = vunpack.c.h.b16 %v1699
  %v3989 = vunpack.c.l.b16 %v1700
  %v3990 = vunpack.c.l.b16 %v1701
  %v3991 = vunpack.c.h.b16 %v1701
  %v3992 = vunpack.c.l.b16 %v1702
  %v3993 = vunpack.c.l.b16 %v1703
  %v3994 = vunpack.c.h.b16 %v1703
  %v3995 = vunpack.c.l.b16 %v1704
  %v3996 = vunpack.c.l.b16 %v1705
  %v3997 = vunpack.c.h.b16 %v1705
  %v3998 = vunpack.c.l.b16 %v1706
  %v3999 = vunpack.c.l.b16 %v1707
  %v4000 = vunpack.c.h.b16 %v1707
  %v4001 = vunpack.c.l.b16 %v1708
  %v4002 = vunpack.c.l.b16 %v1709
  %v4003 = vunpack.c.h.b16 %v1709
  %v4004 = vunpack.c.l.b16 %v1710
  %v4005 = vunpack.c.l.b16 %v1711
  %v4006 = vunpack.c.h.b16 %v1711
  %v4007 = vunpack.c.l.b16 %v1712
  %v4008 = vunpack.c.l.b16 %v1713
  %v4009 = vunpack.c.h.b16 %v1713
  %v4010 = vunpack.c.l.b16 %v1714
  %v4011 = vunpack.c.l.b16 %v1715
  %v4012 = vunpack.c.h.b16 %v1715
  %v4013 = vunpack.c.l.b16 %v1716
  %v4014 = vunpack.c.l.b16 %v1717
  %v4015 = vunpack.c.h.b16 %v1717
  %v4016 = vunpack.c.l.b16 %v1718
  %v4017 = vunpack.c.l.b16 %v1719
  %v4018 = vunpack.c.h.b16 %v1719
  %v4019 = vunpack.c.l.b16 %v1720
  %v4020 = vunpack.c.l.b16 %v1721
  %v4021 = vunpack.c.h.b16 %v1721
  %v4022 = vunpack.c.l.b16 %v1722
  %v4023 = vunpack.c.l.b16 %v1723
  %v4024 = vunpack.c.h.b16 %v1723
  %v4025 = vunpack.c.l.b16 %v1724
  %v4026 = vunpack.c.l.b16 %v1725
  %v4027 = vunpack.c.h.b16 %v1725
  %v4028 = vunpack.c.l.b16 %v1726
  %v4029 = vunpack.c.l.b16 %v1727
  %v4030 = vunpack.c.h.b16 %v1727
  %v4031 = vunpack.c.l.b16 %v1728
  %v4032 = vunpack.c.l.b16 %v1729
  %v4033 = vunpack.c.h.b16 %v1729
  %v4034 = vunpack.c.l.b16 %v1730
  %v4035 = vunpack.c.l.b16 %v1731
  %v4036 = vunpack.c.h.b16 %v1731
  %v4037 = vunpack.c.l.b16 %v1732
  %v4038 = vunpack.c.l.b16 %v1733
  %v4039 = vunpack.c.h.b16 %v1733
  %v4040 = vunpack.c.l.b16 %v1734
  %v4041 = vunpack.c.l.b16 %v1735
  %v4042 = vunpack.c.h.b16 %v1735
  %v4043 = vunpack.c.l.b16 %v1736
  %v4044 = vunpack.c.l.b16 %v1737
  %v4045 = vunpack.c.h.b16 %v1737
  %v4046 = vunpack.c.l.b16 %v1738
  %v4047 = vunpack.c.l.b16 %v1739
  %v4048 = vunpack.c.h.b16 %v1739
  %v4049 = vunpack.c.l.b16 %v1740
  %v4050 = vunpack.c.l.b16 %v1741
  %v4051 = vunpack.c.h.b16 %v1741
  %v4052 = vunpack.c.l.b16 %v1742
  %v4053 = vunpack.c.l.b16 %v1743
  %v4054 = vunpack.c.h.b16 %v1743
  %v4055 = vunpack.c.l.b16 %v1744
  %v4056 = vunpack.c.l.b16 %v1745
  %v4057 = vunpack.c.h.b16 %v1745
  %v4058 = vunpack.c.l.b16 %v1746
  %v4059 = vunpack.c.l.b16 %v1747
  %v4060 = vunpack.c.h.b16 %v1747
  %v4061 = vunpack.c.l.b16 %v1748
  %v4062 = vunpack.c.l.b16 %v1749
  %v4063 = vunpack.c.h.b16 %v1749
  %v4064 = vunpack.c.l.b16 %v1750
  %v4065 = vunpack.c.l.b16 %v1751
  %v4066 = vunpack.c.h.b16 %v1751
  %v4067 = vunpack.c.l.b16 %v1752
  %v4068 = vunpack.c.l.b16 %v1753
  %v4069 = vunpack.c.h.b16 %v1753
  %v4070 = vunpack.c.l.b16 %v1754
  %v4071 = vunpack.c.l.b16 %v1755
  %v4072 = vunpack.c.h.b16 %v1755
  %v4073 = vunpack.c.l.b16 %v1756
  %v4074 = vunpack.c.l.b16 %v1757
  %v4075 = vunpack.c.h.b16 %v1757
  %v4076 = vunpack.c.l.b16 %v1758
  %v4077 = vunpack.c.l.b16 %v1759
  %v4078 = vunpack.c.h.b16 %v1759
  %v4079 = vunpack.c.l.b16 %v1760
  %v4080 = vunpack.c.l.b16 %v1761
  %v4081 = vunpack.c.h.b16 %v1761
  %v4082 = vunpack.c.l.b16 %v1762
  %v4083 = vunpack.c.l.b16 %v1763
  %v4084 = vunpack.c.h.b16 %v1763
  %v4085 = vunpack.c.l.b16 %v1764
  %v4086 = vunpack.c.l.b16 %v1765
  %v4087 = vunpack.c.h.b16 %v1765
  %v4088 = vunpack.c.l.b16 %v1766
  %v4089 = vunpack.c.l.b16 %v1767
  %v4090 = vunpack.c.h.b16 %v1767
  %v4091 = vunpack.c.l.b16 %v1768
  %v4092 = vunpack.c.l.b16 %v1769
  %v4093 = vunpack.c.h.b16 %v1769
  %v4094 = vunpack.c.l.b16 %v1770
  %v4095 = vunpack.c.l.b16 %v1771
  %v4096 = vunpack.c.h.b16 %v1771
  %v4097 = vunpack.c.l.b16 %v1772
  %v4098 = vunpack.c.l.b16 %v1773
  %v4099 = vunpack.c.h.b16 %v1773
  %v4100 = vunpack.c.l.b16 %v1774
  %v4101 = vunpack.c.l.b16 %v1775
  %v4102 = vunpack.c.h.b16 %v1775
  %v4103 = vunpack.c.l.b16 %v1776
  %v4104 = vunpack.c.l.b16 %v1777
  %v4105 = vunpack.c.h.b16 %v1777
  %v4106 = vunpack.c.l.b16 %v1778
  %v4107 = vunpack.c.l.b16 %v1779
  %v4108 = vunpack.c.h.b16 %v1779
  %v4109 = vunpack.c.l.b16 %v1780
  %v4110 = vunpack.c.l.b16 %v1781
  %v4111 = vunpack.c.h.b16 %v1781
  %v4112 = vunpack.c.l.b16 %v1782
  %v4113 = vunpack.c.l.b16 %v1783
  %v4114 = vunpack.c.h.b16 %v1783
  %v4115 = vunpack.c.l.b16 %v1784
  %v4116 = vunpack.c.l.b16 %v1785
  %v4117 = vunpack.c.h.b16 %v1785
  %v4118 = vunpack.c.l.b16 %v1786
  %v4119 = vunpack.c.l.b16 %v1787
  %v4120 = vunpack.c.h.b16 %v1787
  %v4121 = vunpack.c.l.b16 %v1788
  %v4122 = vunpack.c.l.b16 %v1789
  %v4123 = vunpack.c.h.b16 %v1789
  %v4124 = vunpack.c.l.b16 %v1790
  %v4125 = vunpack.c.l.b16 %v1791
  %v4126 = vunpack.c.h.b16 %v1791
  %v4127 = vunpack.c.l.b16 %v1792
  %v4128 = vunpack.c.l.b16 %v1793
  %v4129 = vunpack.c.h.b16 %v1793
  %v4130 = vunpack.c.l.b16 %v1794
  %v4131 = vunpack.c.l.b16 %v1795
  %v4132 = vunpack.c.h.b16 %v1795
  %v4133 = vunpack.c.l.b16 %v1796
  %v4134 = vunpack.c.l.b16 %v1797
  %v4135 = vunpack.c.h.b16 %v1797
  %v4136 = vunpack.c.l.b16 %v1798
  %v4137 = vunpack.c.l.b16 %v1799
  %v4138 = vunpack.c.h.b16 %v1799
  %v4139 = vunpack.c.l.b16 %v1800
  %v4140 = vpack.c.b16 %v3225, %v3222
  %v4141 = vpack.c.b16 %v3226, %v3223
  %v4142 = vpack.c.b16 %v3227, %v3224
  %v4143 = vpack.c.b16 %v3231, %v3228
  %v4144 = vpack.c.b16 %v3232, %v3229
  %v4145 = vpack.c.b16 %v3233, %v3230
  %v4146 = vpack.c.b16 %v3237, %v3234
  %v4147 = vpack.c.b16 %v3238, %v3235
  %v4148 = vpack.c.b16 %v3239, %v3236
  %v4149 = vpack.c.b16 %v3243, %v3240
  %v4150 = vpack.c.b16 %v3244, %v3241
  %v4151 = vpack.c.b16 %v3245, %v3242
  %v4152 = vpack.c.b16 %v3249, %v3246
  %v4153 = vpack.c.b16 %v3250, %v3247
  %v4154 = vpack.c.b16 %v3251, %v3248
  %v4155 = vpack.c.b16 %v3255, %v3252
  %v4156 = vpack.c.b16 %v3256, %v3253
  %v4157 = vpack.c.b16 %v3257, %v3254
  %v4158 = vpack.c.b16 %v3261, %v3258
  %v4159 = vpack.c.b16 %v3262, %v3259
  %v4160 = vpack.c.b16 %v3263, %v3260
  %v4161 = vpack.c.b16 %v3267, %v3264
  %v4162 = vpack.c.b16 %v3268, %v3265
  %v4163 = vpack.c.b16 %v3269, %v3266
  %v4164 = vpack.c.b16 %v3273, %v3270
  %v4165 = vpack.c.b16 %v3274, %v3271
  %v4166 = vpack.c.b16 %v3275, %v3272
  %v4167 = vpack.c.b16 %v3279, %v3276
  %v4168 = vpack.c.b16 %v3280, %v3277
  %v4169 = vpack.c.b16 %v3281, %v3278
  %v4170 = vpack.c.b16 %v3285, %v3282
  %v4171 = vpack.c.b16 %v3286, %v3283
  %v4172 = vpack.c.b16 %v3287, %v3284
  %v4173 = vpack.c.b16 %v3291, %v3288
  %v4174 = vpack.c.b16 %v3292, %v3289
  %v4175 = vpack.c.b16 %v3293, %v3290
  %v4176 = vpack.c.b16 %v3297, %v3294
  %v4177 = vpack.c.b16 %v3298, %v3295
  %v4178 = vpack.c.b16 %v3299, %v3296
  %v4179 = vpack.c.b16 %v3303, %v3300
  %v4180 = vpack.c.b16 %v3304, %v3301
  %v4181 = vpack.c.b16 %v3305, %v3302
  %v4182 = vpack.c.b16 %v3309, %v3306
  %v4183 = vpack.c.b16 %v3310, %v3307
  %v4184 = vpack.c.b16 %v3311, %v3308
  %v4185 = vpack.c.b16 %v3315, %v3312
  %v4186 = vpack.c.b16 %v3316, %v3313
  %v4187 = vpack.c.b16 %v3317, %v3314
  %v4188 = vpack.c.b16 %v3321, %v3318
  %v4189 = vpack.c.b16 %v3322, %v3319
  %v4190 = vpack.c.b16 %v3323, %v3320
  %v4191 = vpack.c.b16 %v3327, %v3324
  %v4192 = vpack.c.b16 %v3328, %v3325
  %v4193 = vpack.c.b16 %v3329, %v3326
  %v4194 = vpack.c.b16 %v3333, %v3330
  %v4195 = vpack.c.b16 %v3334, %v3331
  %v4196 = vpack.c.b16 %v3335, %v3332
  %v4197 = vpack.c.b16 %v3339, %v3336
  %v4198 = vpack.c.b16 %v3340, %v3337
  %v4199 = vpack.c.b16 %v3341, %v3338
  %v4200 = vpack.c.b16 %v3345, %v3342
  %v4201 = vpack.c.b16 %v3346, %v3343
  %v4202 = vpack.c.b16 %v3347, %v3344
  %v4203 = vpack.c.b16 %v3351, %v3348
  %v4204 = vpack.c.b16 %v3352, %v3349
  %v4205 = vpack.c.b16 %v3353, %v3350
  %v4206 = vpack.c.b16 %v3357, %v3354
  %v4207 = vpack.c.b16 %v3358, %v3355
  %v4208 = vpack.c.b16 %v3359, %v3356
  %v4209 = vpack.c.b16 %v3363, %v3360
  %v4210 = vpack.c.b16 %v3364, %v3361
  %v4211 = vpack.c.b16 %v3365, %v3362
  %v4212 = vpack.c.b16 %v3369, %v3366
  %v4213 = vpack.c.b16 %v3370, %v3367
  %v4214 = vpack.c.b16 %v3371, %v3368
  %v4215 = vpack.c.b16 %v3375, %v3372
  %v4216 = vpack.c.b16 %v3376, %v3373
  %v4217 = vpack.c.b16 %v3377, %v3374
  %v4218 = vpack.c.b16 %v3381, %v3378
  %v4219 = vpack.c.b16 %v3382, %v3379
  %v4220 = vpack.c.b16 %v3383, %v3380
  %v4221 = vpack.c.b16 %v3387, %v3384
  %v4222 = vpack.c.b16 %v3388, %v3385
  %v4223 = vpack.c.b16 %v3389, %v3386
  %v4224 = vpack.c.b16 %v3393, %v3390
  %v4225 = vpack.c.b16 %v3394, %v3391
  %v4226 = vpack.c.b16 %v3395, %v3392
  %v4227 = vpack.c.b16 %v3399, %v3396
  %v4228 = vpack.c.b16 %v3400, %v3397
  %v4229 = vpack.c.b16 %v3401, %v3398
  %v4230 = vpack.c.b16 %v3405, %v3402
  %v4231 = vpack.c.b16 %v3406, %v3403
  %v4232 = vpack.c.b16 %v3407, %v3404
  %v4233 = vpack.c.b16 %v3411, %v3408
  %v4234 = vpack.c.b16 %v3412, %v3409
  %v4235 = vpack.c.b16 %v3413, %v3410
  %v4236 = vpack.c.b16 %v3417, %v3414
  %v4237 = vpack.c.b16 %v3418, %v3415
  %v4238 = vpack.c.b16 %v3419, %v3416
  %v4239 = vpack.c.b16 %v3423, %v3420
  %v4240 = vpack.c.b16 %v3424, %v3421
  %v4241 = vpack.c.b16 %v3425, %v3422
  %v4242 = vpack.c.b16 %v3429, %v3426
  %v4243 = vpack.c.b16 %v3430, %v3427
  %v4244 = vpack.c.b16 %v3431, %v3428
  %v4245 = vpack.c.b16 %v3435, %v3432
  %v4246 = vpack.c.b16 %v3436, %v3433
  %v4247 = vpack.c.b16 %v3437, %v3434
  %v4248 = vpack.c.b16 %v3441, %v3438
  %v4249 = vpack.c.b16 %v3442, %v3439
  %v4250 = vpack.c.b16 %v3443, %v3440
  %v4251 = vpack.c.b16 %v3447, %v3444
  %v4252 = vpack.c.b16 %v3448, %v3445
  %v4253 = vpack.c.b16 %v3449, %v3446
  %v4254 = vpack.c.b16 %v3453, %v3450
  %v4255 = vpack.c.b16 %v3454, %v3451
  %v4256 = vpack.c.b16 %v3455, %v3452
  %v4257 = vpack.c.b16 %v3459, %v3456
  %v4258 = vpack.c.b16 %v3460, %v3457
  %v4259 = vpack.c.b16 %v3461, %v3458
  %v4260 = vpack.c.b16 %v3465, %v3462
  %v4261 = vpack.c.b16 %v3466, %v3463
  %v4262 = vpack.c.b16 %v3467, %v3464
  %v4263 = vpack.c.b16 %v3471, %v3468
  %v4264 = vpack.c.b16 %v3472, %v3469
  %v4265 = vpack.c.b16 %v3473, %v3470
  %v4266 = vpack.c.b16 %v3477, %v3474
  %v4267 = vpack.c.b16 %v3478, %v3475
  %v4268 = vpack.c.b16 %v3479, %v3476
  %v4269 = vpack.c.b16 %v3483, %v3480
  %v4270 = vpack.c.b16 %v3484, %v3481
  %v4271 = vpack.c.b16 %v3485, %v3482
  %v4272 = vpack.c.b16 %v3489, %v3486
  %v4273 = vpack.c.b16 %v3490, %v3487
  %v4274 = vpack.c.b16 %v3491, %v3488
  %v4275 = vpack.c.b16 %v3495, %v3492
  %v4276 = vpack.c.b16 %v3496, %v3493
  %v4277 = vpack.c.b16 %v3497, %v3494
  %v4278 = vpack.c.b16 %v3501, %v3498
  %v4279 = vpack.c.b16 %v3502, %v3499
  %v4280 = vpack.c.b16 %v3503, %v3500
  %v4281 = vpack.c.b16 %v3507, %v3504
  %v4282 = vpack.c.b16 %v3508, %v3505
  %v4283 = vpack.c.b16 %v3509, %v3506
  %v4284 = vpack.c.b16 %v3513, %v3510
  %v4285 = vpack.c.b16 %v3514, %v3511
  %v4286 = vpack.c.b16 %v3515, %v3512
  %v4287 = vpack.c.b16 %v3519, %v3516
  %v4288 = vpack.c.b16 %v3520, %v3517
  %v4289 = vpack.c.b16 %v3521, %v3518
  %v4290 = vpack.c.b16 %v3525, %v3522
  %v4291 = vpack.c.b16 %v3526, %v3523
  %v4292 = vpack.c.b16 %v3527, %v3524
  %v4293 = vpack.c.b16 %v3531, %v3528
  %v4294 = vpack.c.b16 %v3532, %v3529
  %v4295 = vpack.c.b16 %v3533, %v3530
  %v4296 = vpack.c.b16 %v3537, %v3534
  %v4297 = vpack.c.b16 %v3538, %v3535
  %v4298 = vpack.c.b16 %v3539, %v3536
  %v4299 = vpack.c.b16 %v3543, %v3540
  %v4300 = vpack.c.b16 %v3544, %v3541
  %v4301 = vpack.c.b16 %v3545, %v3542
  %v4302 = vpack.c.b16 %v3549, %v3546
  %v4303 = vpack.c.b16 %v3550, %v3547
  %v4304 = vpack.c.b16 %v3551, %v3548
  %v4305 = vpack.c.b16 %v3555, %v3552
  %v4306 = vpack.c.b16 %v3556, %v3553
  %v4307 = vpack.c.b16 %v3557, %v3554
  %v4308 = vpack.c.b16 %v3561, %v3558
  %v4309 = vpack.c.b16 %v3562, %v3559
  %v4310 = vpack.c.b16 %v3563, %v3560
  %v4311 = vpack.c.b16 %v3567, %v3564
  %v4312 = vpack.c.b16 %v3568, %v3565
  %v4313 = vpack.c.b16 %v3569, %v3566
  %v4314 = vpack.c.b16 %v3573, %v3570
  %v4315 = vpack.c.b16 %v3574, %v3571
  %v4316 = vpack.c.b16 %v3575, %v3572
  %v4317 = vpack.c.b16 %v3579, %v3576
  %v4318 = vpack.c.b16 %v3580, %v3577
  %v4319 = vpack.c.b16 %v3581, %v3578
  %v4320 = vpack.c.b16 %v3585, %v3582
  %v4321 = vpack.c.b16 %v3586, %v3583
  %v4322 = vpack.c.b16 %v3587, %v3584
  %v4323 = vpack.c.b16 %v3591, %v3588
  %v4324 = vpack.c.b16 %v3592, %v3589
  %v4325 = vpack.c.b16 %v3593, %v3590
  %v4326 = vpack.c.b16 %v3597, %v3594
  %v4327 = vpack.c.b16 %v3598, %v3595
  %v4328 = vpack.c.b16 %v3599, %v3596
  %v4329 = vpack.c.b16 %v3603, %v3600
  %v4330 = vpack.c.b16 %v3604, %v3601
  %v4331 = vpack.c.b16 %v3605, %v3602
  %v4332 = vpack.c.b16 %v3609, %v3606
  %v4333 = vpack.c.b16 %v3610, %v3607
  %v4334 = vpack.c.b16 %v3611, %v3608
  %v4335 = vpack.c.b16 %v3615, %v3612
  %v4336 = vpack.c.b16 %v3616, %v3613
  %v4337 = vpack.c.b16 %v3617, %v3614
  %v4338 = vpack.c.b16 %v3621, %v3618
  %v4339 = vpack.c.b16 %v3622, %v3619
  %v4340 = vpack.c.b16 %v3623, %v3620
  %v4341 = vpack.c.b16 %v3627, %v3624
  %v4342 = vpack.c.b16 %v3628, %v3625
  %v4343 = vpack.c.b16 %v3629, %v3626
  %v4344 = vpack.c.b16 %v3633, %v3630
  %v4345 = vpack.c.b16 %v3634, %v3631
  %v4346 = vpack.c.b16 %v3635, %v3632
  %v4347 = vpack.c.b16 %v3639, %v3636
  %v4348 = vpack.c.b16 %v3640, %v3637
  %v4349 = vpack.c.b16 %v3641, %v3638
  %v4350 = vpack.c.b16 %v3645, %v3642
  %v4351 = vpack.c.b16 %v3646, %v3643
  %v4352 = vpack.c.b16 %v3647, %v3644
  %v4353 = vpack.c.b16 %v3651, %v3648
  %v4354 = vpack.c.b16 %v3652, %v3649
  %v4355 = vpack.c.b16 %v3653, %v3650
  %v4356 = vpack.c.b16 %v3657, %v3654
  %v4357 = vpack.c.b16 %v3658, %v3655
  %v4358 = vpack.c.b16 %v3659, %v3656
  %v4359 = vpack.c.b16 %v3663, %v3660
  %v4360 = vpack.c.b16 %v3664, %v3661
  %v4361 = vpack.c.b16 %v3665, %v3662
  %v4362 = vpack.c.b16 %v3669, %v3666
  %v4363 = vpack.c.b16 %v3670, %v3667
  %v4364 = vpack.c.b16 %v3671, %v3668
  %v4365 = vpack.c.b16 %v3675, %v3672
  %v4366 = vpack.c.b16 %v3676, %v3673
  %v4367 = vpack.c.b16 %v3677, %v3674
  %v4368 = vpack.c.b16 %v3681, %v3678
  %v4369 = vpack.c.b16 %v3682, %v3679
  %v4370 = vpack.c.b16 %v3683, %v3680
  %v4371 = vpack.c.b16 %v3687, %v3684
  %v4372 = vpack.c.b16 %v3688, %v3685
  %v4373 = vpack.c.b16 %v3689, %v3686
  %v4374 = vpack.c.b16 %v3693, %v3690
  %v4375 = vpack.c.b16 %v3694, %v3691
  %v4376 = vpack.c.b16 %v3695, %v3692
  %v4377 = vpack.c.b16 %v3699, %v3696
  %v4378 = vpack.c.b16 %v3700, %v3697
  %v4379 = vpack.c.b16 %v3701, %v3698
  %v4380 = vpack.c.b16 %v3705, %v3702
  %v4381 = vpack.c.b16 %v3706, %v3703
  %v4382 = vpack.c.b16 %v3707, %v3704
  %v4383 = vpack.c.b16 %v3711, %v3708
  %v4384 = vpack.c.b16 %v3712, %v3709
  %v4385 = vpack.c.b16 %v3713, %v3710
  %v4386 = vpack.c.b16 %v3717, %v3714
  %v4387 = vpack.c.b16 %v3718, %v3715
  %v4388 = vpack.c.b16 %v3719, %v3716
  %v4389 = vpack.c.b16 %v3723, %v3720
  %v4390 = vpack.c.b16 %v3724, %v3721
  %v4391 = vpack.c.b16 %v3725, %v3722
  %v4392 = vpack.c.b16 %v3729, %v3726
  %v4393 = vpack.c.b16 %v3730, %v3727
  %v4394 = vpack.c.b16 %v3731, %v3728
  %v4395 = vpack.c.b16 %v3735, %v3732
  %v4396 = vpack.c.b16 %v3736, %v3733
  %v4397 = vpack.c.b16 %v3737, %v3734
  %v4398 = vpack.c.b16 %v3741, %v3738
  %v4399 = vpack.c.b16 %v3742, %v3739
  %v4400 = vpack.c.b16 %v3743, %v3740
  %v4401 = vpack.c.b16 %v3747, %v3744
  %v4402 = vpack.c.b16 %v3748, %v3745
  %v4403 = vpack.c.b16 %v3749, %v3746
  %v4404 = vpack.c.b16 %v3753, %v3750
  %v4405 = vpack.c.b16 %v3754, %v3751
  %v4406 = vpack.c.b16 %v3755, %v3752
  %v4407 = vpack.c.b16 %v3759, %v3756
  %v4408 = vpack.c.b16 %v3760, %v3757
  %v4409 = vpack.c.b16 %v3761, %v3758
  %v4410 = vpack.c.b16 %v3765, %v3762
  %v4411 = vpack.c.b16 %v3766, %v3763
  %v4412 = vpack.c.b16 %v3767, %v3764
  %v4413 = vpack.c.b16 %v3771, %v3768
  %v4414 = vpack.c.b16 %v3772, %v3769
  %v4415 = vpack.c.b16 %v3773, %v3770
  %v4416 = vpack.c.b16 %v3777, %v3774
  %v4417 = vpack.c.b16 %v3778, %v3775
  %v4418 = vpack.c.b16 %v3779, %v3776
  %v4419 = vpack.c.b16 %v3783, %v3780
  %v4420 = vpack.c.b16 %v3784, %v3781
  %v4421 = vpack.c.b16 %v3785, %v3782
  %v4422 = vpack.c.b16 %v3789, %v3786
  %v4423 = vpack.c.b16 %v3790, %v3787
  %v4424 = vpack.c.b16 %v3791, %v3788
  %v4425 = vpack.c.b16 %v3795, %v3792
  %v4426 = vpack.c.b16 %v3796, %v3793
  %v4427 = vpack.c.b16 %v3797, %v3794
  %v4428 = vpack.c.b16 %v3801, %v3798
  %v4429 = vpack.c.b16 %v3802, %v3799
  %v4430 = vpack.c.b16 %v3803, %v3800
  %v4431 = vpack.c.b16 %v3807, %v3804
  %v4432 = vpack.c.b16 %v3808, %v3805
  %v4433 = vpack.c.b16 %v3809, %v3806
  %v4434 = vpack.c.b16 %v3813, %v3810
  %v4435 = vpack.c.b16 %v3814, %v3811
  %v4436 = vpack.c.b16 %v3815, %v3812
  %v4437 = vpack.c.b16 %v3819, %v3816
  %v4438 = vpack.c.b16 %v3820, %v3817
  %v4439 = vpack.c.b16 %v3821, %v3818
  %v4440 = vpack.c.b16 %v3825, %v3822
  %v4441 = vpack.c.b16 %v3826, %v3823
  %v4442 = vpack.c.b16 %v3827, %v3824
  %v4443 = vpack.c.b16 %v3831, %v3828
  %v4444 = vpack.c.b16 %v3832, %v3829
  %v4445 = vpack.c.b16 %v3833, %v3830
  %v4446 = vpack.c.b16 %v3837, %v3834
  %v4447 = vpack.c.b16 %v3838, %v3835
  %v4448 = vpack.c.b16 %v3839, %v3836
  %v4449 = vpack.c.b16 %v3843, %v3840
  %v4450 = vpack.c.b16 %v3844, %v3841
  %v4451 = vpack.c.b16 %v3845, %v3842
  %v4452 = vpack.c.b16 %v3849, %v3846
  %v4453 = vpack.c.b16 %v3850, %v3847
  %v4454 = vpack.c.b16 %v3851, %v3848
  %v4455 = vpack.c.b16 %v3855, %v3852
  %v4456 = vpack.c.b16 %v3856, %v3853
  %v4457 = vpack.c.b16 %v3857, %v3854
  %v4458 = vpack.c.b16 %v3861, %v3858
  %v4459 = vpack.c.b16 %v3862, %v3859
  %v4460 = vpack.c.b16 %v3863, %v3860
  %v4461 = vpack.c.b16 %v3867, %v3864
  %v4462 = vpack.c.b16 %v3868, %v3865
  %v4463 = vpack.c.b16 %v3869, %v3866
  %v4464 = vpack.c.b16 %v3873, %v3870
  %v4465 = vpack.c.b16 %v3874, %v3871
  %v4466 = vpack.c.b16 %v3875, %v3872
  %v4467 = vpack.c.b16 %v3879, %v3876
  %v4468 = vpack.c.b16 %v3880, %v3877
  %v4469 = vpack.c.b16 %v3881, %v3878
  %v4470 = vpack.c.b16 %v3885, %v3882
  %v4471 = vpack.c.b16 %v3886, %v3883
  %v4472 = vpack.c.b16 %v3887, %v3884
  %v4473 = vpack.c.b16 %v3891, %v3888
  %v4474 = vpack.c.b16 %v3892, %v3889
  %v4475 = vpack.c.b16 %v3893, %v3890
  %v4476 = vpack.c.b16 %v3897, %v3894
  %v4477 = vpack.c.b16 %v3898, %v3895
  %v4478 = vpack.c.b16 %v3899, %v3896
  %v4479 = vpack.c.b16 %v3903, %v3900
  %v4480 = vpack.c.b16 %v3904, %v3901
  %v4481 = vpack.c.b16 %v3905, %v3902
  %v4482 = vpack.c.b16 %v3909, %v3906
  %v4483 = vpack.c.b16 %v3910, %v3907
  %v4484 = vpack.c.b16 %v3911, %v3908
  %v4485 = vpack.c.b16 %v3915, %v3912
  %v4486 = vpack.c.b16 %v3916, %v3913
  %v4487 = vpack.c.b16 %v3917, %v3914
  %v4488 = vpack.c.b16 %v3921, %v3918
  %v4489 = vpack.c.b16 %v3922, %v3919
  %v4490 = vpack.c.b16 %v3923, %v3920
  %v4491 = vpack.c.b16 %v3927, %v3924
  %v4492 = vpack.c.b16 %v3928, %v3925
  %v4493 = vpack.c.b16 %v3929, %v3926
  %v4494 = vpack.c.b16 %v3933, %v3930
  %v4495 = vpack.c.b16 %v3934, %v3931
  %v4496 = vpack.c.b16 %v3935, %v3932
  %v4497 = vpack.c.b16 %v3939, %v3936
  %v4498 = vpack.c.b16 %v3940, %v3937
  %v4499 = vpack.c.b16 %v3941, %v3938
  %v4500 = vpack.c.b16 %v3945, %v3942
  %v4501 = vpack.c.b16 %v3946, %v3943
  %v4502 = vpack.c.b16 %v3947, %v3944
  %v4503 = vpack.c.b16 %v3951, %v3948
  %v4504 = vpack.c.b16 %v3952, %v3949
  %v4505 = vpack.c.b16 %v3953, %v3950
  %v4506 = vpack.c.b16 %v3957, %v3954
  %v4507 = vpack.c.b16 %v3958, %v3955
  %v4508 = vpack.c.b16 %v3959, %v3956
  %v4509 = vpack.c.b16 %v3963, %v3960
  %v4510 = vpack.c.b16 %v3964, %v3961
  %v4511 = vpack.c.b16 %v3965, %v3962
  %v4512 = vpack.c.b16 %v3969, %v3966
  %v4513 = vpack.c.b16 %v3970, %v3967
  %v4514 = vpack.c.b16 %v3971, %v3968
  %v4515 = vpack.c.b16 %v3975, %v3972
  %v4516 = vpack.c.b16 %v3976, %v3973
  %v4517 = vpack.c.b16 %v3977, %v3974
  %v4518 = vpack.c.b16 %v3981, %v3978
  %v4519 = vpack.c.b16 %v3982, %v3979
  %v4520 = vpack.c.b16 %v3983, %v3980
  %v4521 = vpack.c.b16 %v3987, %v3984
  %v4522 = vpack.c.b16 %v3988, %v3985
  %v4523 = vpack.c.b16 %v3989, %v3986
  %v4524 = vpack.c.b16 %v3993, %v3990
  %v4525 = vpack.c.b16 %v3994, %v3991
  %v4526 = vpack.c.b16 %v3995, %v3992
  %v4527 = vpack.c.b16 %v3999, %v3996
  %v4528 = vpack.c.b16 %v4000, %v3997
  %v4529 = vpack.c.b16 %v4001, %v3998
  %v4530 = vpack.c.b16 %v4005, %v4002
  %v4531 = vpack.c.b16 %v4006, %v4003
  %v4532 = vpack.c.b16 %v4007, %v4004
  %v4533 = vpack.c.b16 %v4011, %v4008
  %v4534 = vpack.c.b16 %v4012, %v4009
  %v4535 = vpack.c.b16 %v4013, %v4010
  %v4536 = vpack.c.b16 %v4017, %v4014
  %v4537 = vpack.c.b16 %v4018, %v4015
  %v4538 = vpack.c.b16 %v4019, %v4016
  %v4539 = vpack.c.b16 %v4023, %v4020
  %v4540 = vpack.c.b16 %v4024, %v4021
  %v4541 = vpack.c.b16 %v4025, %v4022
  %v4542 = vpack.c.b16 %v4029, %v4026
  %v4543 = vpack.c.b16 %v4030, %v4027
  %v4544 = vpack.c.b16 %v4031, %v4028
  %v4545 = vpack.c.b16 %v4035, %v4032
  %v4546 = vpack.c.b16 %v4036, %v4033
  %v4547 = vpack.c.b16 %v4037, %v4034
  %v4548 = vpack.c.b16 %v4041, %v4038
  %v4549 = vpack.c.b16 %v4042, %v4039
  %v4550 = vpack.c.b16 %v4043, %v4040
  %v4551 = vpack.c.b16 %v4047, %v4044
  %v4552 = vpack.c.b16 %v4048, %v4045
  %v4553 = vpack.c.b16 %v4049, %v4046
  %v4554 = vpack.c.b16 %v4053, %v4050
  %v4555 = vpack.c.b16 %v4054, %v4051
  %v4556 = vpack.c.b16 %v4055, %v4052
  %v4557 = vpack.c.b16 %v4059, %v4056
  %v4558 = vpack.c.b16 %v4060, %v4057
  %v4559 = vpack.c.b16 %v4061, %v4058
  %v4560 = vpack.c.b16 %v4065, %v4062
  %v4561 = vpack.c.b16 %v4066, %v4063
  %v4562 = vpack.c.b16 %v4067, %v4064
  %v4563 = vpack.c.b16 %v4071, %v4068
  %v4564 = vpack.c.b16 %v4072, %v4069
  %v4565 = vpack.c.b16 %v4073, %v4070
  %v4566 = vpack.c.b16 %v4077, %v4074
  %v4567 = vpack.c.b16 %v4078, %v4075
  %v4568 = vpack.c.b16 %v4079, %v4076
  %v4569 = vpack.c.b16 %v4083, %v4080
  %v4570 = vpack.c.b16 %v4084, %v4081
  %v4571 = vpack.c.b16 %v4085, %v4082
  %v4572 = vpack.c.b16 %v4089, %v4086
  %v4573 = vpack.c.b16 %v4090, %v4087
  %v4574 = vpack.c.b16 %v4091, %v4088
  %v4575 = vpack.c.b16 %v4095, %v4092
  %v4576 = vpack.c.b16 %v4096, %v4093
  %v4577 = vpack.c.b16 %v4097, %v4094
  %v4578 = vpack.c.b16 %v4101, %v4098
  %v4579 = vpack.c.b16 %v4102, %v4099
  %v4580 = vpack.c.b16 %v4103, %v4100
  %v4581 = vpack.c.b16 %v4107, %v4104
  %v4582 = vpack.c.b16 %v4108, %v4105
  %v4583 = vpack.c.b16 %v4109, %v4106
  %v4584 = vpack.c.b16 %v4113, %v4110
  %v4585 = vpack.c.b16 %v4114, %v4111
  %v4586 = vpack.c.b16 %v4115, %v4112
  %v4587 = vpack.c.b16 %v4119, %v4116
  %v4588 = vpack.c.b16 %v4120, %v4117
  %v4589 = vpack.c.b16 %v4121, %v4118
  %v4590 = vpack.c.b16 %v4125, %v4122
  %v4591 = vpack.c.b16 %v4126, %v4123
  %v4592 = vpack.c.b16 %v4127, %v4124
  %v4593 = vpack.c.b16 %v4131, %v4128
  %v4594 = vpack.c.b16 %v4132, %v4129
  %v4595 = vpack.c.b16 %v4133, %v4130
  %v4596 = vpack.c.b16 %v4137, %v4134
  %v4597 = vpack.c.b16 %v4138, %v4135
  %v4598 = vpack.c.b16 %v4139, %v4136
  %vm5058 = vcmask 130048
  %v5060 = vsel %vm5058, %v2317, 0
  %v5063 = vsel %vm5058, %v2337, 0
  %v5066 = vsel %vm5058, %v2357, 0
  %v5069 = vsel %vm5058, %v2377, 0
  %v5072 = vsel %vm5058, %v2397, 0
  %v5075 = vsel %vm5058, %v2417, 0
  %v5078 = vsel %vm5058, %v2437, 0
  %v5081 = vsel %vm5058, %v2457, 0
  %5083 = vmatprep.subr.bf16.mxu0 %v4162
  %5084 = vmatpush1.bf16.msra.mxu0 %v4161
  %5085 = vmatprep.subr.bf16.mxu0 %v4159
  %5086 = vmatpush1.bf16.msra.mxu0 %v4158
  %5087 = vmatprep.subr.bf16.mxu0 %v4156
  %5088 = vmatpush1.bf16.msra.mxu0 %v4155
  %5089 = vmatprep.subr.bf16.mxu0 %v4153
  %5090 = vmatpush1.bf16.msra.mxu0 %v4152
  %5091 = vmatprep.subr.bf16.mxu0 %v4150
  %5092 = vmatpush1.bf16.msra.mxu0 %v4149
  %5093 = vmatprep.subr.bf16.mxu0 %v4147
  %5094 = vmatpush1.bf16.msra.mxu0 %v4146
  %5095 = vmatprep.subr.bf16.mxu0 %v4144
  %5096 = vmatpush1.bf16.msra.mxu0 %v4143
  %5097 = vmatprep.subr.bf16.mxu0 %v4141
  %5098 = vmatpush1.bf16.msra.mxu0 %v4140
  %5099 = vmatprep.subr.bf16.mxu0 %v4186
  %5100 = vmatpush2.bf16.msra.mxu0 %v4185
  %5101 = vmatprep.subr.bf16.mxu0 %v4183
  %5102 = vmatpush2.bf16.msra.mxu0 %v4182
  %5103 = vmatprep.subr.bf16.mxu0 %v4180
  %5104 = vmatpush2.bf16.msra.mxu0 %v4179
  %5105 = vmatprep.subr.bf16.mxu0 %v4177
  %5106 = vmatpush2.bf16.msra.mxu0 %v4176
  %5107 = vmatprep.subr.bf16.mxu0 %v4174
  %5108 = vmatpush2.bf16.msra.mxu0 %v4173
  %5109 = vmatprep.subr.bf16.mxu0 %v4171
  %5110 = vmatpush2.bf16.msra.mxu0 %v4170
  %5111 = vmatprep.subr.bf16.mxu0 %v4168
  %5112 = vmatpush2.bf16.msra.mxu0 %v4167
  %5113 = vmatprep.subr.bf16.mxu0 %v4165
  %5114 = vmatpush2.bf16.msra.mxu0 %v4164
  %5115 = vmatprep.mubr.bf16.mxu0 %v2299
  %5116 = vmatmul.mubr.bf16.gmra.mxu0 %v2298
  %v5117 = vpop.f32.mrf.mxu0
  %v5118 = vadd.f32 %v1806, %v5117
  %v5119 = vpop.f32.mrf.mxu0
  %v5120 = vadd.f32 %v1810, %v5119
  %v5121 = vpop.f32.mrf.mxu0
  %v5122 = vadd.f32 %v1806, %v5121
  %v5123 = vpop.f32.mrf.mxu0
  %v5124 = vadd.f32 %v1810, %v5123
  %5125 = vmatprep.mubr.bf16.mxu0 %v2319
  %5126 = vmatmul.mubr.bf16.gmra.mxu0 %v2318
  %v5127 = vpop.f32.mrf.mxu0
  %v5128 = vadd.f32 %v1806, %v5127
  %v5129 = vpop.f32.mrf.mxu0
  %v5130 = vadd.f32 %v1810, %v5129
  %v5131 = vpop.f32.mrf.mxu0
  %v5132 = vadd.f32 %v1806, %v5131
  %v5133 = vpop.f32.mrf.mxu0
  %v5134 = vadd.f32 %v1810, %v5133
  %5135 = vmatprep.mubr.bf16.mxu0 %v2339
  %5136 = vmatmul.mubr.bf16.gmra.mxu0 %v2338
  %v5137 = vpop.f32.mrf.mxu0
  %v5138 = vadd.f32 %v1806, %v5137
  %v5139 = vpop.f32.mrf.mxu0
  %v5140 = vadd.f32 %v1810, %v5139
  %v5141 = vpop.f32.mrf.mxu0
  %v5142 = vadd.f32 %v1806, %v5141
  %v5143 = vpop.f32.mrf.mxu0
  %v5144 = vadd.f32 %v1810, %v5143
  %5145 = vmatprep.mubr.bf16.mxu0 %v2359
  %5146 = vmatmul.mubr.bf16.gmra.mxu0 %v2358
  %v5147 = vpop.f32.mrf.mxu0
  %v5148 = vadd.f32 %v1806, %v5147
  %v5149 = vpop.f32.mrf.mxu0
  %v5150 = vadd.f32 %v1810, %v5149
  %v5151 = vpop.f32.mrf.mxu0
  %v5152 = vadd.f32 %v1806, %v5151
  %v5153 = vpop.f32.mrf.mxu0
  %v5154 = vadd.f32 %v1810, %v5153
  %5155 = vmatprep.mubr.bf16.mxu0 %v2379
  %5156 = vmatmul.mubr.bf16.gmra.mxu0 %v2378
  %v5157 = vpop.f32.mrf.mxu0
  %v5158 = vadd.f32 %v1806, %v5157
  %v5159 = vpop.f32.mrf.mxu0
  %v5160 = vadd.f32 %v1810, %v5159
  %v5161 = vpop.f32.mrf.mxu0
  %v5162 = vadd.f32 %v1806, %v5161
  %v5163 = vpop.f32.mrf.mxu0
  %v5164 = vadd.f32 %v1810, %v5163
  %5165 = vmatprep.mubr.bf16.mxu0 %v2399
  %5166 = vmatmul.mubr.bf16.gmra.mxu0 %v2398
  %v5167 = vpop.f32.mrf.mxu0
  %v5168 = vadd.f32 %v1806, %v5167
  %v5169 = vpop.f32.mrf.mxu0
  %v5170 = vadd.f32 %v1810, %v5169
  %v5171 = vpop.f32.mrf.mxu0
  %v5172 = vadd.f32 %v1806, %v5171
  %v5173 = vpop.f32.mrf.mxu0
  %v5174 = vadd.f32 %v1810, %v5173
  %5175 = vmatprep.mubr.bf16.mxu0 %v2419
  %5176 = vmatmul.mubr.bf16.gmra.mxu0 %v2418
  %v5177 = vpop.f32.mrf.mxu0
  %v5178 = vadd.f32 %v1806, %v5177
  %v5179 = vpop.f32.mrf.mxu0
  %v5180 = vadd.f32 %v1810, %v5179
  %v5181 = vpop.f32.mrf.mxu0
  %v5182 = vadd.f32 %v1806, %v5181
  %v5183 = vpop.f32.mrf.mxu0
  %v5184 = vadd.f32 %v1810, %v5183
  %5185 = vmatprep.mubr.bf16.mxu0 %v2439
  %5186 = vmatmul.mubr.bf16.gmra.mxu0 %v2438
  %v5187 = vpop.f32.mrf.mxu0
  %v5188 = vadd.f32 %v1806, %v5187
  %v5189 = vpop.f32.mrf.mxu0
  %v5190 = vadd.f32 %v1810, %v5189
  %v5191 = vpop.f32.mrf.mxu0
  %v5192 = vadd.f32 %v1806, %v5191
  %v5193 = vpop.f32.mrf.mxu0
  %v5194 = vadd.f32 %v1810, %v5193
  %5195 = vdwg.mxu0
  %5196 = vmatprep.subr.bf16.mxu0 %v4210
  %5197 = vmatpush1.bf16.msra.mxu0 %v4209
  %5198 = vmatprep.subr.bf16.mxu0 %v4207
  %5199 = vmatpush1.bf16.msra.mxu0 %v4206
  %5200 = vmatprep.subr.bf16.mxu0 %v4204
  %5201 = vmatpush1.bf16.msra.mxu0 %v4203
  %5202 = vmatprep.subr.bf16.mxu0 %v4201
  %5203 = vmatpush1.bf16.msra.mxu0 %v4200
  %5204 = vmatprep.subr.bf16.mxu0 %v4198
  %5205 = vmatpush1.bf16.msra.mxu0 %v4197
  %5206 = vmatprep.subr.bf16.mxu0 %v4195
  %5207 = vmatpush1.bf16.msra.mxu0 %v4194
  %5208 = vmatprep.subr.bf16.mxu0 %v4192
  %5209 = vmatpush1.bf16.msra.mxu0 %v4191
  %5210 = vmatprep.subr.bf16.mxu0 %v4189
  %5211 = vmatpush1.bf16.msra.mxu0 %v4188
  %5212 = vmatprep.subr.bf16.mxu0 %v4234
  %5213 = vmatpush2.bf16.msra.mxu0 %v4233
  %5214 = vmatprep.subr.bf16.mxu0 %v4231
  %5215 = vmatpush2.bf16.msra.mxu0 %v4230
  %5216 = vmatprep.subr.bf16.mxu0 %v4228
  %5217 = vmatpush2.bf16.msra.mxu0 %v4227
  %5218 = vmatprep.subr.bf16.mxu0 %v4225
  %5219 = vmatpush2.bf16.msra.mxu0 %v4224
  %5220 = vmatprep.subr.bf16.mxu0 %v4222
  %5221 = vmatpush2.bf16.msra.mxu0 %v4221
  %5222 = vmatprep.subr.bf16.mxu0 %v4219
  %5223 = vmatpush2.bf16.msra.mxu0 %v4218
  %5224 = vmatprep.subr.bf16.mxu0 %v4216
  %5225 = vmatpush2.bf16.msra.mxu0 %v4215
  %5226 = vmatprep.subr.bf16.mxu0 %v4213
  %5227 = vmatpush2.bf16.msra.mxu0 %v4212
  %5228 = vmatprep.mubr.bf16.mxu0 %v2301
  %5229 = vmatmul.mubr.bf16.gmra.mxu0 %v2300
  %v5230 = vpop.f32.mrf.mxu0
  %v5231 = vadd.f32 %v5118, %v5230
  %v5232 = vpop.f32.mrf.mxu0
  %v5233 = vadd.f32 %v5120, %v5232
  %v5234 = vpop.f32.mrf.mxu0
  %v5235 = vadd.f32 %v5122, %v5234
  %v5236 = vpop.f32.mrf.mxu0
  %v5237 = vadd.f32 %v5124, %v5236
  %5238 = vmatprep.mubr.bf16.mxu0 %v2321
  %5239 = vmatmul.mubr.bf16.gmra.mxu0 %v2320
  %v5240 = vpop.f32.mrf.mxu0
  %v5241 = vadd.f32 %v5128, %v5240
  %v5242 = vpop.f32.mrf.mxu0
  %v5243 = vadd.f32 %v5130, %v5242
  %v5244 = vpop.f32.mrf.mxu0
  %v5245 = vadd.f32 %v5132, %v5244
  %v5246 = vpop.f32.mrf.mxu0
  %v5247 = vadd.f32 %v5134, %v5246
  %5248 = vmatprep.mubr.bf16.mxu0 %v2341
  %5249 = vmatmul.mubr.bf16.gmra.mxu0 %v2340
  %v5250 = vpop.f32.mrf.mxu0
  %v5251 = vadd.f32 %v5138, %v5250
  %v5252 = vpop.f32.mrf.mxu0
  %v5253 = vadd.f32 %v5140, %v5252
  %v5254 = vpop.f32.mrf.mxu0
  %v5255 = vadd.f32 %v5142, %v5254
  %v5256 = vpop.f32.mrf.mxu0
  %v5257 = vadd.f32 %v5144, %v5256
  %5258 = vmatprep.mubr.bf16.mxu0 %v2361
  %5259 = vmatmul.mubr.bf16.gmra.mxu0 %v2360
  %v5260 = vpop.f32.mrf.mxu0
  %v5261 = vadd.f32 %v5148, %v5260
  %v5262 = vpop.f32.mrf.mxu0
  %v5263 = vadd.f32 %v5150, %v5262
  %v5264 = vpop.f32.mrf.mxu0
  %v5265 = vadd.f32 %v5152, %v5264
  %v5266 = vpop.f32.mrf.mxu0
  %v5267 = vadd.f32 %v5154, %v5266
  %5268 = vmatprep.mubr.bf16.mxu0 %v2381
  %5269 = vmatmul.mubr.bf16.gmra.mxu0 %v2380
  %v5270 = vpop.f32.mrf.mxu0
  %v5271 = vadd.f32 %v5158, %v5270
  %v5272 = vpop.f32.mrf.mxu0
  %v5273 = vadd.f32 %v5160, %v5272
  %v5274 = vpop.f32.mrf.mxu0
  %v5275 = vadd.f32 %v5162, %v5274
  %v5276 = vpop.f32.mrf.mxu0
  %v5277 = vadd.f32 %v5164, %v5276
  %5278 = vmatprep.mubr.bf16.mxu0 %v2401
  %5279 = vmatmul.mubr.bf16.gmra.mxu0 %v2400
  %v5280 = vpop.f32.mrf.mxu0
  %v5281 = vadd.f32 %v5168, %v5280
  %v5282 = vpop.f32.mrf.mxu0
  %v5283 = vadd.f32 %v5170, %v5282
  %v5284 = vpop.f32.mrf.mxu0
  %v5285 = vadd.f32 %v5172, %v5284
  %v5286 = vpop.f32.mrf.mxu0
  %v5287 = vadd.f32 %v5174, %v5286
  %5288 = vmatprep.mubr.bf16.mxu0 %v2421
  %5289 = vmatmul.mubr.bf16.gmra.mxu0 %v2420
  %v5290 = vpop.f32.mrf.mxu0
  %v5291 = vadd.f32 %v5178, %v5290
  %v5292 = vpop.f32.mrf.mxu0
  %v5293 = vadd.f32 %v5180, %v5292
  %v5294 = vpop.f32.mrf.mxu0
  %v5295 = vadd.f32 %v5182, %v5294
  %v5296 = vpop.f32.mrf.mxu0
  %v5297 = vadd.f32 %v5184, %v5296
  %5298 = vmatprep.mubr.bf16.mxu0 %v2441
  %5299 = vmatmul.mubr.bf16.gmra.mxu0 %v2440
  %v5300 = vpop.f32.mrf.mxu0
  %v5301 = vadd.f32 %v5188, %v5300
  %v5302 = vpop.f32.mrf.mxu0
  %v5303 = vadd.f32 %v5190, %v5302
  %v5304 = vpop.f32.mrf.mxu0
  %v5305 = vadd.f32 %v5192, %v5304
  %v5306 = vpop.f32.mrf.mxu0
  %v5307 = vadd.f32 %v5194, %v5306
  %5308 = vdwg.mxu0
  %5309 = vmatprep.subr.bf16.mxu0 %v4258
  %5310 = vmatpush1.bf16.msra.mxu0 %v4257
  %5311 = vmatprep.subr.bf16.mxu0 %v4255
  %5312 = vmatpush1.bf16.msra.mxu0 %v4254
  %5313 = vmatprep.subr.bf16.mxu0 %v4252
  %5314 = vmatpush1.bf16.msra.mxu0 %v4251
  %5315 = vmatprep.subr.bf16.mxu0 %v4249
  %5316 = vmatpush1.bf16.msra.mxu0 %v4248
  %5317 = vmatprep.subr.bf16.mxu0 %v4246
  %5318 = vmatpush1.bf16.msra.mxu0 %v4245
  %5319 = vmatprep.subr.bf16.mxu0 %v4243
  %5320 = vmatpush1.bf16.msra.mxu0 %v4242
  %5321 = vmatprep.subr.bf16.mxu0 %v4240
  %5322 = vmatpush1.bf16.msra.mxu0 %v4239
  %5323 = vmatprep.subr.bf16.mxu0 %v4237
  %5324 = vmatpush1.bf16.msra.mxu0 %v4236
  %5325 = vmatprep.subr.bf16.mxu0 %v4282
  %5326 = vmatpush2.bf16.msra.mxu0 %v4281
  %5327 = vmatprep.subr.bf16.mxu0 %v4279
  %5328 = vmatpush2.bf16.msra.mxu0 %v4278
  %5329 = vmatprep.subr.bf16.mxu0 %v4276
  %5330 = vmatpush2.bf16.msra.mxu0 %v4275
  %5331 = vmatprep.subr.bf16.mxu0 %v4273
  %5332 = vmatpush2.bf16.msra.mxu0 %v4272
  %5333 = vmatprep.subr.bf16.mxu0 %v4270
  %5334 = vmatpush2.bf16.msra.mxu0 %v4269
  %5335 = vmatprep.subr.bf16.mxu0 %v4267
  %5336 = vmatpush2.bf16.msra.mxu0 %v4266
  %5337 = vmatprep.subr.bf16.mxu0 %v4264
  %5338 = vmatpush2.bf16.msra.mxu0 %v4263
  %5339 = vmatprep.subr.bf16.mxu0 %v4261
  %5340 = vmatpush2.bf16.msra.mxu0 %v4260
  %5341 = vmatprep.mubr.bf16.mxu0 %v2303
  %5342 = vmatmul.mubr.bf16.gmra.mxu0 %v2302
  %v5343 = vpop.f32.mrf.mxu0
  %v5344 = vadd.f32 %v5231, %v5343
  %v5345 = vpop.f32.mrf.mxu0
  %v5346 = vadd.f32 %v5233, %v5345
  %v5347 = vpop.f32.mrf.mxu0
  %v5348 = vadd.f32 %v5235, %v5347
  %v5349 = vpop.f32.mrf.mxu0
  %v5350 = vadd.f32 %v5237, %v5349
  %5351 = vmatprep.mubr.bf16.mxu0 %v2323
  %5352 = vmatmul.mubr.bf16.gmra.mxu0 %v2322
  %v5353 = vpop.f32.mrf.mxu0
  %v5354 = vadd.f32 %v5241, %v5353
  %v5355 = vpop.f32.mrf.mxu0
  %v5356 = vadd.f32 %v5243, %v5355
  %v5357 = vpop.f32.mrf.mxu0
  %v5358 = vadd.f32 %v5245, %v5357
  %v5359 = vpop.f32.mrf.mxu0
  %v5360 = vadd.f32 %v5247, %v5359
  %5361 = vmatprep.mubr.bf16.mxu0 %v2343
  %5362 = vmatmul.mubr.bf16.gmra.mxu0 %v2342
  %v5363 = vpop.f32.mrf.mxu0
  %v5364 = vadd.f32 %v5251, %v5363
  %v5365 = vpop.f32.mrf.mxu0
  %v5366 = vadd.f32 %v5253, %v5365
  %v5367 = vpop.f32.mrf.mxu0
  %v5368 = vadd.f32 %v5255, %v5367
  %v5369 = vpop.f32.mrf.mxu0
  %v5370 = vadd.f32 %v5257, %v5369
  %5371 = vmatprep.mubr.bf16.mxu0 %v2363
  %5372 = vmatmul.mubr.bf16.gmra.mxu0 %v2362
  %v5373 = vpop.f32.mrf.mxu0
  %v5374 = vadd.f32 %v5261, %v5373
  %v5375 = vpop.f32.mrf.mxu0
  %v5376 = vadd.f32 %v5263, %v5375
  %v5377 = vpop.f32.mrf.mxu0
  %v5378 = vadd.f32 %v5265, %v5377
  %v5379 = vpop.f32.mrf.mxu0
  %v5380 = vadd.f32 %v5267, %v5379
  %5381 = vmatprep.mubr.bf16.mxu0 %v2383
  %5382 = vmatmul.mubr.bf16.gmra.mxu0 %v2382
  %v5383 = vpop.f32.mrf.mxu0
  %v5384 = vadd.f32 %v5271, %v5383
  %v5385 = vpop.f32.mrf.mxu0
  %v5386 = vadd.f32 %v5273, %v5385
  %v5387 = vpop.f32.mrf.mxu0
  %v5388 = vadd.f32 %v5275, %v5387
  %v5389 = vpop.f32.mrf.mxu0
  %v5390 = vadd.f32 %v5277, %v5389
  %5391 = vmatprep.mubr.bf16.mxu0 %v2403
  %5392 = vmatmul.mubr.bf16.gmra.mxu0 %v2402
  %v5393 = vpop.f32.mrf.mxu0
  %v5394 = vadd.f32 %v5281, %v5393
  %v5395 = vpop.f32.mrf.mxu0
  %v5396 = vadd.f32 %v5283, %v5395
  %v5397 = vpop.f32.mrf.mxu0
  %v5398 = vadd.f32 %v5285, %v5397
  %v5399 = vpop.f32.mrf.mxu0
  %v5400 = vadd.f32 %v5287, %v5399
  %5401 = vmatprep.mubr.bf16.mxu0 %v2423
  %5402 = vmatmul.mubr.bf16.gmra.mxu0 %v2422
  %v5403 = vpop.f32.mrf.mxu0
  %v5404 = vadd.f32 %v5291, %v5403
  %v5405 = vpop.f32.mrf.mxu0
  %v5406 = vadd.f32 %v5293, %v5405
  %v5407 = vpop.f32.mrf.mxu0
  %v5408 = vadd.f32 %v5295, %v5407
  %v5409 = vpop.f32.mrf.mxu0
  %v5410 = vadd.f32 %v5297, %v5409
  %5411 = vmatprep.mubr.bf16.mxu0 %v2443
  %5412 = vmatmul.mubr.bf16.gmra.mxu0 %v2442
  %v5413 = vpop.f32.mrf.mxu0
  %v5414 = vadd.f32 %v5301, %v5413
  %v5415 = vpop.f32.mrf.mxu0
  %v5416 = vadd.f32 %v5303, %v5415
  %v5417 = vpop.f32.mrf.mxu0
  %v5418 = vadd.f32 %v5305, %v5417
  %v5419 = vpop.f32.mrf.mxu0
  %v5420 = vadd.f32 %v5307, %v5419
  %5421 = vdwg.mxu0
  %5422 = vmatprep.subr.bf16.mxu0 %v4306
  %5423 = vmatpush1.bf16.msra.mxu0 %v4305
  %5424 = vmatprep.subr.bf16.mxu0 %v4303
  %5425 = vmatpush1.bf16.msra.mxu0 %v4302
  %5426 = vmatprep.subr.bf16.mxu0 %v4300
  %5427 = vmatpush1.bf16.msra.mxu0 %v4299
  %5428 = vmatprep.subr.bf16.mxu0 %v4297
  %5429 = vmatpush1.bf16.msra.mxu0 %v4296
  %5430 = vmatprep.subr.bf16.mxu0 %v4294
  %5431 = vmatpush1.bf16.msra.mxu0 %v4293
  %5432 = vmatprep.subr.bf16.mxu0 %v4291
  %5433 = vmatpush1.bf16.msra.mxu0 %v4290
  %5434 = vmatprep.subr.bf16.mxu0 %v4288
  %5435 = vmatpush1.bf16.msra.mxu0 %v4287
  %5436 = vmatprep.subr.bf16.mxu0 %v4285
  %5437 = vmatpush1.bf16.msra.mxu0 %v4284
  %5438 = vmatprep.subr.bf16.mxu0 %v4330
  %5439 = vmatpush2.bf16.msra.mxu0 %v4329
  %5440 = vmatprep.subr.bf16.mxu0 %v4327
  %5441 = vmatpush2.bf16.msra.mxu0 %v4326
  %5442 = vmatprep.subr.bf16.mxu0 %v4324
  %5443 = vmatpush2.bf16.msra.mxu0 %v4323
  %5444 = vmatprep.subr.bf16.mxu0 %v4321
  %5445 = vmatpush2.bf16.msra.mxu0 %v4320
  %5446 = vmatprep.subr.bf16.mxu0 %v4318
  %5447 = vmatpush2.bf16.msra.mxu0 %v4317
  %5448 = vmatprep.subr.bf16.mxu0 %v4315
  %5449 = vmatpush2.bf16.msra.mxu0 %v4314
  %5450 = vmatprep.subr.bf16.mxu0 %v4312
  %5451 = vmatpush2.bf16.msra.mxu0 %v4311
  %5452 = vmatprep.subr.bf16.mxu0 %v4309
  %5453 = vmatpush2.bf16.msra.mxu0 %v4308
  %5454 = vmatprep.mubr.bf16.mxu0 %v2305
  %5455 = vmatmul.mubr.bf16.gmra.mxu0 %v2304
  %v5456 = vpop.f32.mrf.mxu0
  %v5457 = vadd.f32 %v5344, %v5456
  %v5458 = vpop.f32.mrf.mxu0
  %v5459 = vadd.f32 %v5346, %v5458
  %v5460 = vpop.f32.mrf.mxu0
  %v5461 = vadd.f32 %v5348, %v5460
  %v5462 = vpop.f32.mrf.mxu0
  %v5463 = vadd.f32 %v5350, %v5462
  %5464 = vmatprep.mubr.bf16.mxu0 %v2325
  %5465 = vmatmul.mubr.bf16.gmra.mxu0 %v2324
  %v5466 = vpop.f32.mrf.mxu0
  %v5467 = vadd.f32 %v5354, %v5466
  %v5468 = vpop.f32.mrf.mxu0
  %v5469 = vadd.f32 %v5356, %v5468
  %v5470 = vpop.f32.mrf.mxu0
  %v5471 = vadd.f32 %v5358, %v5470
  %v5472 = vpop.f32.mrf.mxu0
  %v5473 = vadd.f32 %v5360, %v5472
  %5474 = vmatprep.mubr.bf16.mxu0 %v2345
  %5475 = vmatmul.mubr.bf16.gmra.mxu0 %v2344
  %v5476 = vpop.f32.mrf.mxu0
  %v5477 = vadd.f32 %v5364, %v5476
  %v5478 = vpop.f32.mrf.mxu0
  %v5479 = vadd.f32 %v5366, %v5478
  %v5480 = vpop.f32.mrf.mxu0
  %v5481 = vadd.f32 %v5368, %v5480
  %v5482 = vpop.f32.mrf.mxu0
  %v5483 = vadd.f32 %v5370, %v5482
  %5484 = vmatprep.mubr.bf16.mxu0 %v2365
  %5485 = vmatmul.mubr.bf16.gmra.mxu0 %v2364
  %v5486 = vpop.f32.mrf.mxu0
  %v5487 = vadd.f32 %v5374, %v5486
  %v5488 = vpop.f32.mrf.mxu0
  %v5489 = vadd.f32 %v5376, %v5488
  %v5490 = vpop.f32.mrf.mxu0
  %v5491 = vadd.f32 %v5378, %v5490
  %v5492 = vpop.f32.mrf.mxu0
  %v5493 = vadd.f32 %v5380, %v5492
  %5494 = vmatprep.mubr.bf16.mxu0 %v2385
  %5495 = vmatmul.mubr.bf16.gmra.mxu0 %v2384
  %v5496 = vpop.f32.mrf.mxu0
  %v5497 = vadd.f32 %v5384, %v5496
  %v5498 = vpop.f32.mrf.mxu0
  %v5499 = vadd.f32 %v5386, %v5498
  %v5500 = vpop.f32.mrf.mxu0
  %v5501 = vadd.f32 %v5388, %v5500
  %v5502 = vpop.f32.mrf.mxu0
  %v5503 = vadd.f32 %v5390, %v5502
  %5504 = vmatprep.mubr.bf16.mxu0 %v2405
  %5505 = vmatmul.mubr.bf16.gmra.mxu0 %v2404
  %v5506 = vpop.f32.mrf.mxu0
  %v5507 = vadd.f32 %v5394, %v5506
  %v5508 = vpop.f32.mrf.mxu0
  %v5509 = vadd.f32 %v5396, %v5508
  %v5510 = vpop.f32.mrf.mxu0
  %v5511 = vadd.f32 %v5398, %v5510
  %v5512 = vpop.f32.mrf.mxu0
  %v5513 = vadd.f32 %v5400, %v5512
  %5514 = vmatprep.mubr.bf16.mxu0 %v2425
  %5515 = vmatmul.mubr.bf16.gmra.mxu0 %v2424
  %v5516 = vpop.f32.mrf.mxu0
  %v5517 = vadd.f32 %v5404, %v5516
  %v5518 = vpop.f32.mrf.mxu0
  %v5519 = vadd.f32 %v5406, %v5518
  %v5520 = vpop.f32.mrf.mxu0
  %v5521 = vadd.f32 %v5408, %v5520
  %v5522 = vpop.f32.mrf.mxu0
  %v5523 = vadd.f32 %v5410, %v5522
  %5524 = vmatprep.mubr.bf16.mxu0 %v2445
  %5525 = vmatmul.mubr.bf16.gmra.mxu0 %v2444
  %v5526 = vpop.f32.mrf.mxu0
  %v5527 = vadd.f32 %v5414, %v5526
  %v5528 = vpop.f32.mrf.mxu0
  %v5529 = vadd.f32 %v5416, %v5528
  %v5530 = vpop.f32.mrf.mxu0
  %v5531 = vadd.f32 %v5418, %v5530
  %v5532 = vpop.f32.mrf.mxu0
  %v5533 = vadd.f32 %v5420, %v5532
  %5534 = vdwg.mxu0
  %5535 = vmatprep.subr.bf16.mxu0 %v4354
  %5536 = vmatpush1.bf16.msra.mxu0 %v4353
  %5537 = vmatprep.subr.bf16.mxu0 %v4351
  %5538 = vmatpush1.bf16.msra.mxu0 %v4350
  %5539 = vmatprep.subr.bf16.mxu0 %v4348
  %5540 = vmatpush1.bf16.msra.mxu0 %v4347
  %5541 = vmatprep.subr.bf16.mxu0 %v4345
  %5542 = vmatpush1.bf16.msra.mxu0 %v4344
  %5543 = vmatprep.subr.bf16.mxu0 %v4342
  %5544 = vmatpush1.bf16.msra.mxu0 %v4341
  %5545 = vmatprep.subr.bf16.mxu0 %v4339
  %5546 = vmatpush1.bf16.msra.mxu0 %v4338
  %5547 = vmatprep.subr.bf16.mxu0 %v4336
  %5548 = vmatpush1.bf16.msra.mxu0 %v4335
  %5549 = vmatprep.subr.bf16.mxu0 %v4333
  %5550 = vmatpush1.bf16.msra.mxu0 %v4332
  %5551 = vmatprep.subr.bf16.mxu0 %v4378
  %5552 = vmatpush2.bf16.msra.mxu0 %v4377
  %5553 = vmatprep.subr.bf16.mxu0 %v4375
  %5554 = vmatpush2.bf16.msra.mxu0 %v4374
  %5555 = vmatprep.subr.bf16.mxu0 %v4372
  %5556 = vmatpush2.bf16.msra.mxu0 %v4371
  %5557 = vmatprep.subr.bf16.mxu0 %v4369
  %5558 = vmatpush2.bf16.msra.mxu0 %v4368
  %5559 = vmatprep.subr.bf16.mxu0 %v4366
  %5560 = vmatpush2.bf16.msra.mxu0 %v4365
  %5561 = vmatprep.subr.bf16.mxu0 %v4363
  %5562 = vmatpush2.bf16.msra.mxu0 %v4362
  %5563 = vmatprep.subr.bf16.mxu0 %v4360
  %5564 = vmatpush2.bf16.msra.mxu0 %v4359
  %5565 = vmatprep.subr.bf16.mxu0 %v4357
  %5566 = vmatpush2.bf16.msra.mxu0 %v4356
  %5567 = vmatprep.mubr.bf16.mxu0 %v2307
  %5568 = vmatmul.mubr.bf16.gmra.mxu0 %v2306
  %v5569 = vpop.f32.mrf.mxu0
  %v5570 = vadd.f32 %v5457, %v5569
  %v5571 = vpop.f32.mrf.mxu0
  %v5572 = vadd.f32 %v5459, %v5571
  %v5573 = vpop.f32.mrf.mxu0
  %v5574 = vadd.f32 %v5461, %v5573
  %v5575 = vpop.f32.mrf.mxu0
  %v5576 = vadd.f32 %v5463, %v5575
  %5577 = vmatprep.mubr.bf16.mxu0 %v2327
  %5578 = vmatmul.mubr.bf16.gmra.mxu0 %v2326
  %v5579 = vpop.f32.mrf.mxu0
  %v5580 = vadd.f32 %v5467, %v5579
  %v5581 = vpop.f32.mrf.mxu0
  %v5582 = vadd.f32 %v5469, %v5581
  %v5583 = vpop.f32.mrf.mxu0
  %v5584 = vadd.f32 %v5471, %v5583
  %v5585 = vpop.f32.mrf.mxu0
  %v5586 = vadd.f32 %v5473, %v5585
  %5587 = vmatprep.mubr.bf16.mxu0 %v2347
  %5588 = vmatmul.mubr.bf16.gmra.mxu0 %v2346
  %v5589 = vpop.f32.mrf.mxu0
  %v5590 = vadd.f32 %v5477, %v5589
  %v5591 = vpop.f32.mrf.mxu0
  %v5592 = vadd.f32 %v5479, %v5591
  %v5593 = vpop.f32.mrf.mxu0
  %v5594 = vadd.f32 %v5481, %v5593
  %v5595 = vpop.f32.mrf.mxu0
  %v5596 = vadd.f32 %v5483, %v5595
  %5597 = vmatprep.mubr.bf16.mxu0 %v2367
  %5598 = vmatmul.mubr.bf16.gmra.mxu0 %v2366
  %v5599 = vpop.f32.mrf.mxu0
  %v5600 = vadd.f32 %v5487, %v5599
  %v5601 = vpop.f32.mrf.mxu0
  %v5602 = vadd.f32 %v5489, %v5601
  %v5603 = vpop.f32.mrf.mxu0
  %v5604 = vadd.f32 %v5491, %v5603
  %v5605 = vpop.f32.mrf.mxu0
  %v5606 = vadd.f32 %v5493, %v5605
  %5607 = vmatprep.mubr.bf16.mxu0 %v2387
  %5608 = vmatmul.mubr.bf16.gmra.mxu0 %v2386
  %v5609 = vpop.f32.mrf.mxu0
  %v5610 = vadd.f32 %v5497, %v5609
  %v5611 = vpop.f32.mrf.mxu0
  %v5612 = vadd.f32 %v5499, %v5611
  %v5613 = vpop.f32.mrf.mxu0
  %v5614 = vadd.f32 %v5501, %v5613
  %v5615 = vpop.f32.mrf.mxu0
  %v5616 = vadd.f32 %v5503, %v5615
  %5617 = vmatprep.mubr.bf16.mxu0 %v2407
  %5618 = vmatmul.mubr.bf16.gmra.mxu0 %v2406
  %v5619 = vpop.f32.mrf.mxu0
  %v5620 = vadd.f32 %v5507, %v5619
  %v5621 = vpop.f32.mrf.mxu0
  %v5622 = vadd.f32 %v5509, %v5621
  %v5623 = vpop.f32.mrf.mxu0
  %v5624 = vadd.f32 %v5511, %v5623
  %v5625 = vpop.f32.mrf.mxu0
  %v5626 = vadd.f32 %v5513, %v5625
  %5627 = vmatprep.mubr.bf16.mxu0 %v2427
  %5628 = vmatmul.mubr.bf16.gmra.mxu0 %v2426
  %v5629 = vpop.f32.mrf.mxu0
  %v5630 = vadd.f32 %v5517, %v5629
  %v5631 = vpop.f32.mrf.mxu0
  %v5632 = vadd.f32 %v5519, %v5631
  %v5633 = vpop.f32.mrf.mxu0
  %v5634 = vadd.f32 %v5521, %v5633
  %v5635 = vpop.f32.mrf.mxu0
  %v5636 = vadd.f32 %v5523, %v5635
  %5637 = vmatprep.mubr.bf16.mxu0 %v2447
  %5638 = vmatmul.mubr.bf16.gmra.mxu0 %v2446
  %v5639 = vpop.f32.mrf.mxu0
  %v5640 = vadd.f32 %v5527, %v5639
  %v5641 = vpop.f32.mrf.mxu0
  %v5642 = vadd.f32 %v5529, %v5641
  %v5643 = vpop.f32.mrf.mxu0
  %v5644 = vadd.f32 %v5531, %v5643
  %v5645 = vpop.f32.mrf.mxu0
  %v5646 = vadd.f32 %v5533, %v5645
  %5647 = vdwg.mxu0
  %5648 = vmatprep.subr.bf16.mxu0 %v4402
  %5649 = vmatpush1.bf16.msra.mxu0 %v4401
  %5650 = vmatprep.subr.bf16.mxu0 %v4399
  %5651 = vmatpush1.bf16.msra.mxu0 %v4398
  %5652 = vmatprep.subr.bf16.mxu0 %v4396
  %5653 = vmatpush1.bf16.msra.mxu0 %v4395
  %5654 = vmatprep.subr.bf16.mxu0 %v4393
  %5655 = vmatpush1.bf16.msra.mxu0 %v4392
  %5656 = vmatprep.subr.bf16.mxu0 %v4390
  %5657 = vmatpush1.bf16.msra.mxu0 %v4389
  %5658 = vmatprep.subr.bf16.mxu0 %v4387
  %5659 = vmatpush1.bf16.msra.mxu0 %v4386
  %5660 = vmatprep.subr.bf16.mxu0 %v4384
  %5661 = vmatpush1.bf16.msra.mxu0 %v4383
  %5662 = vmatprep.subr.bf16.mxu0 %v4381
  %5663 = vmatpush1.bf16.msra.mxu0 %v4380
  %5664 = vmatprep.subr.bf16.mxu0 %v4426
  %5665 = vmatpush2.bf16.msra.mxu0 %v4425
  %5666 = vmatprep.subr.bf16.mxu0 %v4423
  %5667 = vmatpush2.bf16.msra.mxu0 %v4422
  %5668 = vmatprep.subr.bf16.mxu0 %v4420
  %5669 = vmatpush2.bf16.msra.mxu0 %v4419
  %5670 = vmatprep.subr.bf16.mxu0 %v4417
  %5671 = vmatpush2.bf16.msra.mxu0 %v4416
  %5672 = vmatprep.subr.bf16.mxu0 %v4414
  %5673 = vmatpush2.bf16.msra.mxu0 %v4413
  %5674 = vmatprep.subr.bf16.mxu0 %v4411
  %5675 = vmatpush2.bf16.msra.mxu0 %v4410
  %5676 = vmatprep.subr.bf16.mxu0 %v4408
  %5677 = vmatpush2.bf16.msra.mxu0 %v4407
  %5678 = vmatprep.subr.bf16.mxu0 %v4405
  %5679 = vmatpush2.bf16.msra.mxu0 %v4404
  %5680 = vmatprep.mubr.bf16.mxu0 %v2309
  %5681 = vmatmul.mubr.bf16.gmra.mxu0 %v2308
  %v5682 = vpop.f32.mrf.mxu0
  %v5683 = vadd.f32 %v5570, %v5682
  %v5684 = vpop.f32.mrf.mxu0
  %v5685 = vadd.f32 %v5572, %v5684
  %v5686 = vpop.f32.mrf.mxu0
  %v5687 = vadd.f32 %v5574, %v5686
  %v5688 = vpop.f32.mrf.mxu0
  %v5689 = vadd.f32 %v5576, %v5688
  %5690 = vmatprep.mubr.bf16.mxu0 %v2329
  %5691 = vmatmul.mubr.bf16.gmra.mxu0 %v2328
  %v5692 = vpop.f32.mrf.mxu0
  %v5693 = vadd.f32 %v5580, %v5692
  %v5694 = vpop.f32.mrf.mxu0
  %v5695 = vadd.f32 %v5582, %v5694
  %v5696 = vpop.f32.mrf.mxu0
  %v5697 = vadd.f32 %v5584, %v5696
  %v5698 = vpop.f32.mrf.mxu0
  %v5699 = vadd.f32 %v5586, %v5698
  %5700 = vmatprep.mubr.bf16.mxu0 %v2349
  %5701 = vmatmul.mubr.bf16.gmra.mxu0 %v2348
  %v5702 = vpop.f32.mrf.mxu0
  %v5703 = vadd.f32 %v5590, %v5702
  %v5704 = vpop.f32.mrf.mxu0
  %v5705 = vadd.f32 %v5592, %v5704
  %v5706 = vpop.f32.mrf.mxu0
  %v5707 = vadd.f32 %v5594, %v5706
  %v5708 = vpop.f32.mrf.mxu0
  %v5709 = vadd.f32 %v5596, %v5708
  %5710 = vmatprep.mubr.bf16.mxu0 %v2369
  %5711 = vmatmul.mubr.bf16.gmra.mxu0 %v2368
  %v5712 = vpop.f32.mrf.mxu0
  %v5713 = vadd.f32 %v5600, %v5712
  %v5714 = vpop.f32.mrf.mxu0
  %v5715 = vadd.f32 %v5602, %v5714
  %v5716 = vpop.f32.mrf.mxu0
  %v5717 = vadd.f32 %v5604, %v5716
  %v5718 = vpop.f32.mrf.mxu0
  %v5719 = vadd.f32 %v5606, %v5718
  %5720 = vmatprep.mubr.bf16.mxu0 %v2389
  %5721 = vmatmul.mubr.bf16.gmra.mxu0 %v2388
  %v5722 = vpop.f32.mrf.mxu0
  %v5723 = vadd.f32 %v5610, %v5722
  %v5724 = vpop.f32.mrf.mxu0
  %v5725 = vadd.f32 %v5612, %v5724
  %v5726 = vpop.f32.mrf.mxu0
  %v5727 = vadd.f32 %v5614, %v5726
  %v5728 = vpop.f32.mrf.mxu0
  %v5729 = vadd.f32 %v5616, %v5728
  %5730 = vmatprep.mubr.bf16.mxu0 %v2409
  %5731 = vmatmul.mubr.bf16.gmra.mxu0 %v2408
  %v5732 = vpop.f32.mrf.mxu0
  %v5733 = vadd.f32 %v5620, %v5732
  %v5734 = vpop.f32.mrf.mxu0
  %v5735 = vadd.f32 %v5622, %v5734
  %v5736 = vpop.f32.mrf.mxu0
  %v5737 = vadd.f32 %v5624, %v5736
  %v5738 = vpop.f32.mrf.mxu0
  %v5739 = vadd.f32 %v5626, %v5738
  %5740 = vmatprep.mubr.bf16.mxu0 %v2429
  %5741 = vmatmul.mubr.bf16.gmra.mxu0 %v2428
  %v5742 = vpop.f32.mrf.mxu0
  %v5743 = vadd.f32 %v5630, %v5742
  %v5744 = vpop.f32.mrf.mxu0
  %v5745 = vadd.f32 %v5632, %v5744
  %v5746 = vpop.f32.mrf.mxu0
  %v5747 = vadd.f32 %v5634, %v5746
  %v5748 = vpop.f32.mrf.mxu0
  %v5749 = vadd.f32 %v5636, %v5748
  %5750 = vmatprep.mubr.bf16.mxu0 %v2449
  %5751 = vmatmul.mubr.bf16.gmra.mxu0 %v2448
  %v5752 = vpop.f32.mrf.mxu0
  %v5753 = vadd.f32 %v5640, %v5752
  %v5754 = vpop.f32.mrf.mxu0
  %v5755 = vadd.f32 %v5642, %v5754
  %v5756 = vpop.f32.mrf.mxu0
  %v5757 = vadd.f32 %v5644, %v5756
  %v5758 = vpop.f32.mrf.mxu0
  %v5759 = vadd.f32 %v5646, %v5758
  %5760 = vdwg.mxu0
  %5761 = vmatprep.subr.bf16.mxu0 %v4450
  %5762 = vmatpush1.bf16.msra.mxu0 %v4449
  %5763 = vmatprep.subr.bf16.mxu0 %v4447
  %5764 = vmatpush1.bf16.msra.mxu0 %v4446
  %5765 = vmatprep.subr.bf16.mxu0 %v4444
  %5766 = vmatpush1.bf16.msra.mxu0 %v4443
  %5767 = vmatprep.subr.bf16.mxu0 %v4441
  %5768 = vmatpush1.bf16.msra.mxu0 %v4440
  %5769 = vmatprep.subr.bf16.mxu0 %v4438
  %5770 = vmatpush1.bf16.msra.mxu0 %v4437
  %5771 = vmatprep.subr.bf16.mxu0 %v4435
  %5772 = vmatpush1.bf16.msra.mxu0 %v4434
  %5773 = vmatprep.subr.bf16.mxu0 %v4432
  %5774 = vmatpush1.bf16.msra.mxu0 %v4431
  %5775 = vmatprep.subr.bf16.mxu0 %v4429
  %5776 = vmatpush1.bf16.msra.mxu0 %v4428
  %5777 = vmatprep.subr.bf16.mxu0 %v4474
  %5778 = vmatpush2.bf16.msra.mxu0 %v4473
  %5779 = vmatprep.subr.bf16.mxu0 %v4471
  %5780 = vmatpush2.bf16.msra.mxu0 %v4470
  %5781 = vmatprep.subr.bf16.mxu0 %v4468
  %5782 = vmatpush2.bf16.msra.mxu0 %v4467
  %5783 = vmatprep.subr.bf16.mxu0 %v4465
  %5784 = vmatpush2.bf16.msra.mxu0 %v4464
  %5785 = vmatprep.subr.bf16.mxu0 %v4462
  %5786 = vmatpush2.bf16.msra.mxu0 %v4461
  %5787 = vmatprep.subr.bf16.mxu0 %v4459
  %5788 = vmatpush2.bf16.msra.mxu0 %v4458
  %5789 = vmatprep.subr.bf16.mxu0 %v4456
  %5790 = vmatpush2.bf16.msra.mxu0 %v4455
  %5791 = vmatprep.subr.bf16.mxu0 %v4453
  %5792 = vmatpush2.bf16.msra.mxu0 %v4452
  %5793 = vmatprep.mubr.bf16.mxu0 %v2311
  %5794 = vmatmul.mubr.bf16.gmra.mxu0 %v2310
  %v5795 = vpop.f32.mrf.mxu0
  %v5796 = vadd.f32 %v5683, %v5795
  %v5797 = vpop.f32.mrf.mxu0
  %v5798 = vadd.f32 %v5685, %v5797
  %v5799 = vpop.f32.mrf.mxu0
  %v5800 = vadd.f32 %v5687, %v5799
  %v5801 = vpop.f32.mrf.mxu0
  %v5802 = vadd.f32 %v5689, %v5801
  %5803 = vmatprep.mubr.bf16.mxu0 %v2331
  %5804 = vmatmul.mubr.bf16.gmra.mxu0 %v2330
  %v5805 = vpop.f32.mrf.mxu0
  %v5806 = vadd.f32 %v5693, %v5805
  %v5807 = vpop.f32.mrf.mxu0
  %v5808 = vadd.f32 %v5695, %v5807
  %v5809 = vpop.f32.mrf.mxu0
  %v5810 = vadd.f32 %v5697, %v5809
  %v5811 = vpop.f32.mrf.mxu0
  %v5812 = vadd.f32 %v5699, %v5811
  %5813 = vmatprep.mubr.bf16.mxu0 %v2351
  %5814 = vmatmul.mubr.bf16.gmra.mxu0 %v2350
  %v5815 = vpop.f32.mrf.mxu0
  %v5816 = vadd.f32 %v5703, %v5815
  %v5817 = vpop.f32.mrf.mxu0
  %v5818 = vadd.f32 %v5705, %v5817
  %v5819 = vpop.f32.mrf.mxu0
  %v5820 = vadd.f32 %v5707, %v5819
  %v5821 = vpop.f32.mrf.mxu0
  %v5822 = vadd.f32 %v5709, %v5821
  %5823 = vmatprep.mubr.bf16.mxu0 %v2371
  %5824 = vmatmul.mubr.bf16.gmra.mxu0 %v2370
  %v5825 = vpop.f32.mrf.mxu0
  %v5826 = vadd.f32 %v5713, %v5825
  %v5827 = vpop.f32.mrf.mxu0
  %v5828 = vadd.f32 %v5715, %v5827
  %v5829 = vpop.f32.mrf.mxu0
  %v5830 = vadd.f32 %v5717, %v5829
  %v5831 = vpop.f32.mrf.mxu0
  %v5832 = vadd.f32 %v5719, %v5831
  %5833 = vmatprep.mubr.bf16.mxu0 %v2391
  %5834 = vmatmul.mubr.bf16.gmra.mxu0 %v2390
  %v5835 = vpop.f32.mrf.mxu0
  %v5836 = vadd.f32 %v5723, %v5835
  %v5837 = vpop.f32.mrf.mxu0
  %v5838 = vadd.f32 %v5725, %v5837
  %v5839 = vpop.f32.mrf.mxu0
  %v5840 = vadd.f32 %v5727, %v5839
  %v5841 = vpop.f32.mrf.mxu0
  %v5842 = vadd.f32 %v5729, %v5841
  %5843 = vmatprep.mubr.bf16.mxu0 %v2411
  %5844 = vmatmul.mubr.bf16.gmra.mxu0 %v2410
  %v5845 = vpop.f32.mrf.mxu0
  %v5846 = vadd.f32 %v5733, %v5845
  %v5847 = vpop.f32.mrf.mxu0
  %v5848 = vadd.f32 %v5735, %v5847
  %v5849 = vpop.f32.mrf.mxu0
  %v5850 = vadd.f32 %v5737, %v5849
  %v5851 = vpop.f32.mrf.mxu0
  %v5852 = vadd.f32 %v5739, %v5851
  %5853 = vmatprep.mubr.bf16.mxu0 %v2431
  %5854 = vmatmul.mubr.bf16.gmra.mxu0 %v2430
  %v5855 = vpop.f32.mrf.mxu0
  %v5856 = vadd.f32 %v5743, %v5855
  %v5857 = vpop.f32.mrf.mxu0
  %v5858 = vadd.f32 %v5745, %v5857
  %v5859 = vpop.f32.mrf.mxu0
  %v5860 = vadd.f32 %v5747, %v5859
  %v5861 = vpop.f32.mrf.mxu0
  %v5862 = vadd.f32 %v5749, %v5861
  %5863 = vmatprep.mubr.bf16.mxu0 %v2451
  %5864 = vmatmul.mubr.bf16.gmra.mxu0 %v2450
  %v5865 = vpop.f32.mrf.mxu0
  %v5866 = vadd.f32 %v5753, %v5865
  %v5867 = vpop.f32.mrf.mxu0
  %v5868 = vadd.f32 %v5755, %v5867
  %v5869 = vpop.f32.mrf.mxu0
  %v5870 = vadd.f32 %v5757, %v5869
  %v5871 = vpop.f32.mrf.mxu0
  %v5872 = vadd.f32 %v5759, %v5871
  %5873 = vdwg.mxu0
  %5874 = vmatprep.subr.bf16.mxu0 %v4498
  %5875 = vmatpush1.bf16.msra.mxu0 %v4497
  %5876 = vmatprep.subr.bf16.mxu0 %v4495
  %5877 = vmatpush1.bf16.msra.mxu0 %v4494
  %5878 = vmatprep.subr.bf16.mxu0 %v4492
  %5879 = vmatpush1.bf16.msra.mxu0 %v4491
  %5880 = vmatprep.subr.bf16.mxu0 %v4489
  %5881 = vmatpush1.bf16.msra.mxu0 %v4488
  %5882 = vmatprep.subr.bf16.mxu0 %v4486
  %5883 = vmatpush1.bf16.msra.mxu0 %v4485
  %5884 = vmatprep.subr.bf16.mxu0 %v4483
  %5885 = vmatpush1.bf16.msra.mxu0 %v4482
  %5886 = vmatprep.subr.bf16.mxu0 %v4480
  %5887 = vmatpush1.bf16.msra.mxu0 %v4479
  %5888 = vmatprep.subr.bf16.mxu0 %v4477
  %5889 = vmatpush1.bf16.msra.mxu0 %v4476
  %5890 = vmatprep.subr.bf16.mxu0 %v4522
  %5891 = vmatpush2.bf16.msra.mxu0 %v4521
  %5892 = vmatprep.subr.bf16.mxu0 %v4519
  %5893 = vmatpush2.bf16.msra.mxu0 %v4518
  %5894 = vmatprep.subr.bf16.mxu0 %v4516
  %5895 = vmatpush2.bf16.msra.mxu0 %v4515
  %5896 = vmatprep.subr.bf16.mxu0 %v4513
  %5897 = vmatpush2.bf16.msra.mxu0 %v4512
  %5898 = vmatprep.subr.bf16.mxu0 %v4510
  %5899 = vmatpush2.bf16.msra.mxu0 %v4509
  %5900 = vmatprep.subr.bf16.mxu0 %v4507
  %5901 = vmatpush2.bf16.msra.mxu0 %v4506
  %5902 = vmatprep.subr.bf16.mxu0 %v4504
  %5903 = vmatpush2.bf16.msra.mxu0 %v4503
  %5904 = vmatprep.subr.bf16.mxu0 %v4501
  %5905 = vmatpush2.bf16.msra.mxu0 %v4500
  %5906 = vmatprep.mubr.bf16.mxu0 %v2313
  %5907 = vmatmul.mubr.bf16.gmra.mxu0 %v2312
  %v5908 = vpop.f32.mrf.mxu0
  %v5909 = vadd.f32 %v5796, %v5908
  %v5910 = vpop.f32.mrf.mxu0
  %v5911 = vadd.f32 %v5798, %v5910
  %v5912 = vpop.f32.mrf.mxu0
  %v5913 = vadd.f32 %v5800, %v5912
  %v5914 = vpop.f32.mrf.mxu0
  %v5915 = vadd.f32 %v5802, %v5914
  %5916 = vmatprep.mubr.bf16.mxu0 %v2333
  %5917 = vmatmul.mubr.bf16.gmra.mxu0 %v2332
  %v5918 = vpop.f32.mrf.mxu0
  %v5919 = vadd.f32 %v5806, %v5918
  %v5920 = vpop.f32.mrf.mxu0
  %v5921 = vadd.f32 %v5808, %v5920
  %v5922 = vpop.f32.mrf.mxu0
  %v5923 = vadd.f32 %v5810, %v5922
  %v5924 = vpop.f32.mrf.mxu0
  %v5925 = vadd.f32 %v5812, %v5924
  %5926 = vmatprep.mubr.bf16.mxu0 %v2353
  %5927 = vmatmul.mubr.bf16.gmra.mxu0 %v2352
  %v5928 = vpop.f32.mrf.mxu0
  %v5929 = vadd.f32 %v5816, %v5928
  %v5930 = vpop.f32.mrf.mxu0
  %v5931 = vadd.f32 %v5818, %v5930
  %v5932 = vpop.f32.mrf.mxu0
  %v5933 = vadd.f32 %v5820, %v5932
  %v5934 = vpop.f32.mrf.mxu0
  %v5935 = vadd.f32 %v5822, %v5934
  %5936 = vmatprep.mubr.bf16.mxu0 %v2373
  %5937 = vmatmul.mubr.bf16.gmra.mxu0 %v2372
  %v5938 = vpop.f32.mrf.mxu0
  %v5939 = vadd.f32 %v5826, %v5938
  %v5940 = vpop.f32.mrf.mxu0
  %v5941 = vadd.f32 %v5828, %v5940
  %v5942 = vpop.f32.mrf.mxu0
  %v5943 = vadd.f32 %v5830, %v5942
  %v5944 = vpop.f32.mrf.mxu0
  %v5945 = vadd.f32 %v5832, %v5944
  %5946 = vmatprep.mubr.bf16.mxu0 %v2393
  %5947 = vmatmul.mubr.bf16.gmra.mxu0 %v2392
  %v5948 = vpop.f32.mrf.mxu0
  %v5949 = vadd.f32 %v5836, %v5948
  %v5950 = vpop.f32.mrf.mxu0
  %v5951 = vadd.f32 %v5838, %v5950
  %v5952 = vpop.f32.mrf.mxu0
  %v5953 = vadd.f32 %v5840, %v5952
  %v5954 = vpop.f32.mrf.mxu0
  %v5955 = vadd.f32 %v5842, %v5954
  %5956 = vmatprep.mubr.bf16.mxu0 %v2413
  %5957 = vmatmul.mubr.bf16.gmra.mxu0 %v2412
  %v5958 = vpop.f32.mrf.mxu0
  %v5959 = vadd.f32 %v5846, %v5958
  %v5960 = vpop.f32.mrf.mxu0
  %v5961 = vadd.f32 %v5848, %v5960
  %v5962 = vpop.f32.mrf.mxu0
  %v5963 = vadd.f32 %v5850, %v5962
  %v5964 = vpop.f32.mrf.mxu0
  %v5965 = vadd.f32 %v5852, %v5964
  %5966 = vmatprep.mubr.bf16.mxu0 %v2433
  %5967 = vmatmul.mubr.bf16.gmra.mxu0 %v2432
  %v5968 = vpop.f32.mrf.mxu0
  %v5969 = vadd.f32 %v5856, %v5968
  %v5970 = vpop.f32.mrf.mxu0
  %v5971 = vadd.f32 %v5858, %v5970
  %v5972 = vpop.f32.mrf.mxu0
  %v5973 = vadd.f32 %v5860, %v5972
  %v5974 = vpop.f32.mrf.mxu0
  %v5975 = vadd.f32 %v5862, %v5974
  %5976 = vmatprep.mubr.bf16.mxu0 %v2453
  %5977 = vmatmul.mubr.bf16.gmra.mxu0 %v2452
  %v5978 = vpop.f32.mrf.mxu0
  %v5979 = vadd.f32 %v5866, %v5978
  %v5980 = vpop.f32.mrf.mxu0
  %v5981 = vadd.f32 %v5868, %v5980
  %v5982 = vpop.f32.mrf.mxu0
  %v5983 = vadd.f32 %v5870, %v5982
  %v5984 = vpop.f32.mrf.mxu0
  %v5985 = vadd.f32 %v5872, %v5984
  %5986 = vdwg.mxu0
  %5987 = vmatprep.subr.bf16.mxu0 %v4546
  %5988 = vmatpush1.bf16.msra.mxu0 %v4545
  %5989 = vmatprep.subr.bf16.mxu0 %v4543
  %5990 = vmatpush1.bf16.msra.mxu0 %v4542
  %5991 = vmatprep.subr.bf16.mxu0 %v4540
  %5992 = vmatpush1.bf16.msra.mxu0 %v4539
  %5993 = vmatprep.subr.bf16.mxu0 %v4537
  %5994 = vmatpush1.bf16.msra.mxu0 %v4536
  %5995 = vmatprep.subr.bf16.mxu0 %v4534
  %5996 = vmatpush1.bf16.msra.mxu0 %v4533
  %5997 = vmatprep.subr.bf16.mxu0 %v4531
  %5998 = vmatpush1.bf16.msra.mxu0 %v4530
  %5999 = vmatprep.subr.bf16.mxu0 %v4528
  %6000 = vmatpush1.bf16.msra.mxu0 %v4527
  %6001 = vmatprep.subr.bf16.mxu0 %v4525
  %6002 = vmatpush1.bf16.msra.mxu0 %v4524
  %6003 = vmatprep.subr.bf16.mxu0 %v4570
  %6004 = vmatpush2.bf16.msra.mxu0 %v4569
  %6005 = vmatprep.subr.bf16.mxu0 %v4567
  %6006 = vmatpush2.bf16.msra.mxu0 %v4566
  %6007 = vmatprep.subr.bf16.mxu0 %v4564
  %6008 = vmatpush2.bf16.msra.mxu0 %v4563
  %6009 = vmatprep.subr.bf16.mxu0 %v4561
  %6010 = vmatpush2.bf16.msra.mxu0 %v4560
  %6011 = vmatprep.subr.bf16.mxu0 %v4558
  %6012 = vmatpush2.bf16.msra.mxu0 %v4557
  %6013 = vmatprep.subr.bf16.mxu0 %v4555
  %6014 = vmatpush2.bf16.msra.mxu0 %v4554
  %6015 = vmatprep.subr.bf16.mxu0 %v4552
  %6016 = vmatpush2.bf16.msra.mxu0 %v4551
  %6017 = vmatprep.subr.bf16.mxu0 %v4549
  %6018 = vmatpush2.bf16.msra.mxu0 %v4548
  %6019 = vmatprep.mubr.bf16.mxu0 %v2315
  %6020 = vmatmul.mubr.bf16.gmra.mxu0 %v2314
  %v6021 = vpop.f32.mrf.mxu0
  %v6022 = vadd.f32 %v5909, %v6021
  %v6023 = vpop.f32.mrf.mxu0
  %v6024 = vadd.f32 %v5911, %v6023
  %v6025 = vpop.f32.mrf.mxu0
  %v6026 = vadd.f32 %v5913, %v6025
  %v6027 = vpop.f32.mrf.mxu0
  %v6028 = vadd.f32 %v5915, %v6027
  %6029 = vmatprep.mubr.bf16.mxu0 %v2335
  %6030 = vmatmul.mubr.bf16.gmra.mxu0 %v2334
  %v6031 = vpop.f32.mrf.mxu0
  %v6032 = vadd.f32 %v5919, %v6031
  %v6033 = vpop.f32.mrf.mxu0
  %v6034 = vadd.f32 %v5921, %v6033
  %v6035 = vpop.f32.mrf.mxu0
  %v6036 = vadd.f32 %v5923, %v6035
  %v6037 = vpop.f32.mrf.mxu0
  %v6038 = vadd.f32 %v5925, %v6037
  %6039 = vmatprep.mubr.bf16.mxu0 %v2355
  %6040 = vmatmul.mubr.bf16.gmra.mxu0 %v2354
  %v6041 = vpop.f32.mrf.mxu0
  %v6042 = vadd.f32 %v5929, %v6041
  %v6043 = vpop.f32.mrf.mxu0
  %v6044 = vadd.f32 %v5931, %v6043
  %v6045 = vpop.f32.mrf.mxu0
  %v6046 = vadd.f32 %v5933, %v6045
  %v6047 = vpop.f32.mrf.mxu0
  %v6048 = vadd.f32 %v5935, %v6047
  %6049 = vmatprep.mubr.bf16.mxu0 %v2375
  %6050 = vmatmul.mubr.bf16.gmra.mxu0 %v2374
  %v6051 = vpop.f32.mrf.mxu0
  %v6052 = vadd.f32 %v5939, %v6051
  %v6053 = vpop.f32.mrf.mxu0
  %v6054 = vadd.f32 %v5941, %v6053
  %v6055 = vpop.f32.mrf.mxu0
  %v6056 = vadd.f32 %v5943, %v6055
  %v6057 = vpop.f32.mrf.mxu0
  %v6058 = vadd.f32 %v5945, %v6057
  %6059 = vmatprep.mubr.bf16.mxu0 %v2395
  %6060 = vmatmul.mubr.bf16.gmra.mxu0 %v2394
  %v6061 = vpop.f32.mrf.mxu0
  %v6062 = vadd.f32 %v5949, %v6061
  %v6063 = vpop.f32.mrf.mxu0
  %v6064 = vadd.f32 %v5951, %v6063
  %v6065 = vpop.f32.mrf.mxu0
  %v6066 = vadd.f32 %v5953, %v6065
  %v6067 = vpop.f32.mrf.mxu0
  %v6068 = vadd.f32 %v5955, %v6067
  %6069 = vmatprep.mubr.bf16.mxu0 %v2415
  %6070 = vmatmul.mubr.bf16.gmra.mxu0 %v2414
  %v6071 = vpop.f32.mrf.mxu0
  %v6072 = vadd.f32 %v5959, %v6071
  %v6073 = vpop.f32.mrf.mxu0
  %v6074 = vadd.f32 %v5961, %v6073
  %v6075 = vpop.f32.mrf.mxu0
  %v6076 = vadd.f32 %v5963, %v6075
  %v6077 = vpop.f32.mrf.mxu0
  %v6078 = vadd.f32 %v5965, %v6077
  %6079 = vmatprep.mubr.bf16.mxu0 %v2435
  %6080 = vmatmul.mubr.bf16.gmra.mxu0 %v2434
  %v6081 = vpop.f32.mrf.mxu0
  %v6082 = vadd.f32 %v5969, %v6081
  %v6083 = vpop.f32.mrf.mxu0
  %v6084 = vadd.f32 %v5971, %v6083
  %v6085 = vpop.f32.mrf.mxu0
  %v6086 = vadd.f32 %v5973, %v6085
  %v6087 = vpop.f32.mrf.mxu0
  %v6088 = vadd.f32 %v5975, %v6087
  %6089 = vmatprep.mubr.bf16.mxu0 %v2455
  %6090 = vmatmul.mubr.bf16.gmra.mxu0 %v2454
  %v6091 = vpop.f32.mrf.mxu0
  %v6092 = vadd.f32 %v5979, %v6091
  %v6093 = vpop.f32.mrf.mxu0
  %v6094 = vadd.f32 %v5981, %v6093
  %v6095 = vpop.f32.mrf.mxu0
  %v6096 = vadd.f32 %v5983, %v6095
  %v6097 = vpop.f32.mrf.mxu0
  %v6098 = vadd.f32 %v5985, %v6097
  %6099 = vdwg.mxu0
  %6100 = vmatprep.subr.bf16.mxu0 %v4594
  %6101 = vmatpush1.bf16.msra.mxu0 %v4593
  %6102 = vmatprep.subr.bf16.mxu0 %v4591
  %6103 = vmatpush1.bf16.msra.mxu0 %v4590
  %6104 = vmatprep.subr.bf16.mxu0 %v4588
  %6105 = vmatpush1.bf16.msra.mxu0 %v4587
  %6106 = vmatprep.subr.bf16.mxu0 %v4585
  %6107 = vmatpush1.bf16.msra.mxu0 %v4584
  %6108 = vmatprep.subr.bf16.mxu0 %v4582
  %6109 = vmatpush1.bf16.msra.mxu0 %v4581
  %6110 = vmatprep.subr.bf16.mxu0 %v4579
  %6111 = vmatpush1.bf16.msra.mxu0 %v4578
  %6112 = vmatprep.subr.bf16.mxu0 %v4576
  %6113 = vmatpush1.bf16.msra.mxu0 %v4575
  %6114 = vmatprep.subr.bf16.mxu0 %v4573
  %6115 = vmatpush1.bf16.msra.mxu0 %v4572
  %6116 = vmatprep.subr.bf16.mxu0 0
  %6117 = vmatpush2.bf16.msra.mxu0 0
  %6118 = vmatprep.subr.bf16.mxu0 0
  %6119 = vmatpush2.bf16.msra.mxu0 0
  %6120 = vmatprep.subr.bf16.mxu0 0
  %6121 = vmatpush2.bf16.msra.mxu0 0
  %6122 = vmatprep.subr.bf16.mxu0 0
  %6123 = vmatpush2.bf16.msra.mxu0 0
  %6124 = vmatprep.subr.bf16.mxu0 0
  %6125 = vmatpush2.bf16.msra.mxu0 0
  %6126 = vmatprep.subr.bf16.mxu0 0
  %6127 = vmatpush2.bf16.msra.mxu0 0
  %6128 = vmatprep.subr.bf16.mxu0 0
  %6129 = vmatpush2.bf16.msra.mxu0 0
  %6130 = vmatprep.subr.bf16.mxu0 %v4597
  %6131 = vmatpush2.bf16.msra.mxu0 %v4596
  %6132 = vmatprep.mubr.bf16.mxu0 %v5060
  %6133 = vmatmul.mubr.bf16.gmra.mxu0 %v2316
  %v6134 = vpop.f32.mrf.mxu0
  %v6135 = vadd.f32 %v6022, %v6134
  %v6136 = vpop.f32.mrf.mxu0
  %v6137 = vadd.f32 %v6024, %v6136
  %v6138 = vpop.f32.mrf.mxu0
  %v6139 = vadd.f32 %v6026, %v6138
  %v6140 = vpop.f32.mrf.mxu0
  %v6141 = vadd.f32 %v6028, %v6140
  %6142 = vmatprep.mubr.bf16.mxu0 %v5063
  %6143 = vmatmul.mubr.bf16.gmra.mxu0 %v2336
  %v6144 = vpop.f32.mrf.mxu0
  %v6145 = vadd.f32 %v6032, %v6144
  %v6146 = vpop.f32.mrf.mxu0
  %v6147 = vadd.f32 %v6034, %v6146
  %v6148 = vpop.f32.mrf.mxu0
  %v6149 = vadd.f32 %v6036, %v6148
  %v6150 = vpop.f32.mrf.mxu0
  %v6151 = vadd.f32 %v6038, %v6150
  %6152 = vmatprep.mubr.bf16.mxu0 %v5066
  %6153 = vmatmul.mubr.bf16.gmra.mxu0 %v2356
  %v6154 = vpop.f32.mrf.mxu0
  %v6155 = vadd.f32 %v6042, %v6154
  %v6156 = vpop.f32.mrf.mxu0
  %v6157 = vadd.f32 %v6044, %v6156
  %v6158 = vpop.f32.mrf.mxu0
  %v6159 = vadd.f32 %v6046, %v6158
  %v6160 = vpop.f32.mrf.mxu0
  %v6161 = vadd.f32 %v6048, %v6160
  %6162 = vmatprep.mubr.bf16.mxu0 %v5069
  %6163 = vmatmul.mubr.bf16.gmra.mxu0 %v2376
  %v6164 = vpop.f32.mrf.mxu0
  %v6165 = vadd.f32 %v6052, %v6164
  %v6166 = vpop.f32.mrf.mxu0
  %v6167 = vadd.f32 %v6054, %v6166
  %v6168 = vpop.f32.mrf.mxu0
  %v6169 = vadd.f32 %v6056, %v6168
  %v6170 = vpop.f32.mrf.mxu0
  %v6171 = vadd.f32 %v6058, %v6170
  %6172 = vmatprep.mubr.bf16.mxu0 %v5072
  %6173 = vmatmul.mubr.bf16.gmra.mxu0 %v2396
  %v6174 = vpop.f32.mrf.mxu0
  %v6175 = vadd.f32 %v6062, %v6174
  %v6176 = vpop.f32.mrf.mxu0
  %v6177 = vadd.f32 %v6064, %v6176
  %v6178 = vpop.f32.mrf.mxu0
  %v6179 = vadd.f32 %v6066, %v6178
  %v6180 = vpop.f32.mrf.mxu0
  %v6181 = vadd.f32 %v6068, %v6180
  %6182 = vmatprep.mubr.bf16.mxu0 %v5075
  %6183 = vmatmul.mubr.bf16.gmra.mxu0 %v2416
  %v6184 = vpop.f32.mrf.mxu0
  %v6185 = vadd.f32 %v6072, %v6184
  %v6186 = vpop.f32.mrf.mxu0
  %v6187 = vadd.f32 %v6074, %v6186
  %v6188 = vpop.f32.mrf.mxu0
  %v6189 = vadd.f32 %v6076, %v6188
  %v6190 = vpop.f32.mrf.mxu0
  %v6191 = vadd.f32 %v6078, %v6190
  %6192 = vmatprep.mubr.bf16.mxu0 %v5078
  %6193 = vmatmul.mubr.bf16.gmra.mxu0 %v2436
  %v6194 = vpop.f32.mrf.mxu0
  %v6195 = vadd.f32 %v6082, %v6194
  %v6196 = vpop.f32.mrf.mxu0
  %v6197 = vadd.f32 %v6084, %v6196
  %v6198 = vpop.f32.mrf.mxu0
  %v6199 = vadd.f32 %v6086, %v6198
  %v6200 = vpop.f32.mrf.mxu0
  %v6201 = vadd.f32 %v6088, %v6200
  %6202 = vmatprep.mubr.bf16.mxu0 %v5081
  %6203 = vmatmul.mubr.bf16.gmra.mxu0 %v2456
  %v6204 = vpop.f32.mrf.mxu0
  %v6205 = vadd.f32 %v6092, %v6204
  %v6206 = vpop.f32.mrf.mxu0
  %v6207 = vadd.f32 %v6094, %v6206
  %v6208 = vpop.f32.mrf.mxu0
  %v6209 = vadd.f32 %v6096, %v6208
  %v6210 = vpop.f32.mrf.mxu0
  %v6211 = vadd.f32 %v6098, %v6210
  %6212 = vdwg.mxu0
  %6213 = vmatprep.subr.bf16.mxu0 0
  %6214 = vmatpush1.bf16.msra.mxu0 %v4163
  %6215 = vmatprep.subr.bf16.mxu0 0
  %6216 = vmatpush1.bf16.msra.mxu0 %v4160
  %6217 = vmatprep.subr.bf16.mxu0 0
  %6218 = vmatpush1.bf16.msra.mxu0 %v4157
  %6219 = vmatprep.subr.bf16.mxu0 0
  %6220 = vmatpush1.bf16.msra.mxu0 %v4154
  %6221 = vmatprep.subr.bf16.mxu0 0
  %6222 = vmatpush1.bf16.msra.mxu0 %v4151
  %6223 = vmatprep.subr.bf16.mxu0 0
  %6224 = vmatpush1.bf16.msra.mxu0 %v4148
  %6225 = vmatprep.subr.bf16.mxu0 0
  %6226 = vmatpush1.bf16.msra.mxu0 %v4145
  %6227 = vmatprep.subr.bf16.mxu0 0
  %6228 = vmatpush1.bf16.msra.mxu0 %v4142
  %6229 = vmatprep.subr.bf16.mxu0 0
  %6230 = vmatpush2.bf16.msra.mxu0 %v4187
  %6231 = vmatprep.subr.bf16.mxu0 0
  %6232 = vmatpush2.bf16.msra.mxu0 %v4184
  %6233 = vmatprep.subr.bf16.mxu0 0
  %6234 = vmatpush2.bf16.msra.mxu0 %v4181
  %6235 = vmatprep.subr.bf16.mxu0 0
  %6236 = vmatpush2.bf16.msra.mxu0 %v4178
  %6237 = vmatprep.subr.bf16.mxu0 0
  %6238 = vmatpush2.bf16.msra.mxu0 %v4175
  %6239 = vmatprep.subr.bf16.mxu0 0
  %6240 = vmatpush2.bf16.msra.mxu0 %v4172
  %6241 = vmatprep.subr.bf16.mxu0 0
  %6242 = vmatpush2.bf16.msra.mxu0 %v4169
  %6243 = vmatprep.subr.bf16.mxu0 0
  %6244 = vmatpush2.bf16.msra.mxu0 %v4166
  %6245 = vmatprep.mubr.bf16.mxu0 %v2299
  %6246 = vmatmul.mubr.bf16.gmra.mxu0 %v2298
  %v6247 = vpop.f32.mrf.mxu0
  %v6248 = vadd.f32 %v1814, %v6247
  %v6249 = vpop.f32.mrf.mxu0
  %v6250 = vpop.f32.mrf.mxu0
  %v6251 = vadd.f32 %v1814, %v6250
  %v6252 = vpop.f32.mrf.mxu0
  %6253 = vmatprep.mubr.bf16.mxu0 %v2319
  %6254 = vmatmul.mubr.bf16.gmra.mxu0 %v2318
  %v6255 = vpop.f32.mrf.mxu0
  %v6256 = vadd.f32 %v1814, %v6255
  %v6257 = vpop.f32.mrf.mxu0
  %v6258 = vpop.f32.mrf.mxu0
  %v6259 = vadd.f32 %v1814, %v6258
  %v6260 = vpop.f32.mrf.mxu0
  %6261 = vmatprep.mubr.bf16.mxu0 %v2339
  %6262 = vmatmul.mubr.bf16.gmra.mxu0 %v2338
  %v6263 = vpop.f32.mrf.mxu0
  %v6264 = vadd.f32 %v1814, %v6263
  %v6265 = vpop.f32.mrf.mxu0
  %v6266 = vpop.f32.mrf.mxu0
  %v6267 = vadd.f32 %v1814, %v6266
  %v6268 = vpop.f32.mrf.mxu0
  %6269 = vmatprep.mubr.bf16.mxu0 %v2359
  %6270 = vmatmul.mubr.bf16.gmra.mxu0 %v2358
  %v6271 = vpop.f32.mrf.mxu0
  %v6272 = vadd.f32 %v1814, %v6271
  %v6273 = vpop.f32.mrf.mxu0
  %v6274 = vpop.f32.mrf.mxu0
  %v6275 = vadd.f32 %v1814, %v6274
  %v6276 = vpop.f32.mrf.mxu0
  %6277 = vmatprep.mubr.bf16.mxu0 %v2379
  %6278 = vmatmul.mubr.bf16.gmra.mxu0 %v2378
  %v6279 = vpop.f32.mrf.mxu0
  %v6280 = vadd.f32 %v1814, %v6279
  %v6281 = vpop.f32.mrf.mxu0
  %v6282 = vpop.f32.mrf.mxu0
  %v6283 = vadd.f32 %v1814, %v6282
  %v6284 = vpop.f32.mrf.mxu0
  %6285 = vmatprep.mubr.bf16.mxu0 %v2399
  %6286 = vmatmul.mubr.bf16.gmra.mxu0 %v2398
  %v6287 = vpop.f32.mrf.mxu0
  %v6288 = vadd.f32 %v1814, %v6287
  %v6289 = vpop.f32.mrf.mxu0
  %v6290 = vpop.f32.mrf.mxu0
  %v6291 = vadd.f32 %v1814, %v6290
  %v6292 = vpop.f32.mrf.mxu0
  %6293 = vmatprep.mubr.bf16.mxu0 %v2419
  %6294 = vmatmul.mubr.bf16.gmra.mxu0 %v2418
  %v6295 = vpop.f32.mrf.mxu0
  %v6296 = vadd.f32 %v1814, %v6295
  %v6297 = vpop.f32.mrf.mxu0
  %v6298 = vpop.f32.mrf.mxu0
  %v6299 = vadd.f32 %v1814, %v6298
  %v6300 = vpop.f32.mrf.mxu0
  %6301 = vmatprep.mubr.bf16.mxu0 %v2439
  %6302 = vmatmul.mubr.bf16.gmra.mxu0 %v2438
  %v6303 = vpop.f32.mrf.mxu0
  %v6304 = vadd.f32 %v1814, %v6303
  %v6305 = vpop.f32.mrf.mxu0
  %v6306 = vpop.f32.mrf.mxu0
  %v6307 = vadd.f32 %v1814, %v6306
  %v6308 = vpop.f32.mrf.mxu0
  %6309 = vdwg.mxu0
  %6310 = vmatprep.subr.bf16.mxu0 0
  %6311 = vmatpush1.bf16.msra.mxu0 %v4211
  %6312 = vmatprep.subr.bf16.mxu0 0
  %6313 = vmatpush1.bf16.msra.mxu0 %v4208
  %6314 = vmatprep.subr.bf16.mxu0 0
  %6315 = vmatpush1.bf16.msra.mxu0 %v4205
  %6316 = vmatprep.subr.bf16.mxu0 0
  %6317 = vmatpush1.bf16.msra.mxu0 %v4202
  %6318 = vmatprep.subr.bf16.mxu0 0
  %6319 = vmatpush1.bf16.msra.mxu0 %v4199
  %6320 = vmatprep.subr.bf16.mxu0 0
  %6321 = vmatpush1.bf16.msra.mxu0 %v4196
  %6322 = vmatprep.subr.bf16.mxu0 0
  %6323 = vmatpush1.bf16.msra.mxu0 %v4193
  %6324 = vmatprep.subr.bf16.mxu0 0
  %6325 = vmatpush1.bf16.msra.mxu0 %v4190
  %6326 = vmatprep.subr.bf16.mxu0 0
  %6327 = vmatpush2.bf16.msra.mxu0 %v4235
  %6328 = vmatprep.subr.bf16.mxu0 0
  %6329 = vmatpush2.bf16.msra.mxu0 %v4232
  %6330 = vmatprep.subr.bf16.mxu0 0
  %6331 = vmatpush2.bf16.msra.mxu0 %v4229
  %6332 = vmatprep.subr.bf16.mxu0 0
  %6333 = vmatpush2.bf16.msra.mxu0 %v4226
  %6334 = vmatprep.subr.bf16.mxu0 0
  %6335 = vmatpush2.bf16.msra.mxu0 %v4223
  %6336 = vmatprep.subr.bf16.mxu0 0
  %6337 = vmatpush2.bf16.msra.mxu0 %v4220
  %6338 = vmatprep.subr.bf16.mxu0 0
  %6339 = vmatpush2.bf16.msra.mxu0 %v4217
  %6340 = vmatprep.subr.bf16.mxu0 0
  %6341 = vmatpush2.bf16.msra.mxu0 %v4214
  %6342 = vmatprep.mubr.bf16.mxu0 %v2301
  %6343 = vmatmul.mubr.bf16.gmra.mxu0 %v2300
  %v6344 = vpop.f32.mrf.mxu0
  %v6345 = vadd.f32 %v6248, %v6344
  %v6346 = vpop.f32.mrf.mxu0
  %v6347 = vpop.f32.mrf.mxu0
  %v6348 = vadd.f32 %v6251, %v6347
  %v6349 = vpop.f32.mrf.mxu0
  %6350 = vmatprep.mubr.bf16.mxu0 %v2321
  %6351 = vmatmul.mubr.bf16.gmra.mxu0 %v2320
  %v6352 = vpop.f32.mrf.mxu0
  %v6353 = vadd.f32 %v6256, %v6352
  %v6354 = vpop.f32.mrf.mxu0
  %v6355 = vpop.f32.mrf.mxu0
  %v6356 = vadd.f32 %v6259, %v6355
  %v6357 = vpop.f32.mrf.mxu0
  %6358 = vmatprep.mubr.bf16.mxu0 %v2341
  %6359 = vmatmul.mubr.bf16.gmra.mxu0 %v2340
  %v6360 = vpop.f32.mrf.mxu0
  %v6361 = vadd.f32 %v6264, %v6360
  %v6362 = vpop.f32.mrf.mxu0
  %v6363 = vpop.f32.mrf.mxu0
  %v6364 = vadd.f32 %v6267, %v6363
  %v6365 = vpop.f32.mrf.mxu0
  %6366 = vmatprep.mubr.bf16.mxu0 %v2361
  %6367 = vmatmul.mubr.bf16.gmra.mxu0 %v2360
  %v6368 = vpop.f32.mrf.mxu0
  %v6369 = vadd.f32 %v6272, %v6368
  %v6370 = vpop.f32.mrf.mxu0
  %v6371 = vpop.f32.mrf.mxu0
  %v6372 = vadd.f32 %v6275, %v6371
  %v6373 = vpop.f32.mrf.mxu0
  %6374 = vmatprep.mubr.bf16.mxu0 %v2381
  %6375 = vmatmul.mubr.bf16.gmra.mxu0 %v2380
  %v6376 = vpop.f32.mrf.mxu0
  %v6377 = vadd.f32 %v6280, %v6376
  %v6378 = vpop.f32.mrf.mxu0
  %v6379 = vpop.f32.mrf.mxu0
  %v6380 = vadd.f32 %v6283, %v6379
  %v6381 = vpop.f32.mrf.mxu0
  %6382 = vmatprep.mubr.bf16.mxu0 %v2401
  %6383 = vmatmul.mubr.bf16.gmra.mxu0 %v2400
  %v6384 = vpop.f32.mrf.mxu0
  %v6385 = vadd.f32 %v6288, %v6384
  %v6386 = vpop.f32.mrf.mxu0
  %v6387 = vpop.f32.mrf.mxu0
  %v6388 = vadd.f32 %v6291, %v6387
  %v6389 = vpop.f32.mrf.mxu0
  %6390 = vmatprep.mubr.bf16.mxu0 %v2421
  %6391 = vmatmul.mubr.bf16.gmra.mxu0 %v2420
  %v6392 = vpop.f32.mrf.mxu0
  %v6393 = vadd.f32 %v6296, %v6392
  %v6394 = vpop.f32.mrf.mxu0
  %v6395 = vpop.f32.mrf.mxu0
  %v6396 = vadd.f32 %v6299, %v6395
  %v6397 = vpop.f32.mrf.mxu0
  %6398 = vmatprep.mubr.bf16.mxu0 %v2441
  %6399 = vmatmul.mubr.bf16.gmra.mxu0 %v2440
  %v6400 = vpop.f32.mrf.mxu0
  %v6401 = vadd.f32 %v6304, %v6400
  %v6402 = vpop.f32.mrf.mxu0
  %v6403 = vpop.f32.mrf.mxu0
  %v6404 = vadd.f32 %v6307, %v6403
  %v6405 = vpop.f32.mrf.mxu0
  %6406 = vdwg.mxu0
  %6407 = vmatprep.subr.bf16.mxu0 0
  %6408 = vmatpush1.bf16.msra.mxu0 %v4259
  %6409 = vmatprep.subr.bf16.mxu0 0
  %6410 = vmatpush1.bf16.msra.mxu0 %v4256
  %6411 = vmatprep.subr.bf16.mxu0 0
  %6412 = vmatpush1.bf16.msra.mxu0 %v4253
  %6413 = vmatprep.subr.bf16.mxu0 0
  %6414 = vmatpush1.bf16.msra.mxu0 %v4250
  %6415 = vmatprep.subr.bf16.mxu0 0
  %6416 = vmatpush1.bf16.msra.mxu0 %v4247
  %6417 = vmatprep.subr.bf16.mxu0 0
  %6418 = vmatpush1.bf16.msra.mxu0 %v4244
  %6419 = vmatprep.subr.bf16.mxu0 0
  %6420 = vmatpush1.bf16.msra.mxu0 %v4241
  %6421 = vmatprep.subr.bf16.mxu0 0
  %6422 = vmatpush1.bf16.msra.mxu0 %v4238
  %6423 = vmatprep.subr.bf16.mxu0 0
  %6424 = vmatpush2.bf16.msra.mxu0 %v4283
  %6425 = vmatprep.subr.bf16.mxu0 0
  %6426 = vmatpush2.bf16.msra.mxu0 %v4280
  %6427 = vmatprep.subr.bf16.mxu0 0
  %6428 = vmatpush2.bf16.msra.mxu0 %v4277
  %6429 = vmatprep.subr.bf16.mxu0 0
  %6430 = vmatpush2.bf16.msra.mxu0 %v4274
  %6431 = vmatprep.subr.bf16.mxu0 0
  %6432 = vmatpush2.bf16.msra.mxu0 %v4271
  %6433 = vmatprep.subr.bf16.mxu0 0
  %6434 = vmatpush2.bf16.msra.mxu0 %v4268
  %6435 = vmatprep.subr.bf16.mxu0 0
  %6436 = vmatpush2.bf16.msra.mxu0 %v4265
  %6437 = vmatprep.subr.bf16.mxu0 0
  %6438 = vmatpush2.bf16.msra.mxu0 %v4262
  %6439 = vmatprep.mubr.bf16.mxu0 %v2303
  %6440 = vmatmul.mubr.bf16.gmra.mxu0 %v2302
  %v6441 = vpop.f32.mrf.mxu0
  %v6442 = vadd.f32 %v6345, %v6441
  %v6443 = vpop.f32.mrf.mxu0
  %v6444 = vpop.f32.mrf.mxu0
  %v6445 = vadd.f32 %v6348, %v6444
  %v6446 = vpop.f32.mrf.mxu0
  %6447 = vmatprep.mubr.bf16.mxu0 %v2323
  %6448 = vmatmul.mubr.bf16.gmra.mxu0 %v2322
  %v6449 = vpop.f32.mrf.mxu0
  %v6450 = vadd.f32 %v6353, %v6449
  %v6451 = vpop.f32.mrf.mxu0
  %v6452 = vpop.f32.mrf.mxu0
  %v6453 = vadd.f32 %v6356, %v6452
  %v6454 = vpop.f32.mrf.mxu0
  %6455 = vmatprep.mubr.bf16.mxu0 %v2343
  %6456 = vmatmul.mubr.bf16.gmra.mxu0 %v2342
  %v6457 = vpop.f32.mrf.mxu0
  %v6458 = vadd.f32 %v6361, %v6457
  %v6459 = vpop.f32.mrf.mxu0
  %v6460 = vpop.f32.mrf.mxu0
  %v6461 = vadd.f32 %v6364, %v6460
  %v6462 = vpop.f32.mrf.mxu0
  %6463 = vmatprep.mubr.bf16.mxu0 %v2363
  %6464 = vmatmul.mubr.bf16.gmra.mxu0 %v2362
  %v6465 = vpop.f32.mrf.mxu0
  %v6466 = vadd.f32 %v6369, %v6465
  %v6467 = vpop.f32.mrf.mxu0
  %v6468 = vpop.f32.mrf.mxu0
  %v6469 = vadd.f32 %v6372, %v6468
  %v6470 = vpop.f32.mrf.mxu0
  %6471 = vmatprep.mubr.bf16.mxu0 %v2383
  %6472 = vmatmul.mubr.bf16.gmra.mxu0 %v2382
  %v6473 = vpop.f32.mrf.mxu0
  %v6474 = vadd.f32 %v6377, %v6473
  %v6475 = vpop.f32.mrf.mxu0
  %v6476 = vpop.f32.mrf.mxu0
  %v6477 = vadd.f32 %v6380, %v6476
  %v6478 = vpop.f32.mrf.mxu0
  %6479 = vmatprep.mubr.bf16.mxu0 %v2403
  %6480 = vmatmul.mubr.bf16.gmra.mxu0 %v2402
  %v6481 = vpop.f32.mrf.mxu0
  %v6482 = vadd.f32 %v6385, %v6481
  %v6483 = vpop.f32.mrf.mxu0
  %v6484 = vpop.f32.mrf.mxu0
  %v6485 = vadd.f32 %v6388, %v6484
  %v6486 = vpop.f32.mrf.mxu0
  %6487 = vmatprep.mubr.bf16.mxu0 %v2423
  %6488 = vmatmul.mubr.bf16.gmra.mxu0 %v2422
  %v6489 = vpop.f32.mrf.mxu0
  %v6490 = vadd.f32 %v6393, %v6489
  %v6491 = vpop.f32.mrf.mxu0
  %v6492 = vpop.f32.mrf.mxu0
  %v6493 = vadd.f32 %v6396, %v6492
  %v6494 = vpop.f32.mrf.mxu0
  %6495 = vmatprep.mubr.bf16.mxu0 %v2443
  %6496 = vmatmul.mubr.bf16.gmra.mxu0 %v2442
  %v6497 = vpop.f32.mrf.mxu0
  %v6498 = vadd.f32 %v6401, %v6497
  %v6499 = vpop.f32.mrf.mxu0
  %v6500 = vpop.f32.mrf.mxu0
  %v6501 = vadd.f32 %v6404, %v6500
  %v6502 = vpop.f32.mrf.mxu0
  %6503 = vdwg.mxu0
  %6504 = vmatprep.subr.bf16.mxu0 0
  %6505 = vmatpush1.bf16.msra.mxu0 %v4307
  %6506 = vmatprep.subr.bf16.mxu0 0
  %6507 = vmatpush1.bf16.msra.mxu0 %v4304
  %6508 = vmatprep.subr.bf16.mxu0 0
  %6509 = vmatpush1.bf16.msra.mxu0 %v4301
  %6510 = vmatprep.subr.bf16.mxu0 0
  %6511 = vmatpush1.bf16.msra.mxu0 %v4298
  %6512 = vmatprep.subr.bf16.mxu0 0
  %6513 = vmatpush1.bf16.msra.mxu0 %v4295
  %6514 = vmatprep.subr.bf16.mxu0 0
  %6515 = vmatpush1.bf16.msra.mxu0 %v4292
  %6516 = vmatprep.subr.bf16.mxu0 0
  %6517 = vmatpush1.bf16.msra.mxu0 %v4289
  %6518 = vmatprep.subr.bf16.mxu0 0
  %6519 = vmatpush1.bf16.msra.mxu0 %v4286
  %6520 = vmatprep.subr.bf16.mxu0 0
  %6521 = vmatpush2.bf16.msra.mxu0 %v4331
  %6522 = vmatprep.subr.bf16.mxu0 0
  %6523 = vmatpush2.bf16.msra.mxu0 %v4328
  %6524 = vmatprep.subr.bf16.mxu0 0
  %6525 = vmatpush2.bf16.msra.mxu0 %v4325
  %6526 = vmatprep.subr.bf16.mxu0 0
  %6527 = vmatpush2.bf16.msra.mxu0 %v4322
  %6528 = vmatprep.subr.bf16.mxu0 0
  %6529 = vmatpush2.bf16.msra.mxu0 %v4319
  %6530 = vmatprep.subr.bf16.mxu0 0
  %6531 = vmatpush2.bf16.msra.mxu0 %v4316
  %6532 = vmatprep.subr.bf16.mxu0 0
  %6533 = vmatpush2.bf16.msra.mxu0 %v4313
  %6534 = vmatprep.subr.bf16.mxu0 0
  %6535 = vmatpush2.bf16.msra.mxu0 %v4310
  %6536 = vmatprep.mubr.bf16.mxu0 %v2305
  %6537 = vmatmul.mubr.bf16.gmra.mxu0 %v2304
  %v6538 = vpop.f32.mrf.mxu0
  %v6539 = vadd.f32 %v6442, %v6538
  %v6540 = vpop.f32.mrf.mxu0
  %v6541 = vpop.f32.mrf.mxu0
  %v6542 = vadd.f32 %v6445, %v6541
  %v6543 = vpop.f32.mrf.mxu0
  %6544 = vmatprep.mubr.bf16.mxu0 %v2325
  %6545 = vmatmul.mubr.bf16.gmra.mxu0 %v2324
  %v6546 = vpop.f32.mrf.mxu0
  %v6547 = vadd.f32 %v6450, %v6546
  %v6548 = vpop.f32.mrf.mxu0
  %v6549 = vpop.f32.mrf.mxu0
  %v6550 = vadd.f32 %v6453, %v6549
  %v6551 = vpop.f32.mrf.mxu0
  %6552 = vmatprep.mubr.bf16.mxu0 %v2345
  %6553 = vmatmul.mubr.bf16.gmra.mxu0 %v2344
  %v6554 = vpop.f32.mrf.mxu0
  %v6555 = vadd.f32 %v6458, %v6554
  %v6556 = vpop.f32.mrf.mxu0
  %v6557 = vpop.f32.mrf.mxu0
  %v6558 = vadd.f32 %v6461, %v6557
  %v6559 = vpop.f32.mrf.mxu0
  %6560 = vmatprep.mubr.bf16.mxu0 %v2365
  %6561 = vmatmul.mubr.bf16.gmra.mxu0 %v2364
  %v6562 = vpop.f32.mrf.mxu0
  %v6563 = vadd.f32 %v6466, %v6562
  %v6564 = vpop.f32.mrf.mxu0
  %v6565 = vpop.f32.mrf.mxu0
  %v6566 = vadd.f32 %v6469, %v6565
  %v6567 = vpop.f32.mrf.mxu0
  %6568 = vmatprep.mubr.bf16.mxu0 %v2385
  %6569 = vmatmul.mubr.bf16.gmra.mxu0 %v2384
  %v6570 = vpop.f32.mrf.mxu0
  %v6571 = vadd.f32 %v6474, %v6570
  %v6572 = vpop.f32.mrf.mxu0
  %v6573 = vpop.f32.mrf.mxu0
  %v6574 = vadd.f32 %v6477, %v6573
  %v6575 = vpop.f32.mrf.mxu0
  %6576 = vmatprep.mubr.bf16.mxu0 %v2405
  %6577 = vmatmul.mubr.bf16.gmra.mxu0 %v2404
  %v6578 = vpop.f32.mrf.mxu0
  %v6579 = vadd.f32 %v6482, %v6578
  %v6580 = vpop.f32.mrf.mxu0
  %v6581 = vpop.f32.mrf.mxu0
  %v6582 = vadd.f32 %v6485, %v6581
  %v6583 = vpop.f32.mrf.mxu0
  %6584 = vmatprep.mubr.bf16.mxu0 %v2425
  %6585 = vmatmul.mubr.bf16.gmra.mxu0 %v2424
  %v6586 = vpop.f32.mrf.mxu0
  %v6587 = vadd.f32 %v6490, %v6586
  %v6588 = vpop.f32.mrf.mxu0
  %v6589 = vpop.f32.mrf.mxu0
  %v6590 = vadd.f32 %v6493, %v6589
  %v6591 = vpop.f32.mrf.mxu0
  %6592 = vmatprep.mubr.bf16.mxu0 %v2445
  %6593 = vmatmul.mubr.bf16.gmra.mxu0 %v2444
  %v6594 = vpop.f32.mrf.mxu0
  %v6595 = vadd.f32 %v6498, %v6594
  %v6596 = vpop.f32.mrf.mxu0
  %v6597 = vpop.f32.mrf.mxu0
  %v6598 = vadd.f32 %v6501, %v6597
  %v6599 = vpop.f32.mrf.mxu0
  %6600 = vdwg.mxu0
  %6601 = vmatprep.subr.bf16.mxu0 0
  %6602 = vmatpush1.bf16.msra.mxu0 %v4355
  %6603 = vmatprep.subr.bf16.mxu0 0
  %6604 = vmatpush1.bf16.msra.mxu0 %v4352
  %6605 = vmatprep.subr.bf16.mxu0 0
  %6606 = vmatpush1.bf16.msra.mxu0 %v4349
  %6607 = vmatprep.subr.bf16.mxu0 0
  %6608 = vmatpush1.bf16.msra.mxu0 %v4346
  %6609 = vmatprep.subr.bf16.mxu0 0
  %6610 = vmatpush1.bf16.msra.mxu0 %v4343
  %6611 = vmatprep.subr.bf16.mxu0 0
  %6612 = vmatpush1.bf16.msra.mxu0 %v4340
  %6613 = vmatprep.subr.bf16.mxu0 0
  %6614 = vmatpush1.bf16.msra.mxu0 %v4337
  %6615 = vmatprep.subr.bf16.mxu0 0
  %6616 = vmatpush1.bf16.msra.mxu0 %v4334
  %6617 = vmatprep.subr.bf16.mxu0 0
  %6618 = vmatpush2.bf16.msra.mxu0 %v4379
  %6619 = vmatprep.subr.bf16.mxu0 0
  %6620 = vmatpush2.bf16.msra.mxu0 %v4376
  %6621 = vmatprep.subr.bf16.mxu0 0
  %6622 = vmatpush2.bf16.msra.mxu0 %v4373
  %6623 = vmatprep.subr.bf16.mxu0 0
  %6624 = vmatpush2.bf16.msra.mxu0 %v4370
  %6625 = vmatprep.subr.bf16.mxu0 0
  %6626 = vmatpush2.bf16.msra.mxu0 %v4367
  %6627 = vmatprep.subr.bf16.mxu0 0
  %6628 = vmatpush2.bf16.msra.mxu0 %v4364
  %6629 = vmatprep.subr.bf16.mxu0 0
  %6630 = vmatpush2.bf16.msra.mxu0 %v4361
  %6631 = vmatprep.subr.bf16.mxu0 0
  %6632 = vmatpush2.bf16.msra.mxu0 %v4358
  %6633 = vmatprep.mubr.bf16.mxu0 %v2307
  %6634 = vmatmul.mubr.bf16.gmra.mxu0 %v2306
  %v6635 = vpop.f32.mrf.mxu0
  %v6636 = vadd.f32 %v6539, %v6635
  %v6637 = vpop.f32.mrf.mxu0
  %v6638 = vpop.f32.mrf.mxu0
  %v6639 = vadd.f32 %v6542, %v6638
  %v6640 = vpop.f32.mrf.mxu0
  %6641 = vmatprep.mubr.bf16.mxu0 %v2327
  %6642 = vmatmul.mubr.bf16.gmra.mxu0 %v2326
  %v6643 = vpop.f32.mrf.mxu0
  %v6644 = vadd.f32 %v6547, %v6643
  %v6645 = vpop.f32.mrf.mxu0
  %v6646 = vpop.f32.mrf.mxu0
  %v6647 = vadd.f32 %v6550, %v6646
  %v6648 = vpop.f32.mrf.mxu0
  %6649 = vmatprep.mubr.bf16.mxu0 %v2347
  %6650 = vmatmul.mubr.bf16.gmra.mxu0 %v2346
  %v6651 = vpop.f32.mrf.mxu0
  %v6652 = vadd.f32 %v6555, %v6651
  %v6653 = vpop.f32.mrf.mxu0
  %v6654 = vpop.f32.mrf.mxu0
  %v6655 = vadd.f32 %v6558, %v6654
  %v6656 = vpop.f32.mrf.mxu0
  %6657 = vmatprep.mubr.bf16.mxu0 %v2367
  %6658 = vmatmul.mubr.bf16.gmra.mxu0 %v2366
  %v6659 = vpop.f32.mrf.mxu0
  %v6660 = vadd.f32 %v6563, %v6659
  %v6661 = vpop.f32.mrf.mxu0
  %v6662 = vpop.f32.mrf.mxu0
  %v6663 = vadd.f32 %v6566, %v6662
  %v6664 = vpop.f32.mrf.mxu0
  %6665 = vmatprep.mubr.bf16.mxu0 %v2387
  %6666 = vmatmul.mubr.bf16.gmra.mxu0 %v2386
  %v6667 = vpop.f32.mrf.mxu0
  %v6668 = vadd.f32 %v6571, %v6667
  %v6669 = vpop.f32.mrf.mxu0
  %v6670 = vpop.f32.mrf.mxu0
  %v6671 = vadd.f32 %v6574, %v6670
  %v6672 = vpop.f32.mrf.mxu0
  %6673 = vmatprep.mubr.bf16.mxu0 %v2407
  %6674 = vmatmul.mubr.bf16.gmra.mxu0 %v2406
  %v6675 = vpop.f32.mrf.mxu0
  %v6676 = vadd.f32 %v6579, %v6675
  %v6677 = vpop.f32.mrf.mxu0
  %v6678 = vpop.f32.mrf.mxu0
  %v6679 = vadd.f32 %v6582, %v6678
  %v6680 = vpop.f32.mrf.mxu0
  %6681 = vmatprep.mubr.bf16.mxu0 %v2427
  %6682 = vmatmul.mubr.bf16.gmra.mxu0 %v2426
  %v6683 = vpop.f32.mrf.mxu0
  %v6684 = vadd.f32 %v6587, %v6683
  %v6685 = vpop.f32.mrf.mxu0
  %v6686 = vpop.f32.mrf.mxu0
  %v6687 = vadd.f32 %v6590, %v6686
  %v6688 = vpop.f32.mrf.mxu0
  %6689 = vmatprep.mubr.bf16.mxu0 %v2447
  %6690 = vmatmul.mubr.bf16.gmra.mxu0 %v2446
  %v6691 = vpop.f32.mrf.mxu0
  %v6692 = vadd.f32 %v6595, %v6691
  %v6693 = vpop.f32.mrf.mxu0
  %v6694 = vpop.f32.mrf.mxu0
  %v6695 = vadd.f32 %v6598, %v6694
  %v6696 = vpop.f32.mrf.mxu0
  %6697 = vdwg.mxu0
  %6698 = vmatprep.subr.bf16.mxu0 0
  %6699 = vmatpush1.bf16.msra.mxu0 %v4403
  %6700 = vmatprep.subr.bf16.mxu0 0
  %6701 = vmatpush1.bf16.msra.mxu0 %v4400
  %6702 = vmatprep.subr.bf16.mxu0 0
  %6703 = vmatpush1.bf16.msra.mxu0 %v4397
  %6704 = vmatprep.subr.bf16.mxu0 0
  %6705 = vmatpush1.bf16.msra.mxu0 %v4394
  %6706 = vmatprep.subr.bf16.mxu0 0
  %6707 = vmatpush1.bf16.msra.mxu0 %v4391
  %6708 = vmatprep.subr.bf16.mxu0 0
  %6709 = vmatpush1.bf16.msra.mxu0 %v4388
  %6710 = vmatprep.subr.bf16.mxu0 0
  %6711 = vmatpush1.bf16.msra.mxu0 %v4385
  %6712 = vmatprep.subr.bf16.mxu0 0
  %6713 = vmatpush1.bf16.msra.mxu0 %v4382
  %6714 = vmatprep.subr.bf16.mxu0 0
  %6715 = vmatpush2.bf16.msra.mxu0 %v4427
  %6716 = vmatprep.subr.bf16.mxu0 0
  %6717 = vmatpush2.bf16.msra.mxu0 %v4424
  %6718 = vmatprep.subr.bf16.mxu0 0
  %6719 = vmatpush2.bf16.msra.mxu0 %v4421
  %6720 = vmatprep.subr.bf16.mxu0 0
  %6721 = vmatpush2.bf16.msra.mxu0 %v4418
  %6722 = vmatprep.subr.bf16.mxu0 0
  %6723 = vmatpush2.bf16.msra.mxu0 %v4415
  %6724 = vmatprep.subr.bf16.mxu0 0
  %6725 = vmatpush2.bf16.msra.mxu0 %v4412
  %6726 = vmatprep.subr.bf16.mxu0 0
  %6727 = vmatpush2.bf16.msra.mxu0 %v4409
  %6728 = vmatprep.subr.bf16.mxu0 0
  %6729 = vmatpush2.bf16.msra.mxu0 %v4406
  %6730 = vmatprep.mubr.bf16.mxu0 %v2309
  %6731 = vmatmul.mubr.bf16.gmra.mxu0 %v2308
  %v6732 = vpop.f32.mrf.mxu0
  %v6733 = vadd.f32 %v6636, %v6732
  %v6734 = vpop.f32.mrf.mxu0
  %v6735 = vpop.f32.mrf.mxu0
  %v6736 = vadd.f32 %v6639, %v6735
  %v6737 = vpop.f32.mrf.mxu0
  %6738 = vmatprep.mubr.bf16.mxu0 %v2329
  %6739 = vmatmul.mubr.bf16.gmra.mxu0 %v2328
  %v6740 = vpop.f32.mrf.mxu0
  %v6741 = vadd.f32 %v6644, %v6740
  %v6742 = vpop.f32.mrf.mxu0
  %v6743 = vpop.f32.mrf.mxu0
  %v6744 = vadd.f32 %v6647, %v6743
  %v6745 = vpop.f32.mrf.mxu0
  %6746 = vmatprep.mubr.bf16.mxu0 %v2349
  %6747 = vmatmul.mubr.bf16.gmra.mxu0 %v2348
  %v6748 = vpop.f32.mrf.mxu0
  %v6749 = vadd.f32 %v6652, %v6748
  %v6750 = vpop.f32.mrf.mxu0
  %v6751 = vpop.f32.mrf.mxu0
  %v6752 = vadd.f32 %v6655, %v6751
  %v6753 = vpop.f32.mrf.mxu0
  %6754 = vmatprep.mubr.bf16.mxu0 %v2369
  %6755 = vmatmul.mubr.bf16.gmra.mxu0 %v2368
  %v6756 = vpop.f32.mrf.mxu0
  %v6757 = vadd.f32 %v6660, %v6756
  %v6758 = vpop.f32.mrf.mxu0
  %v6759 = vpop.f32.mrf.mxu0
  %v6760 = vadd.f32 %v6663, %v6759
  %v6761 = vpop.f32.mrf.mxu0
  %6762 = vmatprep.mubr.bf16.mxu0 %v2389
  %6763 = vmatmul.mubr.bf16.gmra.mxu0 %v2388
  %v6764 = vpop.f32.mrf.mxu0
  %v6765 = vadd.f32 %v6668, %v6764
  %v6766 = vpop.f32.mrf.mxu0
  %v6767 = vpop.f32.mrf.mxu0
  %v6768 = vadd.f32 %v6671, %v6767
  %v6769 = vpop.f32.mrf.mxu0
  %6770 = vmatprep.mubr.bf16.mxu0 %v2409
  %6771 = vmatmul.mubr.bf16.gmra.mxu0 %v2408
  %v6772 = vpop.f32.mrf.mxu0
  %v6773 = vadd.f32 %v6676, %v6772
  %v6774 = vpop.f32.mrf.mxu0
  %v6775 = vpop.f32.mrf.mxu0
  %v6776 = vadd.f32 %v6679, %v6775
  %v6777 = vpop.f32.mrf.mxu0
  %6778 = vmatprep.mubr.bf16.mxu0 %v2429
  %6779 = vmatmul.mubr.bf16.gmra.mxu0 %v2428
  %v6780 = vpop.f32.mrf.mxu0
  %v6781 = vadd.f32 %v6684, %v6780
  %v6782 = vpop.f32.mrf.mxu0
  %v6783 = vpop.f32.mrf.mxu0
  %v6784 = vadd.f32 %v6687, %v6783
  %v6785 = vpop.f32.mrf.mxu0
  %6786 = vmatprep.mubr.bf16.mxu0 %v2449
  %6787 = vmatmul.mubr.bf16.gmra.mxu0 %v2448
  %v6788 = vpop.f32.mrf.mxu0
  %v6789 = vadd.f32 %v6692, %v6788
  %v6790 = vpop.f32.mrf.mxu0
  %v6791 = vpop.f32.mrf.mxu0
  %v6792 = vadd.f32 %v6695, %v6791
  %v6793 = vpop.f32.mrf.mxu0
  %6794 = vdwg.mxu0
  %6795 = vmatprep.subr.bf16.mxu0 0
  %6796 = vmatpush1.bf16.msra.mxu0 %v4451
  %6797 = vmatprep.subr.bf16.mxu0 0
  %6798 = vmatpush1.bf16.msra.mxu0 %v4448
  %6799 = vmatprep.subr.bf16.mxu0 0
  %6800 = vmatpush1.bf16.msra.mxu0 %v4445
  %6801 = vmatprep.subr.bf16.mxu0 0
  %6802 = vmatpush1.bf16.msra.mxu0 %v4442
  %6803 = vmatprep.subr.bf16.mxu0 0
  %6804 = vmatpush1.bf16.msra.mxu0 %v4439
  %6805 = vmatprep.subr.bf16.mxu0 0
  %6806 = vmatpush1.bf16.msra.mxu0 %v4436
  %6807 = vmatprep.subr.bf16.mxu0 0
  %6808 = vmatpush1.bf16.msra.mxu0 %v4433
  %6809 = vmatprep.subr.bf16.mxu0 0
  %6810 = vmatpush1.bf16.msra.mxu0 %v4430
  %6811 = vmatprep.subr.bf16.mxu0 0
  %6812 = vmatpush2.bf16.msra.mxu0 %v4475
  %6813 = vmatprep.subr.bf16.mxu0 0
  %6814 = vmatpush2.bf16.msra.mxu0 %v4472
  %6815 = vmatprep.subr.bf16.mxu0 0
  %6816 = vmatpush2.bf16.msra.mxu0 %v4469
  %6817 = vmatprep.subr.bf16.mxu0 0
  %6818 = vmatpush2.bf16.msra.mxu0 %v4466
  %6819 = vmatprep.subr.bf16.mxu0 0
  %6820 = vmatpush2.bf16.msra.mxu0 %v4463
  %6821 = vmatprep.subr.bf16.mxu0 0
  %6822 = vmatpush2.bf16.msra.mxu0 %v4460
  %6823 = vmatprep.subr.bf16.mxu0 0
  %6824 = vmatpush2.bf16.msra.mxu0 %v4457
  %6825 = vmatprep.subr.bf16.mxu0 0
  %6826 = vmatpush2.bf16.msra.mxu0 %v4454
  %6827 = vmatprep.mubr.bf16.mxu0 %v2311
  %6828 = vmatmul.mubr.bf16.gmra.mxu0 %v2310
  %v6829 = vpop.f32.mrf.mxu0
  %v6830 = vadd.f32 %v6733, %v6829
  %v6831 = vpop.f32.mrf.mxu0
  %v6832 = vpop.f32.mrf.mxu0
  %v6833 = vadd.f32 %v6736, %v6832
  %v6834 = vpop.f32.mrf.mxu0
  %6835 = vmatprep.mubr.bf16.mxu0 %v2331
  %6836 = vmatmul.mubr.bf16.gmra.mxu0 %v2330
  %v6837 = vpop.f32.mrf.mxu0
  %v6838 = vadd.f32 %v6741, %v6837
  %v6839 = vpop.f32.mrf.mxu0
  %v6840 = vpop.f32.mrf.mxu0
  %v6841 = vadd.f32 %v6744, %v6840
  %v6842 = vpop.f32.mrf.mxu0
  %6843 = vmatprep.mubr.bf16.mxu0 %v2351
  %6844 = vmatmul.mubr.bf16.gmra.mxu0 %v2350
  %v6845 = vpop.f32.mrf.mxu0
  %v6846 = vadd.f32 %v6749, %v6845
  %v6847 = vpop.f32.mrf.mxu0
  %v6848 = vpop.f32.mrf.mxu0
  %v6849 = vadd.f32 %v6752, %v6848
  %v6850 = vpop.f32.mrf.mxu0
  %6851 = vmatprep.mubr.bf16.mxu0 %v2371
  %6852 = vmatmul.mubr.bf16.gmra.mxu0 %v2370
  %v6853 = vpop.f32.mrf.mxu0
  %v6854 = vadd.f32 %v6757, %v6853
  %v6855 = vpop.f32.mrf.mxu0
  %v6856 = vpop.f32.mrf.mxu0
  %v6857 = vadd.f32 %v6760, %v6856
  %v6858 = vpop.f32.mrf.mxu0
  %6859 = vmatprep.mubr.bf16.mxu0 %v2391
  %6860 = vmatmul.mubr.bf16.gmra.mxu0 %v2390
  %v6861 = vpop.f32.mrf.mxu0
  %v6862 = vadd.f32 %v6765, %v6861
  %v6863 = vpop.f32.mrf.mxu0
  %v6864 = vpop.f32.mrf.mxu0
  %v6865 = vadd.f32 %v6768, %v6864
  %v6866 = vpop.f32.mrf.mxu0
  %6867 = vmatprep.mubr.bf16.mxu0 %v2411
  %6868 = vmatmul.mubr.bf16.gmra.mxu0 %v2410
  %v6869 = vpop.f32.mrf.mxu0
  %v6870 = vadd.f32 %v6773, %v6869
  %v6871 = vpop.f32.mrf.mxu0
  %v6872 = vpop.f32.mrf.mxu0
  %v6873 = vadd.f32 %v6776, %v6872
  %v6874 = vpop.f32.mrf.mxu0
  %6875 = vmatprep.mubr.bf16.mxu0 %v2431
  %6876 = vmatmul.mubr.bf16.gmra.mxu0 %v2430
  %v6877 = vpop.f32.mrf.mxu0
  %v6878 = vadd.f32 %v6781, %v6877
  %v6879 = vpop.f32.mrf.mxu0
  %v6880 = vpop.f32.mrf.mxu0
  %v6881 = vadd.f32 %v6784, %v6880
  %v6882 = vpop.f32.mrf.mxu0
  %6883 = vmatprep.mubr.bf16.mxu0 %v2451
  %6884 = vmatmul.mubr.bf16.gmra.mxu0 %v2450
  %v6885 = vpop.f32.mrf.mxu0
  %v6886 = vadd.f32 %v6789, %v6885
  %v6887 = vpop.f32.mrf.mxu0
  %v6888 = vpop.f32.mrf.mxu0
  %v6889 = vadd.f32 %v6792, %v6888
  %v6890 = vpop.f32.mrf.mxu0
  %6891 = vdwg.mxu0
  %6892 = vmatprep.subr.bf16.mxu0 0
  %6893 = vmatpush1.bf16.msra.mxu0 %v4499
  %6894 = vmatprep.subr.bf16.mxu0 0
  %6895 = vmatpush1.bf16.msra.mxu0 %v4496
  %6896 = vmatprep.subr.bf16.mxu0 0
  %6897 = vmatpush1.bf16.msra.mxu0 %v4493
  %6898 = vmatprep.subr.bf16.mxu0 0
  %6899 = vmatpush1.bf16.msra.mxu0 %v4490
  %6900 = vmatprep.subr.bf16.mxu0 0
  %6901 = vmatpush1.bf16.msra.mxu0 %v4487
  %6902 = vmatprep.subr.bf16.mxu0 0
  %6903 = vmatpush1.bf16.msra.mxu0 %v4484
  %6904 = vmatprep.subr.bf16.mxu0 0
  %6905 = vmatpush1.bf16.msra.mxu0 %v4481
  %6906 = vmatprep.subr.bf16.mxu0 0
  %6907 = vmatpush1.bf16.msra.mxu0 %v4478
  %6908 = vmatprep.subr.bf16.mxu0 0
  %6909 = vmatpush2.bf16.msra.mxu0 %v4523
  %6910 = vmatprep.subr.bf16.mxu0 0
  %6911 = vmatpush2.bf16.msra.mxu0 %v4520
  %6912 = vmatprep.subr.bf16.mxu0 0
  %6913 = vmatpush2.bf16.msra.mxu0 %v4517
  %6914 = vmatprep.subr.bf16.mxu0 0
  %6915 = vmatpush2.bf16.msra.mxu0 %v4514
  %6916 = vmatprep.subr.bf16.mxu0 0
  %6917 = vmatpush2.bf16.msra.mxu0 %v4511
  %6918 = vmatprep.subr.bf16.mxu0 0
  %6919 = vmatpush2.bf16.msra.mxu0 %v4508
  %6920 = vmatprep.subr.bf16.mxu0 0
  %6921 = vmatpush2.bf16.msra.mxu0 %v4505
  %6922 = vmatprep.subr.bf16.mxu0 0
  %6923 = vmatpush2.bf16.msra.mxu0 %v4502
  %6924 = vmatprep.mubr.bf16.mxu0 %v2313
  %6925 = vmatmul.mubr.bf16.gmra.mxu0 %v2312
  %v6926 = vpop.f32.mrf.mxu0
  %v6927 = vadd.f32 %v6830, %v6926
  %v6928 = vpop.f32.mrf.mxu0
  %v6929 = vpop.f32.mrf.mxu0
  %v6930 = vadd.f32 %v6833, %v6929
  %v6931 = vpop.f32.mrf.mxu0
  %6932 = vmatprep.mubr.bf16.mxu0 %v2333
  %6933 = vmatmul.mubr.bf16.gmra.mxu0 %v2332
  %v6934 = vpop.f32.mrf.mxu0
  %v6935 = vadd.f32 %v6838, %v6934
  %v6936 = vpop.f32.mrf.mxu0
  %v6937 = vpop.f32.mrf.mxu0
  %v6938 = vadd.f32 %v6841, %v6937
  %v6939 = vpop.f32.mrf.mxu0
  %6940 = vmatprep.mubr.bf16.mxu0 %v2353
  %6941 = vmatmul.mubr.bf16.gmra.mxu0 %v2352
  %v6942 = vpop.f32.mrf.mxu0
  %v6943 = vadd.f32 %v6846, %v6942
  %v6944 = vpop.f32.mrf.mxu0
  %v6945 = vpop.f32.mrf.mxu0
  %v6946 = vadd.f32 %v6849, %v6945
  %v6947 = vpop.f32.mrf.mxu0
  %6948 = vmatprep.mubr.bf16.mxu0 %v2373
  %6949 = vmatmul.mubr.bf16.gmra.mxu0 %v2372
  %v6950 = vpop.f32.mrf.mxu0
  %v6951 = vadd.f32 %v6854, %v6950
  %v6952 = vpop.f32.mrf.mxu0
  %v6953 = vpop.f32.mrf.mxu0
  %v6954 = vadd.f32 %v6857, %v6953
  %v6955 = vpop.f32.mrf.mxu0
  %6956 = vmatprep.mubr.bf16.mxu0 %v2393
  %6957 = vmatmul.mubr.bf16.gmra.mxu0 %v2392
  %v6958 = vpop.f32.mrf.mxu0
  %v6959 = vadd.f32 %v6862, %v6958
  %v6960 = vpop.f32.mrf.mxu0
  %v6961 = vpop.f32.mrf.mxu0
  %v6962 = vadd.f32 %v6865, %v6961
  %v6963 = vpop.f32.mrf.mxu0
  %6964 = vmatprep.mubr.bf16.mxu0 %v2413
  %6965 = vmatmul.mubr.bf16.gmra.mxu0 %v2412
  %v6966 = vpop.f32.mrf.mxu0
  %v6967 = vadd.f32 %v6870, %v6966
  %v6968 = vpop.f32.mrf.mxu0
  %v6969 = vpop.f32.mrf.mxu0
  %v6970 = vadd.f32 %v6873, %v6969
  %v6971 = vpop.f32.mrf.mxu0
  %6972 = vmatprep.mubr.bf16.mxu0 %v2433
  %6973 = vmatmul.mubr.bf16.gmra.mxu0 %v2432
  %v6974 = vpop.f32.mrf.mxu0
  %v6975 = vadd.f32 %v6878, %v6974
  %v6976 = vpop.f32.mrf.mxu0
  %v6977 = vpop.f32.mrf.mxu0
  %v6978 = vadd.f32 %v6881, %v6977
  %v6979 = vpop.f32.mrf.mxu0
  %6980 = vmatprep.mubr.bf16.mxu0 %v2453
  %6981 = vmatmul.mubr.bf16.gmra.mxu0 %v2452
  %v6982 = vpop.f32.mrf.mxu0
  %v6983 = vadd.f32 %v6886, %v6982
  %v6984 = vpop.f32.mrf.mxu0
  %v6985 = vpop.f32.mrf.mxu0
  %v6986 = vadd.f32 %v6889, %v6985
  %v6987 = vpop.f32.mrf.mxu0
  %6988 = vdwg.mxu0
  %6989 = vmatprep.subr.bf16.mxu0 0
  %6990 = vmatpush1.bf16.msra.mxu0 %v4547
  %6991 = vmatprep.subr.bf16.mxu0 0
  %6992 = vmatpush1.bf16.msra.mxu0 %v4544
  %6993 = vmatprep.subr.bf16.mxu0 0
  %6994 = vmatpush1.bf16.msra.mxu0 %v4541
  %6995 = vmatprep.subr.bf16.mxu0 0
  %6996 = vmatpush1.bf16.msra.mxu0 %v4538
  %6997 = vmatprep.subr.bf16.mxu0 0
  %6998 = vmatpush1.bf16.msra.mxu0 %v4535
  %6999 = vmatprep.subr.bf16.mxu0 0
  %7000 = vmatpush1.bf16.msra.mxu0 %v4532
  %7001 = vmatprep.subr.bf16.mxu0 0
  %7002 = vmatpush1.bf16.msra.mxu0 %v4529
  %7003 = vmatprep.subr.bf16.mxu0 0
  %7004 = vmatpush1.bf16.msra.mxu0 %v4526
  %7005 = vmatprep.subr.bf16.mxu0 0
  %7006 = vmatpush2.bf16.msra.mxu0 %v4571
  %7007 = vmatprep.subr.bf16.mxu0 0
  %7008 = vmatpush2.bf16.msra.mxu0 %v4568
  %7009 = vmatprep.subr.bf16.mxu0 0
  %7010 = vmatpush2.bf16.msra.mxu0 %v4565
  %7011 = vmatprep.subr.bf16.mxu0 0
  %7012 = vmatpush2.bf16.msra.mxu0 %v4562
  %7013 = vmatprep.subr.bf16.mxu0 0
  %7014 = vmatpush2.bf16.msra.mxu0 %v4559
  %7015 = vmatprep.subr.bf16.mxu0 0
  %7016 = vmatpush2.bf16.msra.mxu0 %v4556
  %7017 = vmatprep.subr.bf16.mxu0 0
  %7018 = vmatpush2.bf16.msra.mxu0 %v4553
  %7019 = vmatprep.subr.bf16.mxu0 0
  %7020 = vmatpush2.bf16.msra.mxu0 %v4550
  %7021 = vmatprep.mubr.bf16.mxu0 %v2315
  %7022 = vmatmul.mubr.bf16.gmra.mxu0 %v2314
  %v7023 = vpop.f32.mrf.mxu0
  %v7024 = vadd.f32 %v6927, %v7023
  %v7025 = vpop.f32.mrf.mxu0
  %v7026 = vpop.f32.mrf.mxu0
  %v7027 = vadd.f32 %v6930, %v7026
  %v7028 = vpop.f32.mrf.mxu0
  %7029 = vmatprep.mubr.bf16.mxu0 %v2335
  %7030 = vmatmul.mubr.bf16.gmra.mxu0 %v2334
  %v7031 = vpop.f32.mrf.mxu0
  %v7032 = vadd.f32 %v6935, %v7031
  %v7033 = vpop.f32.mrf.mxu0
  %v7034 = vpop.f32.mrf.mxu0
  %v7035 = vadd.f32 %v6938, %v7034
  %v7036 = vpop.f32.mrf.mxu0
  %7037 = vmatprep.mubr.bf16.mxu0 %v2355
  %7038 = vmatmul.mubr.bf16.gmra.mxu0 %v2354
  %v7039 = vpop.f32.mrf.mxu0
  %v7040 = vadd.f32 %v6943, %v7039
  %v7041 = vpop.f32.mrf.mxu0
  %v7042 = vpop.f32.mrf.mxu0
  %v7043 = vadd.f32 %v6946, %v7042
  %v7044 = vpop.f32.mrf.mxu0
  %7045 = vmatprep.mubr.bf16.mxu0 %v2375
  %7046 = vmatmul.mubr.bf16.gmra.mxu0 %v2374
  %v7047 = vpop.f32.mrf.mxu0
  %v7048 = vadd.f32 %v6951, %v7047
  %v7049 = vpop.f32.mrf.mxu0
  %v7050 = vpop.f32.mrf.mxu0
  %v7051 = vadd.f32 %v6954, %v7050
  %v7052 = vpop.f32.mrf.mxu0
  %7053 = vmatprep.mubr.bf16.mxu0 %v2395
  %7054 = vmatmul.mubr.bf16.gmra.mxu0 %v2394
  %v7055 = vpop.f32.mrf.mxu0
  %v7056 = vadd.f32 %v6959, %v7055
  %v7057 = vpop.f32.mrf.mxu0
  %v7058 = vpop.f32.mrf.mxu0
  %v7059 = vadd.f32 %v6962, %v7058
  %v7060 = vpop.f32.mrf.mxu0
  %7061 = vmatprep.mubr.bf16.mxu0 %v2415
  %7062 = vmatmul.mubr.bf16.gmra.mxu0 %v2414
  %v7063 = vpop.f32.mrf.mxu0
  %v7064 = vadd.f32 %v6967, %v7063
  %v7065 = vpop.f32.mrf.mxu0
  %v7066 = vpop.f32.mrf.mxu0
  %v7067 = vadd.f32 %v6970, %v7066
  %v7068 = vpop.f32.mrf.mxu0
  %7069 = vmatprep.mubr.bf16.mxu0 %v2435
  %7070 = vmatmul.mubr.bf16.gmra.mxu0 %v2434
  %v7071 = vpop.f32.mrf.mxu0
  %v7072 = vadd.f32 %v6975, %v7071
  %v7073 = vpop.f32.mrf.mxu0
  %v7074 = vpop.f32.mrf.mxu0
  %v7075 = vadd.f32 %v6978, %v7074
  %v7076 = vpop.f32.mrf.mxu0
  %7077 = vmatprep.mubr.bf16.mxu0 %v2455
  %7078 = vmatmul.mubr.bf16.gmra.mxu0 %v2454
  %v7079 = vpop.f32.mrf.mxu0
  %v7080 = vadd.f32 %v6983, %v7079
  %v7081 = vpop.f32.mrf.mxu0
  %v7082 = vpop.f32.mrf.mxu0
  %v7083 = vadd.f32 %v6986, %v7082
  %v7084 = vpop.f32.mrf.mxu0
  %7085 = vdwg.mxu0
  %7086 = vmatprep.subr.bf16.mxu0 0
  %7087 = vmatpush1.bf16.msra.mxu0 %v4595
  %7088 = vmatprep.subr.bf16.mxu0 0
  %7089 = vmatpush1.bf16.msra.mxu0 %v4592
  %7090 = vmatprep.subr.bf16.mxu0 0
  %7091 = vmatpush1.bf16.msra.mxu0 %v4589
  %7092 = vmatprep.subr.bf16.mxu0 0
  %7093 = vmatpush1.bf16.msra.mxu0 %v4586
  %7094 = vmatprep.subr.bf16.mxu0 0
  %7095 = vmatpush1.bf16.msra.mxu0 %v4583
  %7096 = vmatprep.subr.bf16.mxu0 0
  %7097 = vmatpush1.bf16.msra.mxu0 %v4580
  %7098 = vmatprep.subr.bf16.mxu0 0
  %7099 = vmatpush1.bf16.msra.mxu0 %v4577
  %7100 = vmatprep.subr.bf16.mxu0 0
  %7101 = vmatpush1.bf16.msra.mxu0 %v4574
  %7102 = vmatprep.subr.bf16.mxu0 0
  %7103 = vmatpush2.bf16.msra.mxu0 0
  %7104 = vmatprep.subr.bf16.mxu0 0
  %7105 = vmatpush2.bf16.msra.mxu0 0
  %7106 = vmatprep.subr.bf16.mxu0 0
  %7107 = vmatpush2.bf16.msra.mxu0 0
  %7108 = vmatprep.subr.bf16.mxu0 0
  %7109 = vmatpush2.bf16.msra.mxu0 0
  %7110 = vmatprep.subr.bf16.mxu0 0
  %7111 = vmatpush2.bf16.msra.mxu0 0
  %7112 = vmatprep.subr.bf16.mxu0 0
  %7113 = vmatpush2.bf16.msra.mxu0 0
  %7114 = vmatprep.subr.bf16.mxu0 0
  %7115 = vmatpush2.bf16.msra.mxu0 0
  %7116 = vmatprep.subr.bf16.mxu0 0
  %7117 = vmatpush2.bf16.msra.mxu0 %v4598
  %7118 = vmatprep.mubr.bf16.mxu0 %v5060
  %7119 = vmatmul.mubr.bf16.gmra.mxu0 %v2316
  %v7120 = vpop.f32.mrf.mxu0
  %v7121 = vadd.f32 %v7024, %v7120
  %v7122 = vpop.f32.mrf.mxu0
  %v7123 = vpop.f32.mrf.mxu0
  %v7124 = vadd.f32 %v7027, %v7123
  %v7125 = vpop.f32.mrf.mxu0
  %7126 = vmatprep.mubr.bf16.mxu0 %v5063
  %7127 = vmatmul.mubr.bf16.gmra.mxu0 %v2336
  %v7128 = vpop.f32.mrf.mxu0
  %v7129 = vadd.f32 %v7032, %v7128
  %v7130 = vpop.f32.mrf.mxu0
  %v7131 = vpop.f32.mrf.mxu0
  %v7132 = vadd.f32 %v7035, %v7131
  %v7133 = vpop.f32.mrf.mxu0
  %7134 = vmatprep.mubr.bf16.mxu0 %v5066
  %7135 = vmatmul.mubr.bf16.gmra.mxu0 %v2356
  %v7136 = vpop.f32.mrf.mxu0
  %v7137 = vadd.f32 %v7040, %v7136
  %v7138 = vpop.f32.mrf.mxu0
  %v7139 = vpop.f32.mrf.mxu0
  %v7140 = vadd.f32 %v7043, %v7139
  %v7141 = vpop.f32.mrf.mxu0
  %7142 = vmatprep.mubr.bf16.mxu0 %v5069
  %7143 = vmatmul.mubr.bf16.gmra.mxu0 %v2376
  %v7144 = vpop.f32.mrf.mxu0
  %v7145 = vadd.f32 %v7048, %v7144
  %v7146 = vpop.f32.mrf.mxu0
  %v7147 = vpop.f32.mrf.mxu0
  %v7148 = vadd.f32 %v7051, %v7147
  %v7149 = vpop.f32.mrf.mxu0
  %7150 = vmatprep.mubr.bf16.mxu0 %v5072
  %7151 = vmatmul.mubr.bf16.gmra.mxu0 %v2396
  %v7152 = vpop.f32.mrf.mxu0
  %v7153 = vadd.f32 %v7056, %v7152
  %v7154 = vpop.f32.mrf.mxu0
  %v7155 = vpop.f32.mrf.mxu0
  %v7156 = vadd.f32 %v7059, %v7155
  %v7157 = vpop.f32.mrf.mxu0
  %7158 = vmatprep.mubr.bf16.mxu0 %v5075
  %7159 = vmatmul.mubr.bf16.gmra.mxu0 %v2416
  %v7160 = vpop.f32.mrf.mxu0
  %v7161 = vadd.f32 %v7064, %v7160
  %v7162 = vpop.f32.mrf.mxu0
  %v7163 = vpop.f32.mrf.mxu0
  %v7164 = vadd.f32 %v7067, %v7163
  %v7165 = vpop.f32.mrf.mxu0
  %7166 = vmatprep.mubr.bf16.mxu0 %v5078
  %7167 = vmatmul.mubr.bf16.gmra.mxu0 %v2436
  %v7168 = vpop.f32.mrf.mxu0
  %v7169 = vadd.f32 %v7072, %v7168
  %v7170 = vpop.f32.mrf.mxu0
  %v7171 = vpop.f32.mrf.mxu0
  %v7172 = vadd.f32 %v7075, %v7171
  %v7173 = vpop.f32.mrf.mxu0
  %7174 = vmatprep.mubr.bf16.mxu0 %v5081
  %7175 = vmatmul.mubr.bf16.gmra.mxu0 %v2456
  %v7176 = vpop.f32.mrf.mxu0
  %v7177 = vadd.f32 %v7080, %v7176
  %v7178 = vpop.f32.mrf.mxu0
  %v7179 = vpop.f32.mrf.mxu0
  %v7180 = vadd.f32 %v7083, %v7179
  %v7181 = vpop.f32.mrf.mxu0
  %7182 = vdwg.mxu0
  %v7183 = vmax.f32 %v6135, 0.0
  %v7184 = vmax.f32 %v6137, 0.0
  %v7185 = vmax.f32 %v7121, 0.0
  %v7186 = vmax.f32 %v6139, 0.0
  %v7187 = vmax.f32 %v6141, 0.0
  %v7188 = vmax.f32 %v7124, 0.0
  %v7189 = vmax.f32 %v6145, 0.0
  %v7190 = vmax.f32 %v6147, 0.0
  %v7191 = vmax.f32 %v7129, 0.0
  %v7192 = vmax.f32 %v6149, 0.0
  %v7193 = vmax.f32 %v6151, 0.0
  %v7194 = vmax.f32 %v7132, 0.0
  %v7195 = vmax.f32 %v6155, 0.0
  %v7196 = vmax.f32 %v6157, 0.0
  %v7197 = vmax.f32 %v7137, 0.0
  %v7198 = vmax.f32 %v6159, 0.0
  %v7199 = vmax.f32 %v6161, 0.0
  %v7200 = vmax.f32 %v7140, 0.0
  %v7201 = vmax.f32 %v6165, 0.0
  %v7202 = vmax.f32 %v6167, 0.0
  %v7203 = vmax.f32 %v7145, 0.0
  %v7204 = vmax.f32 %v6169, 0.0
  %v7205 = vmax.f32 %v6171, 0.0
  %v7206 = vmax.f32 %v7148, 0.0
  %v7207 = vmax.f32 %v6175, 0.0
  %v7208 = vmax.f32 %v6177, 0.0
  %v7209 = vmax.f32 %v7153, 0.0
  %v7210 = vmax.f32 %v6179, 0.0
  %v7211 = vmax.f32 %v6181, 0.0
  %v7212 = vmax.f32 %v7156, 0.0
  %v7213 = vmax.f32 %v6185, 0.0
  %v7214 = vmax.f32 %v6187, 0.0
  %v7215 = vmax.f32 %v7161, 0.0
  %v7216 = vmax.f32 %v6189, 0.0
  %v7217 = vmax.f32 %v6191, 0.0
  %v7218 = vmax.f32 %v7164, 0.0
  %v7219 = vmax.f32 %v6195, 0.0
  %v7220 = vmax.f32 %v6197, 0.0
  %v7221 = vmax.f32 %v7169, 0.0
  %v7222 = vmax.f32 %v6199, 0.0
  %v7223 = vmax.f32 %v6201, 0.0
  %v7224 = vmax.f32 %v7172, 0.0
  %v7225 = vmax.f32 %v6205, 0.0
  %v7226 = vmax.f32 %v6207, 0.0
  %v7227 = vmax.f32 %v7177, 0.0
  %v7228 = vmax.f32 %v6209, 0.0
  %v7229 = vmax.f32 %v6211, 0.0
  %v7230 = vmax.f32 %v7180, 0.0
  %7231 = vst [vmem:[%s5] sm:$0xff] %v7183
  %7232 = vst [vmem:[%s5 + $0x8] sm:$0xff] %v7184
  %7233 = vst.msk [vmem:[%s5 + $0x10] sm:$0xff] %vm468, %v7185
  %7234 = vst [vmem:[%s5 + $0x18] sm:$0xff] %v7186
  %7235 = vst [vmem:[%s5 + $0x20] sm:$0xff] %v7187
  %7236 = vst.msk [vmem:[%s5 + $0x28] sm:$0xff] %vm468, %v7188
  %7237 = vst [vmem:[%s5 + $0x30] sm:$0xff] %v7189
  %7238 = vst [vmem:[%s5 + $0x38] sm:$0xff] %v7190
  %7239 = vst.msk [vmem:[%s5 + $0x40] sm:$0xff] %vm468, %v7191
  %7240 = vst [vmem:[%s5 + $0x48] sm:$0xff] %v7192
  %7241 = vst [vmem:[%s5 + $0x50] sm:$0xff] %v7193
  %7242 = vst.msk [vmem:[%s5 + $0x58] sm:$0xff] %vm468, %v7194
  %7243 = vst [vmem:[%s5 + $0x60] sm:$0xff] %v7195
  %7244 = vst [vmem:[%s5 + $0x68] sm:$0xff] %v7196
  %7245 = vst.msk [vmem:[%s5 + $0x70] sm:$0xff] %vm468, %v7197
  %7246 = vst [vmem:[%s5 + $0x78] sm:$0xff] %v7198
  %7247 = vst [vmem:[%s5 + $0x80] sm:$0xff] %v7199
  %7248 = vst.msk [vmem:[%s5 + $0x88] sm:$0xff] %vm468, %v7200
  %7249 = vst [vmem:[%s5 + $0x90] sm:$0xff] %v7201
  %7250 = vst [vmem:[%s5 + $0x98] sm:$0xff] %v7202
  %7251 = vst.msk [vmem:[%s5 + $0xa0] sm:$0xff] %vm468, %v7203
  %7252 = vst [vmem:[%s5 + $0xa8] sm:$0xff] %v7204
  %7253 = vst [vmem:[%s5 + $0xb0] sm:$0xff] %v7205
  %7254 = vst.msk [vmem:[%s5 + $0xb8] sm:$0xff] %vm468, %v7206
  %7255 = vst [vmem:[%s5 + $0xc0] sm:$0xff] %v7207
  %7256 = vst [vmem:[%s5 + $0xc8] sm:$0xff] %v7208
  %7257 = vst.msk [vmem:[%s5 + $0xd0] sm:$0xff] %vm468, %v7209
  %7258 = vst [vmem:[%s5 + $0xd8] sm:$0xff] %v7210
  %7259 = vst [vmem:[%s5 + $0xe0] sm:$0xff] %v7211
  %7260 = vst.msk [vmem:[%s5 + $0xe8] sm:$0xff] %vm468, %v7212
  %7261 = vst [vmem:[%s5 + $0xf0] sm:$0xff] %v7213
  %7262 = vst [vmem:[%s5 + $0xf8] sm:$0xff] %v7214
  %7263 = vst.msk [vmem:[%s5 + $0x100] sm:$0xff] %vm468, %v7215
  %7264 = vst [vmem:[%s5 + $0x108] sm:$0xff] %v7216
  %7265 = vst [vmem:[%s5 + $0x110] sm:$0xff] %v7217
  %7266 = vst.msk [vmem:[%s5 + $0x118] sm:$0xff] %vm468, %v7218
  %7267 = vst [vmem:[%s5 + $0x120] sm:$0xff] %v7219
  %7268 = vst [vmem:[%s5 + $0x128] sm:$0xff] %v7220
  %7269 = vst.msk [vmem:[%s5 + $0x130] sm:$0xff] %vm468, %v7221
  %7270 = vst [vmem:[%s5 + $0x138] sm:$0xff] %v7222
  %7271 = vst [vmem:[%s5 + $0x140] sm:$0xff] %v7223
  %7272 = vst.msk [vmem:[%s5 + $0x148] sm:$0xff] %vm468, %v7224
  %7273 = vst [vmem:[%s5 + $0x150] sm:$0xff] %v7225
  %7274 = vst [vmem:[%s5 + $0x158] sm:$0xff] %v7226
  %7275 = vst.msk [vmem:[%s5 + $0x160] sm:$0xff] %vm468, %v7227
  %7276 = vst [vmem:[%s5 + $0x168] sm:$0xff] %v7228
  %7277 = vst [vmem:[%s5 + $0x170] sm:$0xff] %v7229
  %7278 = vst.msk [vmem:[%s5 + $0x178] sm:$0xff] %vm468, %v7230
  // Predicated region
  $region18: #{reduction_b_forward.5} parent=0 // pred_check
    _
  $region19: #{reduction_b_forward.5} parent=0 // pred_check_branch
    %7280 = sbr.rel (0) target = $region21
  $region20: #{reduction_b_forward.5} parent=0 // pred_region
    _
  $region21: #{reduction_b_forward.5} parent=0 // pred_fallthru
    _
  // Predicated region
  $region22: #{reduction_b_forward.5} parent=0 // pred_check
    _
  $region23: #{reduction_b_forward.5} parent=0 // pred_check_branch
    %7282 = sbr.rel (0) target = $region25
  $region24: #{reduction_b_forward.5} parent=0 // pred_region
    _
  $region25: #{reduction_b_forward.5} parent=0 // pred_fallthru
    _
  // Predicated region
  $region26: #{reduction_b_forward.5} parent=0 // pred_check
    _
  $region27: #{reduction_b_forward.5} parent=0 // pred_check_branch
    %7284 = sbr.rel (0) target = $region29
  $region28: #{reduction_b_forward.5} parent=0 // pred_region
    _
  $region29: #{reduction_b_forward.5} parent=0 // pred_fallthru
    _
  // Predicated region
  $region30: #{reduction_b_forward.5} parent=0 // pred_check
    _
  $region31: #{reduction_b_forward.5} parent=0 // pred_check_branch
    %7286 = sbr.rel (0) target = $region33
  $region32: #{reduction_b_forward.5} parent=0 // pred_region
    _
  $region33: #{reduction_b_forward.5} parent=0 // pred_fallthru
    _

</llo_original>
